<compile_context>
chip_gen: v7x
topology: tpu7x:2x2x1
jax: 0.10.0
libtpu: 0.0.40
codegen_flags: <defaults>
</compile_context>

<pallas_src>
import math
import jax
import jax.numpy as jnp
from jax.experimental import pallas as pl
from jax.experimental.pallas import tpu as pltpu

# ---- model config (small, consistent with the module's __init__) ----
BATCH = 2
FEATURE_DIM = 4          # feature_dim
D_MODEL = 32             # d_model
SEQ = 16                 # input_size == sequence length
NUM_HEADS = 4
HEAD_DIM = D_MODEL // NUM_HEADS
NUM_LAYERS = 2
NUM_CLASSES = 5
DIM_FF = 2048            # nn.TransformerEncoderLayer default dim_feedforward
LN_EPS = 1e-5

M_ROWS = BATCH * SEQ     # 32  -- batch folded into the matmul M dimension
HM = NUM_HEADS * M_ROWS  # 128 -- head-expanded key/value rows (lane-dense)
KTAPS = 7                # all conv scales zero-padded to 7 taps


# ----------------------------------------------------------------------
# Single fused kernel: conv + pos-enc + N encoder layers + final Linear
# ----------------------------------------------------------------------
def fused_forward_kernel(
        x7_ref, wconv_ref, bconv_ref, pos_ref,
        mask_k_ref, mask_v_ref, bias_ref,
        wqkv_ref, bqkv_ref, wo_ref, bo_ref,
        ln1w_ref, ln1b_ref, w1_ref, b1_ref, w2_ref, b2_ref,
        ln2w_ref, ln2b_ref, fcw_ref, fcb_ref, out_ref):
    # ---- multi-scale conv: 3 im2col matmuls (K=28) + ReLU + sum + pos-enc ----
    x7 = x7_ref[...]                                       # (M, 7F)
    h = pos_ref[...]                                       # (M, D) pre-tiled pos-enc
    for i in range(3):
        y = jnp.dot(x7, wconv_ref[i],
                    preferred_element_type=jnp.float32) + bconv_ref[i]
        h = h + jnp.maximum(y, 0.0)

    mask_k = mask_k_ref[...]                               # (D, HM)  head block mask
    mask_v = mask_v_ref[...]                               # (HM, D)  head block mask^T
    bias = bias_ref[...]                                   # (M, HM)  0 / -1e9 cross-batch
    scale = 1.0 / math.sqrt(HEAD_DIM)

    def layer_norm(x, w, b):
        mean = jnp.mean(x, axis=-1, keepdims=True)
        var = jnp.mean(jnp.square(x - mean), axis=-1, keepdims=True)
        return (x - mean) * jax.lax.rsqrt(var + LN_EPS) * w + b

    for l in range(NUM_LAYERS):                            # unrolled (NUM_LAYERS = 2)
        # ---- packed QKV projection: one (M,D)@(D,3D) matmul ----
        qkv = jnp.dot(h, wqkv_ref[l],
                      preferred_element_type=jnp.float32) + bqkv_ref[l]
        q = qkv[:, 0:D_MODEL]
        k = qkv[:, D_MODEL:2 * D_MODEL]
        v = qkv[:, 2 * D_MODEL:3 * D_MODEL]

        # ---- multi-head attention: all batches + heads in 3 dense matmuls ----
        # k_bd[d, hh*M + r] = k[r, d] if d belongs to head hh else 0
        k_bd = jnp.concatenate([k.T] * NUM_HEADS, axis=1) * mask_k        # (D, HM)
        s = jnp.dot(q, k_bd, preferred_element_type=jnp.float32) * scale + bias
        s = s - jnp.max(s, axis=-1, keepdims=True)          # shared row max (valid for softmax)
        e = jnp.exp(s)                                      # cross-batch entries underflow to 0
        # v_bd[hh*M + r, d] = v[r, d] if d belongs to head hh else 0
        v_bd = jnp.concatenate([v] * NUM_HEADS, axis=0) * mask_v          # (HM, D)
        attn_un = jnp.dot(e, v_bd, preferred_element_type=jnp.float32)    # (M, D) unnormalized
        denom = jnp.dot(e, mask_v, preferred_element_type=jnp.float32)    # (M, D) per-head sums
        attn = attn_un * pl.reciprocal(denom, approx=True)
        attn = jnp.dot(attn, wo_ref[l],
                       preferred_element_type=jnp.float32) + bo_ref[l]

        x1 = layer_norm(h + attn, ln1w_ref[l], ln1b_ref[l])

        # ---- FFN: bf16 weights, native bf16 MXU path, f32 accumulation ----
        f = jnp.dot(x1.astype(jnp.bfloat16), w1_ref[l],
                    preferred_element_type=jnp.float32) + b1_ref[l]
        f = jnp.maximum(f, 0.0).astype(jnp.bfloat16)
        f = jnp.dot(f, w2_ref[l],
                    preferred_element_type=jnp.float32) + b2_ref[l]

        h = layer_norm(x1 + f, ln2w_ref[l], ln2b_ref[l])

    # ---- fused final Linear on the last time step of each batch element ----
    last = jnp.concatenate(
        [h[(b + 1) * SEQ - 1:(b + 1) * SEQ, :] for b in range(BATCH)], axis=0)   # (B, D)
    out_ref[...] = (jnp.dot(last, fcw_ref[...], preferred_element_type=jnp.float32)
                    + fcb_ref[0]).astype(out_ref.dtype)


# ----------------------------------------------------------------------
# Host-side packing (layout plumbing only; no model compute)
# ----------------------------------------------------------------------
def _im2col(x):
    # x: (B, S, F) -> (B*S, 7*F) with 'same' padding for the 7-tap window.
    xpad = jnp.pad(x, ((0, 0), (3, 3), (0, 0)))
    cols = jnp.stack([xpad[:, t:t + SEQ, :] for t in range(KTAPS)], axis=2)  # (B,S,7,F)
    return cols.reshape(M_ROWS, KTAPS * FEATURE_DIM)


def _attention_constants():
    d = jnp.arange(D_MODEL)
    c = jnp.arange(HM)
    head_of_d = d // HEAD_DIM
    head_of_c = c // M_ROWS
    mask_k = (head_of_d[:, None] == head_of_c[None, :]).astype(jnp.float32)  # (D, HM)
    mask_v = mask_k.T                                                        # (HM, D)
    m = jnp.arange(M_ROWS)
    batch_of_m = m // SEQ
    batch_of_c = (c % M_ROWS) // SEQ
    bias = jnp.where(batch_of_m[:, None] == batch_of_c[None, :], 0.0, -1e9)
    return mask_k, mask_v, bias.astype(jnp.float32)                          # (M, HM)


def _pack_params(params):
    def pad_taps(w, ksize):
        off = (KTAPS - ksize) // 2
        return jnp.pad(w, ((off, off), (0, 0), (0, 0))).reshape(
            KTAPS * FEATURE_DIM, D_MODEL)

    wconv = jnp.stack([pad_taps(params["w1"], 3),
                       pad_taps(params["w2"], 5),
                       pad_taps(params["w3"], 7)], axis=0)          # (3, 7F, D)
    pos = jnp.tile(params["pos"], (BATCH, 1))                       # (M, D)

    layers = params["layers"]
    stack = lambda name: jnp.stack([lp[name] for lp in layers], axis=0)
    wqkv = jnp.stack([jnp.concatenate(list(lp["wqkv"]), axis=1) for lp in layers], 0)  # (L, D, 3D)
    bqkv = jnp.stack([jnp.concatenate(list(lp["bqkv"]), axis=0) for lp in layers], 0)  # (L, 3D)

    return dict(
        wconv=wconv, bconv=params["cb"], pos=pos,
        wqkv=wqkv, bqkv=bqkv,
        wo=stack("wo"), bo=stack("bo"),
        ln1w=stack("ln1w"), ln1b=stack("ln1b"),
        w1=stack("w1"), b1=stack("b1"),               # w1: (L, D, FF)  bf16
        w2=stack("w2"), b2=stack("b2"),               # w2: (L, FF, D)  bf16
        ln2w=stack("ln2w"), ln2b=stack("ln2b"),
        fcw=params["fcw"], fcb=params["fcb"].reshape(1, NUM_CLASSES),
    )


@jax.jit
def forward(x, params):
    pk = _pack_params(params)
    mask_k, mask_v, bias = _attention_constants()
    x7 = _im2col(x)
    vmem = pl.BlockSpec(memory_space=pltpu.MemorySpace.VMEM)
    return pl.pallas_call(
        fused_forward_kernel,
        out_shape=jax.ShapeDtypeStruct((BATCH, NUM_CLASSES), jnp.float32),
        in_specs=[vmem] * 21,
        out_specs=vmem,
    )(x7, pk["wconv"], pk["bconv"], pk["pos"], mask_k, mask_v, bias,
      pk["wqkv"], pk["bqkv"], pk["wo"], pk["bo"],
      pk["ln1w"], pk["ln1b"], pk["w1"], pk["b1"], pk["w2"], pk["b2"],
      pk["ln2w"], pk["ln2b"], pk["fcw"], pk["fcb"])


# ----------------------------------------------------------------------
# Deterministic parameter init + pure-JAX reference for validation
# ----------------------------------------------------------------------
def init_params(key):
    keys = iter(jax.random.split(key, 64))

    def nrm(shape, scale=0.1):
        return scale * jax.random.normal(next(keys), shape, jnp.float32)

    params = dict(
        w1=nrm((3, FEATURE_DIM, D_MODEL)),
        w2=nrm((5, FEATURE_DIM, D_MODEL)),
        w3=nrm((7, FEATURE_DIM, D_MODEL)),
        cb=nrm((3, D_MODEL), 0.02),
        pos=nrm((SEQ, D_MODEL), 0.02),   # pos_encoder_input (PyTorch inits zeros; randomized here)
        fcw=nrm((D_MODEL, NUM_CLASSES)),
        fcb=nrm((NUM_CLASSES,), 0.02),
        layers=[],
    )
    for _ in range(NUM_LAYERS):
        params["layers"].append(dict(
            wqkv=nrm((3, D_MODEL, D_MODEL)),
            bqkv=nrm((3, D_MODEL), 0.02),
            wo=nrm((D_MODEL, D_MODEL)),
            bo=nrm((D_MODEL,), 0.02),
            ln1w=jnp.ones((D_MODEL,), jnp.float32),
            ln1b=jnp.zeros((D_MODEL,), jnp.float32),
            # FFN weights stored in bf16 (the only large tensors): halves their
            # HBM->VMEM DMA and uses the native bf16 MXU path (f32 accumulate).
            w1=nrm((D_MODEL, DIM_FF)).astype(jnp.bfloat16),
            b1=nrm((DIM_FF,), 0.02),
            w2=nrm((DIM_FF, D_MODEL)).astype(jnp.bfloat16),
            b2=nrm((D_MODEL,), 0.02),
            ln2w=jnp.ones((D_MODEL,), jnp.float32),
            ln2b=jnp.zeros((D_MODEL,), jnp.float32),
        ))
    return params


def reference_forward(x, params):
    xpad = jnp.pad(x, ((0, 0), (3, 3), (0, 0)))

    def conv(w, start, ksize, b):
        acc = jnp.zeros((BATCH, SEQ, D_MODEL), jnp.float32)
        for k in range(ksize):
            acc = acc + jnp.einsum("bsf,fd->bsd", xpad[:, start + k:start + k + SEQ, :], w[k])
        return jax.nn.relu(acc + b)

    h = (conv(params["w1"], 2, 3, params["cb"][0])
         + conv(params["w2"], 1, 5, params["cb"][1])
         + conv(params["w3"], 0, 7, params["cb"][2]))
    h = h + params["pos"][None]

    def ln(x_, w, b):
        m = jnp.mean(x_, -1, keepdims=True)
        var = jnp.mean((x_ - m) ** 2, -1, keepdims=True)
        return (x_ - m) * jax.lax.rsqrt(var + LN_EPS) * w + b

    for lp in params["layers"]:
        q = h @ lp["wqkv"][0] + lp["bqkv"][0]
        k = h @ lp["wqkv"][1] + lp["bqkv"][1]
        v = h @ lp["wqkv"][2] + lp["bqkv"][2]
        qh = q.reshape(BATCH, SEQ, NUM_HEADS, HEAD_DIM)
        kh = k.reshape(BATCH, SEQ, NUM_HEADS, HEAD_DIM)
        vh = v.reshape(BATCH, SEQ, NUM_HEADS, HEAD_DIM)
        s = jnp.einsum("bqhd,bkhd->bhqk", qh, kh) / math.sqrt(HEAD_DIM)
        p = jax.nn.softmax(s, axis=-1)
        a = jnp.einsum("bhqk,bkhd->bqhd", p, vh).reshape(BATCH, SEQ, D_MODEL)
        a = a @ lp["wo"] + lp["bo"]
        h = ln(h + a, lp["ln1w"], lp["ln1b"])
        f = jax.nn.relu(h @ lp["w1"] + lp["b1"]) @ lp["w2"] + lp["b2"]
        h = ln(h + f, lp["ln2w"], lp["ln2b"])
    return h[:, -1, :] @ params["fcw"] + params["fcb"]


if __name__ == "__main__":
    key = jax.random.PRNGKey(0)
    k_x, k_p = jax.random.split(key)
    x = jax.random.normal(k_x, (BATCH, SEQ, FEATURE_DIM), jnp.float32)
    params = init_params(k_p)

    logits = jax.block_until_ready(forward(x, params))
    ref = jax.block_until_ready(reference_forward(x, params))

    assert logits.shape == (BATCH, NUM_CLASSES)
    assert jnp.allclose(logits, ref, rtol=1e-2, atol=1e-2), (logits, ref)

    print("KERNEL_OK")
</pallas_src>

<mosaic_0001>
module attributes {stable_mosaic.version = 11 : i64} {
  func.func @fused_forward_kernel(%arg0: memref<32x28xf32, #tpu.memory_space<vmem>>, %arg1: memref<3x28x32xf32, #tpu.memory_space<vmem>>, %arg2: memref<3x32xf32, #tpu.memory_space<vmem>>, %arg3: memref<32x32xf32, #tpu.memory_space<vmem>>, %arg4: memref<32x128xf32, #tpu.memory_space<vmem>>, %arg5: memref<128x32xf32, #tpu.memory_space<vmem>>, %arg6: memref<32x128xf32, #tpu.memory_space<vmem>>, %arg7: memref<2x32x96xf32, #tpu.memory_space<vmem>>, %arg8: memref<2x96xf32, #tpu.memory_space<vmem>>, %arg9: memref<2x32x32xf32, #tpu.memory_space<vmem>>, %arg10: memref<2x32xf32, #tpu.memory_space<vmem>>, %arg11: memref<2x32xf32, #tpu.memory_space<vmem>>, %arg12: memref<2x32xf32, #tpu.memory_space<vmem>>, %arg13: memref<2x32x2048xbf16, #tpu.memory_space<vmem>>, %arg14: memref<2x2048xf32, #tpu.memory_space<vmem>>, %arg15: memref<2x2048x32xbf16, #tpu.memory_space<vmem>>, %arg16: memref<2x32xf32, #tpu.memory_space<vmem>>, %arg17: memref<2x32xf32, #tpu.memory_space<vmem>>, %arg18: memref<2x32xf32, #tpu.memory_space<vmem>>, %arg19: memref<32x5xf32, #tpu.memory_space<vmem>>, %arg20: memref<1x5xf32, #tpu.memory_space<vmem>>, %arg21: memref<2x5xf32, #tpu.memory_space<vmem>>) attributes {dimension_semantics = [], scalar_prefetch = 0 : i64, scratch_operands = 0 : i64, tpu.core_type = #tpu.core_type<tc>} {
    %c0 = arith.constant 0 : index
    %c0_0 = arith.constant 0 : index
    %0 = vector.load %arg0[%c0, %c0_0] : memref<32x28xf32, #tpu.memory_space<vmem>>, vector<32x28xf32>
    %c0_1 = arith.constant 0 : index
    %c0_2 = arith.constant 0 : index
    %1 = vector.load %arg3[%c0_1, %c0_2] : memref<32x32xf32, #tpu.memory_space<vmem>>, vector<32x32xf32>
    %c0_3 = arith.constant 0 : index
    %c0_4 = arith.constant 0 : index
    %c0_5 = arith.constant 0 : index
    %2 = vector.load %arg1[%c0_3, %c0_4, %c0_5] : memref<3x28x32xf32, #tpu.memory_space<vmem>>, vector<1x28x32xf32>
    %3 = vector.shape_cast %2 : vector<1x28x32xf32> to vector<28x32xf32>
    %cst = arith.constant dense<0.000000e+00> : vector<32x32xf32>
    %4 = tpu.matmul %0, %3, %cst {dimension_numbers = #tpu.dot_dimension_numbers<[1], [0], [0], [1], [0, 0, 1, 1], [], []>} : vector<32x28xf32>, vector<28x32xf32>, vector<32x32xf32> -> vector<32x32xf32>
    %c0_6 = arith.constant 0 : index
    %c0_7 = arith.constant 0 : index
    %5 = vector.load %arg2[%c0_6, %c0_7] : memref<3x32xf32, #tpu.memory_space<vmem>>, vector<1x32xf32>
    %6 = vector.shape_cast %5 : vector<1x32xf32> to vector<32xf32>
    %7 = vector.shape_cast %6 : vector<32xf32> to vector<1x32xf32>
    %8 = vector.broadcast %7 : vector<1x32xf32> to vector<32x32xf32>
    %9 = arith.addf %4, %8 : vector<32x32xf32>
    %cst_8 = arith.constant 0.000000e+00 : f32
    %10 = vector.broadcast %cst_8 : f32 to vector<32x32xf32>
    %11 = arith.maximumf %9, %10 : vector<32x32xf32>
    %12 = arith.addf %1, %11 : vector<32x32xf32>
    %c1 = arith.constant 1 : index
    %c0_9 = arith.constant 0 : index
    %c0_10 = arith.constant 0 : index
    %13 = vector.load %arg1[%c1, %c0_9, %c0_10] : memref<3x28x32xf32, #tpu.memory_space<vmem>>, vector<1x28x32xf32>
    %14 = vector.shape_cast %13 : vector<1x28x32xf32> to vector<28x32xf32>
    %cst_11 = arith.constant dense<0.000000e+00> : vector<32x32xf32>
    %15 = tpu.matmul %0, %14, %cst_11 {dimension_numbers = #tpu.dot_dimension_numbers<[1], [0], [0], [1], [0, 0, 1, 1], [], []>} : vector<32x28xf32>, vector<28x32xf32>, vector<32x32xf32> -> vector<32x32xf32>
    %c1_12 = arith.constant 1 : index
    %c0_13 = arith.constant 0 : index
    %16 = vector.load %arg2[%c1_12, %c0_13] : memref<3x32xf32, #tpu.memory_space<vmem>>, vector<1x32xf32>
    %17 = vector.shape_cast %16 : vector<1x32xf32> to vector<32xf32>
    %18 = vector.shape_cast %17 : vector<32xf32> to vector<1x32xf32>
    %19 = vector.broadcast %18 : vector<1x32xf32> to vector<32x32xf32>
    %20 = arith.addf %15, %19 : vector<32x32xf32>
    %cst_14 = arith.constant 0.000000e+00 : f32
    %21 = vector.broadcast %cst_14 : f32 to vector<32x32xf32>
    %22 = arith.maximumf %20, %21 : vector<32x32xf32>
    %23 = arith.addf %12, %22 : vector<32x32xf32>
    %c2 = arith.constant 2 : index
    %c0_15 = arith.constant 0 : index
    %c0_16 = arith.constant 0 : index
    %24 = vector.load %arg1[%c2, %c0_15, %c0_16] : memref<3x28x32xf32, #tpu.memory_space<vmem>>, vector<1x28x32xf32>
    %25 = vector.shape_cast %24 : vector<1x28x32xf32> to vector<28x32xf32>
    %cst_17 = arith.constant dense<0.000000e+00> : vector<32x32xf32>
    %26 = tpu.matmul %0, %25, %cst_17 {dimension_numbers = #tpu.dot_dimension_numbers<[1], [0], [0], [1], [0, 0, 1, 1], [], []>} : vector<32x28xf32>, vector<28x32xf32>, vector<32x32xf32> -> vector<32x32xf32>
    %c2_18 = arith.constant 2 : index
    %c0_19 = arith.constant 0 : index
    %27 = vector.load %arg2[%c2_18, %c0_19] : memref<3x32xf32, #tpu.memory_space<vmem>>, vector<1x32xf32>
    %28 = vector.shape_cast %27 : vector<1x32xf32> to vector<32xf32>
    %29 = vector.shape_cast %28 : vector<32xf32> to vector<1x32xf32>
    %30 = vector.broadcast %29 : vector<1x32xf32> to vector<32x32xf32>
    %31 = arith.addf %26, %30 : vector<32x32xf32>
    %cst_20 = arith.constant 0.000000e+00 : f32
    %32 = vector.broadcast %cst_20 : f32 to vector<32x32xf32>
    %33 = arith.maximumf %31, %32 : vector<32x32xf32>
    %34 = arith.addf %23, %33 : vector<32x32xf32>
    %c0_21 = arith.constant 0 : index
    %c0_22 = arith.constant 0 : index
    %35 = vector.load %arg4[%c0_21, %c0_22] : memref<32x128xf32, #tpu.memory_space<vmem>>, vector<32x128xf32>
    %c0_23 = arith.constant 0 : index
    %c0_24 = arith.constant 0 : index
    %36 = vector.load %arg5[%c0_23, %c0_24] : memref<128x32xf32, #tpu.memory_space<vmem>>, vector<128x32xf32>
    %c0_25 = arith.constant 0 : index
    %c0_26 = arith.constant 0 : index
    %37 = vector.load %arg6[%c0_25, %c0_26] : memref<32x128xf32, #tpu.memory_space<vmem>>, vector<32x128xf32>
    %c0_27 = arith.constant 0 : index
    %c0_28 = arith.constant 0 : index
    %c0_29 = arith.constant 0 : index
    %38 = vector.load %arg7[%c0_27, %c0_28, %c0_29] : memref<2x32x96xf32, #tpu.memory_space<vmem>>, vector<1x32x96xf32>
    %39 = vector.shape_cast %38 : vector<1x32x96xf32> to vector<32x96xf32>
    %cst_30 = arith.constant dense<0.000000e+00> : vector<32x96xf32>
    %40 = tpu.matmul %34, %39, %cst_30 {dimension_numbers = #tpu.dot_dimension_numbers<[1], [0], [0], [1], [0, 0, 1, 1], [], []>} : vector<32x32xf32>, vector<32x96xf32>, vector<32x96xf32> -> vector<32x96xf32>
    %c0_31 = arith.constant 0 : index
    %c0_32 = arith.constant 0 : index
    %41 = vector.load %arg8[%c0_31, %c0_32] : memref<2x96xf32, #tpu.memory_space<vmem>>, vector<1x96xf32>
    %42 = vector.shape_cast %41 : vector<1x96xf32> to vector<96xf32>
    %43 = vector.shape_cast %42 : vector<96xf32> to vector<1x96xf32>
    %44 = vector.broadcast %43 : vector<1x96xf32> to vector<32x96xf32>
    %45 = arith.addf %40, %44 : vector<32x96xf32>
    %46 = vector.extract_strided_slice %45 {offsets = [0, 0], sizes = [32, 32], strides = [1, 1]} : vector<32x96xf32> to vector<32x32xf32>
    %47 = vector.extract_strided_slice %45 {offsets = [0, 32], sizes = [32, 32], strides = [1, 1]} : vector<32x96xf32> to vector<32x32xf32>
    %48 = vector.extract_strided_slice %45 {offsets = [0, 64], sizes = [32, 32], strides = [1, 1]} : vector<32x96xf32> to vector<32x32xf32>
    %49 = tpu.transpose %47, [1, 0] : vector<32x32xf32> -> vector<32x32xf32>
    %50 = tpu.concatenate %49, %49, %49, %49 in 1 : vector<32x32xf32>, vector<32x32xf32>, vector<32x32xf32>, vector<32x32xf32> -> vector<32x128xf32>
    %51 = arith.mulf %50, %35 : vector<32x128xf32>
    %cst_33 = arith.constant dense<0.000000e+00> : vector<32x128xf32>
    %52 = tpu.matmul %46, %51, %cst_33 {dimension_numbers = #tpu.dot_dimension_numbers<[1], [0], [0], [1], [0, 0, 1, 1], [], []>} : vector<32x32xf32>, vector<32x128xf32>, vector<32x128xf32> -> vector<32x128xf32>
    %cst_34 = arith.constant 0.353553385 : f32
    %53 = vector.broadcast %cst_34 : f32 to vector<32x128xf32>
    %54 = arith.mulf %52, %53 : vector<32x128xf32>
    %55 = arith.addf %54, %37 : vector<32x128xf32>
    %cst_35 = arith.constant dense<0xFF800000> : vector<32xf32>
    %56 = vector.multi_reduction <maximumf>, %55, %cst_35 [1] : vector<32x128xf32> to vector<32xf32>
    %57 = vector.shape_cast %56 : vector<32xf32> to vector<32x1xf32>
    %58 = vector.broadcast %57 : vector<32x1xf32> to vector<32x128xf32>
    %59 = arith.subf %55, %58 : vector<32x128xf32>
    %60 = math.exp %59 : vector<32x128xf32>
    %61 = tpu.concatenate %48, %48, %48, %48 in 0 : vector<32x32xf32>, vector<32x32xf32>, vector<32x32xf32>, vector<32x32xf32> -> vector<128x32xf32>
    %62 = arith.mulf %61, %36 : vector<128x32xf32>
    %cst_36 = arith.constant dense<0.000000e+00> : vector<32x32xf32>
    %63 = tpu.matmul %60, %62, %cst_36 {dimension_numbers = #tpu.dot_dimension_numbers<[1], [0], [0], [1], [0, 0, 1, 1], [], []>} : vector<32x128xf32>, vector<128x32xf32>, vector<32x32xf32> -> vector<32x32xf32>
    %cst_37 = arith.constant dense<0.000000e+00> : vector<32x32xf32>
    %64 = tpu.matmul %60, %36, %cst_37 {dimension_numbers = #tpu.dot_dimension_numbers<[1], [0], [0], [1], [0, 0, 1, 1], [], []>} : vector<32x128xf32>, vector<128x32xf32>, vector<32x32xf32> -> vector<32x32xf32>
    %65 = tpu.reciprocal %64 {approx = true} : vector<32x32xf32> -> vector<32x32xf32>
    %66 = arith.mulf %63, %65 : vector<32x32xf32>
    %c0_38 = arith.constant 0 : index
    %c0_39 = arith.constant 0 : index
    %c0_40 = arith.constant 0 : index
    %67 = vector.load %arg9[%c0_38, %c0_39, %c0_40] : memref<2x32x32xf32, #tpu.memory_space<vmem>>, vector<1x32x32xf32>
    %68 = vector.shape_cast %67 : vector<1x32x32xf32> to vector<32x32xf32>
    %cst_41 = arith.constant dense<0.000000e+00> : vector<32x32xf32>
    %69 = tpu.matmul %66, %68, %cst_41 {dimension_numbers = #tpu.dot_dimension_numbers<[1], [0], [0], [1], [0, 0, 1, 1], [], []>} : vector<32x32xf32>, vector<32x32xf32>, vector<32x32xf32> -> vector<32x32xf32>
    %c0_42 = arith.constant 0 : index
    %c0_43 = arith.constant 0 : index
    %70 = vector.load %arg10[%c0_42, %c0_43] : memref<2x32xf32, #tpu.memory_space<vmem>>, vector<1x32xf32>
    %71 = vector.shape_cast %70 : vector<1x32xf32> to vector<32xf32>
    %72 = vector.shape_cast %71 : vector<32xf32> to vector<1x32xf32>
    %73 = vector.broadcast %72 : vector<1x32xf32> to vector<32x32xf32>
    %74 = arith.addf %69, %73 : vector<32x32xf32>
    %75 = arith.addf %34, %74 : vector<32x32xf32>
    %c0_44 = arith.constant 0 : index
    %c0_45 = arith.constant 0 : index
    %76 = vector.load %arg11[%c0_44, %c0_45] : memref<2x32xf32, #tpu.memory_space<vmem>>, vector<1x32xf32>
    %77 = vector.shape_cast %76 : vector<1x32xf32> to vector<32xf32>
    %c0_46 = arith.constant 0 : index
    %c0_47 = arith.constant 0 : index
    %78 = vector.load %arg12[%c0_46, %c0_47] : memref<2x32xf32, #tpu.memory_space<vmem>>, vector<1x32xf32>
    %79 = vector.shape_cast %78 : vector<1x32xf32> to vector<32xf32>
    %cst_48 = arith.constant dense<0.000000e+00> : vector<32xf32>
    %80 = vector.multi_reduction <add>, %75, %cst_48 [1] : vector<32x32xf32> to vector<32xf32>
    %81 = vector.shape_cast %80 : vector<32xf32> to vector<32x1xf32>
    %cst_49 = arith.constant 3.200000e+01 : f32
    %82 = vector.broadcast %cst_49 : f32 to vector<32x1xf32>
    %83 = arith.divf %81, %82 : vector<32x1xf32>
    %84 = vector.broadcast %83 : vector<32x1xf32> to vector<32x32xf32>
    %85 = arith.subf %75, %84 : vector<32x32xf32>
    %86 = arith.mulf %85, %85 : vector<32x32xf32>
    %cst_50 = arith.constant dense<0.000000e+00> : vector<32xf32>
    %87 = vector.multi_reduction <add>, %86, %cst_50 [1] : vector<32x32xf32> to vector<32xf32>
    %88 = vector.shape_cast %87 : vector<32xf32> to vector<32x1xf32>
    %cst_51 = arith.constant 3.200000e+01 : f32
    %89 = vector.broadcast %cst_51 : f32 to vector<32x1xf32>
    %90 = arith.divf %88, %89 : vector<32x1xf32>
    %91 = vector.broadcast %83 : vector<32x1xf32> to vector<32x32xf32>
    %92 = arith.subf %75, %91 : vector<32x32xf32>
    %cst_52 = arith.constant 9.99999974E-6 : f32
    %93 = vector.broadcast %cst_52 : f32 to vector<32x1xf32>
    %94 = arith.addf %90, %93 : vector<32x1xf32>
    %95 = math.rsqrt %94 : vector<32x1xf32>
    %96 = vector.broadcast %95 : vector<32x1xf32> to vector<32x32xf32>
    %97 = arith.mulf %92, %96 : vector<32x32xf32>
    %98 = vector.shape_cast %77 : vector<32xf32> to vector<1x32xf32>
    %99 = vector.broadcast %98 : vector<1x32xf32> to vector<32x32xf32>
    %100 = arith.mulf %97, %99 : vector<32x32xf32>
    %101 = vector.shape_cast %79 : vector<32xf32> to vector<1x32xf32>
    %102 = vector.broadcast %101 : vector<1x32xf32> to vector<32x32xf32>
    %103 = arith.addf %100, %102 : vector<32x32xf32>
    %104 = arith.truncf %103 : vector<32x32xf32> to vector<32x32xbf16>
    %c0_53 = arith.constant 0 : index
    %c0_54 = arith.constant 0 : index
    %c0_55 = arith.constant 0 : index
    %105 = vector.load %arg13[%c0_53, %c0_54, %c0_55] : memref<2x32x2048xbf16, #tpu.memory_space<vmem>>, vector<1x32x2048xbf16>
    %106 = vector.shape_cast %105 : vector<1x32x2048xbf16> to vector<32x2048xbf16>
    %cst_56 = arith.constant dense<0.000000e+00> : vector<32x2048xf32>
    %107 = tpu.matmul %104, %106, %cst_56 {dimension_numbers = #tpu.dot_dimension_numbers<[1], [0], [0], [1], [0, 0, 1, 1], [], []>} : vector<32x32xbf16>, vector<32x2048xbf16>, vector<32x2048xf32> -> vector<32x2048xf32>
    %c0_57 = arith.constant 0 : index
    %c0_58 = arith.constant 0 : index
    %108 = vector.load %arg14[%c0_57, %c0_58] : memref<2x2048xf32, #tpu.memory_space<vmem>>, vector<1x2048xf32>
    %109 = vector.shape_cast %108 : vector<1x2048xf32> to vector<2048xf32>
    %110 = vector.shape_cast %109 : vector<2048xf32> to vector<1x2048xf32>
    %111 = vector.broadcast %110 : vector<1x2048xf32> to vector<32x2048xf32>
    %112 = arith.addf %107, %111 : vector<32x2048xf32>
    %cst_59 = arith.constant 0.000000e+00 : f32
    %113 = vector.broadcast %cst_59 : f32 to vector<32x2048xf32>
    %114 = arith.maximumf %112, %113 : vector<32x2048xf32>
    %115 = arith.truncf %114 : vector<32x2048xf32> to vector<32x2048xbf16>
    %c0_60 = arith.constant 0 : index
    %c0_61 = arith.constant 0 : index
    %c0_62 = arith.constant 0 : index
    %116 = vector.load %arg15[%c0_60, %c0_61, %c0_62] : memref<2x2048x32xbf16, #tpu.memory_space<vmem>>, vector<1x2048x32xbf16>
    %117 = vector.shape_cast %116 : vector<1x2048x32xbf16> to vector<2048x32xbf16>
    %cst_63 = arith.constant dense<0.000000e+00> : vector<32x32xf32>
    %118 = tpu.matmul %115, %117, %cst_63 {dimension_numbers = #tpu.dot_dimension_numbers<[1], [0], [0], [1], [0, 0, 1, 1], [], []>} : vector<32x2048xbf16>, vector<2048x32xbf16>, vector<32x32xf32> -> vector<32x32xf32>
    %c0_64 = arith.constant 0 : index
    %c0_65 = arith.constant 0 : index
    %119 = vector.load %arg16[%c0_64, %c0_65] : memref<2x32xf32, #tpu.memory_space<vmem>>, vector<1x32xf32>
    %120 = vector.shape_cast %119 : vector<1x32xf32> to vector<32xf32>
    %121 = vector.shape_cast %120 : vector<32xf32> to vector<1x32xf32>
    %122 = vector.broadcast %121 : vector<1x32xf32> to vector<32x32xf32>
    %123 = arith.addf %118, %122 : vector<32x32xf32>
    %124 = arith.addf %103, %123 : vector<32x32xf32>
    %c0_66 = arith.constant 0 : index
    %c0_67 = arith.constant 0 : index
    %125 = vector.load %arg17[%c0_66, %c0_67] : memref<2x32xf32, #tpu.memory_space<vmem>>, vector<1x32xf32>
    %126 = vector.shape_cast %125 : vector<1x32xf32> to vector<32xf32>
    %c0_68 = arith.constant 0 : index
    %c0_69 = arith.constant 0 : index
    %127 = vector.load %arg18[%c0_68, %c0_69] : memref<2x32xf32, #tpu.memory_space<vmem>>, vector<1x32xf32>
    %128 = vector.shape_cast %127 : vector<1x32xf32> to vector<32xf32>
    %cst_70 = arith.constant dense<0.000000e+00> : vector<32xf32>
    %129 = vector.multi_reduction <add>, %124, %cst_70 [1] : vector<32x32xf32> to vector<32xf32>
    %130 = vector.shape_cast %129 : vector<32xf32> to vector<32x1xf32>
    %cst_71 = arith.constant 3.200000e+01 : f32
    %131 = vector.broadcast %cst_71 : f32 to vector<32x1xf32>
    %132 = arith.divf %130, %131 : vector<32x1xf32>
    %133 = vector.broadcast %132 : vector<32x1xf32> to vector<32x32xf32>
    %134 = arith.subf %124, %133 : vector<32x32xf32>
    %135 = arith.mulf %134, %134 : vector<32x32xf32>
    %cst_72 = arith.constant dense<0.000000e+00> : vector<32xf32>
    %136 = vector.multi_reduction <add>, %135, %cst_72 [1] : vector<32x32xf32> to vector<32xf32>
    %137 = vector.shape_cast %136 : vector<32xf32> to vector<32x1xf32>
    %cst_73 = arith.constant 3.200000e+01 : f32
    %138 = vector.broadcast %cst_73 : f32 to vector<32x1xf32>
    %139 = arith.divf %137, %138 : vector<32x1xf32>
    %140 = vector.broadcast %132 : vector<32x1xf32> to vector<32x32xf32>
    %141 = arith.subf %124, %140 : vector<32x32xf32>
    %cst_74 = arith.constant 9.99999974E-6 : f32
    %142 = vector.broadcast %cst_74 : f32 to vector<32x1xf32>
    %143 = arith.addf %139, %142 : vector<32x1xf32>
    %144 = math.rsqrt %143 : vector<32x1xf32>
    %145 = vector.broadcast %144 : vector<32x1xf32> to vector<32x32xf32>
    %146 = arith.mulf %141, %145 : vector<32x32xf32>
    %147 = vector.shape_cast %126 : vector<32xf32> to vector<1x32xf32>
    %148 = vector.broadcast %147 : vector<1x32xf32> to vector<32x32xf32>
    %149 = arith.mulf %146, %148 : vector<32x32xf32>
    %150 = vector.shape_cast %128 : vector<32xf32> to vector<1x32xf32>
    %151 = vector.broadcast %150 : vector<1x32xf32> to vector<32x32xf32>
    %152 = arith.addf %149, %151 : vector<32x32xf32>
    %c1_75 = arith.constant 1 : index
    %c0_76 = arith.constant 0 : index
    %c0_77 = arith.constant 0 : index
    %153 = vector.load %arg7[%c1_75, %c0_76, %c0_77] : memref<2x32x96xf32, #tpu.memory_space<vmem>>, vector<1x32x96xf32>
    %154 = vector.shape_cast %153 : vector<1x32x96xf32> to vector<32x96xf32>
    %cst_78 = arith.constant dense<0.000000e+00> : vector<32x96xf32>
    %155 = tpu.matmul %152, %154, %cst_78 {dimension_numbers = #tpu.dot_dimension_numbers<[1], [0], [0], [1], [0, 0, 1, 1], [], []>} : vector<32x32xf32>, vector<32x96xf32>, vector<32x96xf32> -> vector<32x96xf32>
    %c1_79 = arith.constant 1 : index
    %c0_80 = arith.constant 0 : index
    %156 = vector.load %arg8[%c1_79, %c0_80] : memref<2x96xf32, #tpu.memory_space<vmem>>, vector<1x96xf32>
    %157 = vector.shape_cast %156 : vector<1x96xf32> to vector<96xf32>
    %158 = vector.shape_cast %157 : vector<96xf32> to vector<1x96xf32>
    %159 = vector.broadcast %158 : vector<1x96xf32> to vector<32x96xf32>
    %160 = arith.addf %155, %159 : vector<32x96xf32>
    %161 = vector.extract_strided_slice %160 {offsets = [0, 0], sizes = [32, 32], strides = [1, 1]} : vector<32x96xf32> to vector<32x32xf32>
    %162 = vector.extract_strided_slice %160 {offsets = [0, 32], sizes = [32, 32], strides = [1, 1]} : vector<32x96xf32> to vector<32x32xf32>
    %163 = vector.extract_strided_slice %160 {offsets = [0, 64], sizes = [32, 32], strides = [1, 1]} : vector<32x96xf32> to vector<32x32xf32>
    %164 = tpu.transpose %162, [1, 0] : vector<32x32xf32> -> vector<32x32xf32>
    %165 = tpu.concatenate %164, %164, %164, %164 in 1 : vector<32x32xf32>, vector<32x32xf32>, vector<32x32xf32>, vector<32x32xf32> -> vector<32x128xf32>
    %166 = arith.mulf %165, %35 : vector<32x128xf32>
    %cst_81 = arith.constant dense<0.000000e+00> : vector<32x128xf32>
    %167 = tpu.matmul %161, %166, %cst_81 {dimension_numbers = #tpu.dot_dimension_numbers<[1], [0], [0], [1], [0, 0, 1, 1], [], []>} : vector<32x32xf32>, vector<32x128xf32>, vector<32x128xf32> -> vector<32x128xf32>
    %cst_82 = arith.constant 0.353553385 : f32
    %168 = vector.broadcast %cst_82 : f32 to vector<32x128xf32>
    %169 = arith.mulf %167, %168 : vector<32x128xf32>
    %170 = arith.addf %169, %37 : vector<32x128xf32>
    %cst_83 = arith.constant dense<0xFF800000> : vector<32xf32>
    %171 = vector.multi_reduction <maximumf>, %170, %cst_83 [1] : vector<32x128xf32> to vector<32xf32>
    %172 = vector.shape_cast %171 : vector<32xf32> to vector<32x1xf32>
    %173 = vector.broadcast %172 : vector<32x1xf32> to vector<32x128xf32>
    %174 = arith.subf %170, %173 : vector<32x128xf32>
    %175 = math.exp %174 : vector<32x128xf32>
    %176 = tpu.concatenate %163, %163, %163, %163 in 0 : vector<32x32xf32>, vector<32x32xf32>, vector<32x32xf32>, vector<32x32xf32> -> vector<128x32xf32>
    %177 = arith.mulf %176, %36 : vector<128x32xf32>
    %cst_84 = arith.constant dense<0.000000e+00> : vector<32x32xf32>
    %178 = tpu.matmul %175, %177, %cst_84 {dimension_numbers = #tpu.dot_dimension_numbers<[1], [0], [0], [1], [0, 0, 1, 1], [], []>} : vector<32x128xf32>, vector<128x32xf32>, vector<32x32xf32> -> vector<32x32xf32>
    %cst_85 = arith.constant dense<0.000000e+00> : vector<32x32xf32>
    %179 = tpu.matmul %175, %36, %cst_85 {dimension_numbers = #tpu.dot_dimension_numbers<[1], [0], [0], [1], [0, 0, 1, 1], [], []>} : vector<32x128xf32>, vector<128x32xf32>, vector<32x32xf32> -> vector<32x32xf32>
    %180 = tpu.reciprocal %179 {approx = true} : vector<32x32xf32> -> vector<32x32xf32>
    %181 = arith.mulf %178, %180 : vector<32x32xf32>
    %c1_86 = arith.constant 1 : index
    %c0_87 = arith.constant 0 : index
    %c0_88 = arith.constant 0 : index
    %182 = vector.load %arg9[%c1_86, %c0_87, %c0_88] : memref<2x32x32xf32, #tpu.memory_space<vmem>>, vector<1x32x32xf32>
    %183 = vector.shape_cast %182 : vector<1x32x32xf32> to vector<32x32xf32>
    %cst_89 = arith.constant dense<0.000000e+00> : vector<32x32xf32>
    %184 = tpu.matmul %181, %183, %cst_89 {dimension_numbers = #tpu.dot_dimension_numbers<[1], [0], [0], [1], [0, 0, 1, 1], [], []>} : vector<32x32xf32>, vector<32x32xf32>, vector<32x32xf32> -> vector<32x32xf32>
    %c1_90 = arith.constant 1 : index
    %c0_91 = arith.constant 0 : index
    %185 = vector.load %arg10[%c1_90, %c0_91] : memref<2x32xf32, #tpu.memory_space<vmem>>, vector<1x32xf32>
    %186 = vector.shape_cast %185 : vector<1x32xf32> to vector<32xf32>
    %187 = vector.shape_cast %186 : vector<32xf32> to vector<1x32xf32>
    %188 = vector.broadcast %187 : vector<1x32xf32> to vector<32x32xf32>
    %189 = arith.addf %184, %188 : vector<32x32xf32>
    %190 = arith.addf %152, %189 : vector<32x32xf32>
    %c1_92 = arith.constant 1 : index
    %c0_93 = arith.constant 0 : index
    %191 = vector.load %arg11[%c1_92, %c0_93] : memref<2x32xf32, #tpu.memory_space<vmem>>, vector<1x32xf32>
    %192 = vector.shape_cast %191 : vector<1x32xf32> to vector<32xf32>
    %c1_94 = arith.constant 1 : index
    %c0_95 = arith.constant 0 : index
    %193 = vector.load %arg12[%c1_94, %c0_95] : memref<2x32xf32, #tpu.memory_space<vmem>>, vector<1x32xf32>
    %194 = vector.shape_cast %193 : vector<1x32xf32> to vector<32xf32>
    %cst_96 = arith.constant dense<0.000000e+00> : vector<32xf32>
    %195 = vector.multi_reduction <add>, %190, %cst_96 [1] : vector<32x32xf32> to vector<32xf32>
    %196 = vector.shape_cast %195 : vector<32xf32> to vector<32x1xf32>
    %cst_97 = arith.constant 3.200000e+01 : f32
    %197 = vector.broadcast %cst_97 : f32 to vector<32x1xf32>
    %198 = arith.divf %196, %197 : vector<32x1xf32>
    %199 = vector.broadcast %198 : vector<32x1xf32> to vector<32x32xf32>
    %200 = arith.subf %190, %199 : vector<32x32xf32>
    %201 = arith.mulf %200, %200 : vector<32x32xf32>
    %cst_98 = arith.constant dense<0.000000e+00> : vector<32xf32>
    %202 = vector.multi_reduction <add>, %201, %cst_98 [1] : vector<32x32xf32> to vector<32xf32>
    %203 = vector.shape_cast %202 : vector<32xf32> to vector<32x1xf32>
    %cst_99 = arith.constant 3.200000e+01 : f32
    %204 = vector.broadcast %cst_99 : f32 to vector<32x1xf32>
    %205 = arith.divf %203, %204 : vector<32x1xf32>
    %206 = vector.broadcast %198 : vector<32x1xf32> to vector<32x32xf32>
    %207 = arith.subf %190, %206 : vector<32x32xf32>
    %cst_100 = arith.constant 9.99999974E-6 : f32
    %208 = vector.broadcast %cst_100 : f32 to vector<32x1xf32>
    %209 = arith.addf %205, %208 : vector<32x1xf32>
    %210 = math.rsqrt %209 : vector<32x1xf32>
    %211 = vector.broadcast %210 : vector<32x1xf32> to vector<32x32xf32>
    %212 = arith.mulf %207, %211 : vector<32x32xf32>
    %213 = vector.shape_cast %192 : vector<32xf32> to vector<1x32xf32>
    %214 = vector.broadcast %213 : vector<1x32xf32> to vector<32x32xf32>
    %215 = arith.mulf %212, %214 : vector<32x32xf32>
    %216 = vector.shape_cast %194 : vector<32xf32> to vector<1x32xf32>
    %217 = vector.broadcast %216 : vector<1x32xf32> to vector<32x32xf32>
    %218 = arith.addf %215, %217 : vector<32x32xf32>
    %219 = arith.truncf %218 : vector<32x32xf32> to vector<32x32xbf16>
    %c1_101 = arith.constant 1 : index
    %c0_102 = arith.constant 0 : index
    %c0_103 = arith.constant 0 : index
    %220 = vector.load %arg13[%c1_101, %c0_102, %c0_103] : memref<2x32x2048xbf16, #tpu.memory_space<vmem>>, vector<1x32x2048xbf16>
    %221 = vector.shape_cast %220 : vector<1x32x2048xbf16> to vector<32x2048xbf16>
    %cst_104 = arith.constant dense<0.000000e+00> : vector<32x2048xf32>
    %222 = tpu.matmul %219, %221, %cst_104 {dimension_numbers = #tpu.dot_dimension_numbers<[1], [0], [0], [1], [0, 0, 1, 1], [], []>} : vector<32x32xbf16>, vector<32x2048xbf16>, vector<32x2048xf32> -> vector<32x2048xf32>
    %c1_105 = arith.constant 1 : index
    %c0_106 = arith.constant 0 : index
    %223 = vector.load %arg14[%c1_105, %c0_106] : memref<2x2048xf32, #tpu.memory_space<vmem>>, vector<1x2048xf32>
    %224 = vector.shape_cast %223 : vector<1x2048xf32> to vector<2048xf32>
    %225 = vector.shape_cast %224 : vector<2048xf32> to vector<1x2048xf32>
    %226 = vector.broadcast %225 : vector<1x2048xf32> to vector<32x2048xf32>
    %227 = arith.addf %222, %226 : vector<32x2048xf32>
    %cst_107 = arith.constant 0.000000e+00 : f32
    %228 = vector.broadcast %cst_107 : f32 to vector<32x2048xf32>
    %229 = arith.maximumf %227, %228 : vector<32x2048xf32>
    %230 = arith.truncf %229 : vector<32x2048xf32> to vector<32x2048xbf16>
    %c1_108 = arith.constant 1 : index
    %c0_109 = arith.constant 0 : index
    %c0_110 = arith.constant 0 : index
    %231 = vector.load %arg15[%c1_108, %c0_109, %c0_110] : memref<2x2048x32xbf16, #tpu.memory_space<vmem>>, vector<1x2048x32xbf16>
    %232 = vector.shape_cast %231 : vector<1x2048x32xbf16> to vector<2048x32xbf16>
    %cst_111 = arith.constant dense<0.000000e+00> : vector<32x32xf32>
    %233 = tpu.matmul %230, %232, %cst_111 {dimension_numbers = #tpu.dot_dimension_numbers<[1], [0], [0], [1], [0, 0, 1, 1], [], []>} : vector<32x2048xbf16>, vector<2048x32xbf16>, vector<32x32xf32> -> vector<32x32xf32>
    %c1_112 = arith.constant 1 : index
    %c0_113 = arith.constant 0 : index
    %234 = vector.load %arg16[%c1_112, %c0_113] : memref<2x32xf32, #tpu.memory_space<vmem>>, vector<1x32xf32>
    %235 = vector.shape_cast %234 : vector<1x32xf32> to vector<32xf32>
    %236 = vector.shape_cast %235 : vector<32xf32> to vector<1x32xf32>
    %237 = vector.broadcast %236 : vector<1x32xf32> to vector<32x32xf32>
    %238 = arith.addf %233, %237 : vector<32x32xf32>
    %239 = arith.addf %218, %238 : vector<32x32xf32>
    %c1_114 = arith.constant 1 : index
    %c0_115 = arith.constant 0 : index
    %240 = vector.load %arg17[%c1_114, %c0_115] : memref<2x32xf32, #tpu.memory_space<vmem>>, vector<1x32xf32>
    %241 = vector.shape_cast %240 : vector<1x32xf32> to vector<32xf32>
    %c1_116 = arith.constant 1 : index
    %c0_117 = arith.constant 0 : index
    %242 = vector.load %arg18[%c1_116, %c0_117] : memref<2x32xf32, #tpu.memory_space<vmem>>, vector<1x32xf32>
    %243 = vector.shape_cast %242 : vector<1x32xf32> to vector<32xf32>
    %cst_118 = arith.constant dense<0.000000e+00> : vector<32xf32>
    %244 = vector.multi_reduction <add>, %239, %cst_118 [1] : vector<32x32xf32> to vector<32xf32>
    %245 = vector.shape_cast %244 : vector<32xf32> to vector<32x1xf32>
    %cst_119 = arith.constant 3.200000e+01 : f32
    %246 = vector.broadcast %cst_119 : f32 to vector<32x1xf32>
    %247 = arith.divf %245, %246 : vector<32x1xf32>
    %248 = vector.broadcast %247 : vector<32x1xf32> to vector<32x32xf32>
    %249 = arith.subf %239, %248 : vector<32x32xf32>
    %250 = arith.mulf %249, %249 : vector<32x32xf32>
    %cst_120 = arith.constant dense<0.000000e+00> : vector<32xf32>
    %251 = vector.multi_reduction <add>, %250, %cst_120 [1] : vector<32x32xf32> to vector<32xf32>
    %252 = vector.shape_cast %251 : vector<32xf32> to vector<32x1xf32>
    %cst_121 = arith.constant 3.200000e+01 : f32
    %253 = vector.broadcast %cst_121 : f32 to vector<32x1xf32>
    %254 = arith.divf %252, %253 : vector<32x1xf32>
    %255 = vector.broadcast %247 : vector<32x1xf32> to vector<32x32xf32>
    %256 = arith.subf %239, %255 : vector<32x32xf32>
    %cst_122 = arith.constant 9.99999974E-6 : f32
    %257 = vector.broadcast %cst_122 : f32 to vector<32x1xf32>
    %258 = arith.addf %254, %257 : vector<32x1xf32>
    %259 = math.rsqrt %258 : vector<32x1xf32>
    %260 = vector.broadcast %259 : vector<32x1xf32> to vector<32x32xf32>
    %261 = arith.mulf %256, %260 : vector<32x32xf32>
    %262 = vector.shape_cast %241 : vector<32xf32> to vector<1x32xf32>
    %263 = vector.broadcast %262 : vector<1x32xf32> to vector<32x32xf32>
    %264 = arith.mulf %261, %263 : vector<32x32xf32>
    %265 = vector.shape_cast %243 : vector<32xf32> to vector<1x32xf32>
    %266 = vector.broadcast %265 : vector<1x32xf32> to vector<32x32xf32>
    %267 = arith.addf %264, %266 : vector<32x32xf32>
    %268 = vector.extract_strided_slice %267 {offsets = [15, 0], sizes = [1, 32], strides = [1, 1]} : vector<32x32xf32> to vector<1x32xf32>
    %269 = vector.extract_strided_slice %267 {offsets = [31, 0], sizes = [1, 32], strides = [1, 1]} : vector<32x32xf32> to vector<1x32xf32>
    %270 = tpu.concatenate %268, %269 in 0 : vector<1x32xf32>, vector<1x32xf32> -> vector<2x32xf32>
    %c0_123 = arith.constant 0 : index
    %c0_124 = arith.constant 0 : index
    %271 = vector.load %arg19[%c0_123, %c0_124] : memref<32x5xf32, #tpu.memory_space<vmem>>, vector<32x5xf32>
    %cst_125 = arith.constant dense<0.000000e+00> : vector<2x5xf32>
    %272 = tpu.matmul %270, %271, %cst_125 {dimension_numbers = #tpu.dot_dimension_numbers<[1], [0], [0], [1], [0, 0, 1, 1], [], []>} : vector<2x32xf32>, vector<32x5xf32>, vector<2x5xf32> -> vector<2x5xf32>
    %c0_126 = arith.constant 0 : index
    %c0_127 = arith.constant 0 : index
    %273 = vector.load %arg20[%c0_126, %c0_127] : memref<1x5xf32, #tpu.memory_space<vmem>>, vector<1x5xf32>
    %274 = vector.shape_cast %273 : vector<1x5xf32> to vector<5xf32>
    %275 = vector.shape_cast %274 : vector<5xf32> to vector<1x5xf32>
    %276 = vector.broadcast %275 : vector<1x5xf32> to vector<2x5xf32>
    %277 = arith.addf %272, %276 : vector<2x5xf32>
    %c0_128 = arith.constant 0 : index
    %c0_129 = arith.constant 0 : index
    %278 = vector.load %arg21[%c0_128, %c0_129] : memref<2x5xf32, #tpu.memory_space<vmem>>, vector<2x5xf32>
    tpu.vector_store %arg21[%c0_128, %c0_129], %277 {strides = array<i32>} : memref<2x5xf32, #tpu.memory_space<vmem>>, vector<2x5xf32>,
    return
  }
}

</mosaic_0001>

<llo_original>
// kernel: forward.1
$region0: #{forward.1}
  #allocation0 [shape = 'u32[]', space=smem, size = 0x4, offset = 0x4, fixed_abs, tag = 'smem constant byte address 0x4 - core index']
  #allocation1 [shape = 'u32[144,128]{1,0:T(1,128)}', space=vmem, size = 0x12000, scoped, tag = 'internal scratch']
  %s0 = inlined_call_operand.vmem [shape: f32[32,28], index: 0, kind: input, shape index: {}]
  %s1 = inlined_call_operand.vmem [shape: f32[3,28,32], index: 1, kind: input, shape index: {}]
  %s2 = inlined_call_operand.vmem [shape: f32[3,32], index: 2, kind: input, shape index: {}]
  %s3 = inlined_call_operand.vmem [shape: f32[32,32], index: 3, kind: input, shape index: {}]
  %s4 = inlined_call_operand.vmem [shape: f32[32,128], index: 4, kind: input, shape index: {}]
  %s5 = inlined_call_operand.vmem [shape: f32[128,32], index: 5, kind: input, shape index: {}]
  %s6 = inlined_call_operand.vmem [shape: f32[32,128], index: 6, kind: input, shape index: {}]
  %s7 = inlined_call_operand.vmem [shape: f32[2,32,96], index: 7, kind: input, shape index: {}]
  %s8 = inlined_call_operand.vmem [shape: f32[2,96], index: 8, kind: input, shape index: {}]
  %s9 = inlined_call_operand.vmem [shape: f32[2,32,32], index: 9, kind: input, shape index: {}]
  %s10 = inlined_call_operand.vmem [shape: f32[2,32], index: 10, kind: input, shape index: {}]
  %s11 = inlined_call_operand.vmem [shape: f32[2,32], index: 11, kind: input, shape index: {}]
  %s12 = inlined_call_operand.vmem [shape: f32[2,32], index: 12, kind: input, shape index: {}]
  %s13 = inlined_call_operand.vmem [shape: bf16[2,32,2048], index: 13, kind: input, shape index: {}]
  %s14 = inlined_call_operand.vmem [shape: f32[2,2048], index: 14, kind: input, shape index: {}]
  %s15 = inlined_call_operand.vmem [shape: bf16[2,2048,32], index: 15, kind: input, shape index: {}]
  %s16 = inlined_call_operand.vmem [shape: f32[2,32], index: 16, kind: input, shape index: {}]
  %s17 = inlined_call_operand.vmem [shape: f32[2,32], index: 17, kind: input, shape index: {}]
  %s18 = inlined_call_operand.vmem [shape: f32[2,32], index: 18, kind: input, shape index: {}]
  %s19 = inlined_call_operand.vmem [shape: f32[32,5], index: 19, kind: input, shape index: {}]
  %s20 = inlined_call_operand.vmem [shape: f32[1,5], index: 20, kind: input, shape index: {}]
  %s21 = inlined_call_operand.hbm [shape: f32[2,5], index: 21, kind: output, shape index: {}]
  %s22 = sld [smem:[#allocation0]]
  $region94: #{forward.1} parent=0
    _
  %s24 = ssub.s32 1, %s22
  %s25 = scalar_select 0, %s24, %s22
  $region1: #{forward.1} parent=0
    #allocation2 [shape = 'u8[1024]{0}', space=vmem, size = 0x400, scoped, tag = 'output window, operand 0, single buffered']
    #allocation3 [shape = 's32[1]{0}', space=sflag, size = 0x4, scoped, tag = 'scoped memory for forward.1']
    %26 = vsyncpa [#allocation3], 0
    // Predicated region
    $region2: #{forward.1} parent=1 // pred_check
      _
    $region3: #{forward.1} parent=1 // pred_check_branch
      %28 = sbr.rel (0) target = $region5
    $region4: #{forward.1} parent=1 // pred_region
      _
    $region5: #{forward.1} parent=1 // pred_fallthru
      _
    // Predicated region
    $region6: #{forward.1} parent=1 // pred_check
      _
    $region7: #{forward.1} parent=1 // pred_check_branch
      %30 = sbr.rel (0) target = $region9
    $region8: #{forward.1} parent=1 // pred_region
      _
    $region9: #{forward.1} parent=1 // pred_fallthru
      _
    // Predicated region
    $region10: #{forward.1} parent=1 // pred_check
      _
    $region11: #{forward.1} parent=1 // pred_check_branch
      %32 = sbr.rel (0) target = $region13
    $region12: #{forward.1} parent=1 // pred_region
      _
    $region13: #{forward.1} parent=1 // pred_fallthru
      _
    // Predicated region
    $region14: #{forward.1} parent=1 // pred_check
      _
    $region15: #{forward.1} parent=1 // pred_check_branch
      %34 = sbr.rel (0) target = $region17
    $region16: #{forward.1} parent=1 // pred_region
      _
    $region17: #{forward.1} parent=1 // pred_fallthru
      _
    // Predicated region
    $region18: #{forward.1} parent=1 // pred_check
      _
    $region19: #{forward.1} parent=1 // pred_check_branch
      %36 = sbr.rel (0) target = $region21
    $region20: #{forward.1} parent=1 // pred_region
      _
    $region21: #{forward.1} parent=1 // pred_fallthru
      _
    // Predicated region
    $region22: #{forward.1} parent=1 // pred_check
      _
    $region23: #{forward.1} parent=1 // pred_check_branch
      %38 = sbr.rel (0) target = $region25
    $region24: #{forward.1} parent=1 // pred_region
      _
    $region25: #{forward.1} parent=1 // pred_fallthru
      _
    // Predicated region
    $region26: #{forward.1} parent=1 // pred_check
      _
    $region27: #{forward.1} parent=1 // pred_check_branch
      %40 = sbr.rel (0) target = $region29
    $region28: #{forward.1} parent=1 // pred_region
      _
    $region29: #{forward.1} parent=1 // pred_fallthru
      _
    // Predicated region
    $region30: #{forward.1} parent=1 // pred_check
      _
    $region31: #{forward.1} parent=1 // pred_check_branch
      %42 = sbr.rel (0) target = $region33
    $region32: #{forward.1} parent=1 // pred_region
      _
    $region33: #{forward.1} parent=1 // pred_fallthru
      _
    // Predicated region
    $region34: #{forward.1} parent=1 // pred_check
      _
    $region35: #{forward.1} parent=1 // pred_check_branch
      %44 = sbr.rel (0) target = $region37
    $region36: #{forward.1} parent=1 // pred_region
      _
    $region37: #{forward.1} parent=1 // pred_fallthru
      _
    // Predicated region
    $region38: #{forward.1} parent=1 // pred_check
      _
    $region39: #{forward.1} parent=1 // pred_check_branch
      %46 = sbr.rel (0) target = $region41
    $region40: #{forward.1} parent=1 // pred_region
      _
    $region41: #{forward.1} parent=1 // pred_fallthru
      _
    // Predicated region
    $region42: #{forward.1} parent=1 // pred_check
      _
    $region43: #{forward.1} parent=1 // pred_check_branch
      %48 = sbr.rel (0) target = $region45
    $region44: #{forward.1} parent=1 // pred_region
      _
    $region45: #{forward.1} parent=1 // pred_fallthru
      _
    // Predicated region
    $region46: #{forward.1} parent=1 // pred_check
      _
    $region47: #{forward.1} parent=1 // pred_check_branch
      %50 = sbr.rel (0) target = $region49
    $region48: #{forward.1} parent=1 // pred_region
      _
    $region49: #{forward.1} parent=1 // pred_fallthru
      _
    // Predicated region
    $region50: #{forward.1} parent=1 // pred_check
      _
    $region51: #{forward.1} parent=1 // pred_check_branch
      %52 = sbr.rel (0) target = $region53
    $region52: #{forward.1} parent=1 // pred_region
      _
    $region53: #{forward.1} parent=1 // pred_fallthru
      _
    // Predicated region
    $region54: #{forward.1} parent=1 // pred_check
      _
    $region55: #{forward.1} parent=1 // pred_check_branch
      %54 = sbr.rel (0) target = $region57
    $region56: #{forward.1} parent=1 // pred_region
      _
    $region57: #{forward.1} parent=1 // pred_fallthru
      _
    // Predicated region
    $region58: #{forward.1} parent=1 // pred_check
      _
    $region59: #{forward.1} parent=1 // pred_check_branch
      %56 = sbr.rel (0) target = $region61
    $region60: #{forward.1} parent=1 // pred_region
      _
    $region61: #{forward.1} parent=1 // pred_fallthru
      _
    // Predicated region
    $region62: #{forward.1} parent=1 // pred_check
      _
    $region63: #{forward.1} parent=1 // pred_check_branch
      %58 = sbr.rel (0) target = $region65
    $region64: #{forward.1} parent=1 // pred_region
      _
    $region65: #{forward.1} parent=1 // pred_fallthru
      _
    // Predicated region
    $region66: #{forward.1} parent=1 // pred_check
      _
    $region67: #{forward.1} parent=1 // pred_check_branch
      %60 = sbr.rel (0) target = $region69
    $region68: #{forward.1} parent=1 // pred_region
      _
    $region69: #{forward.1} parent=1 // pred_fallthru
      _
    // Predicated region
    $region70: #{forward.1} parent=1 // pred_check
      _
    $region71: #{forward.1} parent=1 // pred_check_branch
      %62 = sbr.rel (0) target = $region73
    $region72: #{forward.1} parent=1 // pred_region
      _
    $region73: #{forward.1} parent=1 // pred_fallthru
      _
    // Predicated region
    $region74: #{forward.1} parent=1 // pred_check
      _
    $region75: #{forward.1} parent=1 // pred_check_branch
      %64 = sbr.rel (0) target = $region77
    $region76: #{forward.1} parent=1 // pred_region
      _
    $region77: #{forward.1} parent=1 // pred_fallthru
      _
    // Predicated region
    $region78: #{forward.1} parent=1 // pred_check
      _
    $region79: #{forward.1} parent=1 // pred_check_branch
      %66 = sbr.rel (0) target = $region81
    $region80: #{forward.1} parent=1 // pred_region
      _
    $region81: #{forward.1} parent=1 // pred_fallthru
      _
    // Predicated region
    $region82: #{forward.1} parent=1 // pred_check
      _
    $region83: #{forward.1} parent=1 // pred_check_branch
      %68 = sbr.rel (0) target = $region85
    $region84: #{forward.1} parent=1 // pred_region
      _
    $region85: #{forward.1} parent=1 // pred_fallthru
      _
    %v70 = vld [vmem:[%s0] sm:$0xff]
    %v71 = vld [vmem:[%s0 + $0x8] sm:$0xff]
    %v72 = vld [vmem:[%s0 + $0x10] sm:$0xff]
    %v73 = vld [vmem:[%s0 + $0x18] sm:$0xff]
    %v74 = vld [vmem:[%s3] sm:$0xff]
    %v75 = vld [vmem:[%s3 + $0x8] sm:$0xff]
    %v76 = vld [vmem:[%s3 + $0x10] sm:$0xff]
    %v77 = vld [vmem:[%s3 + $0x18] sm:$0xff]
    %v78 = vld [vmem:[%s1] sm:$0xff]
    %v79 = vld [vmem:[%s1 + $0x8] sm:$0xff]
    %v80 = vld [vmem:[%s1 + $0x10] sm:$0xff]
    %v81 = vld [vmem:[%s1 + $0x18] sm:$0xf]
    %v82 = vld [vmem:[%s2] sm:$0x1]
    %v83 = vlaneseq
    %v84 = vshrl.u32 %v83, 7
    %v85 = vsub.s32 0, %v84
    %v86 = vrot.slane %v82, %v85
    %vm87 = vcmask 228352
    %v89 = vsel %vm87, %v70, 0
    %v92 = vsel %vm87, %v71, 0
    %v95 = vsel %vm87, %v72, 0
    %v98 = vsel %vm87, %v73, 0
    %vm100 = vcmask 1043456
    %v102 = vsel %vm100, %v81, 0
    %104 = vmatprep.subr.mxu0 0.0
    %105 = vmatpush1.msra.mxu0 %v78
    %106 = vmatprep.subr.mxu0 0.0
    %107 = vmatpush1.msra.mxu0 %v79
    %108 = vmatprep.subr.mxu0 0.0
    %109 = vmatpush1.msra.mxu0 %v80
    %110 = vmatprep.subr.mxu0 0.0
    %111 = vmatpush1.msra.mxu0 %v102
    %112 = vmatprep.subr.mxu0 0.0
    %113 = vmatpush1.msra.mxu0 0.0
    %114 = vmatprep.subr.mxu0 0.0
    %115 = vmatpush1.msra.mxu0 0.0
    %116 = vmatprep.subr.mxu0 0.0
    %117 = vmatpush1.msra.mxu0 0.0
    %118 = vmatprep.subr.mxu0 0.0
    %119 = vmatpush1.msra.mxu0 0.0
    %120 = vmatprep.subr.mxu0 0.0
    %121 = vmatpush1.msra.mxu0 0.0
    %122 = vmatprep.subr.mxu0 0.0
    %123 = vmatpush1.msra.mxu0 0.0
    %124 = vmatprep.subr.mxu0 0.0
    %125 = vmatpush1.msra.mxu0 0.0
    %126 = vmatprep.subr.mxu0 0.0
    %127 = vmatpush1.msra.mxu0 0.0
    %128 = vmatprep.subr.mxu0 0.0
    %129 = vmatpush1.msra.mxu0 0.0
    %130 = vmatprep.subr.mxu0 0.0
    %131 = vmatpush1.msra.mxu0 0.0
    %132 = vmatprep.subr.mxu0 0.0
    %133 = vmatpush1.msra.mxu0 0.0
    %134 = vmatprep.subr.mxu0 0.0
    %135 = vmatpush1.msra.mxu0 0.0
    %136 = vmatprep.subr.mxu0 0.0
    %137 = vmatpush1.msra.mxu0 0.0
    %138 = vmatprep.subr.mxu0 0.0
    %139 = vmatpush1.msra.mxu0 0.0
    %140 = vmatprep.subr.mxu0 0.0
    %141 = vmatpush1.msra.mxu0 0.0
    %142 = vmatprep.subr.mxu0 0.0
    %143 = vmatpush1.msra.mxu0 0.0
    %144 = vmatprep.subr.mxu0 0.0
    %145 = vmatpush1.msra.mxu0 0.0
    %146 = vmatprep.subr.mxu0 0.0
    %147 = vmatpush1.msra.mxu0 0.0
    %148 = vmatprep.subr.mxu0 0.0
    %149 = vmatpush1.msra.mxu0 0.0
    %150 = vmatprep.subr.mxu0 0.0
    %151 = vmatpush1.msra.mxu0 0.0
    %152 = vmatprep.subr.mxu0 0.0
    %153 = vmatpush1.msra.mxu0 0.0
    %154 = vmatprep.subr.mxu0 0.0
    %155 = vmatpush1.msra.mxu0 0.0
    %156 = vmatprep.subr.mxu0 0.0
    %157 = vmatpush1.msra.mxu0 0.0
    %158 = vmatprep.subr.mxu0 0.0
    %159 = vmatpush1.msra.mxu0 0.0
    %160 = vmatprep.subr.mxu0 0.0
    %161 = vmatpush1.msra.mxu0 0.0
    %162 = vmatprep.subr.mxu0 0.0
    %163 = vmatpush1.msra.mxu0 0.0
    %164 = vmatprep.subr.mxu0 0.0
    %165 = vmatpush1.msra.mxu0 0.0
    %166 = vmatprep.subr.mxu0 0.0
    %167 = vmatpush1.msra.mxu0 0.0
    %168 = vmatprep.mubr.f32.mxu0 0.0
    %169 = vmatmul.mubr.f32.gmra.mrb[0].mxu0 %v89
    %v170 = vpop.f32.mrb[0].mxu0
    %v171 = vadd.f32 %v86, %v170
    %v172 = vpop.f32.mrb[0].mxu0
    %173 = vmatprep.mubr.f32.mxu0 0.0
    %174 = vmatmul.mubr.f32.gmra.mrb[0].mxu0 %v92
    %v175 = vpop.f32.mrb[0].mxu0
    %v176 = vadd.f32 %v86, %v175
    %v177 = vpop.f32.mrb[0].mxu0
    %178 = vmatprep.mubr.f32.mxu0 0.0
    %179 = vmatmul.mubr.f32.gmra.mrb[0].mxu0 %v95
    %v180 = vpop.f32.mrb[0].mxu0
    %v181 = vadd.f32 %v86, %v180
    %v182 = vpop.f32.mrb[0].mxu0
    %183 = vmatprep.mubr.f32.mxu0 0.0
    %184 = vmatmul.mubr.f32.gmra.mrb[0].mxu0 %v98
    %v185 = vpop.f32.mrb[0].mxu0
    %v186 = vadd.f32 %v86, %v185
    %v187 = vpop.f32.mrb[0].mxu0
    %188 = vdwg.mxu0
    %v189 = vmax.f32 %v171, 0.0
    %v190 = vmax.f32 %v176, 0.0
    %v191 = vmax.f32 %v181, 0.0
    %v192 = vmax.f32 %v186, 0.0
    %v193 = vadd.f32 %v74, %v189
    %v194 = vadd.f32 %v75, %v190
    %v195 = vadd.f32 %v76, %v191
    %v196 = vadd.f32 %v77, %v192
    %s197 = scalar_lea.vmem %s1, 32
    %v198 = vld [vmem:[%s197] sm:$0xff]
    %v199 = vld [vmem:[%s197 + $0x8] sm:$0xff]
    %v200 = vld [vmem:[%s197 + $0x10] sm:$0xff]
    %v201 = vld [vmem:[%s197 + $0x18] sm:$0xf]
    %v202 = vld [vmem:[%s2 + $0x1] sm:$0x1]
    %v203 = vlaneseq
    %v204 = vshrl.u32 %v203, 7
    %v205 = vsub.s32 0, %v204
    %v206 = vrot.slane %v202, %v205
    %v208 = vsel %vm100, %v201, 0
    %210 = vmatprep.subr.mxu0 0.0
    %211 = vmatpush1.msra.mxu0 %v198
    %212 = vmatprep.subr.mxu0 0.0
    %213 = vmatpush1.msra.mxu0 %v199
    %214 = vmatprep.subr.mxu0 0.0
    %215 = vmatpush1.msra.mxu0 %v200
    %216 = vmatprep.subr.mxu0 0.0
    %217 = vmatpush1.msra.mxu0 %v208
    %218 = vmatprep.subr.mxu0 0.0
    %219 = vmatpush1.msra.mxu0 0.0
    %220 = vmatprep.subr.mxu0 0.0
    %221 = vmatpush1.msra.mxu0 0.0
    %222 = vmatprep.subr.mxu0 0.0
    %223 = vmatpush1.msra.mxu0 0.0
    %224 = vmatprep.subr.mxu0 0.0
    %225 = vmatpush1.msra.mxu0 0.0
    %226 = vmatprep.subr.mxu0 0.0
    %227 = vmatpush1.msra.mxu0 0.0
    %228 = vmatprep.subr.mxu0 0.0
    %229 = vmatpush1.msra.mxu0 0.0
    %230 = vmatprep.subr.mxu0 0.0
    %231 = vmatpush1.msra.mxu0 0.0
    %232 = vmatprep.subr.mxu0 0.0
    %233 = vmatpush1.msra.mxu0 0.0
    %234 = vmatprep.subr.mxu0 0.0
    %235 = vmatpush1.msra.mxu0 0.0
    %236 = vmatprep.subr.mxu0 0.0
    %237 = vmatpush1.msra.mxu0 0.0
    %238 = vmatprep.subr.mxu0 0.0
    %239 = vmatpush1.msra.mxu0 0.0
    %240 = vmatprep.subr.mxu0 0.0
    %241 = vmatpush1.msra.mxu0 0.0
    %242 = vmatprep.subr.mxu0 0.0
    %243 = vmatpush1.msra.mxu0 0.0
    %244 = vmatprep.subr.mxu0 0.0
    %245 = vmatpush1.msra.mxu0 0.0
    %246 = vmatprep.subr.mxu0 0.0
    %247 = vmatpush1.msra.mxu0 0.0
    %248 = vmatprep.subr.mxu0 0.0
    %249 = vmatpush1.msra.mxu0 0.0
    %250 = vmatprep.subr.mxu0 0.0
    %251 = vmatpush1.msra.mxu0 0.0
    %252 = vmatprep.subr.mxu0 0.0
    %253 = vmatpush1.msra.mxu0 0.0
    %254 = vmatprep.subr.mxu0 0.0
    %255 = vmatpush1.msra.mxu0 0.0
    %256 = vmatprep.subr.mxu0 0.0
    %257 = vmatpush1.msra.mxu0 0.0
    %258 = vmatprep.subr.mxu0 0.0
    %259 = vmatpush1.msra.mxu0 0.0
    %260 = vmatprep.subr.mxu0 0.0
    %261 = vmatpush1.msra.mxu0 0.0
    %262 = vmatprep.subr.mxu0 0.0
    %263 = vmatpush1.msra.mxu0 0.0
    %264 = vmatprep.subr.mxu0 0.0
    %265 = vmatpush1.msra.mxu0 0.0
    %266 = vmatprep.subr.mxu0 0.0
    %267 = vmatpush1.msra.mxu0 0.0
    %268 = vmatprep.subr.mxu0 0.0
    %269 = vmatpush1.msra.mxu0 0.0
    %270 = vmatprep.subr.mxu0 0.0
    %271 = vmatpush1.msra.mxu0 0.0
    %272 = vmatprep.subr.mxu0 0.0
    %273 = vmatpush1.msra.mxu0 0.0
    %274 = vmatprep.mubr.f32.mxu0 0.0
    %275 = vmatmul.mubr.f32.gmra.mrb[0].mxu0 %v89
    %v276 = vpop.f32.mrb[0].mxu0
    %v277 = vadd.f32 %v206, %v276
    %v278 = vpop.f32.mrb[0].mxu0
    %279 = vmatprep.mubr.f32.mxu0 0.0
    %280 = vmatmul.mubr.f32.gmra.mrb[0].mxu0 %v92
    %v281 = vpop.f32.mrb[0].mxu0
    %v282 = vadd.f32 %v206, %v281
    %v283 = vpop.f32.mrb[0].mxu0
    %284 = vmatprep.mubr.f32.mxu0 0.0
    %285 = vmatmul.mubr.f32.gmra.mrb[0].mxu0 %v95
    %v286 = vpop.f32.mrb[0].mxu0
    %v287 = vadd.f32 %v206, %v286
    %v288 = vpop.f32.mrb[0].mxu0
    %289 = vmatprep.mubr.f32.mxu0 0.0
    %290 = vmatmul.mubr.f32.gmra.mrb[0].mxu0 %v98
    %v291 = vpop.f32.mrb[0].mxu0
    %v292 = vadd.f32 %v206, %v291
    %v293 = vpop.f32.mrb[0].mxu0
    %294 = vdwg.mxu0
    %v295 = vmax.f32 %v277, 0.0
    %v296 = vmax.f32 %v282, 0.0
    %v297 = vmax.f32 %v287, 0.0
    %v298 = vmax.f32 %v292, 0.0
    %v299 = vadd.f32 %v193, %v295
    %v300 = vadd.f32 %v194, %v296
    %v301 = vadd.f32 %v195, %v297
    %v302 = vadd.f32 %v196, %v298
    %s303 = scalar_lea.vmem %s1, 64
    %v304 = vld [vmem:[%s303] sm:$0xff]
    %v305 = vld [vmem:[%s303 + $0x8] sm:$0xff]
    %v306 = vld [vmem:[%s303 + $0x10] sm:$0xff]
    %v307 = vld [vmem:[%s303 + $0x18] sm:$0xf]
    %v308 = vld [vmem:[%s2 + $0x2] sm:$0x1]
    %v309 = vlaneseq
    %v310 = vshrl.u32 %v309, 7
    %v311 = vsub.s32 0, %v310
    %v312 = vrot.slane %v308, %v311
    %v314 = vsel %vm100, %v307, 0
    %316 = vmatprep.subr.mxu0 0.0
    %317 = vmatpush1.msra.mxu0 %v304
    %318 = vmatprep.subr.mxu0 0.0
    %319 = vmatpush1.msra.mxu0 %v305
    %320 = vmatprep.subr.mxu0 0.0
    %321 = vmatpush1.msra.mxu0 %v306
    %322 = vmatprep.subr.mxu0 0.0
    %323 = vmatpush1.msra.mxu0 %v314
    %324 = vmatprep.subr.mxu0 0.0
    %325 = vmatpush1.msra.mxu0 0.0
    %326 = vmatprep.subr.mxu0 0.0
    %327 = vmatpush1.msra.mxu0 0.0
    %328 = vmatprep.subr.mxu0 0.0
    %329 = vmatpush1.msra.mxu0 0.0
    %330 = vmatprep.subr.mxu0 0.0
    %331 = vmatpush1.msra.mxu0 0.0
    %332 = vmatprep.subr.mxu0 0.0
    %333 = vmatpush1.msra.mxu0 0.0
    %334 = vmatprep.subr.mxu0 0.0
    %335 = vmatpush1.msra.mxu0 0.0
    %336 = vmatprep.subr.mxu0 0.0
    %337 = vmatpush1.msra.mxu0 0.0
    %338 = vmatprep.subr.mxu0 0.0
    %339 = vmatpush1.msra.mxu0 0.0
    %340 = vmatprep.subr.mxu0 0.0
    %341 = vmatpush1.msra.mxu0 0.0
    %342 = vmatprep.subr.mxu0 0.0
    %343 = vmatpush1.msra.mxu0 0.0
    %344 = vmatprep.subr.mxu0 0.0
    %345 = vmatpush1.msra.mxu0 0.0
    %346 = vmatprep.subr.mxu0 0.0
    %347 = vmatpush1.msra.mxu0 0.0
    %348 = vmatprep.subr.mxu0 0.0
    %349 = vmatpush1.msra.mxu0 0.0
    %350 = vmatprep.subr.mxu0 0.0
    %351 = vmatpush1.msra.mxu0 0.0
    %352 = vmatprep.subr.mxu0 0.0
    %353 = vmatpush1.msra.mxu0 0.0
    %354 = vmatprep.subr.mxu0 0.0
    %355 = vmatpush1.msra.mxu0 0.0
    %356 = vmatprep.subr.mxu0 0.0
    %357 = vmatpush1.msra.mxu0 0.0
    %358 = vmatprep.subr.mxu0 0.0
    %359 = vmatpush1.msra.mxu0 0.0
    %360 = vmatprep.subr.mxu0 0.0
    %361 = vmatpush1.msra.mxu0 0.0
    %362 = vmatprep.subr.mxu0 0.0
    %363 = vmatpush1.msra.mxu0 0.0
    %364 = vmatprep.subr.mxu0 0.0
    %365 = vmatpush1.msra.mxu0 0.0
    %366 = vmatprep.subr.mxu0 0.0
    %367 = vmatpush1.msra.mxu0 0.0
    %368 = vmatprep.subr.mxu0 0.0
    %369 = vmatpush1.msra.mxu0 0.0
    %370 = vmatprep.subr.mxu0 0.0
    %371 = vmatpush1.msra.mxu0 0.0
    %372 = vmatprep.subr.mxu0 0.0
    %373 = vmatpush1.msra.mxu0 0.0
    %374 = vmatprep.subr.mxu0 0.0
    %375 = vmatpush1.msra.mxu0 0.0
    %376 = vmatprep.subr.mxu0 0.0
    %377 = vmatpush1.msra.mxu0 0.0
    %378 = vmatprep.subr.mxu0 0.0
    %379 = vmatpush1.msra.mxu0 0.0
    %380 = vmatprep.mubr.f32.mxu0 0.0
    %381 = vmatmul.mubr.f32.gmra.mrb[0].mxu0 %v89
    %v382 = vpop.f32.mrb[0].mxu0
    %v383 = vadd.f32 %v312, %v382
    %v384 = vpop.f32.mrb[0].mxu0
    %385 = vmatprep.mubr.f32.mxu0 0.0
    %386 = vmatmul.mubr.f32.gmra.mrb[0].mxu0 %v92
    %v387 = vpop.f32.mrb[0].mxu0
    %v388 = vadd.f32 %v312, %v387
    %v389 = vpop.f32.mrb[0].mxu0
    %390 = vmatprep.mubr.f32.mxu0 0.0
    %391 = vmatmul.mubr.f32.gmra.mrb[0].mxu0 %v95
    %v392 = vpop.f32.mrb[0].mxu0
    %v393 = vadd.f32 %v312, %v392
    %v394 = vpop.f32.mrb[0].mxu0
    %395 = vmatprep.mubr.f32.mxu0 0.0
    %396 = vmatmul.mubr.f32.gmra.mrb[0].mxu0 %v98
    %v397 = vpop.f32.mrb[0].mxu0
    %v398 = vadd.f32 %v312, %v397
    %v399 = vpop.f32.mrb[0].mxu0
    %400 = vdwg.mxu0
    %v401 = vmax.f32 %v383, 0.0
    %v402 = vmax.f32 %v388, 0.0
    %v403 = vmax.f32 %v393, 0.0
    %v404 = vmax.f32 %v398, 0.0
    %v405 = vadd.f32 %v299, %v401
    %v406 = vadd.f32 %v300, %v402
    %v407 = vadd.f32 %v301, %v403
    %v408 = vadd.f32 %v302, %v404
    %v409 = vld [vmem:[%s4] sm:$0xff]
    %v410 = vld [vmem:[%s4 + $0x8] sm:$0xff]
    %v411 = vld [vmem:[%s4 + $0x10] sm:$0xff]
    %v412 = vld [vmem:[%s4 + $0x18] sm:$0xff]
    %v413 = vld [vmem:[%s5] sm:$0xff]
    %v414 = vld [vmem:[%s5 + $0x8] sm:$0xff]
    %v415 = vld [vmem:[%s5 + $0x10] sm:$0xff]
    %v416 = vld [vmem:[%s5 + $0x18] sm:$0xff]
    %v417 = vld [vmem:[%s5 + $0x20] sm:$0xff]
    %v418 = vld [vmem:[%s5 + $0x28] sm:$0xff]
    %v419 = vld [vmem:[%s5 + $0x30] sm:$0xff]
    %v420 = vld [vmem:[%s5 + $0x38] sm:$0xff]
    %v421 = vld [vmem:[%s5 + $0x40] sm:$0xff]
    %v422 = vld [vmem:[%s5 + $0x48] sm:$0xff]
    %v423 = vld [vmem:[%s5 + $0x50] sm:$0xff]
    %v424 = vld [vmem:[%s5 + $0x58] sm:$0xff]
    %v425 = vld [vmem:[%s5 + $0x60] sm:$0xff]
    %v426 = vld [vmem:[%s5 + $0x68] sm:$0xff]
    %v427 = vld [vmem:[%s5 + $0x70] sm:$0xff]
    %v428 = vld [vmem:[%s5 + $0x78] sm:$0xff]
    %v429 = vld [vmem:[%s6] sm:$0xff]
    %v430 = vld [vmem:[%s6 + $0x8] sm:$0xff]
    %v431 = vld [vmem:[%s6 + $0x10] sm:$0xff]
    %v432 = vld [vmem:[%s6 + $0x18] sm:$0xff]
    %v433 = vld [vmem:[%s7] sm:$0xff]
    %v434 = vld [vmem:[%s7 + $0x8] sm:$0xff]
    %v435 = vld [vmem:[%s7 + $0x10] sm:$0xff]
    %v436 = vld [vmem:[%s7 + $0x18] sm:$0xff]
    %v437 = vld [vmem:[%s8] sm:$0x1]
    %v438 = vlaneseq
    %v439 = vshrl.u32 %v438, 7
    %v440 = vsub.s32 0, %v439
    %v441 = vrot.slane %v437, %v440
    %vm442 = vcmask 261120
    %v444 = vsel %vm442, %v405, 0
    %v447 = vsel %vm442, %v406, 0
    %v450 = vsel %vm442, %v407, 0
    %v453 = vsel %vm442, %v408, 0
    %455 = vmatprep.subr.mxu0 0.0
    %456 = vmatpush1.msra.mxu0 %v433
    %457 = vmatprep.subr.mxu0 0.0
    %458 = vmatpush1.msra.mxu0 %v434
    %459 = vmatprep.subr.mxu0 0.0
    %460 = vmatpush1.msra.mxu0 %v435
    %461 = vmatprep.subr.mxu0 0.0
    %462 = vmatpush1.msra.mxu0 %v436
    %463 = vmatprep.subr.mxu0 0.0
    %464 = vmatpush1.msra.mxu0 0.0
    %465 = vmatprep.subr.mxu0 0.0
    %466 = vmatpush1.msra.mxu0 0.0
    %467 = vmatprep.subr.mxu0 0.0
    %468 = vmatpush1.msra.mxu0 0.0
    %469 = vmatprep.subr.mxu0 0.0
    %470 = vmatpush1.msra.mxu0 0.0
    %471 = vmatprep.subr.mxu0 0.0
    %472 = vmatpush1.msra.mxu0 0.0
    %473 = vmatprep.subr.mxu0 0.0
    %474 = vmatpush1.msra.mxu0 0.0
    %475 = vmatprep.subr.mxu0 0.0
    %476 = vmatpush1.msra.mxu0 0.0
    %477 = vmatprep.subr.mxu0 0.0
    %478 = vmatpush1.msra.mxu0 0.0
    %479 = vmatprep.subr.mxu0 0.0
    %480 = vmatpush1.msra.mxu0 0.0
    %481 = vmatprep.subr.mxu0 0.0
    %482 = vmatpush1.msra.mxu0 0.0
    %483 = vmatprep.subr.mxu0 0.0
    %484 = vmatpush1.msra.mxu0 0.0
    %485 = vmatprep.subr.mxu0 0.0
    %486 = vmatpush1.msra.mxu0 0.0
    %487 = vmatprep.subr.mxu0 0.0
    %488 = vmatpush1.msra.mxu0 0.0
    %489 = vmatprep.subr.mxu0 0.0
    %490 = vmatpush1.msra.mxu0 0.0
    %491 = vmatprep.subr.mxu0 0.0
    %492 = vmatpush1.msra.mxu0 0.0
    %493 = vmatprep.subr.mxu0 0.0
    %494 = vmatpush1.msra.mxu0 0.0
    %495 = vmatprep.subr.mxu0 0.0
    %496 = vmatpush1.msra.mxu0 0.0
    %497 = vmatprep.subr.mxu0 0.0
    %498 = vmatpush1.msra.mxu0 0.0
    %499 = vmatprep.subr.mxu0 0.0
    %500 = vmatpush1.msra.mxu0 0.0
    %501 = vmatprep.subr.mxu0 0.0
    %502 = vmatpush1.msra.mxu0 0.0
    %503 = vmatprep.subr.mxu0 0.0
    %504 = vmatpush1.msra.mxu0 0.0
    %505 = vmatprep.subr.mxu0 0.0
    %506 = vmatpush1.msra.mxu0 0.0
    %507 = vmatprep.subr.mxu0 0.0
    %508 = vmatpush1.msra.mxu0 0.0
    %509 = vmatprep.subr.mxu0 0.0
    %510 = vmatpush1.msra.mxu0 0.0
    %511 = vmatprep.subr.mxu0 0.0
    %512 = vmatpush1.msra.mxu0 0.0
    %513 = vmatprep.subr.mxu0 0.0
    %514 = vmatpush1.msra.mxu0 0.0
    %515 = vmatprep.subr.mxu0 0.0
    %516 = vmatpush1.msra.mxu0 0.0
    %517 = vmatprep.subr.mxu0 0.0
    %518 = vmatpush1.msra.mxu0 0.0
    %519 = vmatprep.mubr.f32.mxu0 0.0
    %520 = vmatmul.mubr.f32.gmra.mrb[0].mxu0 %v444
    %v521 = vpop.f32.mrb[0].mxu0
    %v522 = vadd.f32 %v441, %v521
    %v523 = vpop.f32.mrb[0].mxu0
    %524 = vmatprep.mubr.f32.mxu0 0.0
    %525 = vmatmul.mubr.f32.gmra.mrb[0].mxu0 %v447
    %v526 = vpop.f32.mrb[0].mxu0
    %v527 = vadd.f32 %v441, %v526
    %v528 = vpop.f32.mrb[0].mxu0
    %529 = vmatprep.mubr.f32.mxu0 0.0
    %530 = vmatmul.mubr.f32.gmra.mrb[0].mxu0 %v450
    %v531 = vpop.f32.mrb[0].mxu0
    %v532 = vadd.f32 %v441, %v531
    %v533 = vpop.f32.mrb[0].mxu0
    %534 = vmatprep.mubr.f32.mxu0 0.0
    %535 = vmatmul.mubr.f32.gmra.mrb[0].mxu0 %v453
    %v536 = vpop.f32.mrb[0].mxu0
    %v537 = vadd.f32 %v441, %v536
    %v538 = vpop.f32.mrb[0].mxu0
    %539 = vdwg.mxu0
    %544 = vrot.lane.b32.xlu0 %v522, 96
    %v545 = vpop.permute.xlu0 %544
    %546 = vrot.lane.b32.xlu0 %v527, 96
    %v547 = vpop.permute.xlu0 %546
    %548 = vrot.lane.b32.xlu0 %v532, 96
    %v549 = vpop.permute.xlu0 %548
    %550 = vrot.lane.b32.xlu0 %v537, 96
    %v551 = vpop.permute.xlu0 %550
    %556 = vxpose.xlu0.b32.start [1/16] %v545, 128
    %557 = vxpose.xlu0.b32.cont [2/16] %v547, 128
    %558 = vxpose.xlu0.b32.cont [3/16] %v549, 128
    %559 = vxpose.xlu0.b32.cont [4/16] %v551, 128
    %560 = vxpose.xlu0.b32.cont [5/16] 0.0, 128
    %561 = vxpose.xlu0.b32.cont [6/16] 0.0, 128
    %562 = vxpose.xlu0.b32.cont [7/16] 0.0, 128
    %563 = vxpose.xlu0.b32.cont [8/16] 0.0, 128
    %564 = vxpose.xlu0.b32.cont [9/16] 0.0, 128
    %565 = vxpose.xlu0.b32.cont [10/16] 0.0, 128
    %566 = vxpose.xlu0.b32.cont [11/16] 0.0, 128
    %567 = vxpose.xlu0.b32.cont [12/16] 0.0, 128
    %568 = vxpose.xlu0.b32.cont [13/16] 0.0, 128
    %569 = vxpose.xlu0.b32.cont [14/16] 0.0, 128
    %570 = vxpose.xlu0.b32.cont [15/16] 0.0, 128
    %571 = vxpose.xlu0.b32.end [16/16] 0.0, 128
    %v572 = vpop.trf.xlu0
    %v573 = vpop.trf.xlu0
    %v574 = vpop.trf.xlu0
    %v575 = vpop.trf.xlu0
    %v576 = vpop.trf.xlu0
    %v577 = vpop.trf.xlu0
    %v578 = vpop.trf.xlu0
    %v579 = vpop.trf.xlu0
    %v580 = vpop.trf.xlu0
    %v581 = vpop.trf.xlu0
    %v582 = vpop.trf.xlu0
    %v583 = vpop.trf.xlu0
    %v584 = vpop.trf.xlu0
    %v585 = vpop.trf.xlu0
    %v586 = vpop.trf.xlu0
    %v587 = vpop.trf.xlu0
    %592 = vrot.lane.b32.xlu0 %v572, 32
    %v593 = vpop.permute.xlu0 %592
    %594 = vrot.lane.b32.xlu0 %v573, 32
    %v595 = vpop.permute.xlu0 %594
    %596 = vrot.lane.b32.xlu0 %v574, 32
    %v597 = vpop.permute.xlu0 %596
    %598 = vrot.lane.b32.xlu0 %v575, 32
    %v599 = vpop.permute.xlu0 %598
    %604 = vrot.lane.b32.xlu0 %v572, 64
    %v605 = vpop.permute.xlu0 %604
    %606 = vrot.lane.b32.xlu0 %v573, 64
    %v607 = vpop.permute.xlu0 %606
    %608 = vrot.lane.b32.xlu0 %v574, 64
    %v609 = vpop.permute.xlu0 %608
    %610 = vrot.lane.b32.xlu0 %v575, 64
    %v611 = vpop.permute.xlu0 %610
    %616 = vrot.lane.b32.xlu0 %v572, 96
    %v617 = vpop.permute.xlu0 %616
    %618 = vrot.lane.b32.xlu0 %v573, 96
    %v619 = vpop.permute.xlu0 %618
    %620 = vrot.lane.b32.xlu0 %v574, 96
    %v621 = vpop.permute.xlu0 %620
    %622 = vrot.lane.b32.xlu0 %v575, 96
    %v623 = vpop.permute.xlu0 %622
    %v628 = vsel %vm442, %v572, %v593
    %v629 = vsel %vm442, %v573, %v595
    %v630 = vsel %vm442, %v574, %v597
    %v631 = vsel %vm442, %v575, %v599
    %vm632 = vcmask 523264
    %v633 = vsel %vm632, %v628, %v605
    %v634 = vsel %vm632, %v629, %v607
    %v635 = vsel %vm632, %v630, %v609
    %v636 = vsel %vm632, %v631, %v611
    %vm637 = vcmask 785408
    %v638 = vsel %vm637, %v633, %v617
    %v639 = vsel %vm637, %v634, %v619
    %v640 = vsel %vm637, %v635, %v621
    %v641 = vsel %vm637, %v636, %v623
    %v642 = vmul.f32 %v638, %v409
    %v643 = vmul.f32 %v639, %v410
    %v644 = vmul.f32 %v640, %v411
    %v645 = vmul.f32 %v641, %v412
    %v646 = vsel %vm442, %v522, 0
    %v648 = vsel %vm442, %v527, 0
    %v650 = vsel %vm442, %v532, 0
    %v652 = vsel %vm442, %v537, 0
    %654 = vmatprep.subr.mxu0 0.0
    %655 = vmatpush1.msra.mxu0 %v642
    %656 = vmatprep.subr.mxu0 0.0
    %657 = vmatpush1.msra.mxu0 %v643
    %658 = vmatprep.subr.mxu0 0.0
    %659 = vmatpush1.msra.mxu0 %v644
    %660 = vmatprep.subr.mxu0 0.0
    %661 = vmatpush1.msra.mxu0 %v645
    %662 = vmatprep.subr.mxu0 0.0
    %663 = vmatpush1.msra.mxu0 0.0
    %664 = vmatprep.subr.mxu0 0.0
    %665 = vmatpush1.msra.mxu0 0.0
    %666 = vmatprep.subr.mxu0 0.0
    %667 = vmatpush1.msra.mxu0 0.0
    %668 = vmatprep.subr.mxu0 0.0
    %669 = vmatpush1.msra.mxu0 0.0
    %670 = vmatprep.subr.mxu0 0.0
    %671 = vmatpush1.msra.mxu0 0.0
    %672 = vmatprep.subr.mxu0 0.0
    %673 = vmatpush1.msra.mxu0 0.0
    %674 = vmatprep.subr.mxu0 0.0
    %675 = vmatpush1.msra.mxu0 0.0
    %676 = vmatprep.subr.mxu0 0.0
    %677 = vmatpush1.msra.mxu0 0.0
    %678 = vmatprep.subr.mxu0 0.0
    %679 = vmatpush1.msra.mxu0 0.0
    %680 = vmatprep.subr.mxu0 0.0
    %681 = vmatpush1.msra.mxu0 0.0
    %682 = vmatprep.subr.mxu0 0.0
    %683 = vmatpush1.msra.mxu0 0.0
    %684 = vmatprep.subr.mxu0 0.0
    %685 = vmatpush1.msra.mxu0 0.0
    %686 = vmatprep.subr.mxu0 0.0
    %687 = vmatpush1.msra.mxu0 0.0
    %688 = vmatprep.subr.mxu0 0.0
    %689 = vmatpush1.msra.mxu0 0.0
    %690 = vmatprep.subr.mxu0 0.0
    %691 = vmatpush1.msra.mxu0 0.0
    %692 = vmatprep.subr.mxu0 0.0
    %693 = vmatpush1.msra.mxu0 0.0
    %694 = vmatprep.subr.mxu0 0.0
    %695 = vmatpush1.msra.mxu0 0.0
    %696 = vmatprep.subr.mxu0 0.0
    %697 = vmatpush1.msra.mxu0 0.0
    %698 = vmatprep.subr.mxu0 0.0
    %699 = vmatpush1.msra.mxu0 0.0
    %700 = vmatprep.subr.mxu0 0.0
    %701 = vmatpush1.msra.mxu0 0.0
    %702 = vmatprep.subr.mxu0 0.0
    %703 = vmatpush1.msra.mxu0 0.0
    %704 = vmatprep.subr.mxu0 0.0
    %705 = vmatpush1.msra.mxu0 0.0
    %706 = vmatprep.subr.mxu0 0.0
    %707 = vmatpush1.msra.mxu0 0.0
    %708 = vmatprep.subr.mxu0 0.0
    %709 = vmatpush1.msra.mxu0 0.0
    %710 = vmatprep.subr.mxu0 0.0
    %711 = vmatpush1.msra.mxu0 0.0
    %712 = vmatprep.subr.mxu0 0.0
    %713 = vmatpush1.msra.mxu0 0.0
    %714 = vmatprep.subr.mxu0 0.0
    %715 = vmatpush1.msra.mxu0 0.0
    %716 = vmatprep.subr.mxu0 0.0
    %717 = vmatpush1.msra.mxu0 0.0
    %718 = vmatprep.mubr.f32.mxu0 0.0
    %719 = vmatmul.mubr.f32.gmra.mrb[0].mxu0 %v646
    %v720 = vpop.f32.mrb[0].mxu0
    %v721 = vadd.f32 0.0, %v720
    %v722 = vpop.f32.mrb[0].mxu0
    %723 = vmatprep.mubr.f32.mxu0 0.0
    %724 = vmatmul.mubr.f32.gmra.mrb[0].mxu0 %v648
    %v725 = vpop.f32.mrb[0].mxu0
    %v726 = vadd.f32 0.0, %v725
    %v727 = vpop.f32.mrb[0].mxu0
    %728 = vmatprep.mubr.f32.mxu0 0.0
    %729 = vmatmul.mubr.f32.gmra.mrb[0].mxu0 %v650
    %v730 = vpop.f32.mrb[0].mxu0
    %v731 = vadd.f32 0.0, %v730
    %v732 = vpop.f32.mrb[0].mxu0
    %733 = vmatprep.mubr.f32.mxu0 0.0
    %734 = vmatmul.mubr.f32.gmra.mrb[0].mxu0 %v652
    %v735 = vpop.f32.mrb[0].mxu0
    %v736 = vadd.f32 0.0, %v735
    %v737 = vpop.f32.mrb[0].mxu0
    %738 = vdwg.mxu0
    %v739 = vmul.f32 %v721, 0.35355338
    %v740 = vmul.f32 %v726, 0.35355338
    %v741 = vmul.f32 %v731, 0.35355338
    %v742 = vmul.f32 %v736, 0.35355338
    %v743 = vadd.f32 %v739, %v429
    %v744 = vadd.f32 %v740, %v430
    %v745 = vadd.f32 %v741, %v431
    %v746 = vadd.f32 %v742, %v432
    %747 = vmax.xlane.f32.xlu0 %v743
    %v748 = vpop.xlane.xlu0 %747
    %749 = vmax.xlane.f32.xlu0 %v744
    %v750 = vpop.xlane.xlu0 %749
    %751 = vmax.xlane.f32.xlu0 %v745
    %v752 = vpop.xlane.xlu0 %751
    %753 = vmax.xlane.f32.xlu0 %v746
    %v754 = vpop.xlane.xlu0 %753
    %v755 = vsub.f32 %v743, %v748
    %v756 = vsub.f32 %v744, %v750
    %v757 = vsub.f32 %v745, %v752
    %v758 = vsub.f32 %v746, %v754
    %v759 = vmul.f32 %v755, 1.442695
    %v760 = vpow.pop %v759
    %v761 = vmul.f32 %v756, 1.442695
    %v762 = vpow.pop %v761
    %v763 = vmul.f32 %v757, 1.442695
    %v764 = vpow.pop %v763
    %v765 = vmul.f32 %v758, 1.442695
    %v766 = vpow.pop %v765
    %783 = vrot.lane.b32.xlu0 %v413, 64
    %v784 = vpop.permute.xlu0 %783
    %785 = vrot.lane.b32.xlu0 %v414, 64
    %v786 = vpop.permute.xlu0 %785
    %787 = vrot.lane.b32.xlu0 %v415, 64
    %v788 = vpop.permute.xlu0 %787
    %789 = vrot.lane.b32.xlu0 %v416, 64
    %v790 = vpop.permute.xlu0 %789
    %791 = vrot.lane.b32.xlu0 %v417, 64
    %v792 = vpop.permute.xlu0 %791
    %793 = vrot.lane.b32.xlu0 %v418, 64
    %v794 = vpop.permute.xlu0 %793
    %795 = vrot.lane.b32.xlu0 %v419, 64
    %v796 = vpop.permute.xlu0 %795
    %797 = vrot.lane.b32.xlu0 %v420, 64
    %v798 = vpop.permute.xlu0 %797
    %799 = vrot.lane.b32.xlu0 %v421, 64
    %v800 = vpop.permute.xlu0 %799
    %801 = vrot.lane.b32.xlu0 %v422, 64
    %v802 = vpop.permute.xlu0 %801
    %803 = vrot.lane.b32.xlu0 %v423, 64
    %v804 = vpop.permute.xlu0 %803
    %805 = vrot.lane.b32.xlu0 %v424, 64
    %v806 = vpop.permute.xlu0 %805
    %807 = vrot.lane.b32.xlu0 %v425, 64
    %v808 = vpop.permute.xlu0 %807
    %809 = vrot.lane.b32.xlu0 %v426, 64
    %v810 = vpop.permute.xlu0 %809
    %811 = vrot.lane.b32.xlu0 %v427, 64
    %v812 = vpop.permute.xlu0 %811
    %813 = vrot.lane.b32.xlu0 %v428, 64
    %v814 = vpop.permute.xlu0 %813
    %v831 = vmul.f32 %v522, %v784
    %v832 = vmul.f32 %v527, %v786
    %v833 = vmul.f32 %v532, %v788
    %v834 = vmul.f32 %v537, %v790
    %v835 = vmul.f32 %v522, %v792
    %v836 = vmul.f32 %v527, %v794
    %v837 = vmul.f32 %v532, %v796
    %v838 = vmul.f32 %v537, %v798
    %v839 = vmul.f32 %v522, %v800
    %v840 = vmul.f32 %v527, %v802
    %v841 = vmul.f32 %v532, %v804
    %v842 = vmul.f32 %v537, %v806
    %v843 = vmul.f32 %v522, %v808
    %v844 = vmul.f32 %v527, %v810
    %v845 = vmul.f32 %v532, %v812
    %v846 = vmul.f32 %v537, %v814
    %863 = vrot.lane.b32.xlu0 %v831, 64
    %v864 = vpop.permute.xlu0 %863
    %865 = vrot.lane.b32.xlu0 %v832, 64
    %v866 = vpop.permute.xlu0 %865
    %867 = vrot.lane.b32.xlu0 %v833, 64
    %v868 = vpop.permute.xlu0 %867
    %869 = vrot.lane.b32.xlu0 %v834, 64
    %v870 = vpop.permute.xlu0 %869
    %871 = vrot.lane.b32.xlu0 %v835, 64
    %v872 = vpop.permute.xlu0 %871
    %873 = vrot.lane.b32.xlu0 %v836, 64
    %v874 = vpop.permute.xlu0 %873
    %875 = vrot.lane.b32.xlu0 %v837, 64
    %v876 = vpop.permute.xlu0 %875
    %877 = vrot.lane.b32.xlu0 %v838, 64
    %v878 = vpop.permute.xlu0 %877
    %879 = vrot.lane.b32.xlu0 %v839, 64
    %v880 = vpop.permute.xlu0 %879
    %881 = vrot.lane.b32.xlu0 %v840, 64
    %v882 = vpop.permute.xlu0 %881
    %883 = vrot.lane.b32.xlu0 %v841, 64
    %v884 = vpop.permute.xlu0 %883
    %885 = vrot.lane.b32.xlu0 %v842, 64
    %v886 = vpop.permute.xlu0 %885
    %887 = vrot.lane.b32.xlu0 %v843, 64
    %v888 = vpop.permute.xlu0 %887
    %889 = vrot.lane.b32.xlu0 %v844, 64
    %v890 = vpop.permute.xlu0 %889
    %891 = vrot.lane.b32.xlu0 %v845, 64
    %v892 = vpop.permute.xlu0 %891
    %893 = vrot.lane.b32.xlu0 %v846, 64
    %v894 = vpop.permute.xlu0 %893
    %911 = vmatprep.subr.mxu0 0.0
    %912 = vmatpush1.msra.mxu0 %v864
    %913 = vmatprep.subr.mxu0 0.0
    %914 = vmatpush1.msra.mxu0 %v866
    %915 = vmatprep.subr.mxu0 0.0
    %916 = vmatpush1.msra.mxu0 %v868
    %917 = vmatprep.subr.mxu0 0.0
    %918 = vmatpush1.msra.mxu0 %v870
    %919 = vmatprep.subr.mxu0 0.0
    %920 = vmatpush1.msra.mxu0 %v872
    %921 = vmatprep.subr.mxu0 0.0
    %922 = vmatpush1.msra.mxu0 %v874
    %923 = vmatprep.subr.mxu0 0.0
    %924 = vmatpush1.msra.mxu0 %v876
    %925 = vmatprep.subr.mxu0 0.0
    %926 = vmatpush1.msra.mxu0 %v878
    %927 = vmatprep.subr.mxu0 0.0
    %928 = vmatpush1.msra.mxu0 %v880
    %929 = vmatprep.subr.mxu0 0.0
    %930 = vmatpush1.msra.mxu0 %v882
    %931 = vmatprep.subr.mxu0 0.0
    %932 = vmatpush1.msra.mxu0 %v884
    %933 = vmatprep.subr.mxu0 0.0
    %934 = vmatpush1.msra.mxu0 %v886
    %935 = vmatprep.subr.mxu0 0.0
    %936 = vmatpush1.msra.mxu0 %v888
    %937 = vmatprep.subr.mxu0 0.0
    %938 = vmatpush1.msra.mxu0 %v890
    %939 = vmatprep.subr.mxu0 0.0
    %940 = vmatpush1.msra.mxu0 %v892
    %941 = vmatprep.subr.mxu0 0.0
    %942 = vmatpush1.msra.mxu0 %v894
    %943 = vmatprep.subr.mxu0 0.0
    %944 = vmatpush1.msra.mxu0 0.0
    %945 = vmatprep.subr.mxu0 0.0
    %946 = vmatpush1.msra.mxu0 0.0
    %947 = vmatprep.subr.mxu0 0.0
    %948 = vmatpush1.msra.mxu0 0.0
    %949 = vmatprep.subr.mxu0 0.0
    %950 = vmatpush1.msra.mxu0 0.0
    %951 = vmatprep.subr.mxu0 0.0
    %952 = vmatpush1.msra.mxu0 0.0
    %953 = vmatprep.subr.mxu0 0.0
    %954 = vmatpush1.msra.mxu0 0.0
    %955 = vmatprep.subr.mxu0 0.0
    %956 = vmatpush1.msra.mxu0 0.0
    %957 = vmatprep.subr.mxu0 0.0
    %958 = vmatpush1.msra.mxu0 0.0
    %959 = vmatprep.subr.mxu0 0.0
    %960 = vmatpush1.msra.mxu0 0.0
    %961 = vmatprep.subr.mxu0 0.0
    %962 = vmatpush1.msra.mxu0 0.0
    %963 = vmatprep.subr.mxu0 0.0
    %964 = vmatpush1.msra.mxu0 0.0
    %965 = vmatprep.subr.mxu0 0.0
    %966 = vmatpush1.msra.mxu0 0.0
    %967 = vmatprep.subr.mxu0 0.0
    %968 = vmatpush1.msra.mxu0 0.0
    %969 = vmatprep.subr.mxu0 0.0
    %970 = vmatpush1.msra.mxu0 0.0
    %971 = vmatprep.subr.mxu0 0.0
    %972 = vmatpush1.msra.mxu0 0.0
    %973 = vmatprep.subr.mxu0 0.0
    %974 = vmatpush1.msra.mxu0 0.0
    %975 = vmatprep.mubr.f32.mxu0 0.0
    %976 = vmatmul.mubr.f32.gmra.mrb[0].mxu0 %v760
    %v977 = vpop.f32.mrb[0].mxu0
    %v978 = vadd.f32 0.0, %v977
    %v979 = vpop.f32.mrb[0].mxu0
    %980 = vmatprep.mubr.f32.mxu0 0.0
    %981 = vmatmul.mubr.f32.gmra.mrb[0].mxu0 %v762
    %v982 = vpop.f32.mrb[0].mxu0
    %v983 = vadd.f32 0.0, %v982
    %v984 = vpop.f32.mrb[0].mxu0
    %985 = vmatprep.mubr.f32.mxu0 0.0
    %986 = vmatmul.mubr.f32.gmra.mrb[0].mxu0 %v764
    %v987 = vpop.f32.mrb[0].mxu0
    %v988 = vadd.f32 0.0, %v987
    %v989 = vpop.f32.mrb[0].mxu0
    %990 = vmatprep.mubr.f32.mxu0 0.0
    %991 = vmatmul.mubr.f32.gmra.mrb[0].mxu0 %v766
    %v992 = vpop.f32.mrb[0].mxu0
    %v993 = vadd.f32 0.0, %v992
    %v994 = vpop.f32.mrb[0].mxu0
    %995 = vdwg.mxu0
    %996 = vmatprep.subr.mxu0 0.0
    %997 = vmatpush1.msra.mxu0 %v413
    %998 = vmatprep.subr.mxu0 0.0
    %999 = vmatpush1.msra.mxu0 %v414
    %1000 = vmatprep.subr.mxu0 0.0
    %1001 = vmatpush1.msra.mxu0 %v415
    %1002 = vmatprep.subr.mxu0 0.0
    %1003 = vmatpush1.msra.mxu0 %v416
    %1004 = vmatprep.subr.mxu0 0.0
    %1005 = vmatpush1.msra.mxu0 %v417
    %1006 = vmatprep.subr.mxu0 0.0
    %1007 = vmatpush1.msra.mxu0 %v418
    %1008 = vmatprep.subr.mxu0 0.0
    %1009 = vmatpush1.msra.mxu0 %v419
    %1010 = vmatprep.subr.mxu0 0.0
    %1011 = vmatpush1.msra.mxu0 %v420
    %1012 = vmatprep.subr.mxu0 0.0
    %1013 = vmatpush1.msra.mxu0 %v421
    %1014 = vmatprep.subr.mxu0 0.0
    %1015 = vmatpush1.msra.mxu0 %v422
    %1016 = vmatprep.subr.mxu0 0.0
    %1017 = vmatpush1.msra.mxu0 %v423
    %1018 = vmatprep.subr.mxu0 0.0
    %1019 = vmatpush1.msra.mxu0 %v424
    %1020 = vmatprep.subr.mxu0 0.0
    %1021 = vmatpush1.msra.mxu0 %v425
    %1022 = vmatprep.subr.mxu0 0.0
    %1023 = vmatpush1.msra.mxu0 %v426
    %1024 = vmatprep.subr.mxu0 0.0
    %1025 = vmatpush1.msra.mxu0 %v427
    %1026 = vmatprep.subr.mxu0 0.0
    %1027 = vmatpush1.msra.mxu0 %v428
    %1028 = vmatprep.subr.mxu0 0.0
    %1029 = vmatpush1.msra.mxu0 0.0
    %1030 = vmatprep.subr.mxu0 0.0
    %1031 = vmatpush1.msra.mxu0 0.0
    %1032 = vmatprep.subr.mxu0 0.0
    %1033 = vmatpush1.msra.mxu0 0.0
    %1034 = vmatprep.subr.mxu0 0.0
    %1035 = vmatpush1.msra.mxu0 0.0
    %1036 = vmatprep.subr.mxu0 0.0
    %1037 = vmatpush1.msra.mxu0 0.0
    %1038 = vmatprep.subr.mxu0 0.0
    %1039 = vmatpush1.msra.mxu0 0.0
    %1040 = vmatprep.subr.mxu0 0.0
    %1041 = vmatpush1.msra.mxu0 0.0
    %1042 = vmatprep.subr.mxu0 0.0
    %1043 = vmatpush1.msra.mxu0 0.0
    %1044 = vmatprep.subr.mxu0 0.0
    %1045 = vmatpush1.msra.mxu0 0.0
    %1046 = vmatprep.subr.mxu0 0.0
    %1047 = vmatpush1.msra.mxu0 0.0
    %1048 = vmatprep.subr.mxu0 0.0
    %1049 = vmatpush1.msra.mxu0 0.0
    %1050 = vmatprep.subr.mxu0 0.0
    %1051 = vmatpush1.msra.mxu0 0.0
    %1052 = vmatprep.subr.mxu0 0.0
    %1053 = vmatpush1.msra.mxu0 0.0
    %1054 = vmatprep.subr.mxu0 0.0
    %1055 = vmatpush1.msra.mxu0 0.0
    %1056 = vmatprep.subr.mxu0 0.0
    %1057 = vmatpush1.msra.mxu0 0.0
    %1058 = vmatprep.subr.mxu0 0.0
    %1059 = vmatpush1.msra.mxu0 0.0
    %1060 = vmatprep.mubr.f32.mxu0 0.0
    %1061 = vmatmul.mubr.f32.gmra.mrb[0].mxu0 %v760
    %v1062 = vpop.f32.mrb[0].mxu0
    %v1063 = vadd.f32 0.0, %v1062
    %v1064 = vpop.f32.mrb[0].mxu0
    %1065 = vmatprep.mubr.f32.mxu0 0.0
    %1066 = vmatmul.mubr.f32.gmra.mrb[0].mxu0 %v762
    %v1067 = vpop.f32.mrb[0].mxu0
    %v1068 = vadd.f32 0.0, %v1067
    %v1069 = vpop.f32.mrb[0].mxu0
    %1070 = vmatprep.mubr.f32.mxu0 0.0
    %1071 = vmatmul.mubr.f32.gmra.mrb[0].mxu0 %v764
    %v1072 = vpop.f32.mrb[0].mxu0
    %v1073 = vadd.f32 0.0, %v1072
    %v1074 = vpop.f32.mrb[0].mxu0
    %1075 = vmatprep.mubr.f32.mxu0 0.0
    %1076 = vmatmul.mubr.f32.gmra.mrb[0].mxu0 %v766
    %v1077 = vpop.f32.mrb[0].mxu0
    %v1078 = vadd.f32 0.0, %v1077
    %v1079 = vpop.f32.mrb[0].mxu0
    %1080 = vdwg.mxu0
    %v1081 = vrcp.pop %v1063
    %v1082 = vrcp.pop %v1068
    %v1083 = vrcp.pop %v1073
    %v1084 = vrcp.pop %v1078
    %v1085 = vmul.f32 %v978, %v1081
    %v1086 = vmul.f32 %v983, %v1082
    %v1087 = vmul.f32 %v988, %v1083
    %v1088 = vmul.f32 %v993, %v1084
    %v1089 = vld [vmem:[%s9] sm:$0xff]
    %v1090 = vld [vmem:[%s9 + $0x8] sm:$0xff]
    %v1091 = vld [vmem:[%s9 + $0x10] sm:$0xff]
    %v1092 = vld [vmem:[%s9 + $0x18] sm:$0xff]
    %v1093 = vld [vmem:[%s10] sm:$0x1]
    %v1094 = vlaneseq
    %v1095 = vshrl.u32 %v1094, 7
    %v1096 = vsub.s32 0, %v1095
    %v1097 = vrot.slane %v1093, %v1096
    %v1099 = vsel %vm442, %v1085, 0
    %v1102 = vsel %vm442, %v1086, 0
    %v1105 = vsel %vm442, %v1087, 0
    %v1108 = vsel %vm442, %v1088, 0
    %1110 = vmatprep.subr.mxu0 0.0
    %1111 = vmatpush1.msra.mxu0 %v1089
    %1112 = vmatprep.subr.mxu0 0.0
    %1113 = vmatpush1.msra.mxu0 %v1090
    %1114 = vmatprep.subr.mxu0 0.0
    %1115 = vmatpush1.msra.mxu0 %v1091
    %1116 = vmatprep.subr.mxu0 0.0
    %1117 = vmatpush1.msra.mxu0 %v1092
    %1118 = vmatprep.subr.mxu0 0.0
    %1119 = vmatpush1.msra.mxu0 0.0
    %1120 = vmatprep.subr.mxu0 0.0
    %1121 = vmatpush1.msra.mxu0 0.0
    %1122 = vmatprep.subr.mxu0 0.0
    %1123 = vmatpush1.msra.mxu0 0.0
    %1124 = vmatprep.subr.mxu0 0.0
    %1125 = vmatpush1.msra.mxu0 0.0
    %1126 = vmatprep.subr.mxu0 0.0
    %1127 = vmatpush1.msra.mxu0 0.0
    %1128 = vmatprep.subr.mxu0 0.0
    %1129 = vmatpush1.msra.mxu0 0.0
    %1130 = vmatprep.subr.mxu0 0.0
    %1131 = vmatpush1.msra.mxu0 0.0
    %1132 = vmatprep.subr.mxu0 0.0
    %1133 = vmatpush1.msra.mxu0 0.0
    %1134 = vmatprep.subr.mxu0 0.0
    %1135 = vmatpush1.msra.mxu0 0.0
    %1136 = vmatprep.subr.mxu0 0.0
    %1137 = vmatpush1.msra.mxu0 0.0
    %1138 = vmatprep.subr.mxu0 0.0
    %1139 = vmatpush1.msra.mxu0 0.0
    %1140 = vmatprep.subr.mxu0 0.0
    %1141 = vmatpush1.msra.mxu0 0.0
    %1142 = vmatprep.subr.mxu0 0.0
    %1143 = vmatpush1.msra.mxu0 0.0
    %1144 = vmatprep.subr.mxu0 0.0
    %1145 = vmatpush1.msra.mxu0 0.0
    %1146 = vmatprep.subr.mxu0 0.0
    %1147 = vmatpush1.msra.mxu0 0.0
    %1148 = vmatprep.subr.mxu0 0.0
    %1149 = vmatpush1.msra.mxu0 0.0
    %1150 = vmatprep.subr.mxu0 0.0
    %1151 = vmatpush1.msra.mxu0 0.0
    %1152 = vmatprep.subr.mxu0 0.0
    %1153 = vmatpush1.msra.mxu0 0.0
    %1154 = vmatprep.subr.mxu0 0.0
    %1155 = vmatpush1.msra.mxu0 0.0
    %1156 = vmatprep.subr.mxu0 0.0
    %1157 = vmatpush1.msra.mxu0 0.0
    %1158 = vmatprep.subr.mxu0 0.0
    %1159 = vmatpush1.msra.mxu0 0.0
    %1160 = vmatprep.subr.mxu0 0.0
    %1161 = vmatpush1.msra.mxu0 0.0
    %1162 = vmatprep.subr.mxu0 0.0
    %1163 = vmatpush1.msra.mxu0 0.0
    %1164 = vmatprep.subr.mxu0 0.0
    %1165 = vmatpush1.msra.mxu0 0.0
    %1166 = vmatprep.subr.mxu0 0.0
    %1167 = vmatpush1.msra.mxu0 0.0
    %1168 = vmatprep.subr.mxu0 0.0
    %1169 = vmatpush1.msra.mxu0 0.0
    %1170 = vmatprep.subr.mxu0 0.0
    %1171 = vmatpush1.msra.mxu0 0.0
    %1172 = vmatprep.subr.mxu0 0.0
    %1173 = vmatpush1.msra.mxu0 0.0
    %1174 = vmatprep.mubr.f32.mxu0 0.0
    %1175 = vmatmul.mubr.f32.gmra.mrb[0].mxu0 %v1099
    %v1176 = vpop.f32.mrb[0].mxu0
    %v1177 = vadd.f32 %v1097, %v1176
    %v1178 = vpop.f32.mrb[0].mxu0
    %1179 = vmatprep.mubr.f32.mxu0 0.0
    %1180 = vmatmul.mubr.f32.gmra.mrb[0].mxu0 %v1102
    %v1181 = vpop.f32.mrb[0].mxu0
    %v1182 = vadd.f32 %v1097, %v1181
    %v1183 = vpop.f32.mrb[0].mxu0
    %1184 = vmatprep.mubr.f32.mxu0 0.0
    %1185 = vmatmul.mubr.f32.gmra.mrb[0].mxu0 %v1105
    %v1186 = vpop.f32.mrb[0].mxu0
    %v1187 = vadd.f32 %v1097, %v1186
    %v1188 = vpop.f32.mrb[0].mxu0
    %1189 = vmatprep.mubr.f32.mxu0 0.0
    %1190 = vmatmul.mubr.f32.gmra.mrb[0].mxu0 %v1108
    %v1191 = vpop.f32.mrb[0].mxu0
    %v1192 = vadd.f32 %v1097, %v1191
    %v1193 = vpop.f32.mrb[0].mxu0
    %1194 = vdwg.mxu0
    %v1195 = vadd.f32 %v405, %v1177
    %v1196 = vadd.f32 %v406, %v1182
    %v1197 = vadd.f32 %v407, %v1187
    %v1198 = vadd.f32 %v408, %v1192
    %v1199 = vld [vmem:[%s11] sm:$0x1]
    %v1200 = vld [vmem:[%s12] sm:$0x1]
    %v1201 = vsel %vm442, %v1195, 0.0
    %1202 = vadd.xlane.f32.xlu0 %v1201
    %v1203 = vpop.xlane.xlu0 %1202
    %v1204 = vsel %vm442, %v1196, 0.0
    %1205 = vadd.xlane.f32.xlu0 %v1204
    %v1206 = vpop.xlane.xlu0 %1205
    %v1207 = vsel %vm442, %v1197, 0.0
    %1208 = vadd.xlane.f32.xlu0 %v1207
    %v1209 = vpop.xlane.xlu0 %1208
    %v1210 = vsel %vm442, %v1198, 0.0
    %1211 = vadd.xlane.f32.xlu0 %v1210
    %v1212 = vpop.xlane.xlu0 %1211
    %v1213 = vrcp.pop 32.0
    %v1214 = vmul.f32 %v1203, %v1213
    %v1215 = vmul.f32 %v1206, %v1213
    %v1216 = vmul.f32 %v1209, %v1213
    %v1217 = vmul.f32 %v1212, %v1213
    %v1218 = vsub.f32 %v1195, %v1214
    %v1219 = vsub.f32 %v1196, %v1215
    %v1220 = vsub.f32 %v1197, %v1216
    %v1221 = vsub.f32 %v1198, %v1217
    %v1222 = vmul.f32 %v1218, %v1218
    %v1223 = vmul.f32 %v1219, %v1219
    %v1224 = vmul.f32 %v1220, %v1220
    %v1225 = vmul.f32 %v1221, %v1221
    %v1226 = vsel %vm442, %v1222, 0.0
    %1227 = vadd.xlane.f32.xlu0 %v1226
    %v1228 = vpop.xlane.xlu0 %1227
    %v1229 = vsel %vm442, %v1223, 0.0
    %1230 = vadd.xlane.f32.xlu0 %v1229
    %v1231 = vpop.xlane.xlu0 %1230
    %v1232 = vsel %vm442, %v1224, 0.0
    %1233 = vadd.xlane.f32.xlu0 %v1232
    %v1234 = vpop.xlane.xlu0 %1233
    %v1235 = vsel %vm442, %v1225, 0.0
    %1236 = vadd.xlane.f32.xlu0 %v1235
    %v1237 = vpop.xlane.xlu0 %1236
    %v1238 = vmul.f32 %v1228, %v1213
    %v1239 = vmul.f32 %v1231, %v1213
    %v1240 = vmul.f32 %v1234, %v1213
    %v1241 = vmul.f32 %v1237, %v1213
    %v1242 = vadd.f32 %v1238, 1e-05
    %v1243 = vadd.f32 %v1239, 1e-05
    %v1244 = vadd.f32 %v1240, 1e-05
    %v1245 = vadd.f32 %v1241, 1e-05
    %v1246 = vrsqrt.pop %v1242
    %v1247 = vrsqrt.pop %v1243
    %v1248 = vrsqrt.pop %v1244
    %v1249 = vrsqrt.pop %v1245
    %v1250 = vmul.f32 %v1218, %v1246
    %v1251 = vmul.f32 %v1219, %v1247
    %v1252 = vmul.f32 %v1220, %v1248
    %v1253 = vmul.f32 %v1221, %v1249
    %v1254 = vlaneseq
    %v1255 = vshrl.u32 %v1254, 7
    %v1256 = vsub.s32 0, %v1255
    %v1257 = vrot.slane %v1199, %v1256
    %v1258 = vmul.f32 %v1250, %v1257
    %v1259 = vmul.f32 %v1251, %v1257
    %v1260 = vmul.f32 %v1252, %v1257
    %v1261 = vmul.f32 %v1253, %v1257
    %v1262 = vlaneseq
    %v1263 = vshrl.u32 %v1262, 7
    %v1264 = vsub.s32 0, %v1263
    %v1265 = vrot.slane %v1200, %v1264
    %v1266 = vadd.f32 %v1258, %v1265
    %v1267 = vadd.f32 %v1259, %v1265
    %v1268 = vadd.f32 %v1260, %v1265
    %v1269 = vadd.f32 %v1261, %v1265
    %v1270 = vpack.c.bf16 %v1267, %v1266
    %v1271 = vpack.c.bf16 %v1269, %v1268
    %v1272 = vld [vmem:[%s13] sm:$0xff]
    %v1273 = vld [vmem:[%s13 + $0x8] sm:$0xff]
    %v1274 = vld [vmem:[%s13 + $0x10] sm:$0xff]
    %v1275 = vld [vmem:[%s13 + $0x18] sm:$0xff]
    %v1276 = vld [vmem:[%s13 + $0x20] sm:$0xff]
    %v1277 = vld [vmem:[%s13 + $0x28] sm:$0xff]
    %v1278 = vld [vmem:[%s13 + $0x30] sm:$0xff]
    %v1279 = vld [vmem:[%s13 + $0x38] sm:$0xff]
    %v1280 = vld [vmem:[%s13 + $0x40] sm:$0xff]
    %v1281 = vld [vmem:[%s13 + $0x48] sm:$0xff]
    %v1282 = vld [vmem:[%s13 + $0x50] sm:$0xff]
    %v1283 = vld [vmem:[%s13 + $0x58] sm:$0xff]
    %v1284 = vld [vmem:[%s13 + $0x60] sm:$0xff]
    %v1285 = vld [vmem:[%s13 + $0x68] sm:$0xff]
    %v1286 = vld [vmem:[%s13 + $0x70] sm:$0xff]
    %v1287 = vld [vmem:[%s13 + $0x78] sm:$0xff]
    %v1288 = vld [vmem:[%s13 + $0x80] sm:$0xff]
    %v1289 = vld [vmem:[%s13 + $0x88] sm:$0xff]
    %v1290 = vld [vmem:[%s13 + $0x90] sm:$0xff]
    %v1291 = vld [vmem:[%s13 + $0x98] sm:$0xff]
    %v1292 = vld [vmem:[%s13 + $0xa0] sm:$0xff]
    %v1293 = vld [vmem:[%s13 + $0xa8] sm:$0xff]
    %v1294 = vld [vmem:[%s13 + $0xb0] sm:$0xff]
    %v1295 = vld [vmem:[%s13 + $0xb8] sm:$0xff]
    %v1296 = vld [vmem:[%s13 + $0xc0] sm:$0xff]
    %v1297 = vld [vmem:[%s13 + $0xc8] sm:$0xff]
    %v1298 = vld [vmem:[%s13 + $0xd0] sm:$0xff]
    %v1299 = vld [vmem:[%s13 + $0xd8] sm:$0xff]
    %v1300 = vld [vmem:[%s13 + $0xe0] sm:$0xff]
    %v1301 = vld [vmem:[%s13 + $0xe8] sm:$0xff]
    %v1302 = vld [vmem:[%s13 + $0xf0] sm:$0xff]
    %v1303 = vld [vmem:[%s13 + $0xf8] sm:$0xff]
    %v1304 = vld [vmem:[%s14] ss:$2 sm:$0xff]
    %s1305 = scalar_lea.vmem %s14, 16
    %v1306 = vld [vmem:[%s1305] ss:$2 sm:$0xff]
    %v1309 = vlaneseq
    %v1310 = vshrl.u32 %v1309, 7
    %v1311 = vsub.s32 0, %v1310
    %v1312 = vrot.slane %v1304, %v1311
    %v1313 = vlaneseq
    %v1314 = vshrl.u32 %v1313, 7
    %v1315 = vsub.s32 1, %v1314
    %v1316 = vrot.slane %v1304, %v1315
    %v1317 = vlaneseq
    %v1318 = vshrl.u32 %v1317, 7
    %v1319 = vsub.s32 2, %v1318
    %v1320 = vrot.slane %v1304, %v1319
    %v1321 = vlaneseq
    %v1322 = vshrl.u32 %v1321, 7
    %v1323 = vsub.s32 3, %v1322
    %v1324 = vrot.slane %v1304, %v1323
    %v1325 = vlaneseq
    %v1326 = vshrl.u32 %v1325, 7
    %v1327 = vsub.s32 4, %v1326
    %v1328 = vrot.slane %v1304, %v1327
    %v1329 = vlaneseq
    %v1330 = vshrl.u32 %v1329, 7
    %v1331 = vsub.s32 5, %v1330
    %v1332 = vrot.slane %v1304, %v1331
    %v1333 = vlaneseq
    %v1334 = vshrl.u32 %v1333, 7
    %v1335 = vsub.s32 6, %v1334
    %v1336 = vrot.slane %v1304, %v1335
    %v1337 = vlaneseq
    %v1338 = vshrl.u32 %v1337, 7
    %v1339 = vsub.s32 7, %v1338
    %v1340 = vrot.slane %v1304, %v1339
    %v1341 = vlaneseq
    %v1342 = vshrl.u32 %v1341, 7
    %v1343 = vsub.s32 0, %v1342
    %v1344 = vrot.slane %v1306, %v1343
    %v1345 = vlaneseq
    %v1346 = vshrl.u32 %v1345, 7
    %v1347 = vsub.s32 1, %v1346
    %v1348 = vrot.slane %v1306, %v1347
    %v1349 = vlaneseq
    %v1350 = vshrl.u32 %v1349, 7
    %v1351 = vsub.s32 2, %v1350
    %v1352 = vrot.slane %v1306, %v1351
    %v1353 = vlaneseq
    %v1354 = vshrl.u32 %v1353, 7
    %v1355 = vsub.s32 3, %v1354
    %v1356 = vrot.slane %v1306, %v1355
    %v1357 = vlaneseq
    %v1358 = vshrl.u32 %v1357, 7
    %v1359 = vsub.s32 4, %v1358
    %v1360 = vrot.slane %v1306, %v1359
    %v1361 = vlaneseq
    %v1362 = vshrl.u32 %v1361, 7
    %v1363 = vsub.s32 5, %v1362
    %v1364 = vrot.slane %v1306, %v1363
    %v1365 = vlaneseq
    %v1366 = vshrl.u32 %v1365, 7
    %v1367 = vsub.s32 6, %v1366
    %v1368 = vrot.slane %v1306, %v1367
    %v1369 = vlaneseq
    %v1370 = vshrl.u32 %v1369, 7
    %v1371 = vsub.s32 7, %v1370
    %v1372 = vrot.slane %v1306, %v1371
    %v1421 = vunpack.c.l.b16 %v1272
    %v1422 = vunpack.c.h.b16 %v1272
    %v1423 = vunpack.c.l.b16 %v1273
    %v1424 = vunpack.c.h.b16 %v1273
    %v1425 = vunpack.c.l.b16 %v1274
    %v1426 = vunpack.c.h.b16 %v1274
    %v1427 = vunpack.c.l.b16 %v1275
    %v1428 = vunpack.c.h.b16 %v1275
    %v1429 = vunpack.c.l.b16 %v1276
    %v1430 = vunpack.c.h.b16 %v1276
    %v1431 = vunpack.c.l.b16 %v1277
    %v1432 = vunpack.c.h.b16 %v1277
    %v1433 = vunpack.c.l.b16 %v1278
    %v1434 = vunpack.c.h.b16 %v1278
    %v1435 = vunpack.c.l.b16 %v1279
    %v1436 = vunpack.c.h.b16 %v1279
    %v1437 = vunpack.c.l.b16 %v1280
    %v1438 = vunpack.c.h.b16 %v1280
    %v1439 = vunpack.c.l.b16 %v1281
    %v1440 = vunpack.c.h.b16 %v1281
    %v1441 = vunpack.c.l.b16 %v1282
    %v1442 = vunpack.c.h.b16 %v1282
    %v1443 = vunpack.c.l.b16 %v1283
    %v1444 = vunpack.c.h.b16 %v1283
    %v1445 = vunpack.c.l.b16 %v1284
    %v1446 = vunpack.c.h.b16 %v1284
    %v1447 = vunpack.c.l.b16 %v1285
    %v1448 = vunpack.c.h.b16 %v1285
    %v1449 = vunpack.c.l.b16 %v1286
    %v1450 = vunpack.c.h.b16 %v1286
    %v1451 = vunpack.c.l.b16 %v1287
    %v1452 = vunpack.c.h.b16 %v1287
    %v1453 = vunpack.c.l.b16 %v1288
    %v1454 = vunpack.c.h.b16 %v1288
    %v1455 = vunpack.c.l.b16 %v1289
    %v1456 = vunpack.c.h.b16 %v1289
    %v1457 = vunpack.c.l.b16 %v1290
    %v1458 = vunpack.c.h.b16 %v1290
    %v1459 = vunpack.c.l.b16 %v1291
    %v1460 = vunpack.c.h.b16 %v1291
    %v1461 = vunpack.c.l.b16 %v1292
    %v1462 = vunpack.c.h.b16 %v1292
    %v1463 = vunpack.c.l.b16 %v1293
    %v1464 = vunpack.c.h.b16 %v1293
    %v1465 = vunpack.c.l.b16 %v1294
    %v1466 = vunpack.c.h.b16 %v1294
    %v1467 = vunpack.c.l.b16 %v1295
    %v1468 = vunpack.c.h.b16 %v1295
    %v1469 = vunpack.c.l.b16 %v1296
    %v1470 = vunpack.c.h.b16 %v1296
    %v1471 = vunpack.c.l.b16 %v1297
    %v1472 = vunpack.c.h.b16 %v1297
    %v1473 = vunpack.c.l.b16 %v1298
    %v1474 = vunpack.c.h.b16 %v1298
    %v1475 = vunpack.c.l.b16 %v1299
    %v1476 = vunpack.c.h.b16 %v1299
    %v1477 = vunpack.c.l.b16 %v1300
    %v1478 = vunpack.c.h.b16 %v1300
    %v1479 = vunpack.c.l.b16 %v1301
    %v1480 = vunpack.c.h.b16 %v1301
    %v1481 = vunpack.c.l.b16 %v1302
    %v1482 = vunpack.c.h.b16 %v1302
    %v1483 = vunpack.c.l.b16 %v1303
    %v1484 = vunpack.c.h.b16 %v1303
    %v1485 = vpack.c.b16 %v1437, %v1421
    %v1486 = vpack.c.b16 %v1438, %v1422
    %v1487 = vpack.c.b16 %v1439, %v1423
    %v1488 = vpack.c.b16 %v1440, %v1424
    %v1489 = vpack.c.b16 %v1441, %v1425
    %v1490 = vpack.c.b16 %v1442, %v1426
    %v1491 = vpack.c.b16 %v1443, %v1427
    %v1492 = vpack.c.b16 %v1444, %v1428
    %v1493 = vpack.c.b16 %v1445, %v1429
    %v1494 = vpack.c.b16 %v1446, %v1430
    %v1495 = vpack.c.b16 %v1447, %v1431
    %v1496 = vpack.c.b16 %v1448, %v1432
    %v1497 = vpack.c.b16 %v1449, %v1433
    %v1498 = vpack.c.b16 %v1450, %v1434
    %v1499 = vpack.c.b16 %v1451, %v1435
    %v1500 = vpack.c.b16 %v1452, %v1436
    %v1501 = vpack.c.b16 %v1469, %v1453
    %v1502 = vpack.c.b16 %v1470, %v1454
    %v1503 = vpack.c.b16 %v1471, %v1455
    %v1504 = vpack.c.b16 %v1472, %v1456
    %v1505 = vpack.c.b16 %v1473, %v1457
    %v1506 = vpack.c.b16 %v1474, %v1458
    %v1507 = vpack.c.b16 %v1475, %v1459
    %v1508 = vpack.c.b16 %v1476, %v1460
    %v1509 = vpack.c.b16 %v1477, %v1461
    %v1510 = vpack.c.b16 %v1478, %v1462
    %v1511 = vpack.c.b16 %v1479, %v1463
    %v1512 = vpack.c.b16 %v1480, %v1464
    %v1513 = vpack.c.b16 %v1481, %v1465
    %v1514 = vpack.c.b16 %v1482, %v1466
    %v1515 = vpack.c.b16 %v1483, %v1467
    %v1516 = vpack.c.b16 %v1484, %v1468
    %v1550 = vsel %vm442, %v1270, 0
    %v1553 = vsel %vm442, %v1271, 0
    %1555 = vmatprep.subr.bf16.mxu0 %v1486
    %1556 = vmatpush1.bf16.msra.mxu0 %v1485
    %1557 = vmatprep.subr.bf16.mxu0 %v1502
    %1558 = vmatpush1.bf16.msra.mxu0 %v1501
    %1559 = vmatprep.subr.bf16.mxu0 0
    %1560 = vmatpush1.bf16.msra.mxu0 0
    %1561 = vmatprep.subr.bf16.mxu0 0
    %1562 = vmatpush1.bf16.msra.mxu0 0
    %1563 = vmatprep.subr.bf16.mxu0 0
    %1564 = vmatpush1.bf16.msra.mxu0 0
    %1565 = vmatprep.subr.bf16.mxu0 0
    %1566 = vmatpush1.bf16.msra.mxu0 0
    %1567 = vmatprep.subr.bf16.mxu0 0
    %1568 = vmatpush1.bf16.msra.mxu0 0
    %1569 = vmatprep.subr.bf16.mxu0 0
    %1570 = vmatpush1.bf16.msra.mxu0 0
    %1571 = vmatprep.subr.bf16.mxu0 0
    %1572 = vmatpush1.bf16.msra.mxu0 0
    %1573 = vmatprep.subr.bf16.mxu0 0
    %1574 = vmatpush1.bf16.msra.mxu0 0
    %1575 = vmatprep.subr.bf16.mxu0 0
    %1576 = vmatpush1.bf16.msra.mxu0 0
    %1577 = vmatprep.subr.bf16.mxu0 0
    %1578 = vmatpush1.bf16.msra.mxu0 0
    %1579 = vmatprep.subr.bf16.mxu0 0
    %1580 = vmatpush1.bf16.msra.mxu0 0
    %1581 = vmatprep.subr.bf16.mxu0 0
    %1582 = vmatpush1.bf16.msra.mxu0 0
    %1583 = vmatprep.subr.bf16.mxu0 0
    %1584 = vmatpush1.bf16.msra.mxu0 0
    %1585 = vmatprep.subr.bf16.mxu0 0
    %1586 = vmatpush1.bf16.msra.mxu0 0
    %1587 = vmatprep.mubr.bf16.mxu0 0
    %1588 = vmatmul.mubr.bf16.gmra.mrb[0].mxu0 %v1550
    %v1589 = vpop.f32.mrb[0].mxu0
    %v1590 = vadd.f32 %v1312, %v1589
    %v1591 = vpop.f32.mrb[0].mxu0
    %v1592 = vadd.f32 %v1316, %v1591
    %v1593 = vpop.f32.mrb[0].mxu0
    %v1594 = vadd.f32 %v1312, %v1593
    %v1595 = vpop.f32.mrb[0].mxu0
    %v1596 = vadd.f32 %v1316, %v1595
    %1597 = vmatprep.mubr.bf16.mxu0 0
    %1598 = vmatmul.mubr.bf16.gmra.mrb[0].mxu0 %v1553
    %v1599 = vpop.f32.mrb[0].mxu0
    %v1600 = vadd.f32 %v1312, %v1599
    %v1601 = vpop.f32.mrb[0].mxu0
    %v1602 = vadd.f32 %v1316, %v1601
    %v1603 = vpop.f32.mrb[0].mxu0
    %v1604 = vadd.f32 %v1312, %v1603
    %v1605 = vpop.f32.mrb[0].mxu0
    %v1606 = vadd.f32 %v1316, %v1605
    %1607 = vdwg.mxu0
    %1608 = vmatprep.subr.bf16.mxu0 %v1488
    %1609 = vmatpush1.bf16.msra.mxu0 %v1487
    %1610 = vmatprep.subr.bf16.mxu0 %v1504
    %1611 = vmatpush1.bf16.msra.mxu0 %v1503
    %1612 = vmatprep.subr.bf16.mxu0 0
    %1613 = vmatpush1.bf16.msra.mxu0 0
    %1614 = vmatprep.subr.bf16.mxu0 0
    %1615 = vmatpush1.bf16.msra.mxu0 0
    %1616 = vmatprep.subr.bf16.mxu0 0
    %1617 = vmatpush1.bf16.msra.mxu0 0
    %1618 = vmatprep.subr.bf16.mxu0 0
    %1619 = vmatpush1.bf16.msra.mxu0 0
    %1620 = vmatprep.subr.bf16.mxu0 0
    %1621 = vmatpush1.bf16.msra.mxu0 0
    %1622 = vmatprep.subr.bf16.mxu0 0
    %1623 = vmatpush1.bf16.msra.mxu0 0
    %1624 = vmatprep.subr.bf16.mxu0 0
    %1625 = vmatpush1.bf16.msra.mxu0 0
    %1626 = vmatprep.subr.bf16.mxu0 0
    %1627 = vmatpush1.bf16.msra.mxu0 0
    %1628 = vmatprep.subr.bf16.mxu0 0
    %1629 = vmatpush1.bf16.msra.mxu0 0
    %1630 = vmatprep.subr.bf16.mxu0 0
    %1631 = vmatpush1.bf16.msra.mxu0 0
    %1632 = vmatprep.subr.bf16.mxu0 0
    %1633 = vmatpush1.bf16.msra.mxu0 0
    %1634 = vmatprep.subr.bf16.mxu0 0
    %1635 = vmatpush1.bf16.msra.mxu0 0
    %1636 = vmatprep.subr.bf16.mxu0 0
    %1637 = vmatpush1.bf16.msra.mxu0 0
    %1638 = vmatprep.subr.bf16.mxu0 0
    %1639 = vmatpush1.bf16.msra.mxu0 0
    %1640 = vmatprep.mubr.bf16.mxu0 0
    %1641 = vmatmul.mubr.bf16.gmra.mrb[0].mxu0 %v1550
    %v1642 = vpop.f32.mrb[0].mxu0
    %v1643 = vadd.f32 %v1320, %v1642
    %v1644 = vpop.f32.mrb[0].mxu0
    %v1645 = vadd.f32 %v1324, %v1644
    %v1646 = vpop.f32.mrb[0].mxu0
    %v1647 = vadd.f32 %v1320, %v1646
    %v1648 = vpop.f32.mrb[0].mxu0
    %v1649 = vadd.f32 %v1324, %v1648
    %1650 = vmatprep.mubr.bf16.mxu0 0
    %1651 = vmatmul.mubr.bf16.gmra.mrb[0].mxu0 %v1553
    %v1652 = vpop.f32.mrb[0].mxu0
    %v1653 = vadd.f32 %v1320, %v1652
    %v1654 = vpop.f32.mrb[0].mxu0
    %v1655 = vadd.f32 %v1324, %v1654
    %v1656 = vpop.f32.mrb[0].mxu0
    %v1657 = vadd.f32 %v1320, %v1656
    %v1658 = vpop.f32.mrb[0].mxu0
    %v1659 = vadd.f32 %v1324, %v1658
    %1660 = vdwg.mxu0
    %1661 = vmatprep.subr.bf16.mxu0 %v1490
    %1662 = vmatpush1.bf16.msra.mxu0 %v1489
    %1663 = vmatprep.subr.bf16.mxu0 %v1506
    %1664 = vmatpush1.bf16.msra.mxu0 %v1505
    %1665 = vmatprep.subr.bf16.mxu0 0
    %1666 = vmatpush1.bf16.msra.mxu0 0
    %1667 = vmatprep.subr.bf16.mxu0 0
    %1668 = vmatpush1.bf16.msra.mxu0 0
    %1669 = vmatprep.subr.bf16.mxu0 0
    %1670 = vmatpush1.bf16.msra.mxu0 0
    %1671 = vmatprep.subr.bf16.mxu0 0
    %1672 = vmatpush1.bf16.msra.mxu0 0
    %1673 = vmatprep.subr.bf16.mxu0 0
    %1674 = vmatpush1.bf16.msra.mxu0 0
    %1675 = vmatprep.subr.bf16.mxu0 0
    %1676 = vmatpush1.bf16.msra.mxu0 0
    %1677 = vmatprep.subr.bf16.mxu0 0
    %1678 = vmatpush1.bf16.msra.mxu0 0
    %1679 = vmatprep.subr.bf16.mxu0 0
    %1680 = vmatpush1.bf16.msra.mxu0 0
    %1681 = vmatprep.subr.bf16.mxu0 0
    %1682 = vmatpush1.bf16.msra.mxu0 0
    %1683 = vmatprep.subr.bf16.mxu0 0
    %1684 = vmatpush1.bf16.msra.mxu0 0
    %1685 = vmatprep.subr.bf16.mxu0 0
    %1686 = vmatpush1.bf16.msra.mxu0 0
    %1687 = vmatprep.subr.bf16.mxu0 0
    %1688 = vmatpush1.bf16.msra.mxu0 0
    %1689 = vmatprep.subr.bf16.mxu0 0
    %1690 = vmatpush1.bf16.msra.mxu0 0
    %1691 = vmatprep.subr.bf16.mxu0 0
    %1692 = vmatpush1.bf16.msra.mxu0 0
    %1693 = vmatprep.mubr.bf16.mxu0 0
    %1694 = vmatmul.mubr.bf16.gmra.mrb[0].mxu0 %v1550
    %v1695 = vpop.f32.mrb[0].mxu0
    %v1696 = vadd.f32 %v1328, %v1695
    %v1697 = vpop.f32.mrb[0].mxu0
    %v1698 = vadd.f32 %v1332, %v1697
    %v1699 = vpop.f32.mrb[0].mxu0
    %v1700 = vadd.f32 %v1328, %v1699
    %v1701 = vpop.f32.mrb[0].mxu0
    %v1702 = vadd.f32 %v1332, %v1701
    %1703 = vmatprep.mubr.bf16.mxu0 0
    %1704 = vmatmul.mubr.bf16.gmra.mrb[0].mxu0 %v1553
    %v1705 = vpop.f32.mrb[0].mxu0
    %v1706 = vadd.f32 %v1328, %v1705
    %v1707 = vpop.f32.mrb[0].mxu0
    %v1708 = vadd.f32 %v1332, %v1707
    %v1709 = vpop.f32.mrb[0].mxu0
    %v1710 = vadd.f32 %v1328, %v1709
    %v1711 = vpop.f32.mrb[0].mxu0
    %v1712 = vadd.f32 %v1332, %v1711
    %1713 = vdwg.mxu0
    %1714 = vmatprep.subr.bf16.mxu0 %v1492
    %1715 = vmatpush1.bf16.msra.mxu0 %v1491
    %1716 = vmatprep.subr.bf16.mxu0 %v1508
    %1717 = vmatpush1.bf16.msra.mxu0 %v1507
    %1718 = vmatprep.subr.bf16.mxu0 0
    %1719 = vmatpush1.bf16.msra.mxu0 0
    %1720 = vmatprep.subr.bf16.mxu0 0
    %1721 = vmatpush1.bf16.msra.mxu0 0
    %1722 = vmatprep.subr.bf16.mxu0 0
    %1723 = vmatpush1.bf16.msra.mxu0 0
    %1724 = vmatprep.subr.bf16.mxu0 0
    %1725 = vmatpush1.bf16.msra.mxu0 0
    %1726 = vmatprep.subr.bf16.mxu0 0
    %1727 = vmatpush1.bf16.msra.mxu0 0
    %1728 = vmatprep.subr.bf16.mxu0 0
    %1729 = vmatpush1.bf16.msra.mxu0 0
    %1730 = vmatprep.subr.bf16.mxu0 0
    %1731 = vmatpush1.bf16.msra.mxu0 0
    %1732 = vmatprep.subr.bf16.mxu0 0
    %1733 = vmatpush1.bf16.msra.mxu0 0
    %1734 = vmatprep.subr.bf16.mxu0 0
    %1735 = vmatpush1.bf16.msra.mxu0 0
    %1736 = vmatprep.subr.bf16.mxu0 0
    %1737 = vmatpush1.bf16.msra.mxu0 0
    %1738 = vmatprep.subr.bf16.mxu0 0
    %1739 = vmatpush1.bf16.msra.mxu0 0
    %1740 = vmatprep.subr.bf16.mxu0 0
    %1741 = vmatpush1.bf16.msra.mxu0 0
    %1742 = vmatprep.subr.bf16.mxu0 0
    %1743 = vmatpush1.bf16.msra.mxu0 0
    %1744 = vmatprep.subr.bf16.mxu0 0
    %1745 = vmatpush1.bf16.msra.mxu0 0
    %1746 = vmatprep.mubr.bf16.mxu0 0
    %1747 = vmatmul.mubr.bf16.gmra.mrb[0].mxu0 %v1550
    %v1748 = vpop.f32.mrb[0].mxu0
    %v1749 = vadd.f32 %v1336, %v1748
    %v1750 = vpop.f32.mrb[0].mxu0
    %v1751 = vadd.f32 %v1340, %v1750
    %v1752 = vpop.f32.mrb[0].mxu0
    %v1753 = vadd.f32 %v1336, %v1752
    %v1754 = vpop.f32.mrb[0].mxu0
    %v1755 = vadd.f32 %v1340, %v1754
    %1756 = vmatprep.mubr.bf16.mxu0 0
    %1757 = vmatmul.mubr.bf16.gmra.mrb[0].mxu0 %v1553
    %v1758 = vpop.f32.mrb[0].mxu0
    %v1759 = vadd.f32 %v1336, %v1758
    %v1760 = vpop.f32.mrb[0].mxu0
    %v1761 = vadd.f32 %v1340, %v1760
    %v1762 = vpop.f32.mrb[0].mxu0
    %v1763 = vadd.f32 %v1336, %v1762
    %v1764 = vpop.f32.mrb[0].mxu0
    %v1765 = vadd.f32 %v1340, %v1764
    %1766 = vdwg.mxu0
    %1767 = vmatprep.subr.bf16.mxu0 %v1494
    %1768 = vmatpush1.bf16.msra.mxu0 %v1493
    %1769 = vmatprep.subr.bf16.mxu0 %v1510
    %1770 = vmatpush1.bf16.msra.mxu0 %v1509
    %1771 = vmatprep.subr.bf16.mxu0 0
    %1772 = vmatpush1.bf16.msra.mxu0 0
    %1773 = vmatprep.subr.bf16.mxu0 0
    %1774 = vmatpush1.bf16.msra.mxu0 0
    %1775 = vmatprep.subr.bf16.mxu0 0
    %1776 = vmatpush1.bf16.msra.mxu0 0
    %1777 = vmatprep.subr.bf16.mxu0 0
    %1778 = vmatpush1.bf16.msra.mxu0 0
    %1779 = vmatprep.subr.bf16.mxu0 0
    %1780 = vmatpush1.bf16.msra.mxu0 0
    %1781 = vmatprep.subr.bf16.mxu0 0
    %1782 = vmatpush1.bf16.msra.mxu0 0
    %1783 = vmatprep.subr.bf16.mxu0 0
    %1784 = vmatpush1.bf16.msra.mxu0 0
    %1785 = vmatprep.subr.bf16.mxu0 0
    %1786 = vmatpush1.bf16.msra.mxu0 0
    %1787 = vmatprep.subr.bf16.mxu0 0
    %1788 = vmatpush1.bf16.msra.mxu0 0
    %1789 = vmatprep.subr.bf16.mxu0 0
    %1790 = vmatpush1.bf16.msra.mxu0 0
    %1791 = vmatprep.subr.bf16.mxu0 0
    %1792 = vmatpush1.bf16.msra.mxu0 0
    %1793 = vmatprep.subr.bf16.mxu0 0
    %1794 = vmatpush1.bf16.msra.mxu0 0
    %1795 = vmatprep.subr.bf16.mxu0 0
    %1796 = vmatpush1.bf16.msra.mxu0 0
    %1797 = vmatprep.subr.bf16.mxu0 0
    %1798 = vmatpush1.bf16.msra.mxu0 0
    %1799 = vmatprep.mubr.bf16.mxu0 0
    %1800 = vmatmul.mubr.bf16.gmra.mrb[0].mxu0 %v1550
    %v1801 = vpop.f32.mrb[0].mxu0
    %v1802 = vadd.f32 %v1344, %v1801
    %v1803 = vpop.f32.mrb[0].mxu0
    %v1804 = vadd.f32 %v1348, %v1803
    %v1805 = vpop.f32.mrb[0].mxu0
    %v1806 = vadd.f32 %v1344, %v1805
    %v1807 = vpop.f32.mrb[0].mxu0
    %v1808 = vadd.f32 %v1348, %v1807
    %1809 = vmatprep.mubr.bf16.mxu0 0
    %1810 = vmatmul.mubr.bf16.gmra.mrb[0].mxu0 %v1553
    %v1811 = vpop.f32.mrb[0].mxu0
    %v1812 = vadd.f32 %v1344, %v1811
    %v1813 = vpop.f32.mrb[0].mxu0
    %v1814 = vadd.f32 %v1348, %v1813
    %v1815 = vpop.f32.mrb[0].mxu0
    %v1816 = vadd.f32 %v1344, %v1815
    %v1817 = vpop.f32.mrb[0].mxu0
    %v1818 = vadd.f32 %v1348, %v1817
    %1819 = vdwg.mxu0
    %1820 = vmatprep.subr.bf16.mxu0 %v1496
    %1821 = vmatpush1.bf16.msra.mxu0 %v1495
    %1822 = vmatprep.subr.bf16.mxu0 %v1512
    %1823 = vmatpush1.bf16.msra.mxu0 %v1511
    %1824 = vmatprep.subr.bf16.mxu0 0
    %1825 = vmatpush1.bf16.msra.mxu0 0
    %1826 = vmatprep.subr.bf16.mxu0 0
    %1827 = vmatpush1.bf16.msra.mxu0 0
    %1828 = vmatprep.subr.bf16.mxu0 0
    %1829 = vmatpush1.bf16.msra.mxu0 0
    %1830 = vmatprep.subr.bf16.mxu0 0
    %1831 = vmatpush1.bf16.msra.mxu0 0
    %1832 = vmatprep.subr.bf16.mxu0 0
    %1833 = vmatpush1.bf16.msra.mxu0 0
    %1834 = vmatprep.subr.bf16.mxu0 0
    %1835 = vmatpush1.bf16.msra.mxu0 0
    %1836 = vmatprep.subr.bf16.mxu0 0
    %1837 = vmatpush1.bf16.msra.mxu0 0
    %1838 = vmatprep.subr.bf16.mxu0 0
    %1839 = vmatpush1.bf16.msra.mxu0 0
    %1840 = vmatprep.subr.bf16.mxu0 0
    %1841 = vmatpush1.bf16.msra.mxu0 0
    %1842 = vmatprep.subr.bf16.mxu0 0
    %1843 = vmatpush1.bf16.msra.mxu0 0
    %1844 = vmatprep.subr.bf16.mxu0 0
    %1845 = vmatpush1.bf16.msra.mxu0 0
    %1846 = vmatprep.subr.bf16.mxu0 0
    %1847 = vmatpush1.bf16.msra.mxu0 0
    %1848 = vmatprep.subr.bf16.mxu0 0
    %1849 = vmatpush1.bf16.msra.mxu0 0
    %1850 = vmatprep.subr.bf16.mxu0 0
    %1851 = vmatpush1.bf16.msra.mxu0 0
    %1852 = vmatprep.mubr.bf16.mxu0 0
    %1853 = vmatmul.mubr.bf16.gmra.mrb[0].mxu0 %v1550
    %v1854 = vpop.f32.mrb[0].mxu0
    %v1855 = vadd.f32 %v1352, %v1854
    %v1856 = vpop.f32.mrb[0].mxu0
    %v1857 = vadd.f32 %v1356, %v1856
    %v1858 = vpop.f32.mrb[0].mxu0
    %v1859 = vadd.f32 %v1352, %v1858
    %v1860 = vpop.f32.mrb[0].mxu0
    %v1861 = vadd.f32 %v1356, %v1860
    %1862 = vmatprep.mubr.bf16.mxu0 0
    %1863 = vmatmul.mubr.bf16.gmra.mrb[0].mxu0 %v1553
    %v1864 = vpop.f32.mrb[0].mxu0
    %v1865 = vadd.f32 %v1352, %v1864
    %v1866 = vpop.f32.mrb[0].mxu0
    %v1867 = vadd.f32 %v1356, %v1866
    %v1868 = vpop.f32.mrb[0].mxu0
    %v1869 = vadd.f32 %v1352, %v1868
    %v1870 = vpop.f32.mrb[0].mxu0
    %v1871 = vadd.f32 %v1356, %v1870
    %1872 = vdwg.mxu0
    %1873 = vmatprep.subr.bf16.mxu0 %v1498
    %1874 = vmatpush1.bf16.msra.mxu0 %v1497
    %1875 = vmatprep.subr.bf16.mxu0 %v1514
    %1876 = vmatpush1.bf16.msra.mxu0 %v1513
    %1877 = vmatprep.subr.bf16.mxu0 0
    %1878 = vmatpush1.bf16.msra.mxu0 0
    %1879 = vmatprep.subr.bf16.mxu0 0
    %1880 = vmatpush1.bf16.msra.mxu0 0
    %1881 = vmatprep.subr.bf16.mxu0 0
    %1882 = vmatpush1.bf16.msra.mxu0 0
    %1883 = vmatprep.subr.bf16.mxu0 0
    %1884 = vmatpush1.bf16.msra.mxu0 0
    %1885 = vmatprep.subr.bf16.mxu0 0
    %1886 = vmatpush1.bf16.msra.mxu0 0
    %1887 = vmatprep.subr.bf16.mxu0 0
    %1888 = vmatpush1.bf16.msra.mxu0 0
    %1889 = vmatprep.subr.bf16.mxu0 0
    %1890 = vmatpush1.bf16.msra.mxu0 0
    %1891 = vmatprep.subr.bf16.mxu0 0
    %1892 = vmatpush1.bf16.msra.mxu0 0
    %1893 = vmatprep.subr.bf16.mxu0 0
    %1894 = vmatpush1.bf16.msra.mxu0 0
    %1895 = vmatprep.subr.bf16.mxu0 0
    %1896 = vmatpush1.bf16.msra.mxu0 0
    %1897 = vmatprep.subr.bf16.mxu0 0
    %1898 = vmatpush1.bf16.msra.mxu0 0
    %1899 = vmatprep.subr.bf16.mxu0 0
    %1900 = vmatpush1.bf16.msra.mxu0 0
    %1901 = vmatprep.subr.bf16.mxu0 0
    %1902 = vmatpush1.bf16.msra.mxu0 0
    %1903 = vmatprep.subr.bf16.mxu0 0
    %1904 = vmatpush1.bf16.msra.mxu0 0
    %1905 = vmatprep.mubr.bf16.mxu0 0
    %1906 = vmatmul.mubr.bf16.gmra.mrb[0].mxu0 %v1550
    %v1907 = vpop.f32.mrb[0].mxu0
    %v1908 = vadd.f32 %v1360, %v1907
    %v1909 = vpop.f32.mrb[0].mxu0
    %v1910 = vadd.f32 %v1364, %v1909
    %v1911 = vpop.f32.mrb[0].mxu0
    %v1912 = vadd.f32 %v1360, %v1911
    %v1913 = vpop.f32.mrb[0].mxu0
    %v1914 = vadd.f32 %v1364, %v1913
    %1915 = vmatprep.mubr.bf16.mxu0 0
    %1916 = vmatmul.mubr.bf16.gmra.mrb[0].mxu0 %v1553
    %v1917 = vpop.f32.mrb[0].mxu0
    %v1918 = vadd.f32 %v1360, %v1917
    %v1919 = vpop.f32.mrb[0].mxu0
    %v1920 = vadd.f32 %v1364, %v1919
    %v1921 = vpop.f32.mrb[0].mxu0
    %v1922 = vadd.f32 %v1360, %v1921
    %v1923 = vpop.f32.mrb[0].mxu0
    %v1924 = vadd.f32 %v1364, %v1923
    %1925 = vdwg.mxu0
    %1926 = vmatprep.subr.bf16.mxu0 %v1500
    %1927 = vmatpush1.bf16.msra.mxu0 %v1499
    %1928 = vmatprep.subr.bf16.mxu0 %v1516
    %1929 = vmatpush1.bf16.msra.mxu0 %v1515
    %1930 = vmatprep.subr.bf16.mxu0 0
    %1931 = vmatpush1.bf16.msra.mxu0 0
    %1932 = vmatprep.subr.bf16.mxu0 0
    %1933 = vmatpush1.bf16.msra.mxu0 0
    %1934 = vmatprep.subr.bf16.mxu0 0
    %1935 = vmatpush1.bf16.msra.mxu0 0
    %1936 = vmatprep.subr.bf16.mxu0 0
    %1937 = vmatpush1.bf16.msra.mxu0 0
    %1938 = vmatprep.subr.bf16.mxu0 0
    %1939 = vmatpush1.bf16.msra.mxu0 0
    %1940 = vmatprep.subr.bf16.mxu0 0
    %1941 = vmatpush1.bf16.msra.mxu0 0
    %1942 = vmatprep.subr.bf16.mxu0 0
    %1943 = vmatpush1.bf16.msra.mxu0 0
    %1944 = vmatprep.subr.bf16.mxu0 0
    %1945 = vmatpush1.bf16.msra.mxu0 0
    %1946 = vmatprep.subr.bf16.mxu0 0
    %1947 = vmatpush1.bf16.msra.mxu0 0
    %1948 = vmatprep.subr.bf16.mxu0 0
    %1949 = vmatpush1.bf16.msra.mxu0 0
    %1950 = vmatprep.subr.bf16.mxu0 0
    %1951 = vmatpush1.bf16.msra.mxu0 0
    %1952 = vmatprep.subr.bf16.mxu0 0
    %1953 = vmatpush1.bf16.msra.mxu0 0
    %1954 = vmatprep.subr.bf16.mxu0 0
    %1955 = vmatpush1.bf16.msra.mxu0 0
    %1956 = vmatprep.subr.bf16.mxu0 0
    %1957 = vmatpush1.bf16.msra.mxu0 0
    %1958 = vmatprep.mubr.bf16.mxu0 0
    %1959 = vmatmul.mubr.bf16.gmra.mrb[0].mxu0 %v1550
    %v1960 = vpop.f32.mrb[0].mxu0
    %v1961 = vadd.f32 %v1368, %v1960
    %v1962 = vpop.f32.mrb[0].mxu0
    %v1963 = vadd.f32 %v1372, %v1962
    %v1964 = vpop.f32.mrb[0].mxu0
    %v1965 = vadd.f32 %v1368, %v1964
    %v1966 = vpop.f32.mrb[0].mxu0
    %v1967 = vadd.f32 %v1372, %v1966
    %1968 = vmatprep.mubr.bf16.mxu0 0
    %1969 = vmatmul.mubr.bf16.gmra.mrb[0].mxu0 %v1553
    %v1970 = vpop.f32.mrb[0].mxu0
    %v1971 = vadd.f32 %v1368, %v1970
    %v1972 = vpop.f32.mrb[0].mxu0
    %v1973 = vadd.f32 %v1372, %v1972
    %v1974 = vpop.f32.mrb[0].mxu0
    %v1975 = vadd.f32 %v1368, %v1974
    %v1976 = vpop.f32.mrb[0].mxu0
    %v1977 = vadd.f32 %v1372, %v1976
    %1978 = vdwg.mxu0
    %v1979 = vmax.f32 %v1590, 0.0
    %v1980 = vmax.f32 %v1592, 0.0
    %v1981 = vmax.f32 %v1643, 0.0
    %v1982 = vmax.f32 %v1645, 0.0
    %v1983 = vmax.f32 %v1696, 0.0
    %v1984 = vmax.f32 %v1698, 0.0
    %v1985 = vmax.f32 %v1749, 0.0
    %v1986 = vmax.f32 %v1751, 0.0
    %v1987 = vmax.f32 %v1802, 0.0
    %v1988 = vmax.f32 %v1804, 0.0
    %v1989 = vmax.f32 %v1855, 0.0
    %v1990 = vmax.f32 %v1857, 0.0
    %v1991 = vmax.f32 %v1908, 0.0
    %v1992 = vmax.f32 %v1910, 0.0
    %v1993 = vmax.f32 %v1961, 0.0
    %v1994 = vmax.f32 %v1963, 0.0
    %v1995 = vmax.f32 %v1594, 0.0
    %v1996 = vmax.f32 %v1596, 0.0
    %v1997 = vmax.f32 %v1647, 0.0
    %v1998 = vmax.f32 %v1649, 0.0
    %v1999 = vmax.f32 %v1700, 0.0
    %v2000 = vmax.f32 %v1702, 0.0
    %v2001 = vmax.f32 %v1753, 0.0
    %v2002 = vmax.f32 %v1755, 0.0
    %v2003 = vmax.f32 %v1806, 0.0
    %v2004 = vmax.f32 %v1808, 0.0
    %v2005 = vmax.f32 %v1859, 0.0
    %v2006 = vmax.f32 %v1861, 0.0
    %v2007 = vmax.f32 %v1912, 0.0
    %v2008 = vmax.f32 %v1914, 0.0
    %v2009 = vmax.f32 %v1965, 0.0
    %v2010 = vmax.f32 %v1967, 0.0
    %v2011 = vmax.f32 %v1600, 0.0
    %v2012 = vmax.f32 %v1602, 0.0
    %v2013 = vmax.f32 %v1653, 0.0
    %v2014 = vmax.f32 %v1655, 0.0
    %v2015 = vmax.f32 %v1706, 0.0
    %v2016 = vmax.f32 %v1708, 0.0
    %v2017 = vmax.f32 %v1759, 0.0
    %v2018 = vmax.f32 %v1761, 0.0
    %v2019 = vmax.f32 %v1812, 0.0
    %v2020 = vmax.f32 %v1814, 0.0
    %v2021 = vmax.f32 %v1865, 0.0
    %v2022 = vmax.f32 %v1867, 0.0
    %v2023 = vmax.f32 %v1918, 0.0
    %v2024 = vmax.f32 %v1920, 0.0
    %v2025 = vmax.f32 %v1971, 0.0
    %v2026 = vmax.f32 %v1973, 0.0
    %v2027 = vmax.f32 %v1604, 0.0
    %v2028 = vmax.f32 %v1606, 0.0
    %v2029 = vmax.f32 %v1657, 0.0
    %v2030 = vmax.f32 %v1659, 0.0
    %v2031 = vmax.f32 %v1710, 0.0
    %v2032 = vmax.f32 %v1712, 0.0
    %v2033 = vmax.f32 %v1763, 0.0
    %v2034 = vmax.f32 %v1765, 0.0
    %v2035 = vmax.f32 %v1816, 0.0
    %v2036 = vmax.f32 %v1818, 0.0
    %v2037 = vmax.f32 %v1869, 0.0
    %v2038 = vmax.f32 %v1871, 0.0
    %v2039 = vmax.f32 %v1922, 0.0
    %v2040 = vmax.f32 %v1924, 0.0
    %v2041 = vmax.f32 %v1975, 0.0
    %v2042 = vmax.f32 %v1977, 0.0
    %v2043 = vpack.c.bf16 %v1995, %v1979
    %v2044 = vpack.c.bf16 %v1996, %v1980
    %v2045 = vpack.c.bf16 %v1997, %v1981
    %v2046 = vpack.c.bf16 %v1998, %v1982
    %v2047 = vpack.c.bf16 %v1999, %v1983
    %v2048 = vpack.c.bf16 %v2000, %v1984
    %v2049 = vpack.c.bf16 %v2001, %v1985
    %v2050 = vpack.c.bf16 %v2002, %v1986
    %v2051 = vpack.c.bf16 %v2003, %v1987
    %v2052 = vpack.c.bf16 %v2004, %v1988
    %v2053 = vpack.c.bf16 %v2005, %v1989
    %v2054 = vpack.c.bf16 %v2006, %v1990
    %v2055 = vpack.c.bf16 %v2007, %v1991
    %v2056 = vpack.c.bf16 %v2008, %v1992
    %v2057 = vpack.c.bf16 %v2009, %v1993
    %v2058 = vpack.c.bf16 %v2010, %v1994
    %v2059 = vpack.c.bf16 %v2027, %v2011
    %v2060 = vpack.c.bf16 %v2028, %v2012
    %v2061 = vpack.c.bf16 %v2029, %v2013
    %v2062 = vpack.c.bf16 %v2030, %v2014
    %v2063 = vpack.c.bf16 %v2031, %v2015
    %v2064 = vpack.c.bf16 %v2032, %v2016
    %v2065 = vpack.c.bf16 %v2033, %v2017
    %v2066 = vpack.c.bf16 %v2034, %v2018
    %v2067 = vpack.c.bf16 %v2035, %v2019
    %v2068 = vpack.c.bf16 %v2036, %v2020
    %v2069 = vpack.c.bf16 %v2037, %v2021
    %v2070 = vpack.c.bf16 %v2038, %v2022
    %v2071 = vpack.c.bf16 %v2039, %v2023
    %v2072 = vpack.c.bf16 %v2040, %v2024
    %v2073 = vpack.c.bf16 %v2041, %v2025
    %v2074 = vpack.c.bf16 %v2042, %v2026
    %v2075 = vld [vmem:[%s15] sm:$0xf]
    %v2076 = vld [vmem:[%s15 + $0x4] sm:$0xf]
    %v2077 = vld [vmem:[%s15 + $0x8] sm:$0xf]
    %v2078 = vld [vmem:[%s15 + $0xc] sm:$0xf]
    %v2079 = vld [vmem:[%s15 + $0x10] sm:$0xf]
    %v2080 = vld [vmem:[%s15 + $0x14] sm:$0xf]
    %v2081 = vld [vmem:[%s15 + $0x18] sm:$0xf]
    %v2082 = vld [vmem:[%s15 + $0x1c] sm:$0xf]
    %v2083 = vld [vmem:[%s15 + $0x20] sm:$0xf]
    %v2084 = vld [vmem:[%s15 + $0x24] sm:$0xf]
    %v2085 = vld [vmem:[%s15 + $0x28] sm:$0xf]
    %v2086 = vld [vmem:[%s15 + $0x2c] sm:$0xf]
    %v2087 = vld [vmem:[%s15 + $0x30] sm:$0xf]
    %v2088 = vld [vmem:[%s15 + $0x34] sm:$0xf]
    %v2089 = vld [vmem:[%s15 + $0x38] sm:$0xf]
    %v2090 = vld [vmem:[%s15 + $0x3c] sm:$0xf]
    %v2091 = vld [vmem:[%s15 + $0x40] sm:$0xf]
    %v2092 = vld [vmem:[%s15 + $0x44] sm:$0xf]
    %v2093 = vld [vmem:[%s15 + $0x48] sm:$0xf]
    %v2094 = vld [vmem:[%s15 + $0x4c] sm:$0xf]
    %v2095 = vld [vmem:[%s15 + $0x50] sm:$0xf]
    %v2096 = vld [vmem:[%s15 + $0x54] sm:$0xf]
    %v2097 = vld [vmem:[%s15 + $0x58] sm:$0xf]
    %v2098 = vld [vmem:[%s15 + $0x5c] sm:$0xf]
    %v2099 = vld [vmem:[%s15 + $0x60] sm:$0xf]
    %v2100 = vld [vmem:[%s15 + $0x64] sm:$0xf]
    %v2101 = vld [vmem:[%s15 + $0x68] sm:$0xf]
    %v2102 = vld [vmem:[%s15 + $0x6c] sm:$0xf]
    %v2103 = vld [vmem:[%s15 + $0x70] sm:$0xf]
    %v2104 = vld [vmem:[%s15 + $0x74] sm:$0xf]
    %v2105 = vld [vmem:[%s15 + $0x78] sm:$0xf]
    %v2106 = vld [vmem:[%s15 + $0x7c] sm:$0xf]
    %v2107 = vld [vmem:[%s15 + $0x80] sm:$0xf]
    %v2108 = vld [vmem:[%s15 + $0x84] sm:$0xf]
    %v2109 = vld [vmem:[%s15 + $0x88] sm:$0xf]
    %v2110 = vld [vmem:[%s15 + $0x8c] sm:$0xf]
    %v2111 = vld [vmem:[%s15 + $0x90] sm:$0xf]
    %v2112 = vld [vmem:[%s15 + $0x94] sm:$0xf]
    %v2113 = vld [vmem:[%s15 + $0x98] sm:$0xf]
    %v2114 = vld [vmem:[%s15 + $0x9c] sm:$0xf]
    %v2115 = vld [vmem:[%s15 + $0xa0] sm:$0xf]
    %v2116 = vld [vmem:[%s15 + $0xa4] sm:$0xf]
    %v2117 = vld [vmem:[%s15 + $0xa8] sm:$0xf]
    %v2118 = vld [vmem:[%s15 + $0xac] sm:$0xf]
    %v2119 = vld [vmem:[%s15 + $0xb0] sm:$0xf]
    %v2120 = vld [vmem:[%s15 + $0xb4] sm:$0xf]
    %v2121 = vld [vmem:[%s15 + $0xb8] sm:$0xf]
    %v2122 = vld [vmem:[%s15 + $0xbc] sm:$0xf]
    %v2123 = vld [vmem:[%s15 + $0xc0] sm:$0xf]
    %v2124 = vld [vmem:[%s15 + $0xc4] sm:$0xf]
    %v2125 = vld [vmem:[%s15 + $0xc8] sm:$0xf]
    %v2126 = vld [vmem:[%s15 + $0xcc] sm:$0xf]
    %v2127 = vld [vmem:[%s15 + $0xd0] sm:$0xf]
    %v2128 = vld [vmem:[%s15 + $0xd4] sm:$0xf]
    %v2129 = vld [vmem:[%s15 + $0xd8] sm:$0xf]
    %v2130 = vld [vmem:[%s15 + $0xdc] sm:$0xf]
    %v2131 = vld [vmem:[%s15 + $0xe0] sm:$0xf]
    %v2132 = vld [vmem:[%s15 + $0xe4] sm:$0xf]
    %v2133 = vld [vmem:[%s15 + $0xe8] sm:$0xf]
    %v2134 = vld [vmem:[%s15 + $0xec] sm:$0xf]
    %v2135 = vld [vmem:[%s15 + $0xf0] sm:$0xf]
    %v2136 = vld [vmem:[%s15 + $0xf4] sm:$0xf]
    %v2137 = vld [vmem:[%s15 + $0xf8] sm:$0xf]
    %v2138 = vld [vmem:[%s15 + $0xfc] sm:$0xf]
    %v2139 = vld [vmem:[%s15 + $0x100] sm:$0xf]
    %v2140 = vld [vmem:[%s15 + $0x104] sm:$0xf]
    %v2141 = vld [vmem:[%s15 + $0x108] sm:$0xf]
    %v2142 = vld [vmem:[%s15 + $0x10c] sm:$0xf]
    %v2143 = vld [vmem:[%s15 + $0x110] sm:$0xf]
    %v2144 = vld [vmem:[%s15 + $0x114] sm:$0xf]
    %v2145 = vld [vmem:[%s15 + $0x118] sm:$0xf]
    %v2146 = vld [vmem:[%s15 + $0x11c] sm:$0xf]
    %v2147 = vld [vmem:[%s15 + $0x120] sm:$0xf]
    %v2148 = vld [vmem:[%s15 + $0x124] sm:$0xf]
    %v2149 = vld [vmem:[%s15 + $0x128] sm:$0xf]
    %v2150 = vld [vmem:[%s15 + $0x12c] sm:$0xf]
    %v2151 = vld [vmem:[%s15 + $0x130] sm:$0xf]
    %v2152 = vld [vmem:[%s15 + $0x134] sm:$0xf]
    %v2153 = vld [vmem:[%s15 + $0x138] sm:$0xf]
    %v2154 = vld [vmem:[%s15 + $0x13c] sm:$0xf]
    %v2155 = vld [vmem:[%s15 + $0x140] sm:$0xf]
    %v2156 = vld [vmem:[%s15 + $0x144] sm:$0xf]
    %v2157 = vld [vmem:[%s15 + $0x148] sm:$0xf]
    %v2158 = vld [vmem:[%s15 + $0x14c] sm:$0xf]
    %v2159 = vld [vmem:[%s15 + $0x150] sm:$0xf]
    %v2160 = vld [vmem:[%s15 + $0x154] sm:$0xf]
    %v2161 = vld [vmem:[%s15 + $0x158] sm:$0xf]
    %v2162 = vld [vmem:[%s15 + $0x15c] sm:$0xf]
    %v2163 = vld [vmem:[%s15 + $0x160] sm:$0xf]
    %v2164 = vld [vmem:[%s15 + $0x164] sm:$0xf]
    %v2165 = vld [vmem:[%s15 + $0x168] sm:$0xf]
    %v2166 = vld [vmem:[%s15 + $0x16c] sm:$0xf]
    %v2167 = vld [vmem:[%s15 + $0x170] sm:$0xf]
    %v2168 = vld [vmem:[%s15 + $0x174] sm:$0xf]
    %v2169 = vld [vmem:[%s15 + $0x178] sm:$0xf]
    %v2170 = vld [vmem:[%s15 + $0x17c] sm:$0xf]
    %v2171 = vld [vmem:[%s15 + $0x180] sm:$0xf]
    %v2172 = vld [vmem:[%s15 + $0x184] sm:$0xf]
    %v2173 = vld [vmem:[%s15 + $0x188] sm:$0xf]
    %v2174 = vld [vmem:[%s15 + $0x18c] sm:$0xf]
    %v2175 = vld [vmem:[%s15 + $0x190] sm:$0xf]
    %v2176 = vld [vmem:[%s15 + $0x194] sm:$0xf]
    %v2177 = vld [vmem:[%s15 + $0x198] sm:$0xf]
    %v2178 = vld [vmem:[%s15 + $0x19c] sm:$0xf]
    %v2179 = vld [vmem:[%s15 + $0x1a0] sm:$0xf]
    %v2180 = vld [vmem:[%s15 + $0x1a4] sm:$0xf]
    %v2181 = vld [vmem:[%s15 + $0x1a8] sm:$0xf]
    %v2182 = vld [vmem:[%s15 + $0x1ac] sm:$0xf]
    %v2183 = vld [vmem:[%s15 + $0x1b0] sm:$0xf]
    %v2184 = vld [vmem:[%s15 + $0x1b4] sm:$0xf]
    %v2185 = vld [vmem:[%s15 + $0x1b8] sm:$0xf]
    %v2186 = vld [vmem:[%s15 + $0x1bc] sm:$0xf]
    %v2187 = vld [vmem:[%s15 + $0x1c0] sm:$0xf]
    %v2188 = vld [vmem:[%s15 + $0x1c4] sm:$0xf]
    %v2189 = vld [vmem:[%s15 + $0x1c8] sm:$0xf]
    %v2190 = vld [vmem:[%s15 + $0x1cc] sm:$0xf]
    %v2191 = vld [vmem:[%s15 + $0x1d0] sm:$0xf]
    %v2192 = vld [vmem:[%s15 + $0x1d4] sm:$0xf]
    %v2193 = vld [vmem:[%s15 + $0x1d8] sm:$0xf]
    %v2194 = vld [vmem:[%s15 + $0x1dc] sm:$0xf]
    %v2195 = vld [vmem:[%s15 + $0x1e0] sm:$0xf]
    %v2196 = vld [vmem:[%s15 + $0x1e4] sm:$0xf]
    %v2197 = vld [vmem:[%s15 + $0x1e8] sm:$0xf]
    %v2198 = vld [vmem:[%s15 + $0x1ec] sm:$0xf]
    %v2199 = vld [vmem:[%s15 + $0x1f0] sm:$0xf]
    %v2200 = vld [vmem:[%s15 + $0x1f4] sm:$0xf]
    %v2201 = vld [vmem:[%s15 + $0x1f8] sm:$0xf]
    %v2202 = vld [vmem:[%s15 + $0x1fc] sm:$0xf]
    %v2203 = vld [vmem:[%s15 + $0x200] sm:$0xf]
    %v2204 = vld [vmem:[%s15 + $0x204] sm:$0xf]
    %v2205 = vld [vmem:[%s15 + $0x208] sm:$0xf]
    %v2206 = vld [vmem:[%s15 + $0x20c] sm:$0xf]
    %v2207 = vld [vmem:[%s15 + $0x210] sm:$0xf]
    %v2208 = vld [vmem:[%s15 + $0x214] sm:$0xf]
    %v2209 = vld [vmem:[%s15 + $0x218] sm:$0xf]
    %v2210 = vld [vmem:[%s15 + $0x21c] sm:$0xf]
    %v2211 = vld [vmem:[%s15 + $0x220] sm:$0xf]
    %v2212 = vld [vmem:[%s15 + $0x224] sm:$0xf]
    %v2213 = vld [vmem:[%s15 + $0x228] sm:$0xf]
    %v2214 = vld [vmem:[%s15 + $0x22c] sm:$0xf]
    %v2215 = vld [vmem:[%s15 + $0x230] sm:$0xf]
    %v2216 = vld [vmem:[%s15 + $0x234] sm:$0xf]
    %v2217 = vld [vmem:[%s15 + $0x238] sm:$0xf]
    %v2218 = vld [vmem:[%s15 + $0x23c] sm:$0xf]
    %v2219 = vld [vmem:[%s15 + $0x240] sm:$0xf]
    %v2220 = vld [vmem:[%s15 + $0x244] sm:$0xf]
    %v2221 = vld [vmem:[%s15 + $0x248] sm:$0xf]
    %v2222 = vld [vmem:[%s15 + $0x24c] sm:$0xf]
    %v2223 = vld [vmem:[%s15 + $0x250] sm:$0xf]
    %v2224 = vld [vmem:[%s15 + $0x254] sm:$0xf]
    %v2225 = vld [vmem:[%s15 + $0x258] sm:$0xf]
    %v2226 = vld [vmem:[%s15 + $0x25c] sm:$0xf]
    %v2227 = vld [vmem:[%s15 + $0x260] sm:$0xf]
    %v2228 = vld [vmem:[%s15 + $0x264] sm:$0xf]
    %v2229 = vld [vmem:[%s15 + $0x268] sm:$0xf]
    %v2230 = vld [vmem:[%s15 + $0x26c] sm:$0xf]
    %v2231 = vld [vmem:[%s15 + $0x270] sm:$0xf]
    %v2232 = vld [vmem:[%s15 + $0x274] sm:$0xf]
    %v2233 = vld [vmem:[%s15 + $0x278] sm:$0xf]
    %v2234 = vld [vmem:[%s15 + $0x27c] sm:$0xf]
    %v2235 = vld [vmem:[%s15 + $0x280] sm:$0xf]
    %v2236 = vld [vmem:[%s15 + $0x284] sm:$0xf]
    %v2237 = vld [vmem:[%s15 + $0x288] sm:$0xf]
    %v2238 = vld [vmem:[%s15 + $0x28c] sm:$0xf]
    %v2239 = vld [vmem:[%s15 + $0x290] sm:$0xf]
    %v2240 = vld [vmem:[%s15 + $0x294] sm:$0xf]
    %v2241 = vld [vmem:[%s15 + $0x298] sm:$0xf]
    %v2242 = vld [vmem:[%s15 + $0x29c] sm:$0xf]
    %v2243 = vld [vmem:[%s15 + $0x2a0] sm:$0xf]
    %v2244 = vld [vmem:[%s15 + $0x2a4] sm:$0xf]
    %v2245 = vld [vmem:[%s15 + $0x2a8] sm:$0xf]
    %v2246 = vld [vmem:[%s15 + $0x2ac] sm:$0xf]
    %v2247 = vld [vmem:[%s15 + $0x2b0] sm:$0xf]
    %v2248 = vld [vmem:[%s15 + $0x2b4] sm:$0xf]
    %v2249 = vld [vmem:[%s15 + $0x2b8] sm:$0xf]
    %v2250 = vld [vmem:[%s15 + $0x2bc] sm:$0xf]
    %v2251 = vld [vmem:[%s15 + $0x2c0] sm:$0xf]
    %v2252 = vld [vmem:[%s15 + $0x2c4] sm:$0xf]
    %v2253 = vld [vmem:[%s15 + $0x2c8] sm:$0xf]
    %v2254 = vld [vmem:[%s15 + $0x2cc] sm:$0xf]
    %v2255 = vld [vmem:[%s15 + $0x2d0] sm:$0xf]
    %v2256 = vld [vmem:[%s15 + $0x2d4] sm:$0xf]
    %v2257 = vld [vmem:[%s15 + $0x2d8] sm:$0xf]
    %v2258 = vld [vmem:[%s15 + $0x2dc] sm:$0xf]
    %v2259 = vld [vmem:[%s15 + $0x2e0] sm:$0xf]
    %v2260 = vld [vmem:[%s15 + $0x2e4] sm:$0xf]
    %v2261 = vld [vmem:[%s15 + $0x2e8] sm:$0xf]
    %v2262 = vld [vmem:[%s15 + $0x2ec] sm:$0xf]
    %v2263 = vld [vmem:[%s15 + $0x2f0] sm:$0xf]
    %v2264 = vld [vmem:[%s15 + $0x2f4] sm:$0xf]
    %v2265 = vld [vmem:[%s15 + $0x2f8] sm:$0xf]
    %v2266 = vld [vmem:[%s15 + $0x2fc] sm:$0xf]
    %v2267 = vld [vmem:[%s15 + $0x300] sm:$0xf]
    %v2268 = vld [vmem:[%s15 + $0x304] sm:$0xf]
    %v2269 = vld [vmem:[%s15 + $0x308] sm:$0xf]
    %v2270 = vld [vmem:[%s15 + $0x30c] sm:$0xf]
    %v2271 = vld [vmem:[%s15 + $0x310] sm:$0xf]
    %v2272 = vld [vmem:[%s15 + $0x314] sm:$0xf]
    %v2273 = vld [vmem:[%s15 + $0x318] sm:$0xf]
    %v2274 = vld [vmem:[%s15 + $0x31c] sm:$0xf]
    %v2275 = vld [vmem:[%s15 + $0x320] sm:$0xf]
    %v2276 = vld [vmem:[%s15 + $0x324] sm:$0xf]
    %v2277 = vld [vmem:[%s15 + $0x328] sm:$0xf]
    %v2278 = vld [vmem:[%s15 + $0x32c] sm:$0xf]
    %v2279 = vld [vmem:[%s15 + $0x330] sm:$0xf]
    %v2280 = vld [vmem:[%s15 + $0x334] sm:$0xf]
    %v2281 = vld [vmem:[%s15 + $0x338] sm:$0xf]
    %v2282 = vld [vmem:[%s15 + $0x33c] sm:$0xf]
    %v2283 = vld [vmem:[%s15 + $0x340] sm:$0xf]
    %v2284 = vld [vmem:[%s15 + $0x344] sm:$0xf]
    %v2285 = vld [vmem:[%s15 + $0x348] sm:$0xf]
    %v2286 = vld [vmem:[%s15 + $0x34c] sm:$0xf]
    %v2287 = vld [vmem:[%s15 + $0x350] sm:$0xf]
    %v2288 = vld [vmem:[%s15 + $0x354] sm:$0xf]
    %v2289 = vld [vmem:[%s15 + $0x358] sm:$0xf]
    %v2290 = vld [vmem:[%s15 + $0x35c] sm:$0xf]
    %v2291 = vld [vmem:[%s15 + $0x360] sm:$0xf]
    %v2292 = vld [vmem:[%s15 + $0x364] sm:$0xf]
    %v2293 = vld [vmem:[%s15 + $0x368] sm:$0xf]
    %v2294 = vld [vmem:[%s15 + $0x36c] sm:$0xf]
    %v2295 = vld [vmem:[%s15 + $0x370] sm:$0xf]
    %v2296 = vld [vmem:[%s15 + $0x374] sm:$0xf]
    %v2297 = vld [vmem:[%s15 + $0x378] sm:$0xf]
    %v2298 = vld [vmem:[%s15 + $0x37c] sm:$0xf]
    %v2299 = vld [vmem:[%s15 + $0x380] sm:$0xf]
    %v2300 = vld [vmem:[%s15 + $0x384] sm:$0xf]
    %v2301 = vld [vmem:[%s15 + $0x388] sm:$0xf]
    %v2302 = vld [vmem:[%s15 + $0x38c] sm:$0xf]
    %v2303 = vld [vmem:[%s15 + $0x390] sm:$0xf]
    %v2304 = vld [vmem:[%s15 + $0x394] sm:$0xf]
    %v2305 = vld [vmem:[%s15 + $0x398] sm:$0xf]
    %v2306 = vld [vmem:[%s15 + $0x39c] sm:$0xf]
    %v2307 = vld [vmem:[%s15 + $0x3a0] sm:$0xf]
    %v2308 = vld [vmem:[%s15 + $0x3a4] sm:$0xf]
    %v2309 = vld [vmem:[%s15 + $0x3a8] sm:$0xf]
    %v2310 = vld [vmem:[%s15 + $0x3ac] sm:$0xf]
    %v2311 = vld [vmem:[%s15 + $0x3b0] sm:$0xf]
    %v2312 = vld [vmem:[%s15 + $0x3b4] sm:$0xf]
    %v2313 = vld [vmem:[%s15 + $0x3b8] sm:$0xf]
    %v2314 = vld [vmem:[%s15 + $0x3bc] sm:$0xf]
    %v2315 = vld [vmem:[%s15 + $0x3c0] sm:$0xf]
    %v2316 = vld [vmem:[%s15 + $0x3c4] sm:$0xf]
    %v2317 = vld [vmem:[%s15 + $0x3c8] sm:$0xf]
    %v2318 = vld [vmem:[%s15 + $0x3cc] sm:$0xf]
    %v2319 = vld [vmem:[%s15 + $0x3d0] sm:$0xf]
    %v2320 = vld [vmem:[%s15 + $0x3d4] sm:$0xf]
    %v2321 = vld [vmem:[%s15 + $0x3d8] sm:$0xf]
    %v2322 = vld [vmem:[%s15 + $0x3dc] sm:$0xf]
    %v2323 = vld [vmem:[%s15 + $0x3e0] sm:$0xf]
    %v2324 = vld [vmem:[%s15 + $0x3e4] sm:$0xf]
    %v2325 = vld [vmem:[%s15 + $0x3e8] sm:$0xf]
    %v2326 = vld [vmem:[%s15 + $0x3ec] sm:$0xf]
    %v2327 = vld [vmem:[%s15 + $0x3f0] sm:$0xf]
    %v2328 = vld [vmem:[%s15 + $0x3f4] sm:$0xf]
    %v2329 = vld [vmem:[%s15 + $0x3f8] sm:$0xf]
    %v2330 = vld [vmem:[%s15 + $0x3fc] sm:$0xf]
    %v2331 = vld [vmem:[%s16] sm:$0x1]
    %v2332 = vlaneseq
    %v2333 = vshrl.u32 %v2332, 7
    %v2334 = vsub.s32 0, %v2333
    %v2335 = vrot.slane %v2331, %v2334
    %v2592 = vunpack.c.l.b16 %v2075
    %v2593 = vunpack.c.l.b16 %v2076
    %v2594 = vunpack.c.l.b16 %v2077
    %v2595 = vunpack.c.l.b16 %v2078
    %v2596 = vunpack.c.l.b16 %v2079
    %v2597 = vunpack.c.l.b16 %v2080
    %v2598 = vunpack.c.l.b16 %v2081
    %v2599 = vunpack.c.l.b16 %v2082
    %v2600 = vunpack.c.l.b16 %v2083
    %v2601 = vunpack.c.l.b16 %v2084
    %v2602 = vunpack.c.l.b16 %v2085
    %v2603 = vunpack.c.l.b16 %v2086
    %v2604 = vunpack.c.l.b16 %v2087
    %v2605 = vunpack.c.l.b16 %v2088
    %v2606 = vunpack.c.l.b16 %v2089
    %v2607 = vunpack.c.l.b16 %v2090
    %v2608 = vunpack.c.l.b16 %v2091
    %v2609 = vunpack.c.l.b16 %v2092
    %v2610 = vunpack.c.l.b16 %v2093
    %v2611 = vunpack.c.l.b16 %v2094
    %v2612 = vunpack.c.l.b16 %v2095
    %v2613 = vunpack.c.l.b16 %v2096
    %v2614 = vunpack.c.l.b16 %v2097
    %v2615 = vunpack.c.l.b16 %v2098
    %v2616 = vunpack.c.l.b16 %v2099
    %v2617 = vunpack.c.l.b16 %v2100
    %v2618 = vunpack.c.l.b16 %v2101
    %v2619 = vunpack.c.l.b16 %v2102
    %v2620 = vunpack.c.l.b16 %v2103
    %v2621 = vunpack.c.l.b16 %v2104
    %v2622 = vunpack.c.l.b16 %v2105
    %v2623 = vunpack.c.l.b16 %v2106
    %v2624 = vunpack.c.l.b16 %v2107
    %v2625 = vunpack.c.l.b16 %v2108
    %v2626 = vunpack.c.l.b16 %v2109
    %v2627 = vunpack.c.l.b16 %v2110
    %v2628 = vunpack.c.l.b16 %v2111
    %v2629 = vunpack.c.l.b16 %v2112
    %v2630 = vunpack.c.l.b16 %v2113
    %v2631 = vunpack.c.l.b16 %v2114
    %v2632 = vunpack.c.l.b16 %v2115
    %v2633 = vunpack.c.l.b16 %v2116
    %v2634 = vunpack.c.l.b16 %v2117
    %v2635 = vunpack.c.l.b16 %v2118
    %v2636 = vunpack.c.l.b16 %v2119
    %v2637 = vunpack.c.l.b16 %v2120
    %v2638 = vunpack.c.l.b16 %v2121
    %v2639 = vunpack.c.l.b16 %v2122
    %v2640 = vunpack.c.l.b16 %v2123
    %v2641 = vunpack.c.l.b16 %v2124
    %v2642 = vunpack.c.l.b16 %v2125
    %v2643 = vunpack.c.l.b16 %v2126
    %v2644 = vunpack.c.l.b16 %v2127
    %v2645 = vunpack.c.l.b16 %v2128
    %v2646 = vunpack.c.l.b16 %v2129
    %v2647 = vunpack.c.l.b16 %v2130
    %v2648 = vunpack.c.l.b16 %v2131
    %v2649 = vunpack.c.l.b16 %v2132
    %v2650 = vunpack.c.l.b16 %v2133
    %v2651 = vunpack.c.l.b16 %v2134
    %v2652 = vunpack.c.l.b16 %v2135
    %v2653 = vunpack.c.l.b16 %v2136
    %v2654 = vunpack.c.l.b16 %v2137
    %v2655 = vunpack.c.l.b16 %v2138
    %v2656 = vunpack.c.l.b16 %v2139
    %v2657 = vunpack.c.l.b16 %v2140
    %v2658 = vunpack.c.l.b16 %v2141
    %v2659 = vunpack.c.l.b16 %v2142
    %v2660 = vunpack.c.l.b16 %v2143
    %v2661 = vunpack.c.l.b16 %v2144
    %v2662 = vunpack.c.l.b16 %v2145
    %v2663 = vunpack.c.l.b16 %v2146
    %v2664 = vunpack.c.l.b16 %v2147
    %v2665 = vunpack.c.l.b16 %v2148
    %v2666 = vunpack.c.l.b16 %v2149
    %v2667 = vunpack.c.l.b16 %v2150
    %v2668 = vunpack.c.l.b16 %v2151
    %v2669 = vunpack.c.l.b16 %v2152
    %v2670 = vunpack.c.l.b16 %v2153
    %v2671 = vunpack.c.l.b16 %v2154
    %v2672 = vunpack.c.l.b16 %v2155
    %v2673 = vunpack.c.l.b16 %v2156
    %v2674 = vunpack.c.l.b16 %v2157
    %v2675 = vunpack.c.l.b16 %v2158
    %v2676 = vunpack.c.l.b16 %v2159
    %v2677 = vunpack.c.l.b16 %v2160
    %v2678 = vunpack.c.l.b16 %v2161
    %v2679 = vunpack.c.l.b16 %v2162
    %v2680 = vunpack.c.l.b16 %v2163
    %v2681 = vunpack.c.l.b16 %v2164
    %v2682 = vunpack.c.l.b16 %v2165
    %v2683 = vunpack.c.l.b16 %v2166
    %v2684 = vunpack.c.l.b16 %v2167
    %v2685 = vunpack.c.l.b16 %v2168
    %v2686 = vunpack.c.l.b16 %v2169
    %v2687 = vunpack.c.l.b16 %v2170
    %v2688 = vunpack.c.l.b16 %v2171
    %v2689 = vunpack.c.l.b16 %v2172
    %v2690 = vunpack.c.l.b16 %v2173
    %v2691 = vunpack.c.l.b16 %v2174
    %v2692 = vunpack.c.l.b16 %v2175
    %v2693 = vunpack.c.l.b16 %v2176
    %v2694 = vunpack.c.l.b16 %v2177
    %v2695 = vunpack.c.l.b16 %v2178
    %v2696 = vunpack.c.l.b16 %v2179
    %v2697 = vunpack.c.l.b16 %v2180
    %v2698 = vunpack.c.l.b16 %v2181
    %v2699 = vunpack.c.l.b16 %v2182
    %v2700 = vunpack.c.l.b16 %v2183
    %v2701 = vunpack.c.l.b16 %v2184
    %v2702 = vunpack.c.l.b16 %v2185
    %v2703 = vunpack.c.l.b16 %v2186
    %v2704 = vunpack.c.l.b16 %v2187
    %v2705 = vunpack.c.l.b16 %v2188
    %v2706 = vunpack.c.l.b16 %v2189
    %v2707 = vunpack.c.l.b16 %v2190
    %v2708 = vunpack.c.l.b16 %v2191
    %v2709 = vunpack.c.l.b16 %v2192
    %v2710 = vunpack.c.l.b16 %v2193
    %v2711 = vunpack.c.l.b16 %v2194
    %v2712 = vunpack.c.l.b16 %v2195
    %v2713 = vunpack.c.l.b16 %v2196
    %v2714 = vunpack.c.l.b16 %v2197
    %v2715 = vunpack.c.l.b16 %v2198
    %v2716 = vunpack.c.l.b16 %v2199
    %v2717 = vunpack.c.l.b16 %v2200
    %v2718 = vunpack.c.l.b16 %v2201
    %v2719 = vunpack.c.l.b16 %v2202
    %v2720 = vunpack.c.l.b16 %v2203
    %v2721 = vunpack.c.l.b16 %v2204
    %v2722 = vunpack.c.l.b16 %v2205
    %v2723 = vunpack.c.l.b16 %v2206
    %v2724 = vunpack.c.l.b16 %v2207
    %v2725 = vunpack.c.l.b16 %v2208
    %v2726 = vunpack.c.l.b16 %v2209
    %v2727 = vunpack.c.l.b16 %v2210
    %v2728 = vunpack.c.l.b16 %v2211
    %v2729 = vunpack.c.l.b16 %v2212
    %v2730 = vunpack.c.l.b16 %v2213
    %v2731 = vunpack.c.l.b16 %v2214
    %v2732 = vunpack.c.l.b16 %v2215
    %v2733 = vunpack.c.l.b16 %v2216
    %v2734 = vunpack.c.l.b16 %v2217
    %v2735 = vunpack.c.l.b16 %v2218
    %v2736 = vunpack.c.l.b16 %v2219
    %v2737 = vunpack.c.l.b16 %v2220
    %v2738 = vunpack.c.l.b16 %v2221
    %v2739 = vunpack.c.l.b16 %v2222
    %v2740 = vunpack.c.l.b16 %v2223
    %v2741 = vunpack.c.l.b16 %v2224
    %v2742 = vunpack.c.l.b16 %v2225
    %v2743 = vunpack.c.l.b16 %v2226
    %v2744 = vunpack.c.l.b16 %v2227
    %v2745 = vunpack.c.l.b16 %v2228
    %v2746 = vunpack.c.l.b16 %v2229
    %v2747 = vunpack.c.l.b16 %v2230
    %v2748 = vunpack.c.l.b16 %v2231
    %v2749 = vunpack.c.l.b16 %v2232
    %v2750 = vunpack.c.l.b16 %v2233
    %v2751 = vunpack.c.l.b16 %v2234
    %v2752 = vunpack.c.l.b16 %v2235
    %v2753 = vunpack.c.l.b16 %v2236
    %v2754 = vunpack.c.l.b16 %v2237
    %v2755 = vunpack.c.l.b16 %v2238
    %v2756 = vunpack.c.l.b16 %v2239
    %v2757 = vunpack.c.l.b16 %v2240
    %v2758 = vunpack.c.l.b16 %v2241
    %v2759 = vunpack.c.l.b16 %v2242
    %v2760 = vunpack.c.l.b16 %v2243
    %v2761 = vunpack.c.l.b16 %v2244
    %v2762 = vunpack.c.l.b16 %v2245
    %v2763 = vunpack.c.l.b16 %v2246
    %v2764 = vunpack.c.l.b16 %v2247
    %v2765 = vunpack.c.l.b16 %v2248
    %v2766 = vunpack.c.l.b16 %v2249
    %v2767 = vunpack.c.l.b16 %v2250
    %v2768 = vunpack.c.l.b16 %v2251
    %v2769 = vunpack.c.l.b16 %v2252
    %v2770 = vunpack.c.l.b16 %v2253
    %v2771 = vunpack.c.l.b16 %v2254
    %v2772 = vunpack.c.l.b16 %v2255
    %v2773 = vunpack.c.l.b16 %v2256
    %v2774 = vunpack.c.l.b16 %v2257
    %v2775 = vunpack.c.l.b16 %v2258
    %v2776 = vunpack.c.l.b16 %v2259
    %v2777 = vunpack.c.l.b16 %v2260
    %v2778 = vunpack.c.l.b16 %v2261
    %v2779 = vunpack.c.l.b16 %v2262
    %v2780 = vunpack.c.l.b16 %v2263
    %v2781 = vunpack.c.l.b16 %v2264
    %v2782 = vunpack.c.l.b16 %v2265
    %v2783 = vunpack.c.l.b16 %v2266
    %v2784 = vunpack.c.l.b16 %v2267
    %v2785 = vunpack.c.l.b16 %v2268
    %v2786 = vunpack.c.l.b16 %v2269
    %v2787 = vunpack.c.l.b16 %v2270
    %v2788 = vunpack.c.l.b16 %v2271
    %v2789 = vunpack.c.l.b16 %v2272
    %v2790 = vunpack.c.l.b16 %v2273
    %v2791 = vunpack.c.l.b16 %v2274
    %v2792 = vunpack.c.l.b16 %v2275
    %v2793 = vunpack.c.l.b16 %v2276
    %v2794 = vunpack.c.l.b16 %v2277
    %v2795 = vunpack.c.l.b16 %v2278
    %v2796 = vunpack.c.l.b16 %v2279
    %v2797 = vunpack.c.l.b16 %v2280
    %v2798 = vunpack.c.l.b16 %v2281
    %v2799 = vunpack.c.l.b16 %v2282
    %v2800 = vunpack.c.l.b16 %v2283
    %v2801 = vunpack.c.l.b16 %v2284
    %v2802 = vunpack.c.l.b16 %v2285
    %v2803 = vunpack.c.l.b16 %v2286
    %v2804 = vunpack.c.l.b16 %v2287
    %v2805 = vunpack.c.l.b16 %v2288
    %v2806 = vunpack.c.l.b16 %v2289
    %v2807 = vunpack.c.l.b16 %v2290
    %v2808 = vunpack.c.l.b16 %v2291
    %v2809 = vunpack.c.l.b16 %v2292
    %v2810 = vunpack.c.l.b16 %v2293
    %v2811 = vunpack.c.l.b16 %v2294
    %v2812 = vunpack.c.l.b16 %v2295
    %v2813 = vunpack.c.l.b16 %v2296
    %v2814 = vunpack.c.l.b16 %v2297
    %v2815 = vunpack.c.l.b16 %v2298
    %v2816 = vunpack.c.l.b16 %v2299
    %v2817 = vunpack.c.l.b16 %v2300
    %v2818 = vunpack.c.l.b16 %v2301
    %v2819 = vunpack.c.l.b16 %v2302
    %v2820 = vunpack.c.l.b16 %v2303
    %v2821 = vunpack.c.l.b16 %v2304
    %v2822 = vunpack.c.l.b16 %v2305
    %v2823 = vunpack.c.l.b16 %v2306
    %v2824 = vunpack.c.l.b16 %v2307
    %v2825 = vunpack.c.l.b16 %v2308
    %v2826 = vunpack.c.l.b16 %v2309
    %v2827 = vunpack.c.l.b16 %v2310
    %v2828 = vunpack.c.l.b16 %v2311
    %v2829 = vunpack.c.l.b16 %v2312
    %v2830 = vunpack.c.l.b16 %v2313
    %v2831 = vunpack.c.l.b16 %v2314
    %v2832 = vunpack.c.l.b16 %v2315
    %v2833 = vunpack.c.l.b16 %v2316
    %v2834 = vunpack.c.l.b16 %v2317
    %v2835 = vunpack.c.l.b16 %v2318
    %v2836 = vunpack.c.l.b16 %v2319
    %v2837 = vunpack.c.l.b16 %v2320
    %v2838 = vunpack.c.l.b16 %v2321
    %v2839 = vunpack.c.l.b16 %v2322
    %v2840 = vunpack.c.l.b16 %v2323
    %v2841 = vunpack.c.l.b16 %v2324
    %v2842 = vunpack.c.l.b16 %v2325
    %v2843 = vunpack.c.l.b16 %v2326
    %v2844 = vunpack.c.l.b16 %v2327
    %v2845 = vunpack.c.l.b16 %v2328
    %v2846 = vunpack.c.l.b16 %v2329
    %v2847 = vunpack.c.l.b16 %v2330
    %v2848 = vpack.c.b16 %v2593, %v2592
    %v2849 = vpack.c.b16 %v2595, %v2594
    %v2850 = vpack.c.b16 %v2597, %v2596
    %v2851 = vpack.c.b16 %v2599, %v2598
    %v2852 = vpack.c.b16 %v2601, %v2600
    %v2853 = vpack.c.b16 %v2603, %v2602
    %v2854 = vpack.c.b16 %v2605, %v2604
    %v2855 = vpack.c.b16 %v2607, %v2606
    %v2856 = vpack.c.b16 %v2609, %v2608
    %v2857 = vpack.c.b16 %v2611, %v2610
    %v2858 = vpack.c.b16 %v2613, %v2612
    %v2859 = vpack.c.b16 %v2615, %v2614
    %v2860 = vpack.c.b16 %v2617, %v2616
    %v2861 = vpack.c.b16 %v2619, %v2618
    %v2862 = vpack.c.b16 %v2621, %v2620
    %v2863 = vpack.c.b16 %v2623, %v2622
    %v2864 = vpack.c.b16 %v2625, %v2624
    %v2865 = vpack.c.b16 %v2627, %v2626
    %v2866 = vpack.c.b16 %v2629, %v2628
    %v2867 = vpack.c.b16 %v2631, %v2630
    %v2868 = vpack.c.b16 %v2633, %v2632
    %v2869 = vpack.c.b16 %v2635, %v2634
    %v2870 = vpack.c.b16 %v2637, %v2636
    %v2871 = vpack.c.b16 %v2639, %v2638
    %v2872 = vpack.c.b16 %v2641, %v2640
    %v2873 = vpack.c.b16 %v2643, %v2642
    %v2874 = vpack.c.b16 %v2645, %v2644
    %v2875 = vpack.c.b16 %v2647, %v2646
    %v2876 = vpack.c.b16 %v2649, %v2648
    %v2877 = vpack.c.b16 %v2651, %v2650
    %v2878 = vpack.c.b16 %v2653, %v2652
    %v2879 = vpack.c.b16 %v2655, %v2654
    %v2880 = vpack.c.b16 %v2657, %v2656
    %v2881 = vpack.c.b16 %v2659, %v2658
    %v2882 = vpack.c.b16 %v2661, %v2660
    %v2883 = vpack.c.b16 %v2663, %v2662
    %v2884 = vpack.c.b16 %v2665, %v2664
    %v2885 = vpack.c.b16 %v2667, %v2666
    %v2886 = vpack.c.b16 %v2669, %v2668
    %v2887 = vpack.c.b16 %v2671, %v2670
    %v2888 = vpack.c.b16 %v2673, %v2672
    %v2889 = vpack.c.b16 %v2675, %v2674
    %v2890 = vpack.c.b16 %v2677, %v2676
    %v2891 = vpack.c.b16 %v2679, %v2678
    %v2892 = vpack.c.b16 %v2681, %v2680
    %v2893 = vpack.c.b16 %v2683, %v2682
    %v2894 = vpack.c.b16 %v2685, %v2684
    %v2895 = vpack.c.b16 %v2687, %v2686
    %v2896 = vpack.c.b16 %v2689, %v2688
    %v2897 = vpack.c.b16 %v2691, %v2690
    %v2898 = vpack.c.b16 %v2693, %v2692
    %v2899 = vpack.c.b16 %v2695, %v2694
    %v2900 = vpack.c.b16 %v2697, %v2696
    %v2901 = vpack.c.b16 %v2699, %v2698
    %v2902 = vpack.c.b16 %v2701, %v2700
    %v2903 = vpack.c.b16 %v2703, %v2702
    %v2904 = vpack.c.b16 %v2705, %v2704
    %v2905 = vpack.c.b16 %v2707, %v2706
    %v2906 = vpack.c.b16 %v2709, %v2708
    %v2907 = vpack.c.b16 %v2711, %v2710
    %v2908 = vpack.c.b16 %v2713, %v2712
    %v2909 = vpack.c.b16 %v2715, %v2714
    %v2910 = vpack.c.b16 %v2717, %v2716
    %v2911 = vpack.c.b16 %v2719, %v2718
    %v2912 = vpack.c.b16 %v2721, %v2720
    %v2913 = vpack.c.b16 %v2723, %v2722
    %v2914 = vpack.c.b16 %v2725, %v2724
    %v2915 = vpack.c.b16 %v2727, %v2726
    %v2916 = vpack.c.b16 %v2729, %v2728
    %v2917 = vpack.c.b16 %v2731, %v2730
    %v2918 = vpack.c.b16 %v2733, %v2732
    %v2919 = vpack.c.b16 %v2735, %v2734
    %v2920 = vpack.c.b16 %v2737, %v2736
    %v2921 = vpack.c.b16 %v2739, %v2738
    %v2922 = vpack.c.b16 %v2741, %v2740
    %v2923 = vpack.c.b16 %v2743, %v2742
    %v2924 = vpack.c.b16 %v2745, %v2744
    %v2925 = vpack.c.b16 %v2747, %v2746
    %v2926 = vpack.c.b16 %v2749, %v2748
    %v2927 = vpack.c.b16 %v2751, %v2750
    %v2928 = vpack.c.b16 %v2753, %v2752
    %v2929 = vpack.c.b16 %v2755, %v2754
    %v2930 = vpack.c.b16 %v2757, %v2756
    %v2931 = vpack.c.b16 %v2759, %v2758
    %v2932 = vpack.c.b16 %v2761, %v2760
    %v2933 = vpack.c.b16 %v2763, %v2762
    %v2934 = vpack.c.b16 %v2765, %v2764
    %v2935 = vpack.c.b16 %v2767, %v2766
    %v2936 = vpack.c.b16 %v2769, %v2768
    %v2937 = vpack.c.b16 %v2771, %v2770
    %v2938 = vpack.c.b16 %v2773, %v2772
    %v2939 = vpack.c.b16 %v2775, %v2774
    %v2940 = vpack.c.b16 %v2777, %v2776
    %v2941 = vpack.c.b16 %v2779, %v2778
    %v2942 = vpack.c.b16 %v2781, %v2780
    %v2943 = vpack.c.b16 %v2783, %v2782
    %v2944 = vpack.c.b16 %v2785, %v2784
    %v2945 = vpack.c.b16 %v2787, %v2786
    %v2946 = vpack.c.b16 %v2789, %v2788
    %v2947 = vpack.c.b16 %v2791, %v2790
    %v2948 = vpack.c.b16 %v2793, %v2792
    %v2949 = vpack.c.b16 %v2795, %v2794
    %v2950 = vpack.c.b16 %v2797, %v2796
    %v2951 = vpack.c.b16 %v2799, %v2798
    %v2952 = vpack.c.b16 %v2801, %v2800
    %v2953 = vpack.c.b16 %v2803, %v2802
    %v2954 = vpack.c.b16 %v2805, %v2804
    %v2955 = vpack.c.b16 %v2807, %v2806
    %v2956 = vpack.c.b16 %v2809, %v2808
    %v2957 = vpack.c.b16 %v2811, %v2810
    %v2958 = vpack.c.b16 %v2813, %v2812
    %v2959 = vpack.c.b16 %v2815, %v2814
    %v2960 = vpack.c.b16 %v2817, %v2816
    %v2961 = vpack.c.b16 %v2819, %v2818
    %v2962 = vpack.c.b16 %v2821, %v2820
    %v2963 = vpack.c.b16 %v2823, %v2822
    %v2964 = vpack.c.b16 %v2825, %v2824
    %v2965 = vpack.c.b16 %v2827, %v2826
    %v2966 = vpack.c.b16 %v2829, %v2828
    %v2967 = vpack.c.b16 %v2831, %v2830
    %v2968 = vpack.c.b16 %v2833, %v2832
    %v2969 = vpack.c.b16 %v2835, %v2834
    %v2970 = vpack.c.b16 %v2837, %v2836
    %v2971 = vpack.c.b16 %v2839, %v2838
    %v2972 = vpack.c.b16 %v2841, %v2840
    %v2973 = vpack.c.b16 %v2843, %v2842
    %v2974 = vpack.c.b16 %v2845, %v2844
    %v2975 = vpack.c.b16 %v2847, %v2846
    %3104 = vmatprep.subr.bf16.mxu0 0
    %3105 = vmatpush1.bf16.msra.mxu0 %v2848
    %3106 = vmatprep.subr.bf16.mxu0 0
    %3107 = vmatpush1.bf16.msra.mxu0 %v2849
    %3108 = vmatprep.subr.bf16.mxu0 0
    %3109 = vmatpush1.bf16.msra.mxu0 %v2850
    %3110 = vmatprep.subr.bf16.mxu0 0
    %3111 = vmatpush1.bf16.msra.mxu0 %v2851
    %3112 = vmatprep.subr.bf16.mxu0 0
    %3113 = vmatpush1.bf16.msra.mxu0 %v2852
    %3114 = vmatprep.subr.bf16.mxu0 0
    %3115 = vmatpush1.bf16.msra.mxu0 %v2853
    %3116 = vmatprep.subr.bf16.mxu0 0
    %3117 = vmatpush1.bf16.msra.mxu0 %v2854
    %3118 = vmatprep.subr.bf16.mxu0 0
    %3119 = vmatpush1.bf16.msra.mxu0 %v2855
    %3120 = vmatprep.subr.bf16.mxu0 0
    %3121 = vmatpush1.bf16.msra.mxu0 %v2856
    %3122 = vmatprep.subr.bf16.mxu0 0
    %3123 = vmatpush1.bf16.msra.mxu0 %v2857
    %3124 = vmatprep.subr.bf16.mxu0 0
    %3125 = vmatpush1.bf16.msra.mxu0 %v2858
    %3126 = vmatprep.subr.bf16.mxu0 0
    %3127 = vmatpush1.bf16.msra.mxu0 %v2859
    %3128 = vmatprep.subr.bf16.mxu0 0
    %3129 = vmatpush1.bf16.msra.mxu0 %v2860
    %3130 = vmatprep.subr.bf16.mxu0 0
    %3131 = vmatpush1.bf16.msra.mxu0 %v2861
    %3132 = vmatprep.subr.bf16.mxu0 0
    %3133 = vmatpush1.bf16.msra.mxu0 %v2862
    %3134 = vmatprep.subr.bf16.mxu0 0
    %3135 = vmatpush1.bf16.msra.mxu0 %v2863
    %3136 = vmatprep.mubr.bf16.mxu0 %v2044
    %3137 = vmatmul.mubr.bf16.gmra.mrb[0].mxu0 %v2043
    %v3138 = vpop.f32.mrb[0].mxu0
    %v3139 = vadd.f32 %v2335, %v3138
    %v3140 = vpop.f32.mrb[0].mxu0
    %v3141 = vpop.f32.mrb[0].mxu0
    %v3142 = vadd.f32 %v2335, %v3141
    %v3143 = vpop.f32.mrb[0].mxu0
    %3144 = vmatprep.mubr.bf16.mxu0 %v2060
    %3145 = vmatmul.mubr.bf16.gmra.mrb[0].mxu0 %v2059
    %v3146 = vpop.f32.mrb[0].mxu0
    %v3147 = vadd.f32 %v2335, %v3146
    %v3148 = vpop.f32.mrb[0].mxu0
    %v3149 = vpop.f32.mrb[0].mxu0
    %v3150 = vadd.f32 %v2335, %v3149
    %v3151 = vpop.f32.mrb[0].mxu0
    %3152 = vdwg.mxu0
    %3153 = vmatprep.subr.bf16.mxu0 0
    %3154 = vmatpush1.bf16.msra.mxu0 %v2864
    %3155 = vmatprep.subr.bf16.mxu0 0
    %3156 = vmatpush1.bf16.msra.mxu0 %v2865
    %3157 = vmatprep.subr.bf16.mxu0 0
    %3158 = vmatpush1.bf16.msra.mxu0 %v2866
    %3159 = vmatprep.subr.bf16.mxu0 0
    %3160 = vmatpush1.bf16.msra.mxu0 %v2867
    %3161 = vmatprep.subr.bf16.mxu0 0
    %3162 = vmatpush1.bf16.msra.mxu0 %v2868
    %3163 = vmatprep.subr.bf16.mxu0 0
    %3164 = vmatpush1.bf16.msra.mxu0 %v2869
    %3165 = vmatprep.subr.bf16.mxu0 0
    %3166 = vmatpush1.bf16.msra.mxu0 %v2870
    %3167 = vmatprep.subr.bf16.mxu0 0
    %3168 = vmatpush1.bf16.msra.mxu0 %v2871
    %3169 = vmatprep.subr.bf16.mxu0 0
    %3170 = vmatpush1.bf16.msra.mxu0 %v2872
    %3171 = vmatprep.subr.bf16.mxu0 0
    %3172 = vmatpush1.bf16.msra.mxu0 %v2873
    %3173 = vmatprep.subr.bf16.mxu0 0
    %3174 = vmatpush1.bf16.msra.mxu0 %v2874
    %3175 = vmatprep.subr.bf16.mxu0 0
    %3176 = vmatpush1.bf16.msra.mxu0 %v2875
    %3177 = vmatprep.subr.bf16.mxu0 0
    %3178 = vmatpush1.bf16.msra.mxu0 %v2876
    %3179 = vmatprep.subr.bf16.mxu0 0
    %3180 = vmatpush1.bf16.msra.mxu0 %v2877
    %3181 = vmatprep.subr.bf16.mxu0 0
    %3182 = vmatpush1.bf16.msra.mxu0 %v2878
    %3183 = vmatprep.subr.bf16.mxu0 0
    %3184 = vmatpush1.bf16.msra.mxu0 %v2879
    %3185 = vmatprep.mubr.bf16.mxu0 %v2046
    %3186 = vmatmul.mubr.bf16.gmra.mrb[0].mxu0 %v2045
    %v3187 = vpop.f32.mrb[0].mxu0
    %v3188 = vadd.f32 %v3139, %v3187
    %v3189 = vpop.f32.mrb[0].mxu0
    %v3190 = vpop.f32.mrb[0].mxu0
    %v3191 = vadd.f32 %v3142, %v3190
    %v3192 = vpop.f32.mrb[0].mxu0
    %3193 = vmatprep.mubr.bf16.mxu0 %v2062
    %3194 = vmatmul.mubr.bf16.gmra.mrb[0].mxu0 %v2061
    %v3195 = vpop.f32.mrb[0].mxu0
    %v3196 = vadd.f32 %v3147, %v3195
    %v3197 = vpop.f32.mrb[0].mxu0
    %v3198 = vpop.f32.mrb[0].mxu0
    %v3199 = vadd.f32 %v3150, %v3198
    %v3200 = vpop.f32.mrb[0].mxu0
    %3201 = vdwg.mxu0
    %3202 = vmatprep.subr.bf16.mxu0 0
    %3203 = vmatpush1.bf16.msra.mxu0 %v2880
    %3204 = vmatprep.subr.bf16.mxu0 0
    %3205 = vmatpush1.bf16.msra.mxu0 %v2881
    %3206 = vmatprep.subr.bf16.mxu0 0
    %3207 = vmatpush1.bf16.msra.mxu0 %v2882
    %3208 = vmatprep.subr.bf16.mxu0 0
    %3209 = vmatpush1.bf16.msra.mxu0 %v2883
    %3210 = vmatprep.subr.bf16.mxu0 0
    %3211 = vmatpush1.bf16.msra.mxu0 %v2884
    %3212 = vmatprep.subr.bf16.mxu0 0
    %3213 = vmatpush1.bf16.msra.mxu0 %v2885
    %3214 = vmatprep.subr.bf16.mxu0 0
    %3215 = vmatpush1.bf16.msra.mxu0 %v2886
    %3216 = vmatprep.subr.bf16.mxu0 0
    %3217 = vmatpush1.bf16.msra.mxu0 %v2887
    %3218 = vmatprep.subr.bf16.mxu0 0
    %3219 = vmatpush1.bf16.msra.mxu0 %v2888
    %3220 = vmatprep.subr.bf16.mxu0 0
    %3221 = vmatpush1.bf16.msra.mxu0 %v2889
    %3222 = vmatprep.subr.bf16.mxu0 0
    %3223 = vmatpush1.bf16.msra.mxu0 %v2890
    %3224 = vmatprep.subr.bf16.mxu0 0
    %3225 = vmatpush1.bf16.msra.mxu0 %v2891
    %3226 = vmatprep.subr.bf16.mxu0 0
    %3227 = vmatpush1.bf16.msra.mxu0 %v2892
    %3228 = vmatprep.subr.bf16.mxu0 0
    %3229 = vmatpush1.bf16.msra.mxu0 %v2893
    %3230 = vmatprep.subr.bf16.mxu0 0
    %3231 = vmatpush1.bf16.msra.mxu0 %v2894
    %3232 = vmatprep.subr.bf16.mxu0 0
    %3233 = vmatpush1.bf16.msra.mxu0 %v2895
    %3234 = vmatprep.mubr.bf16.mxu0 %v2048
    %3235 = vmatmul.mubr.bf16.gmra.mrb[0].mxu0 %v2047
    %v3236 = vpop.f32.mrb[0].mxu0
    %v3237 = vadd.f32 %v3188, %v3236
    %v3238 = vpop.f32.mrb[0].mxu0
    %v3239 = vpop.f32.mrb[0].mxu0
    %v3240 = vadd.f32 %v3191, %v3239
    %v3241 = vpop.f32.mrb[0].mxu0
    %3242 = vmatprep.mubr.bf16.mxu0 %v2064
    %3243 = vmatmul.mubr.bf16.gmra.mrb[0].mxu0 %v2063
    %v3244 = vpop.f32.mrb[0].mxu0
    %v3245 = vadd.f32 %v3196, %v3244
    %v3246 = vpop.f32.mrb[0].mxu0
    %v3247 = vpop.f32.mrb[0].mxu0
    %v3248 = vadd.f32 %v3199, %v3247
    %v3249 = vpop.f32.mrb[0].mxu0
    %3250 = vdwg.mxu0
    %3251 = vmatprep.subr.bf16.mxu0 0
    %3252 = vmatpush1.bf16.msra.mxu0 %v2896
    %3253 = vmatprep.subr.bf16.mxu0 0
    %3254 = vmatpush1.bf16.msra.mxu0 %v2897
    %3255 = vmatprep.subr.bf16.mxu0 0
    %3256 = vmatpush1.bf16.msra.mxu0 %v2898
    %3257 = vmatprep.subr.bf16.mxu0 0
    %3258 = vmatpush1.bf16.msra.mxu0 %v2899
    %3259 = vmatprep.subr.bf16.mxu0 0
    %3260 = vmatpush1.bf16.msra.mxu0 %v2900
    %3261 = vmatprep.subr.bf16.mxu0 0
    %3262 = vmatpush1.bf16.msra.mxu0 %v2901
    %3263 = vmatprep.subr.bf16.mxu0 0
    %3264 = vmatpush1.bf16.msra.mxu0 %v2902
    %3265 = vmatprep.subr.bf16.mxu0 0
    %3266 = vmatpush1.bf16.msra.mxu0 %v2903
    %3267 = vmatprep.subr.bf16.mxu0 0
    %3268 = vmatpush1.bf16.msra.mxu0 %v2904
    %3269 = vmatprep.subr.bf16.mxu0 0
    %3270 = vmatpush1.bf16.msra.mxu0 %v2905
    %3271 = vmatprep.subr.bf16.mxu0 0
    %3272 = vmatpush1.bf16.msra.mxu0 %v2906
    %3273 = vmatprep.subr.bf16.mxu0 0
    %3274 = vmatpush1.bf16.msra.mxu0 %v2907
    %3275 = vmatprep.subr.bf16.mxu0 0
    %3276 = vmatpush1.bf16.msra.mxu0 %v2908
    %3277 = vmatprep.subr.bf16.mxu0 0
    %3278 = vmatpush1.bf16.msra.mxu0 %v2909
    %3279 = vmatprep.subr.bf16.mxu0 0
    %3280 = vmatpush1.bf16.msra.mxu0 %v2910
    %3281 = vmatprep.subr.bf16.mxu0 0
    %3282 = vmatpush1.bf16.msra.mxu0 %v2911
    %3283 = vmatprep.mubr.bf16.mxu0 %v2050
    %3284 = vmatmul.mubr.bf16.gmra.mrb[0].mxu0 %v2049
    %v3285 = vpop.f32.mrb[0].mxu0
    %v3286 = vadd.f32 %v3237, %v3285
    %v3287 = vpop.f32.mrb[0].mxu0
    %v3288 = vpop.f32.mrb[0].mxu0
    %v3289 = vadd.f32 %v3240, %v3288
    %v3290 = vpop.f32.mrb[0].mxu0
    %3291 = vmatprep.mubr.bf16.mxu0 %v2066
    %3292 = vmatmul.mubr.bf16.gmra.mrb[0].mxu0 %v2065
    %v3293 = vpop.f32.mrb[0].mxu0
    %v3294 = vadd.f32 %v3245, %v3293
    %v3295 = vpop.f32.mrb[0].mxu0
    %v3296 = vpop.f32.mrb[0].mxu0
    %v3297 = vadd.f32 %v3248, %v3296
    %v3298 = vpop.f32.mrb[0].mxu0
    %3299 = vdwg.mxu0
    %3300 = vmatprep.subr.bf16.mxu0 0
    %3301 = vmatpush1.bf16.msra.mxu0 %v2912
    %3302 = vmatprep.subr.bf16.mxu0 0
    %3303 = vmatpush1.bf16.msra.mxu0 %v2913
    %3304 = vmatprep.subr.bf16.mxu0 0
    %3305 = vmatpush1.bf16.msra.mxu0 %v2914
    %3306 = vmatprep.subr.bf16.mxu0 0
    %3307 = vmatpush1.bf16.msra.mxu0 %v2915
    %3308 = vmatprep.subr.bf16.mxu0 0
    %3309 = vmatpush1.bf16.msra.mxu0 %v2916
    %3310 = vmatprep.subr.bf16.mxu0 0
    %3311 = vmatpush1.bf16.msra.mxu0 %v2917
    %3312 = vmatprep.subr.bf16.mxu0 0
    %3313 = vmatpush1.bf16.msra.mxu0 %v2918
    %3314 = vmatprep.subr.bf16.mxu0 0
    %3315 = vmatpush1.bf16.msra.mxu0 %v2919
    %3316 = vmatprep.subr.bf16.mxu0 0
    %3317 = vmatpush1.bf16.msra.mxu0 %v2920
    %3318 = vmatprep.subr.bf16.mxu0 0
    %3319 = vmatpush1.bf16.msra.mxu0 %v2921
    %3320 = vmatprep.subr.bf16.mxu0 0
    %3321 = vmatpush1.bf16.msra.mxu0 %v2922
    %3322 = vmatprep.subr.bf16.mxu0 0
    %3323 = vmatpush1.bf16.msra.mxu0 %v2923
    %3324 = vmatprep.subr.bf16.mxu0 0
    %3325 = vmatpush1.bf16.msra.mxu0 %v2924
    %3326 = vmatprep.subr.bf16.mxu0 0
    %3327 = vmatpush1.bf16.msra.mxu0 %v2925
    %3328 = vmatprep.subr.bf16.mxu0 0
    %3329 = vmatpush1.bf16.msra.mxu0 %v2926
    %3330 = vmatprep.subr.bf16.mxu0 0
    %3331 = vmatpush1.bf16.msra.mxu0 %v2927
    %3332 = vmatprep.mubr.bf16.mxu0 %v2052
    %3333 = vmatmul.mubr.bf16.gmra.mrb[0].mxu0 %v2051
    %v3334 = vpop.f32.mrb[0].mxu0
    %v3335 = vadd.f32 %v3286, %v3334
    %v3336 = vpop.f32.mrb[0].mxu0
    %v3337 = vpop.f32.mrb[0].mxu0
    %v3338 = vadd.f32 %v3289, %v3337
    %v3339 = vpop.f32.mrb[0].mxu0
    %3340 = vmatprep.mubr.bf16.mxu0 %v2068
    %3341 = vmatmul.mubr.bf16.gmra.mrb[0].mxu0 %v2067
    %v3342 = vpop.f32.mrb[0].mxu0
    %v3343 = vadd.f32 %v3294, %v3342
    %v3344 = vpop.f32.mrb[0].mxu0
    %v3345 = vpop.f32.mrb[0].mxu0
    %v3346 = vadd.f32 %v3297, %v3345
    %v3347 = vpop.f32.mrb[0].mxu0
    %3348 = vdwg.mxu0
    %3349 = vmatprep.subr.bf16.mxu0 0
    %3350 = vmatpush1.bf16.msra.mxu0 %v2928
    %3351 = vmatprep.subr.bf16.mxu0 0
    %3352 = vmatpush1.bf16.msra.mxu0 %v2929
    %3353 = vmatprep.subr.bf16.mxu0 0
    %3354 = vmatpush1.bf16.msra.mxu0 %v2930
    %3355 = vmatprep.subr.bf16.mxu0 0
    %3356 = vmatpush1.bf16.msra.mxu0 %v2931
    %3357 = vmatprep.subr.bf16.mxu0 0
    %3358 = vmatpush1.bf16.msra.mxu0 %v2932
    %3359 = vmatprep.subr.bf16.mxu0 0
    %3360 = vmatpush1.bf16.msra.mxu0 %v2933
    %3361 = vmatprep.subr.bf16.mxu0 0
    %3362 = vmatpush1.bf16.msra.mxu0 %v2934
    %3363 = vmatprep.subr.bf16.mxu0 0
    %3364 = vmatpush1.bf16.msra.mxu0 %v2935
    %3365 = vmatprep.subr.bf16.mxu0 0
    %3366 = vmatpush1.bf16.msra.mxu0 %v2936
    %3367 = vmatprep.subr.bf16.mxu0 0
    %3368 = vmatpush1.bf16.msra.mxu0 %v2937
    %3369 = vmatprep.subr.bf16.mxu0 0
    %3370 = vmatpush1.bf16.msra.mxu0 %v2938
    %3371 = vmatprep.subr.bf16.mxu0 0
    %3372 = vmatpush1.bf16.msra.mxu0 %v2939
    %3373 = vmatprep.subr.bf16.mxu0 0
    %3374 = vmatpush1.bf16.msra.mxu0 %v2940
    %3375 = vmatprep.subr.bf16.mxu0 0
    %3376 = vmatpush1.bf16.msra.mxu0 %v2941
    %3377 = vmatprep.subr.bf16.mxu0 0
    %3378 = vmatpush1.bf16.msra.mxu0 %v2942
    %3379 = vmatprep.subr.bf16.mxu0 0
    %3380 = vmatpush1.bf16.msra.mxu0 %v2943
    %3381 = vmatprep.mubr.bf16.mxu0 %v2054
    %3382 = vmatmul.mubr.bf16.gmra.mrb[0].mxu0 %v2053
    %v3383 = vpop.f32.mrb[0].mxu0
    %v3384 = vadd.f32 %v3335, %v3383
    %v3385 = vpop.f32.mrb[0].mxu0
    %v3386 = vpop.f32.mrb[0].mxu0
    %v3387 = vadd.f32 %v3338, %v3386
    %v3388 = vpop.f32.mrb[0].mxu0
    %3389 = vmatprep.mubr.bf16.mxu0 %v2070
    %3390 = vmatmul.mubr.bf16.gmra.mrb[0].mxu0 %v2069
    %v3391 = vpop.f32.mrb[0].mxu0
    %v3392 = vadd.f32 %v3343, %v3391
    %v3393 = vpop.f32.mrb[0].mxu0
    %v3394 = vpop.f32.mrb[0].mxu0
    %v3395 = vadd.f32 %v3346, %v3394
    %v3396 = vpop.f32.mrb[0].mxu0
    %3397 = vdwg.mxu0
    %3398 = vmatprep.subr.bf16.mxu0 0
    %3399 = vmatpush1.bf16.msra.mxu0 %v2944
    %3400 = vmatprep.subr.bf16.mxu0 0
    %3401 = vmatpush1.bf16.msra.mxu0 %v2945
    %3402 = vmatprep.subr.bf16.mxu0 0
    %3403 = vmatpush1.bf16.msra.mxu0 %v2946
    %3404 = vmatprep.subr.bf16.mxu0 0
    %3405 = vmatpush1.bf16.msra.mxu0 %v2947
    %3406 = vmatprep.subr.bf16.mxu0 0
    %3407 = vmatpush1.bf16.msra.mxu0 %v2948
    %3408 = vmatprep.subr.bf16.mxu0 0
    %3409 = vmatpush1.bf16.msra.mxu0 %v2949
    %3410 = vmatprep.subr.bf16.mxu0 0
    %3411 = vmatpush1.bf16.msra.mxu0 %v2950
    %3412 = vmatprep.subr.bf16.mxu0 0
    %3413 = vmatpush1.bf16.msra.mxu0 %v2951
    %3414 = vmatprep.subr.bf16.mxu0 0
    %3415 = vmatpush1.bf16.msra.mxu0 %v2952
    %3416 = vmatprep.subr.bf16.mxu0 0
    %3417 = vmatpush1.bf16.msra.mxu0 %v2953
    %3418 = vmatprep.subr.bf16.mxu0 0
    %3419 = vmatpush1.bf16.msra.mxu0 %v2954
    %3420 = vmatprep.subr.bf16.mxu0 0
    %3421 = vmatpush1.bf16.msra.mxu0 %v2955
    %3422 = vmatprep.subr.bf16.mxu0 0
    %3423 = vmatpush1.bf16.msra.mxu0 %v2956
    %3424 = vmatprep.subr.bf16.mxu0 0
    %3425 = vmatpush1.bf16.msra.mxu0 %v2957
    %3426 = vmatprep.subr.bf16.mxu0 0
    %3427 = vmatpush1.bf16.msra.mxu0 %v2958
    %3428 = vmatprep.subr.bf16.mxu0 0
    %3429 = vmatpush1.bf16.msra.mxu0 %v2959
    %3430 = vmatprep.mubr.bf16.mxu0 %v2056
    %3431 = vmatmul.mubr.bf16.gmra.mrb[0].mxu0 %v2055
    %v3432 = vpop.f32.mrb[0].mxu0
    %v3433 = vadd.f32 %v3384, %v3432
    %v3434 = vpop.f32.mrb[0].mxu0
    %v3435 = vpop.f32.mrb[0].mxu0
    %v3436 = vadd.f32 %v3387, %v3435
    %v3437 = vpop.f32.mrb[0].mxu0
    %3438 = vmatprep.mubr.bf16.mxu0 %v2072
    %3439 = vmatmul.mubr.bf16.gmra.mrb[0].mxu0 %v2071
    %v3440 = vpop.f32.mrb[0].mxu0
    %v3441 = vadd.f32 %v3392, %v3440
    %v3442 = vpop.f32.mrb[0].mxu0
    %v3443 = vpop.f32.mrb[0].mxu0
    %v3444 = vadd.f32 %v3395, %v3443
    %v3445 = vpop.f32.mrb[0].mxu0
    %3446 = vdwg.mxu0
    %3447 = vmatprep.subr.bf16.mxu0 0
    %3448 = vmatpush1.bf16.msra.mxu0 %v2960
    %3449 = vmatprep.subr.bf16.mxu0 0
    %3450 = vmatpush1.bf16.msra.mxu0 %v2961
    %3451 = vmatprep.subr.bf16.mxu0 0
    %3452 = vmatpush1.bf16.msra.mxu0 %v2962
    %3453 = vmatprep.subr.bf16.mxu0 0
    %3454 = vmatpush1.bf16.msra.mxu0 %v2963
    %3455 = vmatprep.subr.bf16.mxu0 0
    %3456 = vmatpush1.bf16.msra.mxu0 %v2964
    %3457 = vmatprep.subr.bf16.mxu0 0
    %3458 = vmatpush1.bf16.msra.mxu0 %v2965
    %3459 = vmatprep.subr.bf16.mxu0 0
    %3460 = vmatpush1.bf16.msra.mxu0 %v2966
    %3461 = vmatprep.subr.bf16.mxu0 0
    %3462 = vmatpush1.bf16.msra.mxu0 %v2967
    %3463 = vmatprep.subr.bf16.mxu0 0
    %3464 = vmatpush1.bf16.msra.mxu0 %v2968
    %3465 = vmatprep.subr.bf16.mxu0 0
    %3466 = vmatpush1.bf16.msra.mxu0 %v2969
    %3467 = vmatprep.subr.bf16.mxu0 0
    %3468 = vmatpush1.bf16.msra.mxu0 %v2970
    %3469 = vmatprep.subr.bf16.mxu0 0
    %3470 = vmatpush1.bf16.msra.mxu0 %v2971
    %3471 = vmatprep.subr.bf16.mxu0 0
    %3472 = vmatpush1.bf16.msra.mxu0 %v2972
    %3473 = vmatprep.subr.bf16.mxu0 0
    %3474 = vmatpush1.bf16.msra.mxu0 %v2973
    %3475 = vmatprep.subr.bf16.mxu0 0
    %3476 = vmatpush1.bf16.msra.mxu0 %v2974
    %3477 = vmatprep.subr.bf16.mxu0 0
    %3478 = vmatpush1.bf16.msra.mxu0 %v2975
    %3479 = vmatprep.mubr.bf16.mxu0 %v2058
    %3480 = vmatmul.mubr.bf16.gmra.mrb[0].mxu0 %v2057
    %v3481 = vpop.f32.mrb[0].mxu0
    %v3482 = vadd.f32 %v3433, %v3481
    %v3483 = vpop.f32.mrb[0].mxu0
    %v3484 = vpop.f32.mrb[0].mxu0
    %v3485 = vadd.f32 %v3436, %v3484
    %v3486 = vpop.f32.mrb[0].mxu0
    %3487 = vmatprep.mubr.bf16.mxu0 %v2074
    %3488 = vmatmul.mubr.bf16.gmra.mrb[0].mxu0 %v2073
    %v3489 = vpop.f32.mrb[0].mxu0
    %v3490 = vadd.f32 %v3441, %v3489
    %v3491 = vpop.f32.mrb[0].mxu0
    %v3492 = vpop.f32.mrb[0].mxu0
    %v3493 = vadd.f32 %v3444, %v3492
    %v3494 = vpop.f32.mrb[0].mxu0
    %3495 = vdwg.mxu0
    %v3496 = vadd.f32 %v1266, %v3482
    %v3497 = vadd.f32 %v1267, %v3485
    %v3498 = vadd.f32 %v1268, %v3490
    %v3499 = vadd.f32 %v1269, %v3493
    %v3500 = vld [vmem:[%s17] sm:$0x1]
    %v3501 = vld [vmem:[%s18] sm:$0x1]
    %v3502 = vsel %vm442, %v3496, 0.0
    %3503 = vadd.xlane.f32.xlu0 %v3502
    %v3504 = vpop.xlane.xlu0 %3503
    %v3505 = vsel %vm442, %v3497, 0.0
    %3506 = vadd.xlane.f32.xlu0 %v3505
    %v3507 = vpop.xlane.xlu0 %3506
    %v3508 = vsel %vm442, %v3498, 0.0
    %3509 = vadd.xlane.f32.xlu0 %v3508
    %v3510 = vpop.xlane.xlu0 %3509
    %v3511 = vsel %vm442, %v3499, 0.0
    %3512 = vadd.xlane.f32.xlu0 %v3511
    %v3513 = vpop.xlane.xlu0 %3512
    %v3514 = vmul.f32 %v3504, %v1213
    %v3515 = vmul.f32 %v3507, %v1213
    %v3516 = vmul.f32 %v3510, %v1213
    %v3517 = vmul.f32 %v3513, %v1213
    %v3518 = vsub.f32 %v3496, %v3514
    %v3519 = vsub.f32 %v3497, %v3515
    %v3520 = vsub.f32 %v3498, %v3516
    %v3521 = vsub.f32 %v3499, %v3517
    %v3522 = vmul.f32 %v3518, %v3518
    %v3523 = vmul.f32 %v3519, %v3519
    %v3524 = vmul.f32 %v3520, %v3520
    %v3525 = vmul.f32 %v3521, %v3521
    %v3526 = vsel %vm442, %v3522, 0.0
    %3527 = vadd.xlane.f32.xlu0 %v3526
    %v3528 = vpop.xlane.xlu0 %3527
    %v3529 = vsel %vm442, %v3523, 0.0
    %3530 = vadd.xlane.f32.xlu0 %v3529
    %v3531 = vpop.xlane.xlu0 %3530
    %v3532 = vsel %vm442, %v3524, 0.0
    %3533 = vadd.xlane.f32.xlu0 %v3532
    %v3534 = vpop.xlane.xlu0 %3533
    %v3535 = vsel %vm442, %v3525, 0.0
    %3536 = vadd.xlane.f32.xlu0 %v3535
    %v3537 = vpop.xlane.xlu0 %3536
    %v3538 = vmul.f32 %v3528, %v1213
    %v3539 = vmul.f32 %v3531, %v1213
    %v3540 = vmul.f32 %v3534, %v1213
    %v3541 = vmul.f32 %v3537, %v1213
    %v3542 = vadd.f32 %v3538, 1e-05
    %v3543 = vadd.f32 %v3539, 1e-05
    %v3544 = vadd.f32 %v3540, 1e-05
    %v3545 = vadd.f32 %v3541, 1e-05
    %v3546 = vrsqrt.pop %v3542
    %v3547 = vrsqrt.pop %v3543
    %v3548 = vrsqrt.pop %v3544
    %v3549 = vrsqrt.pop %v3545
    %v3550 = vmul.f32 %v3518, %v3546
    %v3551 = vmul.f32 %v3519, %v3547
    %v3552 = vmul.f32 %v3520, %v3548
    %v3553 = vmul.f32 %v3521, %v3549
    %v3554 = vlaneseq
    %v3555 = vshrl.u32 %v3554, 7
    %v3556 = vsub.s32 0, %v3555
    %v3557 = vrot.slane %v3500, %v3556
    %v3558 = vmul.f32 %v3550, %v3557
    %v3559 = vmul.f32 %v3551, %v3557
    %v3560 = vmul.f32 %v3552, %v3557
    %v3561 = vmul.f32 %v3553, %v3557
    %v3562 = vlaneseq
    %v3563 = vshrl.u32 %v3562, 7
    %v3564 = vsub.s32 0, %v3563
    %v3565 = vrot.slane %v3501, %v3564
    %v3566 = vadd.f32 %v3558, %v3565
    %v3567 = vadd.f32 %v3559, %v3565
    %v3568 = vadd.f32 %v3560, %v3565
    %v3569 = vadd.f32 %v3561, %v3565
    %s3570 = scalar_lea.vmem %s7, 32
    %v3571 = vld [vmem:[%s3570] sm:$0xff]
    %v3572 = vld [vmem:[%s3570 + $0x8] sm:$0xff]
    %v3573 = vld [vmem:[%s3570 + $0x10] sm:$0xff]
    %v3574 = vld [vmem:[%s3570 + $0x18] sm:$0xff]
    %v3575 = vld [vmem:[%s8 + $0x1] sm:$0x1]
    %v3576 = vlaneseq
    %v3577 = vshrl.u32 %v3576, 7
    %v3578 = vsub.s32 0, %v3577
    %v3579 = vrot.slane %v3575, %v3578
    %v3581 = vsel %vm442, %v3566, 0
    %v3584 = vsel %vm442, %v3567, 0
    %v3587 = vsel %vm442, %v3568, 0
    %v3590 = vsel %vm442, %v3569, 0
    %3592 = vmatprep.subr.mxu0 0.0
    %3593 = vmatpush1.msra.mxu0 %v3571
    %3594 = vmatprep.subr.mxu0 0.0
    %3595 = vmatpush1.msra.mxu0 %v3572
    %3596 = vmatprep.subr.mxu0 0.0
    %3597 = vmatpush1.msra.mxu0 %v3573
    %3598 = vmatprep.subr.mxu0 0.0
    %3599 = vmatpush1.msra.mxu0 %v3574
    %3600 = vmatprep.subr.mxu0 0.0
    %3601 = vmatpush1.msra.mxu0 0.0
    %3602 = vmatprep.subr.mxu0 0.0
    %3603 = vmatpush1.msra.mxu0 0.0
    %3604 = vmatprep.subr.mxu0 0.0
    %3605 = vmatpush1.msra.mxu0 0.0
    %3606 = vmatprep.subr.mxu0 0.0
    %3607 = vmatpush1.msra.mxu0 0.0
    %3608 = vmatprep.subr.mxu0 0.0
    %3609 = vmatpush1.msra.mxu0 0.0
    %3610 = vmatprep.subr.mxu0 0.0
    %3611 = vmatpush1.msra.mxu0 0.0
    %3612 = vmatprep.subr.mxu0 0.0
    %3613 = vmatpush1.msra.mxu0 0.0
    %3614 = vmatprep.subr.mxu0 0.0
    %3615 = vmatpush1.msra.mxu0 0.0
    %3616 = vmatprep.subr.mxu0 0.0
    %3617 = vmatpush1.msra.mxu0 0.0
    %3618 = vmatprep.subr.mxu0 0.0
    %3619 = vmatpush1.msra.mxu0 0.0
    %3620 = vmatprep.subr.mxu0 0.0
    %3621 = vmatpush1.msra.mxu0 0.0
    %3622 = vmatprep.subr.mxu0 0.0
    %3623 = vmatpush1.msra.mxu0 0.0
    %3624 = vmatprep.subr.mxu0 0.0
    %3625 = vmatpush1.msra.mxu0 0.0
    %3626 = vmatprep.subr.mxu0 0.0
    %3627 = vmatpush1.msra.mxu0 0.0
    %3628 = vmatprep.subr.mxu0 0.0
    %3629 = vmatpush1.msra.mxu0 0.0
    %3630 = vmatprep.subr.mxu0 0.0
    %3631 = vmatpush1.msra.mxu0 0.0
    %3632 = vmatprep.subr.mxu0 0.0
    %3633 = vmatpush1.msra.mxu0 0.0
    %3634 = vmatprep.subr.mxu0 0.0
    %3635 = vmatpush1.msra.mxu0 0.0
    %3636 = vmatprep.subr.mxu0 0.0
    %3637 = vmatpush1.msra.mxu0 0.0
    %3638 = vmatprep.subr.mxu0 0.0
    %3639 = vmatpush1.msra.mxu0 0.0
    %3640 = vmatprep.subr.mxu0 0.0
    %3641 = vmatpush1.msra.mxu0 0.0
    %3642 = vmatprep.subr.mxu0 0.0
    %3643 = vmatpush1.msra.mxu0 0.0
    %3644 = vmatprep.subr.mxu0 0.0
    %3645 = vmatpush1.msra.mxu0 0.0
    %3646 = vmatprep.subr.mxu0 0.0
    %3647 = vmatpush1.msra.mxu0 0.0
    %3648 = vmatprep.subr.mxu0 0.0
    %3649 = vmatpush1.msra.mxu0 0.0
    %3650 = vmatprep.subr.mxu0 0.0
    %3651 = vmatpush1.msra.mxu0 0.0
    %3652 = vmatprep.subr.mxu0 0.0
    %3653 = vmatpush1.msra.mxu0 0.0
    %3654 = vmatprep.subr.mxu0 0.0
    %3655 = vmatpush1.msra.mxu0 0.0
    %3656 = vmatprep.mubr.f32.mxu0 0.0
    %3657 = vmatmul.mubr.f32.gmra.mrb[0].mxu0 %v3581
    %v3658 = vpop.f32.mrb[0].mxu0
    %v3659 = vadd.f32 %v3579, %v3658
    %v3660 = vpop.f32.mrb[0].mxu0
    %3661 = vmatprep.mubr.f32.mxu0 0.0
    %3662 = vmatmul.mubr.f32.gmra.mrb[0].mxu0 %v3584
    %v3663 = vpop.f32.mrb[0].mxu0
    %v3664 = vadd.f32 %v3579, %v3663
    %v3665 = vpop.f32.mrb[0].mxu0
    %3666 = vmatprep.mubr.f32.mxu0 0.0
    %3667 = vmatmul.mubr.f32.gmra.mrb[0].mxu0 %v3587
    %v3668 = vpop.f32.mrb[0].mxu0
    %v3669 = vadd.f32 %v3579, %v3668
    %v3670 = vpop.f32.mrb[0].mxu0
    %3671 = vmatprep.mubr.f32.mxu0 0.0
    %3672 = vmatmul.mubr.f32.gmra.mrb[0].mxu0 %v3590
    %v3673 = vpop.f32.mrb[0].mxu0
    %v3674 = vadd.f32 %v3579, %v3673
    %v3675 = vpop.f32.mrb[0].mxu0
    %3676 = vdwg.mxu0
    %3681 = vrot.lane.b32.xlu0 %v3659, 96
    %v3682 = vpop.permute.xlu0 %3681
    %3683 = vrot.lane.b32.xlu0 %v3664, 96
    %v3684 = vpop.permute.xlu0 %3683
    %3685 = vrot.lane.b32.xlu0 %v3669, 96
    %v3686 = vpop.permute.xlu0 %3685
    %3687 = vrot.lane.b32.xlu0 %v3674, 96
    %v3688 = vpop.permute.xlu0 %3687
    %3693 = vxpose.xlu0.b32.start [1/16] %v3682, 128
    %3694 = vxpose.xlu0.b32.cont [2/16] %v3684, 128
    %3695 = vxpose.xlu0.b32.cont [3/16] %v3686, 128
    %3696 = vxpose.xlu0.b32.cont [4/16] %v3688, 128
    %3697 = vxpose.xlu0.b32.cont [5/16] 0.0, 128
    %3698 = vxpose.xlu0.b32.cont [6/16] 0.0, 128
    %3699 = vxpose.xlu0.b32.cont [7/16] 0.0, 128
    %3700 = vxpose.xlu0.b32.cont [8/16] 0.0, 128
    %3701 = vxpose.xlu0.b32.cont [9/16] 0.0, 128
    %3702 = vxpose.xlu0.b32.cont [10/16] 0.0, 128
    %3703 = vxpose.xlu0.b32.cont [11/16] 0.0, 128
    %3704 = vxpose.xlu0.b32.cont [12/16] 0.0, 128
    %3705 = vxpose.xlu0.b32.cont [13/16] 0.0, 128
    %3706 = vxpose.xlu0.b32.cont [14/16] 0.0, 128
    %3707 = vxpose.xlu0.b32.cont [15/16] 0.0, 128
    %3708 = vxpose.xlu0.b32.end [16/16] 0.0, 128
    %v3709 = vpop.trf.xlu0
    %v3710 = vpop.trf.xlu0
    %v3711 = vpop.trf.xlu0
    %v3712 = vpop.trf.xlu0
    %v3713 = vpop.trf.xlu0
    %v3714 = vpop.trf.xlu0
    %v3715 = vpop.trf.xlu0
    %v3716 = vpop.trf.xlu0
    %v3717 = vpop.trf.xlu0
    %v3718 = vpop.trf.xlu0
    %v3719 = vpop.trf.xlu0
    %v3720 = vpop.trf.xlu0
    %v3721 = vpop.trf.xlu0
    %v3722 = vpop.trf.xlu0
    %v3723 = vpop.trf.xlu0
    %v3724 = vpop.trf.xlu0
    %3729 = vrot.lane.b32.xlu0 %v3709, 32
    %v3730 = vpop.permute.xlu0 %3729
    %3731 = vrot.lane.b32.xlu0 %v3710, 32
    %v3732 = vpop.permute.xlu0 %3731
    %3733 = vrot.lane.b32.xlu0 %v3711, 32
    %v3734 = vpop.permute.xlu0 %3733
    %3735 = vrot.lane.b32.xlu0 %v3712, 32
    %v3736 = vpop.permute.xlu0 %3735
    %3741 = vrot.lane.b32.xlu0 %v3709, 64
    %v3742 = vpop.permute.xlu0 %3741
    %3743 = vrot.lane.b32.xlu0 %v3710, 64
    %v3744 = vpop.permute.xlu0 %3743
    %3745 = vrot.lane.b32.xlu0 %v3711, 64
    %v3746 = vpop.permute.xlu0 %3745
    %3747 = vrot.lane.b32.xlu0 %v3712, 64
    %v3748 = vpop.permute.xlu0 %3747
    %3753 = vrot.lane.b32.xlu0 %v3709, 96
    %v3754 = vpop.permute.xlu0 %3753
    %3755 = vrot.lane.b32.xlu0 %v3710, 96
    %v3756 = vpop.permute.xlu0 %3755
    %3757 = vrot.lane.b32.xlu0 %v3711, 96
    %v3758 = vpop.permute.xlu0 %3757
    %3759 = vrot.lane.b32.xlu0 %v3712, 96
    %v3760 = vpop.permute.xlu0 %3759
    %v3765 = vsel %vm442, %v3709, %v3730
    %v3766 = vsel %vm442, %v3710, %v3732
    %v3767 = vsel %vm442, %v3711, %v3734
    %v3768 = vsel %vm442, %v3712, %v3736
    %v3769 = vsel %vm632, %v3765, %v3742
    %v3770 = vsel %vm632, %v3766, %v3744
    %v3771 = vsel %vm632, %v3767, %v3746
    %v3772 = vsel %vm632, %v3768, %v3748
    %v3773 = vsel %vm637, %v3769, %v3754
    %v3774 = vsel %vm637, %v3770, %v3756
    %v3775 = vsel %vm637, %v3771, %v3758
    %v3776 = vsel %vm637, %v3772, %v3760
    %v3777 = vmul.f32 %v3773, %v409
    %v3778 = vmul.f32 %v3774, %v410
    %v3779 = vmul.f32 %v3775, %v411
    %v3780 = vmul.f32 %v3776, %v412
    %v3781 = vsel %vm442, %v3659, 0
    %v3783 = vsel %vm442, %v3664, 0
    %v3785 = vsel %vm442, %v3669, 0
    %v3787 = vsel %vm442, %v3674, 0
    %3789 = vmatprep.subr.mxu0 0.0
    %3790 = vmatpush1.msra.mxu0 %v3777
    %3791 = vmatprep.subr.mxu0 0.0
    %3792 = vmatpush1.msra.mxu0 %v3778
    %3793 = vmatprep.subr.mxu0 0.0
    %3794 = vmatpush1.msra.mxu0 %v3779
    %3795 = vmatprep.subr.mxu0 0.0
    %3796 = vmatpush1.msra.mxu0 %v3780
    %3797 = vmatprep.subr.mxu0 0.0
    %3798 = vmatpush1.msra.mxu0 0.0
    %3799 = vmatprep.subr.mxu0 0.0
    %3800 = vmatpush1.msra.mxu0 0.0
    %3801 = vmatprep.subr.mxu0 0.0
    %3802 = vmatpush1.msra.mxu0 0.0
    %3803 = vmatprep.subr.mxu0 0.0
    %3804 = vmatpush1.msra.mxu0 0.0
    %3805 = vmatprep.subr.mxu0 0.0
    %3806 = vmatpush1.msra.mxu0 0.0
    %3807 = vmatprep.subr.mxu0 0.0
    %3808 = vmatpush1.msra.mxu0 0.0
    %3809 = vmatprep.subr.mxu0 0.0
    %3810 = vmatpush1.msra.mxu0 0.0
    %3811 = vmatprep.subr.mxu0 0.0
    %3812 = vmatpush1.msra.mxu0 0.0
    %3813 = vmatprep.subr.mxu0 0.0
    %3814 = vmatpush1.msra.mxu0 0.0
    %3815 = vmatprep.subr.mxu0 0.0
    %3816 = vmatpush1.msra.mxu0 0.0
    %3817 = vmatprep.subr.mxu0 0.0
    %3818 = vmatpush1.msra.mxu0 0.0
    %3819 = vmatprep.subr.mxu0 0.0
    %3820 = vmatpush1.msra.mxu0 0.0
    %3821 = vmatprep.subr.mxu0 0.0
    %3822 = vmatpush1.msra.mxu0 0.0
    %3823 = vmatprep.subr.mxu0 0.0
    %3824 = vmatpush1.msra.mxu0 0.0
    %3825 = vmatprep.subr.mxu0 0.0
    %3826 = vmatpush1.msra.mxu0 0.0
    %3827 = vmatprep.subr.mxu0 0.0
    %3828 = vmatpush1.msra.mxu0 0.0
    %3829 = vmatprep.subr.mxu0 0.0
    %3830 = vmatpush1.msra.mxu0 0.0
    %3831 = vmatprep.subr.mxu0 0.0
    %3832 = vmatpush1.msra.mxu0 0.0
    %3833 = vmatprep.subr.mxu0 0.0
    %3834 = vmatpush1.msra.mxu0 0.0
    %3835 = vmatprep.subr.mxu0 0.0
    %3836 = vmatpush1.msra.mxu0 0.0
    %3837 = vmatprep.subr.mxu0 0.0
    %3838 = vmatpush1.msra.mxu0 0.0
    %3839 = vmatprep.subr.mxu0 0.0
    %3840 = vmatpush1.msra.mxu0 0.0
    %3841 = vmatprep.subr.mxu0 0.0
    %3842 = vmatpush1.msra.mxu0 0.0
    %3843 = vmatprep.subr.mxu0 0.0
    %3844 = vmatpush1.msra.mxu0 0.0
    %3845 = vmatprep.subr.mxu0 0.0
    %3846 = vmatpush1.msra.mxu0 0.0
    %3847 = vmatprep.subr.mxu0 0.0
    %3848 = vmatpush1.msra.mxu0 0.0
    %3849 = vmatprep.subr.mxu0 0.0
    %3850 = vmatpush1.msra.mxu0 0.0
    %3851 = vmatprep.subr.mxu0 0.0
    %3852 = vmatpush1.msra.mxu0 0.0
    %3853 = vmatprep.mubr.f32.mxu0 0.0
    %3854 = vmatmul.mubr.f32.gmra.mrb[0].mxu0 %v3781
    %v3855 = vpop.f32.mrb[0].mxu0
    %v3856 = vadd.f32 0.0, %v3855
    %v3857 = vpop.f32.mrb[0].mxu0
    %3858 = vmatprep.mubr.f32.mxu0 0.0
    %3859 = vmatmul.mubr.f32.gmra.mrb[0].mxu0 %v3783
    %v3860 = vpop.f32.mrb[0].mxu0
    %v3861 = vadd.f32 0.0, %v3860
    %v3862 = vpop.f32.mrb[0].mxu0
    %3863 = vmatprep.mubr.f32.mxu0 0.0
    %3864 = vmatmul.mubr.f32.gmra.mrb[0].mxu0 %v3785
    %v3865 = vpop.f32.mrb[0].mxu0
    %v3866 = vadd.f32 0.0, %v3865
    %v3867 = vpop.f32.mrb[0].mxu0
    %3868 = vmatprep.mubr.f32.mxu0 0.0
    %3869 = vmatmul.mubr.f32.gmra.mrb[0].mxu0 %v3787
    %v3870 = vpop.f32.mrb[0].mxu0
    %v3871 = vadd.f32 0.0, %v3870
    %v3872 = vpop.f32.mrb[0].mxu0
    %3873 = vdwg.mxu0
    %v3874 = vmul.f32 %v3856, 0.35355338
    %v3875 = vmul.f32 %v3861, 0.35355338
    %v3876 = vmul.f32 %v3866, 0.35355338
    %v3877 = vmul.f32 %v3871, 0.35355338
    %v3878 = vadd.f32 %v3874, %v429
    %v3879 = vadd.f32 %v3875, %v430
    %v3880 = vadd.f32 %v3876, %v431
    %v3881 = vadd.f32 %v3877, %v432
    %3882 = vmax.xlane.f32.xlu0 %v3878
    %v3883 = vpop.xlane.xlu0 %3882
    %3884 = vmax.xlane.f32.xlu0 %v3879
    %v3885 = vpop.xlane.xlu0 %3884
    %3886 = vmax.xlane.f32.xlu0 %v3880
    %v3887 = vpop.xlane.xlu0 %3886
    %3888 = vmax.xlane.f32.xlu0 %v3881
    %v3889 = vpop.xlane.xlu0 %3888
    %v3890 = vsub.f32 %v3878, %v3883
    %v3891 = vsub.f32 %v3879, %v3885
    %v3892 = vsub.f32 %v3880, %v3887
    %v3893 = vsub.f32 %v3881, %v3889
    %v3894 = vmul.f32 %v3890, 1.442695
    %v3895 = vpow.pop %v3894
    %v3896 = vmul.f32 %v3891, 1.442695
    %v3897 = vpow.pop %v3896
    %v3898 = vmul.f32 %v3892, 1.442695
    %v3899 = vpow.pop %v3898
    %v3900 = vmul.f32 %v3893, 1.442695
    %v3901 = vpow.pop %v3900
    %v3902 = vmul.f32 %v3659, %v784
    %v3903 = vmul.f32 %v3664, %v786
    %v3904 = vmul.f32 %v3669, %v788
    %v3905 = vmul.f32 %v3674, %v790
    %v3906 = vmul.f32 %v3659, %v792
    %v3907 = vmul.f32 %v3664, %v794
    %v3908 = vmul.f32 %v3669, %v796
    %v3909 = vmul.f32 %v3674, %v798
    %v3910 = vmul.f32 %v3659, %v800
    %v3911 = vmul.f32 %v3664, %v802
    %v3912 = vmul.f32 %v3669, %v804
    %v3913 = vmul.f32 %v3674, %v806
    %v3914 = vmul.f32 %v3659, %v808
    %v3915 = vmul.f32 %v3664, %v810
    %v3916 = vmul.f32 %v3669, %v812
    %v3917 = vmul.f32 %v3674, %v814
    %3934 = vrot.lane.b32.xlu0 %v3902, 64
    %v3935 = vpop.permute.xlu0 %3934
    %3936 = vrot.lane.b32.xlu0 %v3903, 64
    %v3937 = vpop.permute.xlu0 %3936
    %3938 = vrot.lane.b32.xlu0 %v3904, 64
    %v3939 = vpop.permute.xlu0 %3938
    %3940 = vrot.lane.b32.xlu0 %v3905, 64
    %v3941 = vpop.permute.xlu0 %3940
    %3942 = vrot.lane.b32.xlu0 %v3906, 64
    %v3943 = vpop.permute.xlu0 %3942
    %3944 = vrot.lane.b32.xlu0 %v3907, 64
    %v3945 = vpop.permute.xlu0 %3944
    %3946 = vrot.lane.b32.xlu0 %v3908, 64
    %v3947 = vpop.permute.xlu0 %3946
    %3948 = vrot.lane.b32.xlu0 %v3909, 64
    %v3949 = vpop.permute.xlu0 %3948
    %3950 = vrot.lane.b32.xlu0 %v3910, 64
    %v3951 = vpop.permute.xlu0 %3950
    %3952 = vrot.lane.b32.xlu0 %v3911, 64
    %v3953 = vpop.permute.xlu0 %3952
    %3954 = vrot.lane.b32.xlu0 %v3912, 64
    %v3955 = vpop.permute.xlu0 %3954
    %3956 = vrot.lane.b32.xlu0 %v3913, 64
    %v3957 = vpop.permute.xlu0 %3956
    %3958 = vrot.lane.b32.xlu0 %v3914, 64
    %v3959 = vpop.permute.xlu0 %3958
    %3960 = vrot.lane.b32.xlu0 %v3915, 64
    %v3961 = vpop.permute.xlu0 %3960
    %3962 = vrot.lane.b32.xlu0 %v3916, 64
    %v3963 = vpop.permute.xlu0 %3962
    %3964 = vrot.lane.b32.xlu0 %v3917, 64
    %v3965 = vpop.permute.xlu0 %3964
    %3982 = vmatprep.subr.mxu0 0.0
    %3983 = vmatpush1.msra.mxu0 %v3935
    %3984 = vmatprep.subr.mxu0 0.0
    %3985 = vmatpush1.msra.mxu0 %v3937
    %3986 = vmatprep.subr.mxu0 0.0
    %3987 = vmatpush1.msra.mxu0 %v3939
    %3988 = vmatprep.subr.mxu0 0.0
    %3989 = vmatpush1.msra.mxu0 %v3941
    %3990 = vmatprep.subr.mxu0 0.0
    %3991 = vmatpush1.msra.mxu0 %v3943
    %3992 = vmatprep.subr.mxu0 0.0
    %3993 = vmatpush1.msra.mxu0 %v3945
    %3994 = vmatprep.subr.mxu0 0.0
    %3995 = vmatpush1.msra.mxu0 %v3947
    %3996 = vmatprep.subr.mxu0 0.0
    %3997 = vmatpush1.msra.mxu0 %v3949
    %3998 = vmatprep.subr.mxu0 0.0
    %3999 = vmatpush1.msra.mxu0 %v3951
    %4000 = vmatprep.subr.mxu0 0.0
    %4001 = vmatpush1.msra.mxu0 %v3953
    %4002 = vmatprep.subr.mxu0 0.0
    %4003 = vmatpush1.msra.mxu0 %v3955
    %4004 = vmatprep.subr.mxu0 0.0
    %4005 = vmatpush1.msra.mxu0 %v3957
    %4006 = vmatprep.subr.mxu0 0.0
    %4007 = vmatpush1.msra.mxu0 %v3959
    %4008 = vmatprep.subr.mxu0 0.0
    %4009 = vmatpush1.msra.mxu0 %v3961
    %4010 = vmatprep.subr.mxu0 0.0
    %4011 = vmatpush1.msra.mxu0 %v3963
    %4012 = vmatprep.subr.mxu0 0.0
    %4013 = vmatpush1.msra.mxu0 %v3965
    %4014 = vmatprep.subr.mxu0 0.0
    %4015 = vmatpush1.msra.mxu0 0.0
    %4016 = vmatprep.subr.mxu0 0.0
    %4017 = vmatpush1.msra.mxu0 0.0
    %4018 = vmatprep.subr.mxu0 0.0
    %4019 = vmatpush1.msra.mxu0 0.0
    %4020 = vmatprep.subr.mxu0 0.0
    %4021 = vmatpush1.msra.mxu0 0.0
    %4022 = vmatprep.subr.mxu0 0.0
    %4023 = vmatpush1.msra.mxu0 0.0
    %4024 = vmatprep.subr.mxu0 0.0
    %4025 = vmatpush1.msra.mxu0 0.0
    %4026 = vmatprep.subr.mxu0 0.0
    %4027 = vmatpush1.msra.mxu0 0.0
    %4028 = vmatprep.subr.mxu0 0.0
    %4029 = vmatpush1.msra.mxu0 0.0
    %4030 = vmatprep.subr.mxu0 0.0
    %4031 = vmatpush1.msra.mxu0 0.0
    %4032 = vmatprep.subr.mxu0 0.0
    %4033 = vmatpush1.msra.mxu0 0.0
    %4034 = vmatprep.subr.mxu0 0.0
    %4035 = vmatpush1.msra.mxu0 0.0
    %4036 = vmatprep.subr.mxu0 0.0
    %4037 = vmatpush1.msra.mxu0 0.0
    %4038 = vmatprep.subr.mxu0 0.0
    %4039 = vmatpush1.msra.mxu0 0.0
    %4040 = vmatprep.subr.mxu0 0.0
    %4041 = vmatpush1.msra.mxu0 0.0
    %4042 = vmatprep.subr.mxu0 0.0
    %4043 = vmatpush1.msra.mxu0 0.0
    %4044 = vmatprep.subr.mxu0 0.0
    %4045 = vmatpush1.msra.mxu0 0.0
    %4046 = vmatprep.mubr.f32.mxu0 0.0
    %4047 = vmatmul.mubr.f32.gmra.mrb[0].mxu0 %v3895
    %v4048 = vpop.f32.mrb[0].mxu0
    %v4049 = vadd.f32 0.0, %v4048
    %v4050 = vpop.f32.mrb[0].mxu0
    %4051 = vmatprep.mubr.f32.mxu0 0.0
    %4052 = vmatmul.mubr.f32.gmra.mrb[0].mxu0 %v3897
    %v4053 = vpop.f32.mrb[0].mxu0
    %v4054 = vadd.f32 0.0, %v4053
    %v4055 = vpop.f32.mrb[0].mxu0
    %4056 = vmatprep.mubr.f32.mxu0 0.0
    %4057 = vmatmul.mubr.f32.gmra.mrb[0].mxu0 %v3899
    %v4058 = vpop.f32.mrb[0].mxu0
    %v4059 = vadd.f32 0.0, %v4058
    %v4060 = vpop.f32.mrb[0].mxu0
    %4061 = vmatprep.mubr.f32.mxu0 0.0
    %4062 = vmatmul.mubr.f32.gmra.mrb[0].mxu0 %v3901
    %v4063 = vpop.f32.mrb[0].mxu0
    %v4064 = vadd.f32 0.0, %v4063
    %v4065 = vpop.f32.mrb[0].mxu0
    %4066 = vdwg.mxu0
    %4067 = vmatprep.subr.mxu0 0.0
    %4068 = vmatpush1.msra.mxu0 %v413
    %4069 = vmatprep.subr.mxu0 0.0
    %4070 = vmatpush1.msra.mxu0 %v414
    %4071 = vmatprep.subr.mxu0 0.0
    %4072 = vmatpush1.msra.mxu0 %v415
    %4073 = vmatprep.subr.mxu0 0.0
    %4074 = vmatpush1.msra.mxu0 %v416
    %4075 = vmatprep.subr.mxu0 0.0
    %4076 = vmatpush1.msra.mxu0 %v417
    %4077 = vmatprep.subr.mxu0 0.0
    %4078 = vmatpush1.msra.mxu0 %v418
    %4079 = vmatprep.subr.mxu0 0.0
    %4080 = vmatpush1.msra.mxu0 %v419
    %4081 = vmatprep.subr.mxu0 0.0
    %4082 = vmatpush1.msra.mxu0 %v420
    %4083 = vmatprep.subr.mxu0 0.0
    %4084 = vmatpush1.msra.mxu0 %v421
    %4085 = vmatprep.subr.mxu0 0.0
    %4086 = vmatpush1.msra.mxu0 %v422
    %4087 = vmatprep.subr.mxu0 0.0
    %4088 = vmatpush1.msra.mxu0 %v423
    %4089 = vmatprep.subr.mxu0 0.0
    %4090 = vmatpush1.msra.mxu0 %v424
    %4091 = vmatprep.subr.mxu0 0.0
    %4092 = vmatpush1.msra.mxu0 %v425
    %4093 = vmatprep.subr.mxu0 0.0
    %4094 = vmatpush1.msra.mxu0 %v426
    %4095 = vmatprep.subr.mxu0 0.0
    %4096 = vmatpush1.msra.mxu0 %v427
    %4097 = vmatprep.subr.mxu0 0.0
    %4098 = vmatpush1.msra.mxu0 %v428
    %4099 = vmatprep.subr.mxu0 0.0
    %4100 = vmatpush1.msra.mxu0 0.0
    %4101 = vmatprep.subr.mxu0 0.0
    %4102 = vmatpush1.msra.mxu0 0.0
    %4103 = vmatprep.subr.mxu0 0.0
    %4104 = vmatpush1.msra.mxu0 0.0
    %4105 = vmatprep.subr.mxu0 0.0
    %4106 = vmatpush1.msra.mxu0 0.0
    %4107 = vmatprep.subr.mxu0 0.0
    %4108 = vmatpush1.msra.mxu0 0.0
    %4109 = vmatprep.subr.mxu0 0.0
    %4110 = vmatpush1.msra.mxu0 0.0
    %4111 = vmatprep.subr.mxu0 0.0
    %4112 = vmatpush1.msra.mxu0 0.0
    %4113 = vmatprep.subr.mxu0 0.0
    %4114 = vmatpush1.msra.mxu0 0.0
    %4115 = vmatprep.subr.mxu0 0.0
    %4116 = vmatpush1.msra.mxu0 0.0
    %4117 = vmatprep.subr.mxu0 0.0
    %4118 = vmatpush1.msra.mxu0 0.0
    %4119 = vmatprep.subr.mxu0 0.0
    %4120 = vmatpush1.msra.mxu0 0.0
    %4121 = vmatprep.subr.mxu0 0.0
    %4122 = vmatpush1.msra.mxu0 0.0
    %4123 = vmatprep.subr.mxu0 0.0
    %4124 = vmatpush1.msra.mxu0 0.0
    %4125 = vmatprep.subr.mxu0 0.0
    %4126 = vmatpush1.msra.mxu0 0.0
    %4127 = vmatprep.subr.mxu0 0.0
    %4128 = vmatpush1.msra.mxu0 0.0
    %4129 = vmatprep.subr.mxu0 0.0
    %4130 = vmatpush1.msra.mxu0 0.0
    %4131 = vmatprep.mubr.f32.mxu0 0.0
    %4132 = vmatmul.mubr.f32.gmra.mrb[0].mxu0 %v3895
    %v4133 = vpop.f32.mrb[0].mxu0
    %v4134 = vadd.f32 0.0, %v4133
    %v4135 = vpop.f32.mrb[0].mxu0
    %4136 = vmatprep.mubr.f32.mxu0 0.0
    %4137 = vmatmul.mubr.f32.gmra.mrb[0].mxu0 %v3897
    %v4138 = vpop.f32.mrb[0].mxu0
    %v4139 = vadd.f32 0.0, %v4138
    %v4140 = vpop.f32.mrb[0].mxu0
    %4141 = vmatprep.mubr.f32.mxu0 0.0
    %4142 = vmatmul.mubr.f32.gmra.mrb[0].mxu0 %v3899
    %v4143 = vpop.f32.mrb[0].mxu0
    %v4144 = vadd.f32 0.0, %v4143
    %v4145 = vpop.f32.mrb[0].mxu0
    %4146 = vmatprep.mubr.f32.mxu0 0.0
    %4147 = vmatmul.mubr.f32.gmra.mrb[0].mxu0 %v3901
    %v4148 = vpop.f32.mrb[0].mxu0
    %v4149 = vadd.f32 0.0, %v4148
    %v4150 = vpop.f32.mrb[0].mxu0
    %4151 = vdwg.mxu0
    %v4152 = vrcp.pop %v4134
    %v4153 = vrcp.pop %v4139
    %v4154 = vrcp.pop %v4144
    %v4155 = vrcp.pop %v4149
    %v4156 = vmul.f32 %v4049, %v4152
    %v4157 = vmul.f32 %v4054, %v4153
    %v4158 = vmul.f32 %v4059, %v4154
    %v4159 = vmul.f32 %v4064, %v4155
    %s4160 = scalar_lea.vmem %s9, 32
    %v4161 = vld [vmem:[%s4160] sm:$0xff]
    %v4162 = vld [vmem:[%s4160 + $0x8] sm:$0xff]
    %v4163 = vld [vmem:[%s4160 + $0x10] sm:$0xff]
    %v4164 = vld [vmem:[%s4160 + $0x18] sm:$0xff]
    %v4165 = vld [vmem:[%s10 + $0x1] sm:$0x1]
    %v4166 = vlaneseq
    %v4167 = vshrl.u32 %v4166, 7
    %v4168 = vsub.s32 0, %v4167
    %v4169 = vrot.slane %v4165, %v4168
    %v4171 = vsel %vm442, %v4156, 0
    %v4174 = vsel %vm442, %v4157, 0
    %v4177 = vsel %vm442, %v4158, 0
    %v4180 = vsel %vm442, %v4159, 0
    %4182 = vmatprep.subr.mxu0 0.0
    %4183 = vmatpush1.msra.mxu0 %v4161
    %4184 = vmatprep.subr.mxu0 0.0
    %4185 = vmatpush1.msra.mxu0 %v4162
    %4186 = vmatprep.subr.mxu0 0.0
    %4187 = vmatpush1.msra.mxu0 %v4163
    %4188 = vmatprep.subr.mxu0 0.0
    %4189 = vmatpush1.msra.mxu0 %v4164
    %4190 = vmatprep.subr.mxu0 0.0
    %4191 = vmatpush1.msra.mxu0 0.0
    %4192 = vmatprep.subr.mxu0 0.0
    %4193 = vmatpush1.msra.mxu0 0.0
    %4194 = vmatprep.subr.mxu0 0.0
    %4195 = vmatpush1.msra.mxu0 0.0
    %4196 = vmatprep.subr.mxu0 0.0
    %4197 = vmatpush1.msra.mxu0 0.0
    %4198 = vmatprep.subr.mxu0 0.0
    %4199 = vmatpush1.msra.mxu0 0.0
    %4200 = vmatprep.subr.mxu0 0.0
    %4201 = vmatpush1.msra.mxu0 0.0
    %4202 = vmatprep.subr.mxu0 0.0
    %4203 = vmatpush1.msra.mxu0 0.0
    %4204 = vmatprep.subr.mxu0 0.0
    %4205 = vmatpush1.msra.mxu0 0.0
    %4206 = vmatprep.subr.mxu0 0.0
    %4207 = vmatpush1.msra.mxu0 0.0
    %4208 = vmatprep.subr.mxu0 0.0
    %4209 = vmatpush1.msra.mxu0 0.0
    %4210 = vmatprep.subr.mxu0 0.0
    %4211 = vmatpush1.msra.mxu0 0.0
    %4212 = vmatprep.subr.mxu0 0.0
    %4213 = vmatpush1.msra.mxu0 0.0
    %4214 = vmatprep.subr.mxu0 0.0
    %4215 = vmatpush1.msra.mxu0 0.0
    %4216 = vmatprep.subr.mxu0 0.0
    %4217 = vmatpush1.msra.mxu0 0.0
    %4218 = vmatprep.subr.mxu0 0.0
    %4219 = vmatpush1.msra.mxu0 0.0
    %4220 = vmatprep.subr.mxu0 0.0
    %4221 = vmatpush1.msra.mxu0 0.0
    %4222 = vmatprep.subr.mxu0 0.0
    %4223 = vmatpush1.msra.mxu0 0.0
    %4224 = vmatprep.subr.mxu0 0.0
    %4225 = vmatpush1.msra.mxu0 0.0
    %4226 = vmatprep.subr.mxu0 0.0
    %4227 = vmatpush1.msra.mxu0 0.0
    %4228 = vmatprep.subr.mxu0 0.0
    %4229 = vmatpush1.msra.mxu0 0.0
    %4230 = vmatprep.subr.mxu0 0.0
    %4231 = vmatpush1.msra.mxu0 0.0
    %4232 = vmatprep.subr.mxu0 0.0
    %4233 = vmatpush1.msra.mxu0 0.0
    %4234 = vmatprep.subr.mxu0 0.0
    %4235 = vmatpush1.msra.mxu0 0.0
    %4236 = vmatprep.subr.mxu0 0.0
    %4237 = vmatpush1.msra.mxu0 0.0
    %4238 = vmatprep.subr.mxu0 0.0
    %4239 = vmatpush1.msra.mxu0 0.0
    %4240 = vmatprep.subr.mxu0 0.0
    %4241 = vmatpush1.msra.mxu0 0.0
    %4242 = vmatprep.subr.mxu0 0.0
    %4243 = vmatpush1.msra.mxu0 0.0
    %4244 = vmatprep.subr.mxu0 0.0
    %4245 = vmatpush1.msra.mxu0 0.0
    %4246 = vmatprep.mubr.f32.mxu0 0.0
    %4247 = vmatmul.mubr.f32.gmra.mrb[0].mxu0 %v4171
    %v4248 = vpop.f32.mrb[0].mxu0
    %v4249 = vadd.f32 %v4169, %v4248
    %v4250 = vpop.f32.mrb[0].mxu0
    %4251 = vmatprep.mubr.f32.mxu0 0.0
    %4252 = vmatmul.mubr.f32.gmra.mrb[0].mxu0 %v4174
    %v4253 = vpop.f32.mrb[0].mxu0
    %v4254 = vadd.f32 %v4169, %v4253
    %v4255 = vpop.f32.mrb[0].mxu0
    %4256 = vmatprep.mubr.f32.mxu0 0.0
    %4257 = vmatmul.mubr.f32.gmra.mrb[0].mxu0 %v4177
    %v4258 = vpop.f32.mrb[0].mxu0
    %v4259 = vadd.f32 %v4169, %v4258
    %v4260 = vpop.f32.mrb[0].mxu0
    %4261 = vmatprep.mubr.f32.mxu0 0.0
    %4262 = vmatmul.mubr.f32.gmra.mrb[0].mxu0 %v4180
    %v4263 = vpop.f32.mrb[0].mxu0
    %v4264 = vadd.f32 %v4169, %v4263
    %v4265 = vpop.f32.mrb[0].mxu0
    %4266 = vdwg.mxu0
    %v4267 = vadd.f32 %v3566, %v4249
    %v4268 = vadd.f32 %v3567, %v4254
    %v4269 = vadd.f32 %v3568, %v4259
    %v4270 = vadd.f32 %v3569, %v4264
    %v4271 = vld [vmem:[%s11 + $0x1] sm:$0x1]
    %v4272 = vld [vmem:[%s12 + $0x1] sm:$0x1]
    %v4273 = vsel %vm442, %v4267, 0.0
    %4274 = vadd.xlane.f32.xlu0 %v4273
    %v4275 = vpop.xlane.xlu0 %4274
    %v4276 = vsel %vm442, %v4268, 0.0
    %4277 = vadd.xlane.f32.xlu0 %v4276
    %v4278 = vpop.xlane.xlu0 %4277
    %v4279 = vsel %vm442, %v4269, 0.0
    %4280 = vadd.xlane.f32.xlu0 %v4279
    %v4281 = vpop.xlane.xlu0 %4280
    %v4282 = vsel %vm442, %v4270, 0.0
    %4283 = vadd.xlane.f32.xlu0 %v4282
    %v4284 = vpop.xlane.xlu0 %4283
    %v4285 = vmul.f32 %v4275, %v1213
    %v4286 = vmul.f32 %v4278, %v1213
    %v4287 = vmul.f32 %v4281, %v1213
    %v4288 = vmul.f32 %v4284, %v1213
    %v4289 = vsub.f32 %v4267, %v4285
    %v4290 = vsub.f32 %v4268, %v4286
    %v4291 = vsub.f32 %v4269, %v4287
    %v4292 = vsub.f32 %v4270, %v4288
    %v4293 = vmul.f32 %v4289, %v4289
    %v4294 = vmul.f32 %v4290, %v4290
    %v4295 = vmul.f32 %v4291, %v4291
    %v4296 = vmul.f32 %v4292, %v4292
    %v4297 = vsel %vm442, %v4293, 0.0
    %4298 = vadd.xlane.f32.xlu0 %v4297
    %v4299 = vpop.xlane.xlu0 %4298
    %v4300 = vsel %vm442, %v4294, 0.0
    %4301 = vadd.xlane.f32.xlu0 %v4300
    %v4302 = vpop.xlane.xlu0 %4301
    %v4303 = vsel %vm442, %v4295, 0.0
    %4304 = vadd.xlane.f32.xlu0 %v4303
    %v4305 = vpop.xlane.xlu0 %4304
    %v4306 = vsel %vm442, %v4296, 0.0
    %4307 = vadd.xlane.f32.xlu0 %v4306
    %v4308 = vpop.xlane.xlu0 %4307
    %v4309 = vmul.f32 %v4299, %v1213
    %v4310 = vmul.f32 %v4302, %v1213
    %v4311 = vmul.f32 %v4305, %v1213
    %v4312 = vmul.f32 %v4308, %v1213
    %v4313 = vadd.f32 %v4309, 1e-05
    %v4314 = vadd.f32 %v4310, 1e-05
    %v4315 = vadd.f32 %v4311, 1e-05
    %v4316 = vadd.f32 %v4312, 1e-05
    %v4317 = vrsqrt.pop %v4313
    %v4318 = vrsqrt.pop %v4314
    %v4319 = vrsqrt.pop %v4315
    %v4320 = vrsqrt.pop %v4316
    %v4321 = vmul.f32 %v4289, %v4317
    %v4322 = vmul.f32 %v4290, %v4318
    %v4323 = vmul.f32 %v4291, %v4319
    %v4324 = vmul.f32 %v4292, %v4320
    %v4325 = vlaneseq
    %v4326 = vshrl.u32 %v4325, 7
    %v4327 = vsub.s32 0, %v4326
    %v4328 = vrot.slane %v4271, %v4327
    %v4329 = vmul.f32 %v4321, %v4328
    %v4330 = vmul.f32 %v4322, %v4328
    %v4331 = vmul.f32 %v4323, %v4328
    %v4332 = vmul.f32 %v4324, %v4328
    %v4333 = vlaneseq
    %v4334 = vshrl.u32 %v4333, 7
    %v4335 = vsub.s32 0, %v4334
    %v4336 = vrot.slane %v4272, %v4335
    %v4337 = vadd.f32 %v4329, %v4336
    %v4338 = vadd.f32 %v4330, %v4336
    %v4339 = vadd.f32 %v4331, %v4336
    %v4340 = vadd.f32 %v4332, %v4336
    %v4341 = vpack.c.bf16 %v4338, %v4337
    %v4342 = vpack.c.bf16 %v4340, %v4339
    %s4343 = scalar_lea.vmem %s13, 256
    %v4344 = vld [vmem:[%s4343] sm:$0xff]
    %v4345 = vld [vmem:[%s4343 + $0x8] sm:$0xff]
    %v4346 = vld [vmem:[%s4343 + $0x10] sm:$0xff]
    %v4347 = vld [vmem:[%s4343 + $0x18] sm:$0xff]
    %v4348 = vld [vmem:[%s4343 + $0x20] sm:$0xff]
    %v4349 = vld [vmem:[%s4343 + $0x28] sm:$0xff]
    %v4350 = vld [vmem:[%s4343 + $0x30] sm:$0xff]
    %v4351 = vld [vmem:[%s4343 + $0x38] sm:$0xff]
    %v4352 = vld [vmem:[%s4343 + $0x40] sm:$0xff]
    %v4353 = vld [vmem:[%s4343 + $0x48] sm:$0xff]
    %v4354 = vld [vmem:[%s4343 + $0x50] sm:$0xff]
    %v4355 = vld [vmem:[%s4343 + $0x58] sm:$0xff]
    %v4356 = vld [vmem:[%s4343 + $0x60] sm:$0xff]
    %v4357 = vld [vmem:[%s4343 + $0x68] sm:$0xff]
    %v4358 = vld [vmem:[%s4343 + $0x70] sm:$0xff]
    %v4359 = vld [vmem:[%s4343 + $0x78] sm:$0xff]
    %v4360 = vld [vmem:[%s4343 + $0x80] sm:$0xff]
    %v4361 = vld [vmem:[%s4343 + $0x88] sm:$0xff]
    %v4362 = vld [vmem:[%s4343 + $0x90] sm:$0xff]
    %v4363 = vld [vmem:[%s4343 + $0x98] sm:$0xff]
    %v4364 = vld [vmem:[%s4343 + $0xa0] sm:$0xff]
    %v4365 = vld [vmem:[%s4343 + $0xa8] sm:$0xff]
    %v4366 = vld [vmem:[%s4343 + $0xb0] sm:$0xff]
    %v4367 = vld [vmem:[%s4343 + $0xb8] sm:$0xff]
    %v4368 = vld [vmem:[%s4343 + $0xc0] sm:$0xff]
    %v4369 = vld [vmem:[%s4343 + $0xc8] sm:$0xff]
    %v4370 = vld [vmem:[%s4343 + $0xd0] sm:$0xff]
    %v4371 = vld [vmem:[%s4343 + $0xd8] sm:$0xff]
    %v4372 = vld [vmem:[%s4343 + $0xe0] sm:$0xff]
    %v4373 = vld [vmem:[%s4343 + $0xe8] sm:$0xff]
    %v4374 = vld [vmem:[%s4343 + $0xf0] sm:$0xff]
    %v4375 = vld [vmem:[%s4343 + $0xf8] sm:$0xff]
    %s4376 = scalar_lea.vmem %s14, 1
    %v4377 = vld [vmem:[%s4376] ss:$2 sm:$0xff]
    %s4378 = scalar_lea.vmem %s14, 17
    %v4379 = vld [vmem:[%s4378] ss:$2 sm:$0xff]
    %v4382 = vlaneseq
    %v4383 = vshrl.u32 %v4382, 7
    %v4384 = vsub.s32 0, %v4383
    %v4385 = vrot.slane %v4377, %v4384
    %v4386 = vlaneseq
    %v4387 = vshrl.u32 %v4386, 7
    %v4388 = vsub.s32 1, %v4387
    %v4389 = vrot.slane %v4377, %v4388
    %v4390 = vlaneseq
    %v4391 = vshrl.u32 %v4390, 7
    %v4392 = vsub.s32 2, %v4391
    %v4393 = vrot.slane %v4377, %v4392
    %v4394 = vlaneseq
    %v4395 = vshrl.u32 %v4394, 7
    %v4396 = vsub.s32 3, %v4395
    %v4397 = vrot.slane %v4377, %v4396
    %v4398 = vlaneseq
    %v4399 = vshrl.u32 %v4398, 7
    %v4400 = vsub.s32 4, %v4399
    %v4401 = vrot.slane %v4377, %v4400
    %v4402 = vlaneseq
    %v4403 = vshrl.u32 %v4402, 7
    %v4404 = vsub.s32 5, %v4403
    %v4405 = vrot.slane %v4377, %v4404
    %v4406 = vlaneseq
    %v4407 = vshrl.u32 %v4406, 7
    %v4408 = vsub.s32 6, %v4407
    %v4409 = vrot.slane %v4377, %v4408
    %v4410 = vlaneseq
    %v4411 = vshrl.u32 %v4410, 7
    %v4412 = vsub.s32 7, %v4411
    %v4413 = vrot.slane %v4377, %v4412
    %v4414 = vlaneseq
    %v4415 = vshrl.u32 %v4414, 7
    %v4416 = vsub.s32 0, %v4415
    %v4417 = vrot.slane %v4379, %v4416
    %v4418 = vlaneseq
    %v4419 = vshrl.u32 %v4418, 7
    %v4420 = vsub.s32 1, %v4419
    %v4421 = vrot.slane %v4379, %v4420
    %v4422 = vlaneseq
    %v4423 = vshrl.u32 %v4422, 7
    %v4424 = vsub.s32 2, %v4423
    %v4425 = vrot.slane %v4379, %v4424
    %v4426 = vlaneseq
    %v4427 = vshrl.u32 %v4426, 7
    %v4428 = vsub.s32 3, %v4427
    %v4429 = vrot.slane %v4379, %v4428
    %v4430 = vlaneseq
    %v4431 = vshrl.u32 %v4430, 7
    %v4432 = vsub.s32 4, %v4431
    %v4433 = vrot.slane %v4379, %v4432
    %v4434 = vlaneseq
    %v4435 = vshrl.u32 %v4434, 7
    %v4436 = vsub.s32 5, %v4435
    %v4437 = vrot.slane %v4379, %v4436
    %v4438 = vlaneseq
    %v4439 = vshrl.u32 %v4438, 7
    %v4440 = vsub.s32 6, %v4439
    %v4441 = vrot.slane %v4379, %v4440
    %v4442 = vlaneseq
    %v4443 = vshrl.u32 %v4442, 7
    %v4444 = vsub.s32 7, %v4443
    %v4445 = vrot.slane %v4379, %v4444
    %v4494 = vunpack.c.l.b16 %v4344
    %v4495 = vunpack.c.h.b16 %v4344
    %v4496 = vunpack.c.l.b16 %v4345
    %v4497 = vunpack.c.h.b16 %v4345
    %v4498 = vunpack.c.l.b16 %v4346
    %v4499 = vunpack.c.h.b16 %v4346
    %v4500 = vunpack.c.l.b16 %v4347
    %v4501 = vunpack.c.h.b16 %v4347
    %v4502 = vunpack.c.l.b16 %v4348
    %v4503 = vunpack.c.h.b16 %v4348
    %v4504 = vunpack.c.l.b16 %v4349
    %v4505 = vunpack.c.h.b16 %v4349
    %v4506 = vunpack.c.l.b16 %v4350
    %v4507 = vunpack.c.h.b16 %v4350
    %v4508 = vunpack.c.l.b16 %v4351
    %v4509 = vunpack.c.h.b16 %v4351
    %v4510 = vunpack.c.l.b16 %v4352
    %v4511 = vunpack.c.h.b16 %v4352
    %v4512 = vunpack.c.l.b16 %v4353
    %v4513 = vunpack.c.h.b16 %v4353
    %v4514 = vunpack.c.l.b16 %v4354
    %v4515 = vunpack.c.h.b16 %v4354
    %v4516 = vunpack.c.l.b16 %v4355
    %v4517 = vunpack.c.h.b16 %v4355
    %v4518 = vunpack.c.l.b16 %v4356
    %v4519 = vunpack.c.h.b16 %v4356
    %v4520 = vunpack.c.l.b16 %v4357
    %v4521 = vunpack.c.h.b16 %v4357
    %v4522 = vunpack.c.l.b16 %v4358
    %v4523 = vunpack.c.h.b16 %v4358
    %v4524 = vunpack.c.l.b16 %v4359
    %v4525 = vunpack.c.h.b16 %v4359
    %v4526 = vunpack.c.l.b16 %v4360
    %v4527 = vunpack.c.h.b16 %v4360
    %v4528 = vunpack.c.l.b16 %v4361
    %v4529 = vunpack.c.h.b16 %v4361
    %v4530 = vunpack.c.l.b16 %v4362
    %v4531 = vunpack.c.h.b16 %v4362
    %v4532 = vunpack.c.l.b16 %v4363
    %v4533 = vunpack.c.h.b16 %v4363
    %v4534 = vunpack.c.l.b16 %v4364
    %v4535 = vunpack.c.h.b16 %v4364
    %v4536 = vunpack.c.l.b16 %v4365
    %v4537 = vunpack.c.h.b16 %v4365
    %v4538 = vunpack.c.l.b16 %v4366
    %v4539 = vunpack.c.h.b16 %v4366
    %v4540 = vunpack.c.l.b16 %v4367
    %v4541 = vunpack.c.h.b16 %v4367
    %v4542 = vunpack.c.l.b16 %v4368
    %v4543 = vunpack.c.h.b16 %v4368
    %v4544 = vunpack.c.l.b16 %v4369
    %v4545 = vunpack.c.h.b16 %v4369
    %v4546 = vunpack.c.l.b16 %v4370
    %v4547 = vunpack.c.h.b16 %v4370
    %v4548 = vunpack.c.l.b16 %v4371
    %v4549 = vunpack.c.h.b16 %v4371
    %v4550 = vunpack.c.l.b16 %v4372
    %v4551 = vunpack.c.h.b16 %v4372
    %v4552 = vunpack.c.l.b16 %v4373
    %v4553 = vunpack.c.h.b16 %v4373
    %v4554 = vunpack.c.l.b16 %v4374
    %v4555 = vunpack.c.h.b16 %v4374
    %v4556 = vunpack.c.l.b16 %v4375
    %v4557 = vunpack.c.h.b16 %v4375
    %v4558 = vpack.c.b16 %v4510, %v4494
    %v4559 = vpack.c.b16 %v4511, %v4495
    %v4560 = vpack.c.b16 %v4512, %v4496
    %v4561 = vpack.c.b16 %v4513, %v4497
    %v4562 = vpack.c.b16 %v4514, %v4498
    %v4563 = vpack.c.b16 %v4515, %v4499
    %v4564 = vpack.c.b16 %v4516, %v4500
    %v4565 = vpack.c.b16 %v4517, %v4501
    %v4566 = vpack.c.b16 %v4518, %v4502
    %v4567 = vpack.c.b16 %v4519, %v4503
    %v4568 = vpack.c.b16 %v4520, %v4504
    %v4569 = vpack.c.b16 %v4521, %v4505
    %v4570 = vpack.c.b16 %v4522, %v4506
    %v4571 = vpack.c.b16 %v4523, %v4507
    %v4572 = vpack.c.b16 %v4524, %v4508
    %v4573 = vpack.c.b16 %v4525, %v4509
    %v4574 = vpack.c.b16 %v4542, %v4526
    %v4575 = vpack.c.b16 %v4543, %v4527
    %v4576 = vpack.c.b16 %v4544, %v4528
    %v4577 = vpack.c.b16 %v4545, %v4529
    %v4578 = vpack.c.b16 %v4546, %v4530
    %v4579 = vpack.c.b16 %v4547, %v4531
    %v4580 = vpack.c.b16 %v4548, %v4532
    %v4581 = vpack.c.b16 %v4549, %v4533
    %v4582 = vpack.c.b16 %v4550, %v4534
    %v4583 = vpack.c.b16 %v4551, %v4535
    %v4584 = vpack.c.b16 %v4552, %v4536
    %v4585 = vpack.c.b16 %v4553, %v4537
    %v4586 = vpack.c.b16 %v4554, %v4538
    %v4587 = vpack.c.b16 %v4555, %v4539
    %v4588 = vpack.c.b16 %v4556, %v4540
    %v4589 = vpack.c.b16 %v4557, %v4541
    %v4623 = vsel %vm442, %v4341, 0
    %v4626 = vsel %vm442, %v4342, 0
    %4628 = vmatprep.subr.bf16.mxu0 %v4559
    %4629 = vmatpush1.bf16.msra.mxu0 %v4558
    %4630 = vmatprep.subr.bf16.mxu0 %v4575
    %4631 = vmatpush1.bf16.msra.mxu0 %v4574
    %4632 = vmatprep.subr.bf16.mxu0 0
    %4633 = vmatpush1.bf16.msra.mxu0 0
    %4634 = vmatprep.subr.bf16.mxu0 0
    %4635 = vmatpush1.bf16.msra.mxu0 0
    %4636 = vmatprep.subr.bf16.mxu0 0
    %4637 = vmatpush1.bf16.msra.mxu0 0
    %4638 = vmatprep.subr.bf16.mxu0 0
    %4639 = vmatpush1.bf16.msra.mxu0 0
    %4640 = vmatprep.subr.bf16.mxu0 0
    %4641 = vmatpush1.bf16.msra.mxu0 0
    %4642 = vmatprep.subr.bf16.mxu0 0
    %4643 = vmatpush1.bf16.msra.mxu0 0
    %4644 = vmatprep.subr.bf16.mxu0 0
    %4645 = vmatpush1.bf16.msra.mxu0 0
    %4646 = vmatprep.subr.bf16.mxu0 0
    %4647 = vmatpush1.bf16.msra.mxu0 0
    %4648 = vmatprep.subr.bf16.mxu0 0
    %4649 = vmatpush1.bf16.msra.mxu0 0
    %4650 = vmatprep.subr.bf16.mxu0 0
    %4651 = vmatpush1.bf16.msra.mxu0 0
    %4652 = vmatprep.subr.bf16.mxu0 0
    %4653 = vmatpush1.bf16.msra.mxu0 0
    %4654 = vmatprep.subr.bf16.mxu0 0
    %4655 = vmatpush1.bf16.msra.mxu0 0
    %4656 = vmatprep.subr.bf16.mxu0 0
    %4657 = vmatpush1.bf16.msra.mxu0 0
    %4658 = vmatprep.subr.bf16.mxu0 0
    %4659 = vmatpush1.bf16.msra.mxu0 0
    %4660 = vmatprep.mubr.bf16.mxu0 0
    %4661 = vmatmul.mubr.bf16.gmra.mrb[0].mxu0 %v4623
    %v4662 = vpop.f32.mrb[0].mxu0
    %v4663 = vadd.f32 %v4385, %v4662
    %v4664 = vpop.f32.mrb[0].mxu0
    %v4665 = vadd.f32 %v4389, %v4664
    %v4666 = vpop.f32.mrb[0].mxu0
    %v4667 = vadd.f32 %v4385, %v4666
    %v4668 = vpop.f32.mrb[0].mxu0
    %v4669 = vadd.f32 %v4389, %v4668
    %4670 = vmatprep.mubr.bf16.mxu0 0
    %4671 = vmatmul.mubr.bf16.gmra.mrb[0].mxu0 %v4626
    %v4672 = vpop.f32.mrb[0].mxu0
    %v4673 = vadd.f32 %v4385, %v4672
    %v4674 = vpop.f32.mrb[0].mxu0
    %v4675 = vadd.f32 %v4389, %v4674
    %v4676 = vpop.f32.mrb[0].mxu0
    %v4677 = vadd.f32 %v4385, %v4676
    %v4678 = vpop.f32.mrb[0].mxu0
    %v4679 = vadd.f32 %v4389, %v4678
    %4680 = vdwg.mxu0
    %4681 = vmatprep.subr.bf16.mxu0 %v4561
    %4682 = vmatpush1.bf16.msra.mxu0 %v4560
    %4683 = vmatprep.subr.bf16.mxu0 %v4577
    %4684 = vmatpush1.bf16.msra.mxu0 %v4576
    %4685 = vmatprep.subr.bf16.mxu0 0
    %4686 = vmatpush1.bf16.msra.mxu0 0
    %4687 = vmatprep.subr.bf16.mxu0 0
    %4688 = vmatpush1.bf16.msra.mxu0 0
    %4689 = vmatprep.subr.bf16.mxu0 0
    %4690 = vmatpush1.bf16.msra.mxu0 0
    %4691 = vmatprep.subr.bf16.mxu0 0
    %4692 = vmatpush1.bf16.msra.mxu0 0
    %4693 = vmatprep.subr.bf16.mxu0 0
    %4694 = vmatpush1.bf16.msra.mxu0 0
    %4695 = vmatprep.subr.bf16.mxu0 0
    %4696 = vmatpush1.bf16.msra.mxu0 0
    %4697 = vmatprep.subr.bf16.mxu0 0
    %4698 = vmatpush1.bf16.msra.mxu0 0
    %4699 = vmatprep.subr.bf16.mxu0 0
    %4700 = vmatpush1.bf16.msra.mxu0 0
    %4701 = vmatprep.subr.bf16.mxu0 0
    %4702 = vmatpush1.bf16.msra.mxu0 0
    %4703 = vmatprep.subr.bf16.mxu0 0
    %4704 = vmatpush1.bf16.msra.mxu0 0
    %4705 = vmatprep.subr.bf16.mxu0 0
    %4706 = vmatpush1.bf16.msra.mxu0 0
    %4707 = vmatprep.subr.bf16.mxu0 0
    %4708 = vmatpush1.bf16.msra.mxu0 0
    %4709 = vmatprep.subr.bf16.mxu0 0
    %4710 = vmatpush1.bf16.msra.mxu0 0
    %4711 = vmatprep.subr.bf16.mxu0 0
    %4712 = vmatpush1.bf16.msra.mxu0 0
    %4713 = vmatprep.mubr.bf16.mxu0 0
    %4714 = vmatmul.mubr.bf16.gmra.mrb[0].mxu0 %v4623
    %v4715 = vpop.f32.mrb[0].mxu0
    %v4716 = vadd.f32 %v4393, %v4715
    %v4717 = vpop.f32.mrb[0].mxu0
    %v4718 = vadd.f32 %v4397, %v4717
    %v4719 = vpop.f32.mrb[0].mxu0
    %v4720 = vadd.f32 %v4393, %v4719
    %v4721 = vpop.f32.mrb[0].mxu0
    %v4722 = vadd.f32 %v4397, %v4721
    %4723 = vmatprep.mubr.bf16.mxu0 0
    %4724 = vmatmul.mubr.bf16.gmra.mrb[0].mxu0 %v4626
    %v4725 = vpop.f32.mrb[0].mxu0
    %v4726 = vadd.f32 %v4393, %v4725
    %v4727 = vpop.f32.mrb[0].mxu0
    %v4728 = vadd.f32 %v4397, %v4727
    %v4729 = vpop.f32.mrb[0].mxu0
    %v4730 = vadd.f32 %v4393, %v4729
    %v4731 = vpop.f32.mrb[0].mxu0
    %v4732 = vadd.f32 %v4397, %v4731
    %4733 = vdwg.mxu0
    %4734 = vmatprep.subr.bf16.mxu0 %v4563
    %4735 = vmatpush1.bf16.msra.mxu0 %v4562
    %4736 = vmatprep.subr.bf16.mxu0 %v4579
    %4737 = vmatpush1.bf16.msra.mxu0 %v4578
    %4738 = vmatprep.subr.bf16.mxu0 0
    %4739 = vmatpush1.bf16.msra.mxu0 0
    %4740 = vmatprep.subr.bf16.mxu0 0
    %4741 = vmatpush1.bf16.msra.mxu0 0
    %4742 = vmatprep.subr.bf16.mxu0 0
    %4743 = vmatpush1.bf16.msra.mxu0 0
    %4744 = vmatprep.subr.bf16.mxu0 0
    %4745 = vmatpush1.bf16.msra.mxu0 0
    %4746 = vmatprep.subr.bf16.mxu0 0
    %4747 = vmatpush1.bf16.msra.mxu0 0
    %4748 = vmatprep.subr.bf16.mxu0 0
    %4749 = vmatpush1.bf16.msra.mxu0 0
    %4750 = vmatprep.subr.bf16.mxu0 0
    %4751 = vmatpush1.bf16.msra.mxu0 0
    %4752 = vmatprep.subr.bf16.mxu0 0
    %4753 = vmatpush1.bf16.msra.mxu0 0
    %4754 = vmatprep.subr.bf16.mxu0 0
    %4755 = vmatpush1.bf16.msra.mxu0 0
    %4756 = vmatprep.subr.bf16.mxu0 0
    %4757 = vmatpush1.bf16.msra.mxu0 0
    %4758 = vmatprep.subr.bf16.mxu0 0
    %4759 = vmatpush1.bf16.msra.mxu0 0
    %4760 = vmatprep.subr.bf16.mxu0 0
    %4761 = vmatpush1.bf16.msra.mxu0 0
    %4762 = vmatprep.subr.bf16.mxu0 0
    %4763 = vmatpush1.bf16.msra.mxu0 0
    %4764 = vmatprep.subr.bf16.mxu0 0
    %4765 = vmatpush1.bf16.msra.mxu0 0
    %4766 = vmatprep.mubr.bf16.mxu0 0
    %4767 = vmatmul.mubr.bf16.gmra.mrb[0].mxu0 %v4623
    %v4768 = vpop.f32.mrb[0].mxu0
    %v4769 = vadd.f32 %v4401, %v4768
    %v4770 = vpop.f32.mrb[0].mxu0
    %v4771 = vadd.f32 %v4405, %v4770
    %v4772 = vpop.f32.mrb[0].mxu0
    %v4773 = vadd.f32 %v4401, %v4772
    %v4774 = vpop.f32.mrb[0].mxu0
    %v4775 = vadd.f32 %v4405, %v4774
    %4776 = vmatprep.mubr.bf16.mxu0 0
    %4777 = vmatmul.mubr.bf16.gmra.mrb[0].mxu0 %v4626
    %v4778 = vpop.f32.mrb[0].mxu0
    %v4779 = vadd.f32 %v4401, %v4778
    %v4780 = vpop.f32.mrb[0].mxu0
    %v4781 = vadd.f32 %v4405, %v4780
    %v4782 = vpop.f32.mrb[0].mxu0
    %v4783 = vadd.f32 %v4401, %v4782
    %v4784 = vpop.f32.mrb[0].mxu0
    %v4785 = vadd.f32 %v4405, %v4784
    %4786 = vdwg.mxu0
    %4787 = vmatprep.subr.bf16.mxu0 %v4565
    %4788 = vmatpush1.bf16.msra.mxu0 %v4564
    %4789 = vmatprep.subr.bf16.mxu0 %v4581
    %4790 = vmatpush1.bf16.msra.mxu0 %v4580
    %4791 = vmatprep.subr.bf16.mxu0 0
    %4792 = vmatpush1.bf16.msra.mxu0 0
    %4793 = vmatprep.subr.bf16.mxu0 0
    %4794 = vmatpush1.bf16.msra.mxu0 0
    %4795 = vmatprep.subr.bf16.mxu0 0
    %4796 = vmatpush1.bf16.msra.mxu0 0
    %4797 = vmatprep.subr.bf16.mxu0 0
    %4798 = vmatpush1.bf16.msra.mxu0 0
    %4799 = vmatprep.subr.bf16.mxu0 0
    %4800 = vmatpush1.bf16.msra.mxu0 0
    %4801 = vmatprep.subr.bf16.mxu0 0
    %4802 = vmatpush1.bf16.msra.mxu0 0
    %4803 = vmatprep.subr.bf16.mxu0 0
    %4804 = vmatpush1.bf16.msra.mxu0 0
    %4805 = vmatprep.subr.bf16.mxu0 0
    %4806 = vmatpush1.bf16.msra.mxu0 0
    %4807 = vmatprep.subr.bf16.mxu0 0
    %4808 = vmatpush1.bf16.msra.mxu0 0
    %4809 = vmatprep.subr.bf16.mxu0 0
    %4810 = vmatpush1.bf16.msra.mxu0 0
    %4811 = vmatprep.subr.bf16.mxu0 0
    %4812 = vmatpush1.bf16.msra.mxu0 0
    %4813 = vmatprep.subr.bf16.mxu0 0
    %4814 = vmatpush1.bf16.msra.mxu0 0
    %4815 = vmatprep.subr.bf16.mxu0 0
    %4816 = vmatpush1.bf16.msra.mxu0 0
    %4817 = vmatprep.subr.bf16.mxu0 0
    %4818 = vmatpush1.bf16.msra.mxu0 0
    %4819 = vmatprep.mubr.bf16.mxu0 0
    %4820 = vmatmul.mubr.bf16.gmra.mrb[0].mxu0 %v4623
    %v4821 = vpop.f32.mrb[0].mxu0
    %v4822 = vadd.f32 %v4409, %v4821
    %v4823 = vpop.f32.mrb[0].mxu0
    %v4824 = vadd.f32 %v4413, %v4823
    %v4825 = vpop.f32.mrb[0].mxu0
    %v4826 = vadd.f32 %v4409, %v4825
    %v4827 = vpop.f32.mrb[0].mxu0
    %v4828 = vadd.f32 %v4413, %v4827
    %4829 = vmatprep.mubr.bf16.mxu0 0
    %4830 = vmatmul.mubr.bf16.gmra.mrb[0].mxu0 %v4626
    %v4831 = vpop.f32.mrb[0].mxu0
    %v4832 = vadd.f32 %v4409, %v4831
    %v4833 = vpop.f32.mrb[0].mxu0
    %v4834 = vadd.f32 %v4413, %v4833
    %v4835 = vpop.f32.mrb[0].mxu0
    %v4836 = vadd.f32 %v4409, %v4835
    %v4837 = vpop.f32.mrb[0].mxu0
    %v4838 = vadd.f32 %v4413, %v4837
    %4839 = vdwg.mxu0
    %4840 = vmatprep.subr.bf16.mxu0 %v4567
    %4841 = vmatpush1.bf16.msra.mxu0 %v4566
    %4842 = vmatprep.subr.bf16.mxu0 %v4583
    %4843 = vmatpush1.bf16.msra.mxu0 %v4582
    %4844 = vmatprep.subr.bf16.mxu0 0
    %4845 = vmatpush1.bf16.msra.mxu0 0
    %4846 = vmatprep.subr.bf16.mxu0 0
    %4847 = vmatpush1.bf16.msra.mxu0 0
    %4848 = vmatprep.subr.bf16.mxu0 0
    %4849 = vmatpush1.bf16.msra.mxu0 0
    %4850 = vmatprep.subr.bf16.mxu0 0
    %4851 = vmatpush1.bf16.msra.mxu0 0
    %4852 = vmatprep.subr.bf16.mxu0 0
    %4853 = vmatpush1.bf16.msra.mxu0 0
    %4854 = vmatprep.subr.bf16.mxu0 0
    %4855 = vmatpush1.bf16.msra.mxu0 0
    %4856 = vmatprep.subr.bf16.mxu0 0
    %4857 = vmatpush1.bf16.msra.mxu0 0
    %4858 = vmatprep.subr.bf16.mxu0 0
    %4859 = vmatpush1.bf16.msra.mxu0 0
    %4860 = vmatprep.subr.bf16.mxu0 0
    %4861 = vmatpush1.bf16.msra.mxu0 0
    %4862 = vmatprep.subr.bf16.mxu0 0
    %4863 = vmatpush1.bf16.msra.mxu0 0
    %4864 = vmatprep.subr.bf16.mxu0 0
    %4865 = vmatpush1.bf16.msra.mxu0 0
    %4866 = vmatprep.subr.bf16.mxu0 0
    %4867 = vmatpush1.bf16.msra.mxu0 0
    %4868 = vmatprep.subr.bf16.mxu0 0
    %4869 = vmatpush1.bf16.msra.mxu0 0
    %4870 = vmatprep.subr.bf16.mxu0 0
    %4871 = vmatpush1.bf16.msra.mxu0 0
    %4872 = vmatprep.mubr.bf16.mxu0 0
    %4873 = vmatmul.mubr.bf16.gmra.mrb[0].mxu0 %v4623
    %v4874 = vpop.f32.mrb[0].mxu0
    %v4875 = vadd.f32 %v4417, %v4874
    %v4876 = vpop.f32.mrb[0].mxu0
    %v4877 = vadd.f32 %v4421, %v4876
    %v4878 = vpop.f32.mrb[0].mxu0
    %v4879 = vadd.f32 %v4417, %v4878
    %v4880 = vpop.f32.mrb[0].mxu0
    %v4881 = vadd.f32 %v4421, %v4880
    %4882 = vmatprep.mubr.bf16.mxu0 0
    %4883 = vmatmul.mubr.bf16.gmra.mrb[0].mxu0 %v4626
    %v4884 = vpop.f32.mrb[0].mxu0
    %v4885 = vadd.f32 %v4417, %v4884
    %v4886 = vpop.f32.mrb[0].mxu0
    %v4887 = vadd.f32 %v4421, %v4886
    %v4888 = vpop.f32.mrb[0].mxu0
    %v4889 = vadd.f32 %v4417, %v4888
    %v4890 = vpop.f32.mrb[0].mxu0
    %v4891 = vadd.f32 %v4421, %v4890
    %4892 = vdwg.mxu0
    %4893 = vmatprep.subr.bf16.mxu0 %v4569
    %4894 = vmatpush1.bf16.msra.mxu0 %v4568
    %4895 = vmatprep.subr.bf16.mxu0 %v4585
    %4896 = vmatpush1.bf16.msra.mxu0 %v4584
    %4897 = vmatprep.subr.bf16.mxu0 0
    %4898 = vmatpush1.bf16.msra.mxu0 0
    %4899 = vmatprep.subr.bf16.mxu0 0
    %4900 = vmatpush1.bf16.msra.mxu0 0
    %4901 = vmatprep.subr.bf16.mxu0 0
    %4902 = vmatpush1.bf16.msra.mxu0 0
    %4903 = vmatprep.subr.bf16.mxu0 0
    %4904 = vmatpush1.bf16.msra.mxu0 0
    %4905 = vmatprep.subr.bf16.mxu0 0
    %4906 = vmatpush1.bf16.msra.mxu0 0
    %4907 = vmatprep.subr.bf16.mxu0 0
    %4908 = vmatpush1.bf16.msra.mxu0 0
    %4909 = vmatprep.subr.bf16.mxu0 0
    %4910 = vmatpush1.bf16.msra.mxu0 0
    %4911 = vmatprep.subr.bf16.mxu0 0
    %4912 = vmatpush1.bf16.msra.mxu0 0
    %4913 = vmatprep.subr.bf16.mxu0 0
    %4914 = vmatpush1.bf16.msra.mxu0 0
    %4915 = vmatprep.subr.bf16.mxu0 0
    %4916 = vmatpush1.bf16.msra.mxu0 0
    %4917 = vmatprep.subr.bf16.mxu0 0
    %4918 = vmatpush1.bf16.msra.mxu0 0
    %4919 = vmatprep.subr.bf16.mxu0 0
    %4920 = vmatpush1.bf16.msra.mxu0 0
    %4921 = vmatprep.subr.bf16.mxu0 0
    %4922 = vmatpush1.bf16.msra.mxu0 0
    %4923 = vmatprep.subr.bf16.mxu0 0
    %4924 = vmatpush1.bf16.msra.mxu0 0
    %4925 = vmatprep.mubr.bf16.mxu0 0
    %4926 = vmatmul.mubr.bf16.gmra.mrb[0].mxu0 %v4623
    %v4927 = vpop.f32.mrb[0].mxu0
    %v4928 = vadd.f32 %v4425, %v4927
    %v4929 = vpop.f32.mrb[0].mxu0
    %v4930 = vadd.f32 %v4429, %v4929
    %v4931 = vpop.f32.mrb[0].mxu0
    %v4932 = vadd.f32 %v4425, %v4931
    %v4933 = vpop.f32.mrb[0].mxu0
    %v4934 = vadd.f32 %v4429, %v4933
    %4935 = vmatprep.mubr.bf16.mxu0 0
    %4936 = vmatmul.mubr.bf16.gmra.mrb[0].mxu0 %v4626
    %v4937 = vpop.f32.mrb[0].mxu0
    %v4938 = vadd.f32 %v4425, %v4937
    %v4939 = vpop.f32.mrb[0].mxu0
    %v4940 = vadd.f32 %v4429, %v4939
    %v4941 = vpop.f32.mrb[0].mxu0
    %v4942 = vadd.f32 %v4425, %v4941
    %v4943 = vpop.f32.mrb[0].mxu0
    %v4944 = vadd.f32 %v4429, %v4943
    %4945 = vdwg.mxu0
    %4946 = vmatprep.subr.bf16.mxu0 %v4571
    %4947 = vmatpush1.bf16.msra.mxu0 %v4570
    %4948 = vmatprep.subr.bf16.mxu0 %v4587
    %4949 = vmatpush1.bf16.msra.mxu0 %v4586
    %4950 = vmatprep.subr.bf16.mxu0 0
    %4951 = vmatpush1.bf16.msra.mxu0 0
    %4952 = vmatprep.subr.bf16.mxu0 0
    %4953 = vmatpush1.bf16.msra.mxu0 0
    %4954 = vmatprep.subr.bf16.mxu0 0
    %4955 = vmatpush1.bf16.msra.mxu0 0
    %4956 = vmatprep.subr.bf16.mxu0 0
    %4957 = vmatpush1.bf16.msra.mxu0 0
    %4958 = vmatprep.subr.bf16.mxu0 0
    %4959 = vmatpush1.bf16.msra.mxu0 0
    %4960 = vmatprep.subr.bf16.mxu0 0
    %4961 = vmatpush1.bf16.msra.mxu0 0
    %4962 = vmatprep.subr.bf16.mxu0 0
    %4963 = vmatpush1.bf16.msra.mxu0 0
    %4964 = vmatprep.subr.bf16.mxu0 0
    %4965 = vmatpush1.bf16.msra.mxu0 0
    %4966 = vmatprep.subr.bf16.mxu0 0
    %4967 = vmatpush1.bf16.msra.mxu0 0
    %4968 = vmatprep.subr.bf16.mxu0 0
    %4969 = vmatpush1.bf16.msra.mxu0 0
    %4970 = vmatprep.subr.bf16.mxu0 0
    %4971 = vmatpush1.bf16.msra.mxu0 0
    %4972 = vmatprep.subr.bf16.mxu0 0
    %4973 = vmatpush1.bf16.msra.mxu0 0
    %4974 = vmatprep.subr.bf16.mxu0 0
    %4975 = vmatpush1.bf16.msra.mxu0 0
    %4976 = vmatprep.subr.bf16.mxu0 0
    %4977 = vmatpush1.bf16.msra.mxu0 0
    %4978 = vmatprep.mubr.bf16.mxu0 0
    %4979 = vmatmul.mubr.bf16.gmra.mrb[0].mxu0 %v4623
    %v4980 = vpop.f32.mrb[0].mxu0
    %v4981 = vadd.f32 %v4433, %v4980
    %v4982 = vpop.f32.mrb[0].mxu0
    %v4983 = vadd.f32 %v4437, %v4982
    %v4984 = vpop.f32.mrb[0].mxu0
    %v4985 = vadd.f32 %v4433, %v4984
    %v4986 = vpop.f32.mrb[0].mxu0
    %v4987 = vadd.f32 %v4437, %v4986
    %4988 = vmatprep.mubr.bf16.mxu0 0
    %4989 = vmatmul.mubr.bf16.gmra.mrb[0].mxu0 %v4626
    %v4990 = vpop.f32.mrb[0].mxu0
    %v4991 = vadd.f32 %v4433, %v4990
    %v4992 = vpop.f32.mrb[0].mxu0
    %v4993 = vadd.f32 %v4437, %v4992
    %v4994 = vpop.f32.mrb[0].mxu0
    %v4995 = vadd.f32 %v4433, %v4994
    %v4996 = vpop.f32.mrb[0].mxu0
    %v4997 = vadd.f32 %v4437, %v4996
    %4998 = vdwg.mxu0
    %4999 = vmatprep.subr.bf16.mxu0 %v4573
    %5000 = vmatpush1.bf16.msra.mxu0 %v4572
    %5001 = vmatprep.subr.bf16.mxu0 %v4589
    %5002 = vmatpush1.bf16.msra.mxu0 %v4588
    %5003 = vmatprep.subr.bf16.mxu0 0
    %5004 = vmatpush1.bf16.msra.mxu0 0
    %5005 = vmatprep.subr.bf16.mxu0 0
    %5006 = vmatpush1.bf16.msra.mxu0 0
    %5007 = vmatprep.subr.bf16.mxu0 0
    %5008 = vmatpush1.bf16.msra.mxu0 0
    %5009 = vmatprep.subr.bf16.mxu0 0
    %5010 = vmatpush1.bf16.msra.mxu0 0
    %5011 = vmatprep.subr.bf16.mxu0 0
    %5012 = vmatpush1.bf16.msra.mxu0 0
    %5013 = vmatprep.subr.bf16.mxu0 0
    %5014 = vmatpush1.bf16.msra.mxu0 0
    %5015 = vmatprep.subr.bf16.mxu0 0
    %5016 = vmatpush1.bf16.msra.mxu0 0
    %5017 = vmatprep.subr.bf16.mxu0 0
    %5018 = vmatpush1.bf16.msra.mxu0 0
    %5019 = vmatprep.subr.bf16.mxu0 0
    %5020 = vmatpush1.bf16.msra.mxu0 0
    %5021 = vmatprep.subr.bf16.mxu0 0
    %5022 = vmatpush1.bf16.msra.mxu0 0
    %5023 = vmatprep.subr.bf16.mxu0 0
    %5024 = vmatpush1.bf16.msra.mxu0 0
    %5025 = vmatprep.subr.bf16.mxu0 0
    %5026 = vmatpush1.bf16.msra.mxu0 0
    %5027 = vmatprep.subr.bf16.mxu0 0
    %5028 = vmatpush1.bf16.msra.mxu0 0
    %5029 = vmatprep.subr.bf16.mxu0 0
    %5030 = vmatpush1.bf16.msra.mxu0 0
    %5031 = vmatprep.mubr.bf16.mxu0 0
    %5032 = vmatmul.mubr.bf16.gmra.mrb[0].mxu0 %v4623
    %v5033 = vpop.f32.mrb[0].mxu0
    %v5034 = vadd.f32 %v4441, %v5033
    %v5035 = vpop.f32.mrb[0].mxu0
    %v5036 = vadd.f32 %v4445, %v5035
    %v5037 = vpop.f32.mrb[0].mxu0
    %v5038 = vadd.f32 %v4441, %v5037
    %v5039 = vpop.f32.mrb[0].mxu0
    %v5040 = vadd.f32 %v4445, %v5039
    %5041 = vmatprep.mubr.bf16.mxu0 0
    %5042 = vmatmul.mubr.bf16.gmra.mrb[0].mxu0 %v4626
    %v5043 = vpop.f32.mrb[0].mxu0
    %v5044 = vadd.f32 %v4441, %v5043
    %v5045 = vpop.f32.mrb[0].mxu0
    %v5046 = vadd.f32 %v4445, %v5045
    %v5047 = vpop.f32.mrb[0].mxu0
    %v5048 = vadd.f32 %v4441, %v5047
    %v5049 = vpop.f32.mrb[0].mxu0
    %v5050 = vadd.f32 %v4445, %v5049
    %5051 = vdwg.mxu0
    %v5052 = vmax.f32 %v4663, 0.0
    %v5053 = vmax.f32 %v4665, 0.0
    %v5054 = vmax.f32 %v4716, 0.0
    %v5055 = vmax.f32 %v4718, 0.0
    %v5056 = vmax.f32 %v4769, 0.0
    %v5057 = vmax.f32 %v4771, 0.0
    %v5058 = vmax.f32 %v4822, 0.0
    %v5059 = vmax.f32 %v4824, 0.0
    %v5060 = vmax.f32 %v4875, 0.0
    %v5061 = vmax.f32 %v4877, 0.0
    %v5062 = vmax.f32 %v4928, 0.0
    %v5063 = vmax.f32 %v4930, 0.0
    %v5064 = vmax.f32 %v4981, 0.0
    %v5065 = vmax.f32 %v4983, 0.0
    %v5066 = vmax.f32 %v5034, 0.0
    %v5067 = vmax.f32 %v5036, 0.0
    %v5068 = vmax.f32 %v4667, 0.0
    %v5069 = vmax.f32 %v4669, 0.0
    %v5070 = vmax.f32 %v4720, 0.0
    %v5071 = vmax.f32 %v4722, 0.0
    %v5072 = vmax.f32 %v4773, 0.0
    %v5073 = vmax.f32 %v4775, 0.0
    %v5074 = vmax.f32 %v4826, 0.0
    %v5075 = vmax.f32 %v4828, 0.0
    %v5076 = vmax.f32 %v4879, 0.0
    %v5077 = vmax.f32 %v4881, 0.0
    %v5078 = vmax.f32 %v4932, 0.0
    %v5079 = vmax.f32 %v4934, 0.0
    %v5080 = vmax.f32 %v4985, 0.0
    %v5081 = vmax.f32 %v4987, 0.0
    %v5082 = vmax.f32 %v5038, 0.0
    %v5083 = vmax.f32 %v5040, 0.0
    %v5084 = vmax.f32 %v4673, 0.0
    %v5085 = vmax.f32 %v4675, 0.0
    %v5086 = vmax.f32 %v4726, 0.0
    %v5087 = vmax.f32 %v4728, 0.0
    %v5088 = vmax.f32 %v4779, 0.0
    %v5089 = vmax.f32 %v4781, 0.0
    %v5090 = vmax.f32 %v4832, 0.0
    %v5091 = vmax.f32 %v4834, 0.0
    %v5092 = vmax.f32 %v4885, 0.0
    %v5093 = vmax.f32 %v4887, 0.0
    %v5094 = vmax.f32 %v4938, 0.0
    %v5095 = vmax.f32 %v4940, 0.0
    %v5096 = vmax.f32 %v4991, 0.0
    %v5097 = vmax.f32 %v4993, 0.0
    %v5098 = vmax.f32 %v5044, 0.0
    %v5099 = vmax.f32 %v5046, 0.0
    %v5100 = vmax.f32 %v4677, 0.0
    %v5101 = vmax.f32 %v4679, 0.0
    %v5102 = vmax.f32 %v4730, 0.0
    %v5103 = vmax.f32 %v4732, 0.0
    %v5104 = vmax.f32 %v4783, 0.0
    %v5105 = vmax.f32 %v4785, 0.0
    %v5106 = vmax.f32 %v4836, 0.0
    %v5107 = vmax.f32 %v4838, 0.0
    %v5108 = vmax.f32 %v4889, 0.0
    %v5109 = vmax.f32 %v4891, 0.0
    %v5110 = vmax.f32 %v4942, 0.0
    %v5111 = vmax.f32 %v4944, 0.0
    %v5112 = vmax.f32 %v4995, 0.0
    %v5113 = vmax.f32 %v4997, 0.0
    %v5114 = vmax.f32 %v5048, 0.0
    %v5115 = vmax.f32 %v5050, 0.0
    %v5116 = vpack.c.bf16 %v5068, %v5052
    %v5117 = vpack.c.bf16 %v5069, %v5053
    %v5118 = vpack.c.bf16 %v5070, %v5054
    %v5119 = vpack.c.bf16 %v5071, %v5055
    %v5120 = vpack.c.bf16 %v5072, %v5056
    %v5121 = vpack.c.bf16 %v5073, %v5057
    %v5122 = vpack.c.bf16 %v5074, %v5058
    %v5123 = vpack.c.bf16 %v5075, %v5059
    %v5124 = vpack.c.bf16 %v5076, %v5060
    %v5125 = vpack.c.bf16 %v5077, %v5061
    %v5126 = vpack.c.bf16 %v5078, %v5062
    %v5127 = vpack.c.bf16 %v5079, %v5063
    %v5128 = vpack.c.bf16 %v5080, %v5064
    %v5129 = vpack.c.bf16 %v5081, %v5065
    %v5130 = vpack.c.bf16 %v5082, %v5066
    %v5131 = vpack.c.bf16 %v5083, %v5067
    %v5132 = vpack.c.bf16 %v5100, %v5084
    %v5133 = vpack.c.bf16 %v5101, %v5085
    %v5134 = vpack.c.bf16 %v5102, %v5086
    %v5135 = vpack.c.bf16 %v5103, %v5087
    %v5136 = vpack.c.bf16 %v5104, %v5088
    %v5137 = vpack.c.bf16 %v5105, %v5089
    %v5138 = vpack.c.bf16 %v5106, %v5090
    %v5139 = vpack.c.bf16 %v5107, %v5091
    %v5140 = vpack.c.bf16 %v5108, %v5092
    %v5141 = vpack.c.bf16 %v5109, %v5093
    %v5142 = vpack.c.bf16 %v5110, %v5094
    %v5143 = vpack.c.bf16 %v5111, %v5095
    %v5144 = vpack.c.bf16 %v5112, %v5096
    %v5145 = vpack.c.bf16 %v5113, %v5097
    %v5146 = vpack.c.bf16 %v5114, %v5098
    %v5147 = vpack.c.bf16 %v5115, %v5099
    %s5148 = scalar_lea.vmem %s15, 1024
    %v5149 = vld [vmem:[%s5148] sm:$0xf]
    %v5150 = vld [vmem:[%s5148 + $0x4] sm:$0xf]
    %v5151 = vld [vmem:[%s5148 + $0x8] sm:$0xf]
    %v5152 = vld [vmem:[%s5148 + $0xc] sm:$0xf]
    %v5153 = vld [vmem:[%s5148 + $0x10] sm:$0xf]
    %v5154 = vld [vmem:[%s5148 + $0x14] sm:$0xf]
    %v5155 = vld [vmem:[%s5148 + $0x18] sm:$0xf]
    %v5156 = vld [vmem:[%s5148 + $0x1c] sm:$0xf]
    %v5157 = vld [vmem:[%s5148 + $0x20] sm:$0xf]
    %v5158 = vld [vmem:[%s5148 + $0x24] sm:$0xf]
    %v5159 = vld [vmem:[%s5148 + $0x28] sm:$0xf]
    %v5160 = vld [vmem:[%s5148 + $0x2c] sm:$0xf]
    %v5161 = vld [vmem:[%s5148 + $0x30] sm:$0xf]
    %v5162 = vld [vmem:[%s5148 + $0x34] sm:$0xf]
    %v5163 = vld [vmem:[%s5148 + $0x38] sm:$0xf]
    %v5164 = vld [vmem:[%s5148 + $0x3c] sm:$0xf]
    %v5165 = vld [vmem:[%s5148 + $0x40] sm:$0xf]
    %v5166 = vld [vmem:[%s5148 + $0x44] sm:$0xf]
    %v5167 = vld [vmem:[%s5148 + $0x48] sm:$0xf]
    %v5168 = vld [vmem:[%s5148 + $0x4c] sm:$0xf]
    %v5169 = vld [vmem:[%s5148 + $0x50] sm:$0xf]
    %v5170 = vld [vmem:[%s5148 + $0x54] sm:$0xf]
    %v5171 = vld [vmem:[%s5148 + $0x58] sm:$0xf]
    %v5172 = vld [vmem:[%s5148 + $0x5c] sm:$0xf]
    %v5173 = vld [vmem:[%s5148 + $0x60] sm:$0xf]
    %v5174 = vld [vmem:[%s5148 + $0x64] sm:$0xf]
    %v5175 = vld [vmem:[%s5148 + $0x68] sm:$0xf]
    %v5176 = vld [vmem:[%s5148 + $0x6c] sm:$0xf]
    %v5177 = vld [vmem:[%s5148 + $0x70] sm:$0xf]
    %v5178 = vld [vmem:[%s5148 + $0x74] sm:$0xf]
    %v5179 = vld [vmem:[%s5148 + $0x78] sm:$0xf]
    %v5180 = vld [vmem:[%s5148 + $0x7c] sm:$0xf]
    %v5181 = vld [vmem:[%s5148 + $0x80] sm:$0xf]
    %v5182 = vld [vmem:[%s5148 + $0x84] sm:$0xf]
    %v5183 = vld [vmem:[%s5148 + $0x88] sm:$0xf]
    %v5184 = vld [vmem:[%s5148 + $0x8c] sm:$0xf]
    %v5185 = vld [vmem:[%s5148 + $0x90] sm:$0xf]
    %v5186 = vld [vmem:[%s5148 + $0x94] sm:$0xf]
    %v5187 = vld [vmem:[%s5148 + $0x98] sm:$0xf]
    %v5188 = vld [vmem:[%s5148 + $0x9c] sm:$0xf]
    %v5189 = vld [vmem:[%s5148 + $0xa0] sm:$0xf]
    %v5190 = vld [vmem:[%s5148 + $0xa4] sm:$0xf]
    %v5191 = vld [vmem:[%s5148 + $0xa8] sm:$0xf]
    %v5192 = vld [vmem:[%s5148 + $0xac] sm:$0xf]
    %v5193 = vld [vmem:[%s5148 + $0xb0] sm:$0xf]
    %v5194 = vld [vmem:[%s5148 + $0xb4] sm:$0xf]
    %v5195 = vld [vmem:[%s5148 + $0xb8] sm:$0xf]
    %v5196 = vld [vmem:[%s5148 + $0xbc] sm:$0xf]
    %v5197 = vld [vmem:[%s5148 + $0xc0] sm:$0xf]
    %v5198 = vld [vmem:[%s5148 + $0xc4] sm:$0xf]
    %v5199 = vld [vmem:[%s5148 + $0xc8] sm:$0xf]
    %v5200 = vld [vmem:[%s5148 + $0xcc] sm:$0xf]
    %v5201 = vld [vmem:[%s5148 + $0xd0] sm:$0xf]
    %v5202 = vld [vmem:[%s5148 + $0xd4] sm:$0xf]
    %v5203 = vld [vmem:[%s5148 + $0xd8] sm:$0xf]
    %v5204 = vld [vmem:[%s5148 + $0xdc] sm:$0xf]
    %v5205 = vld [vmem:[%s5148 + $0xe0] sm:$0xf]
    %v5206 = vld [vmem:[%s5148 + $0xe4] sm:$0xf]
    %v5207 = vld [vmem:[%s5148 + $0xe8] sm:$0xf]
    %v5208 = vld [vmem:[%s5148 + $0xec] sm:$0xf]
    %v5209 = vld [vmem:[%s5148 + $0xf0] sm:$0xf]
    %v5210 = vld [vmem:[%s5148 + $0xf4] sm:$0xf]
    %v5211 = vld [vmem:[%s5148 + $0xf8] sm:$0xf]
    %v5212 = vld [vmem:[%s5148 + $0xfc] sm:$0xf]
    %v5213 = vld [vmem:[%s5148 + $0x100] sm:$0xf]
    %v5214 = vld [vmem:[%s5148 + $0x104] sm:$0xf]
    %v5215 = vld [vmem:[%s5148 + $0x108] sm:$0xf]
    %v5216 = vld [vmem:[%s5148 + $0x10c] sm:$0xf]
    %v5217 = vld [vmem:[%s5148 + $0x110] sm:$0xf]
    %v5218 = vld [vmem:[%s5148 + $0x114] sm:$0xf]
    %v5219 = vld [vmem:[%s5148 + $0x118] sm:$0xf]
    %v5220 = vld [vmem:[%s5148 + $0x11c] sm:$0xf]
    %v5221 = vld [vmem:[%s5148 + $0x120] sm:$0xf]
    %v5222 = vld [vmem:[%s5148 + $0x124] sm:$0xf]
    %v5223 = vld [vmem:[%s5148 + $0x128] sm:$0xf]
    %v5224 = vld [vmem:[%s5148 + $0x12c] sm:$0xf]
    %v5225 = vld [vmem:[%s5148 + $0x130] sm:$0xf]
    %v5226 = vld [vmem:[%s5148 + $0x134] sm:$0xf]
    %v5227 = vld [vmem:[%s5148 + $0x138] sm:$0xf]
    %v5228 = vld [vmem:[%s5148 + $0x13c] sm:$0xf]
    %v5229 = vld [vmem:[%s5148 + $0x140] sm:$0xf]
    %v5230 = vld [vmem:[%s5148 + $0x144] sm:$0xf]
    %v5231 = vld [vmem:[%s5148 + $0x148] sm:$0xf]
    %v5232 = vld [vmem:[%s5148 + $0x14c] sm:$0xf]
    %v5233 = vld [vmem:[%s5148 + $0x150] sm:$0xf]
    %v5234 = vld [vmem:[%s5148 + $0x154] sm:$0xf]
    %v5235 = vld [vmem:[%s5148 + $0x158] sm:$0xf]
    %v5236 = vld [vmem:[%s5148 + $0x15c] sm:$0xf]
    %v5237 = vld [vmem:[%s5148 + $0x160] sm:$0xf]
    %v5238 = vld [vmem:[%s5148 + $0x164] sm:$0xf]
    %v5239 = vld [vmem:[%s5148 + $0x168] sm:$0xf]
    %v5240 = vld [vmem:[%s5148 + $0x16c] sm:$0xf]
    %v5241 = vld [vmem:[%s5148 + $0x170] sm:$0xf]
    %v5242 = vld [vmem:[%s5148 + $0x174] sm:$0xf]
    %v5243 = vld [vmem:[%s5148 + $0x178] sm:$0xf]
    %v5244 = vld [vmem:[%s5148 + $0x17c] sm:$0xf]
    %v5245 = vld [vmem:[%s5148 + $0x180] sm:$0xf]
    %v5246 = vld [vmem:[%s5148 + $0x184] sm:$0xf]
    %v5247 = vld [vmem:[%s5148 + $0x188] sm:$0xf]
    %v5248 = vld [vmem:[%s5148 + $0x18c] sm:$0xf]
    %v5249 = vld [vmem:[%s5148 + $0x190] sm:$0xf]
    %v5250 = vld [vmem:[%s5148 + $0x194] sm:$0xf]
    %v5251 = vld [vmem:[%s5148 + $0x198] sm:$0xf]
    %v5252 = vld [vmem:[%s5148 + $0x19c] sm:$0xf]
    %v5253 = vld [vmem:[%s5148 + $0x1a0] sm:$0xf]
    %v5254 = vld [vmem:[%s5148 + $0x1a4] sm:$0xf]
    %v5255 = vld [vmem:[%s5148 + $0x1a8] sm:$0xf]
    %v5256 = vld [vmem:[%s5148 + $0x1ac] sm:$0xf]
    %v5257 = vld [vmem:[%s5148 + $0x1b0] sm:$0xf]
    %v5258 = vld [vmem:[%s5148 + $0x1b4] sm:$0xf]
    %v5259 = vld [vmem:[%s5148 + $0x1b8] sm:$0xf]
    %v5260 = vld [vmem:[%s5148 + $0x1bc] sm:$0xf]
    %v5261 = vld [vmem:[%s5148 + $0x1c0] sm:$0xf]
    %v5262 = vld [vmem:[%s5148 + $0x1c4] sm:$0xf]
    %v5263 = vld [vmem:[%s5148 + $0x1c8] sm:$0xf]
    %v5264 = vld [vmem:[%s5148 + $0x1cc] sm:$0xf]
    %v5265 = vld [vmem:[%s5148 + $0x1d0] sm:$0xf]
    %v5266 = vld [vmem:[%s5148 + $0x1d4] sm:$0xf]
    %v5267 = vld [vmem:[%s5148 + $0x1d8] sm:$0xf]
    %v5268 = vld [vmem:[%s5148 + $0x1dc] sm:$0xf]
    %v5269 = vld [vmem:[%s5148 + $0x1e0] sm:$0xf]
    %v5270 = vld [vmem:[%s5148 + $0x1e4] sm:$0xf]
    %v5271 = vld [vmem:[%s5148 + $0x1e8] sm:$0xf]
    %v5272 = vld [vmem:[%s5148 + $0x1ec] sm:$0xf]
    %v5273 = vld [vmem:[%s5148 + $0x1f0] sm:$0xf]
    %v5274 = vld [vmem:[%s5148 + $0x1f4] sm:$0xf]
    %v5275 = vld [vmem:[%s5148 + $0x1f8] sm:$0xf]
    %v5276 = vld [vmem:[%s5148 + $0x1fc] sm:$0xf]
    %v5277 = vld [vmem:[%s5148 + $0x200] sm:$0xf]
    %v5278 = vld [vmem:[%s5148 + $0x204] sm:$0xf]
    %v5279 = vld [vmem:[%s5148 + $0x208] sm:$0xf]
    %v5280 = vld [vmem:[%s5148 + $0x20c] sm:$0xf]
    %v5281 = vld [vmem:[%s5148 + $0x210] sm:$0xf]
    %v5282 = vld [vmem:[%s5148 + $0x214] sm:$0xf]
    %v5283 = vld [vmem:[%s5148 + $0x218] sm:$0xf]
    %v5284 = vld [vmem:[%s5148 + $0x21c] sm:$0xf]
    %v5285 = vld [vmem:[%s5148 + $0x220] sm:$0xf]
    %v5286 = vld [vmem:[%s5148 + $0x224] sm:$0xf]
    %v5287 = vld [vmem:[%s5148 + $0x228] sm:$0xf]
    %v5288 = vld [vmem:[%s5148 + $0x22c] sm:$0xf]
    %v5289 = vld [vmem:[%s5148 + $0x230] sm:$0xf]
    %v5290 = vld [vmem:[%s5148 + $0x234] sm:$0xf]
    %v5291 = vld [vmem:[%s5148 + $0x238] sm:$0xf]
    %v5292 = vld [vmem:[%s5148 + $0x23c] sm:$0xf]
    %v5293 = vld [vmem:[%s5148 + $0x240] sm:$0xf]
    %v5294 = vld [vmem:[%s5148 + $0x244] sm:$0xf]
    %v5295 = vld [vmem:[%s5148 + $0x248] sm:$0xf]
    %v5296 = vld [vmem:[%s5148 + $0x24c] sm:$0xf]
    %v5297 = vld [vmem:[%s5148 + $0x250] sm:$0xf]
    %v5298 = vld [vmem:[%s5148 + $0x254] sm:$0xf]
    %v5299 = vld [vmem:[%s5148 + $0x258] sm:$0xf]
    %v5300 = vld [vmem:[%s5148 + $0x25c] sm:$0xf]
    %v5301 = vld [vmem:[%s5148 + $0x260] sm:$0xf]
    %v5302 = vld [vmem:[%s5148 + $0x264] sm:$0xf]
    %v5303 = vld [vmem:[%s5148 + $0x268] sm:$0xf]
    %v5304 = vld [vmem:[%s5148 + $0x26c] sm:$0xf]
    %v5305 = vld [vmem:[%s5148 + $0x270] sm:$0xf]
    %v5306 = vld [vmem:[%s5148 + $0x274] sm:$0xf]
    %v5307 = vld [vmem:[%s5148 + $0x278] sm:$0xf]
    %v5308 = vld [vmem:[%s5148 + $0x27c] sm:$0xf]
    %v5309 = vld [vmem:[%s5148 + $0x280] sm:$0xf]
    %v5310 = vld [vmem:[%s5148 + $0x284] sm:$0xf]
    %v5311 = vld [vmem:[%s5148 + $0x288] sm:$0xf]
    %v5312 = vld [vmem:[%s5148 + $0x28c] sm:$0xf]
    %v5313 = vld [vmem:[%s5148 + $0x290] sm:$0xf]
    %v5314 = vld [vmem:[%s5148 + $0x294] sm:$0xf]
    %v5315 = vld [vmem:[%s5148 + $0x298] sm:$0xf]
    %v5316 = vld [vmem:[%s5148 + $0x29c] sm:$0xf]
    %v5317 = vld [vmem:[%s5148 + $0x2a0] sm:$0xf]
    %v5318 = vld [vmem:[%s5148 + $0x2a4] sm:$0xf]
    %v5319 = vld [vmem:[%s5148 + $0x2a8] sm:$0xf]
    %v5320 = vld [vmem:[%s5148 + $0x2ac] sm:$0xf]
    %v5321 = vld [vmem:[%s5148 + $0x2b0] sm:$0xf]
    %v5322 = vld [vmem:[%s5148 + $0x2b4] sm:$0xf]
    %v5323 = vld [vmem:[%s5148 + $0x2b8] sm:$0xf]
    %v5324 = vld [vmem:[%s5148 + $0x2bc] sm:$0xf]
    %v5325 = vld [vmem:[%s5148 + $0x2c0] sm:$0xf]
    %v5326 = vld [vmem:[%s5148 + $0x2c4] sm:$0xf]
    %v5327 = vld [vmem:[%s5148 + $0x2c8] sm:$0xf]
    %v5328 = vld [vmem:[%s5148 + $0x2cc] sm:$0xf]
    %v5329 = vld [vmem:[%s5148 + $0x2d0] sm:$0xf]
    %v5330 = vld [vmem:[%s5148 + $0x2d4] sm:$0xf]
    %v5331 = vld [vmem:[%s5148 + $0x2d8] sm:$0xf]
    %v5332 = vld [vmem:[%s5148 + $0x2dc] sm:$0xf]
    %v5333 = vld [vmem:[%s5148 + $0x2e0] sm:$0xf]
    %v5334 = vld [vmem:[%s5148 + $0x2e4] sm:$0xf]
    %v5335 = vld [vmem:[%s5148 + $0x2e8] sm:$0xf]
    %v5336 = vld [vmem:[%s5148 + $0x2ec] sm:$0xf]
    %v5337 = vld [vmem:[%s5148 + $0x2f0] sm:$0xf]
    %v5338 = vld [vmem:[%s5148 + $0x2f4] sm:$0xf]
    %v5339 = vld [vmem:[%s5148 + $0x2f8] sm:$0xf]
    %v5340 = vld [vmem:[%s5148 + $0x2fc] sm:$0xf]
    %v5341 = vld [vmem:[%s5148 + $0x300] sm:$0xf]
    %v5342 = vld [vmem:[%s5148 + $0x304] sm:$0xf]
    %v5343 = vld [vmem:[%s5148 + $0x308] sm:$0xf]
    %v5344 = vld [vmem:[%s5148 + $0x30c] sm:$0xf]
    %v5345 = vld [vmem:[%s5148 + $0x310] sm:$0xf]
    %v5346 = vld [vmem:[%s5148 + $0x314] sm:$0xf]
    %v5347 = vld [vmem:[%s5148 + $0x318] sm:$0xf]
    %v5348 = vld [vmem:[%s5148 + $0x31c] sm:$0xf]
    %v5349 = vld [vmem:[%s5148 + $0x320] sm:$0xf]
    %v5350 = vld [vmem:[%s5148 + $0x324] sm:$0xf]
    %v5351 = vld [vmem:[%s5148 + $0x328] sm:$0xf]
    %v5352 = vld [vmem:[%s5148 + $0x32c] sm:$0xf]
    %v5353 = vld [vmem:[%s5148 + $0x330] sm:$0xf]
    %v5354 = vld [vmem:[%s5148 + $0x334] sm:$0xf]
    %v5355 = vld [vmem:[%s5148 + $0x338] sm:$0xf]
    %v5356 = vld [vmem:[%s5148 + $0x33c] sm:$0xf]
    %v5357 = vld [vmem:[%s5148 + $0x340] sm:$0xf]
    %v5358 = vld [vmem:[%s5148 + $0x344] sm:$0xf]
    %v5359 = vld [vmem:[%s5148 + $0x348] sm:$0xf]
    %v5360 = vld [vmem:[%s5148 + $0x34c] sm:$0xf]
    %v5361 = vld [vmem:[%s5148 + $0x350] sm:$0xf]
    %v5362 = vld [vmem:[%s5148 + $0x354] sm:$0xf]
    %v5363 = vld [vmem:[%s5148 + $0x358] sm:$0xf]
    %v5364 = vld [vmem:[%s5148 + $0x35c] sm:$0xf]
    %v5365 = vld [vmem:[%s5148 + $0x360] sm:$0xf]
    %v5366 = vld [vmem:[%s5148 + $0x364] sm:$0xf]
    %v5367 = vld [vmem:[%s5148 + $0x368] sm:$0xf]
    %v5368 = vld [vmem:[%s5148 + $0x36c] sm:$0xf]
    %v5369 = vld [vmem:[%s5148 + $0x370] sm:$0xf]
    %v5370 = vld [vmem:[%s5148 + $0x374] sm:$0xf]
    %v5371 = vld [vmem:[%s5148 + $0x378] sm:$0xf]
    %v5372 = vld [vmem:[%s5148 + $0x37c] sm:$0xf]
    %v5373 = vld [vmem:[%s5148 + $0x380] sm:$0xf]
    %v5374 = vld [vmem:[%s5148 + $0x384] sm:$0xf]
    %v5375 = vld [vmem:[%s5148 + $0x388] sm:$0xf]
    %v5376 = vld [vmem:[%s5148 + $0x38c] sm:$0xf]
    %v5377 = vld [vmem:[%s5148 + $0x390] sm:$0xf]
    %v5378 = vld [vmem:[%s5148 + $0x394] sm:$0xf]
    %v5379 = vld [vmem:[%s5148 + $0x398] sm:$0xf]
    %v5380 = vld [vmem:[%s5148 + $0x39c] sm:$0xf]
    %v5381 = vld [vmem:[%s5148 + $0x3a0] sm:$0xf]
    %v5382 = vld [vmem:[%s5148 + $0x3a4] sm:$0xf]
    %v5383 = vld [vmem:[%s5148 + $0x3a8] sm:$0xf]
    %v5384 = vld [vmem:[%s5148 + $0x3ac] sm:$0xf]
    %v5385 = vld [vmem:[%s5148 + $0x3b0] sm:$0xf]
    %v5386 = vld [vmem:[%s5148 + $0x3b4] sm:$0xf]
    %v5387 = vld [vmem:[%s5148 + $0x3b8] sm:$0xf]
    %v5388 = vld [vmem:[%s5148 + $0x3bc] sm:$0xf]
    %v5389 = vld [vmem:[%s5148 + $0x3c0] sm:$0xf]
    %v5390 = vld [vmem:[%s5148 + $0x3c4] sm:$0xf]
    %v5391 = vld [vmem:[%s5148 + $0x3c8] sm:$0xf]
    %v5392 = vld [vmem:[%s5148 + $0x3cc] sm:$0xf]
    %v5393 = vld [vmem:[%s5148 + $0x3d0] sm:$0xf]
    %v5394 = vld [vmem:[%s5148 + $0x3d4] sm:$0xf]
    %v5395 = vld [vmem:[%s5148 + $0x3d8] sm:$0xf]
    %v5396 = vld [vmem:[%s5148 + $0x3dc] sm:$0xf]
    %v5397 = vld [vmem:[%s5148 + $0x3e0] sm:$0xf]
    %v5398 = vld [vmem:[%s5148 + $0x3e4] sm:$0xf]
    %v5399 = vld [vmem:[%s5148 + $0x3e8] sm:$0xf]
    %v5400 = vld [vmem:[%s5148 + $0x3ec] sm:$0xf]
    %v5401 = vld [vmem:[%s5148 + $0x3f0] sm:$0xf]
    %v5402 = vld [vmem:[%s5148 + $0x3f4] sm:$0xf]
    %v5403 = vld [vmem:[%s5148 + $0x3f8] sm:$0xf]
    %v5404 = vld [vmem:[%s5148 + $0x3fc] sm:$0xf]
    %v5405 = vld [vmem:[%s16 + $0x1] sm:$0x1]
    %v5406 = vlaneseq
    %v5407 = vshrl.u32 %v5406, 7
    %v5408 = vsub.s32 0, %v5407
    %v5409 = vrot.slane %v5405, %v5408
    %v5666 = vunpack.c.l.b16 %v5149
    %v5667 = vunpack.c.l.b16 %v5150
    %v5668 = vunpack.c.l.b16 %v5151
    %v5669 = vunpack.c.l.b16 %v5152
    %v5670 = vunpack.c.l.b16 %v5153
    %v5671 = vunpack.c.l.b16 %v5154
    %v5672 = vunpack.c.l.b16 %v5155
    %v5673 = vunpack.c.l.b16 %v5156
    %v5674 = vunpack.c.l.b16 %v5157
    %v5675 = vunpack.c.l.b16 %v5158
    %v5676 = vunpack.c.l.b16 %v5159
    %v5677 = vunpack.c.l.b16 %v5160
    %v5678 = vunpack.c.l.b16 %v5161
    %v5679 = vunpack.c.l.b16 %v5162
    %v5680 = vunpack.c.l.b16 %v5163
    %v5681 = vunpack.c.l.b16 %v5164
    %v5682 = vunpack.c.l.b16 %v5165
    %v5683 = vunpack.c.l.b16 %v5166
    %v5684 = vunpack.c.l.b16 %v5167
    %v5685 = vunpack.c.l.b16 %v5168
    %v5686 = vunpack.c.l.b16 %v5169
    %v5687 = vunpack.c.l.b16 %v5170
    %v5688 = vunpack.c.l.b16 %v5171
    %v5689 = vunpack.c.l.b16 %v5172
    %v5690 = vunpack.c.l.b16 %v5173
    %v5691 = vunpack.c.l.b16 %v5174
    %v5692 = vunpack.c.l.b16 %v5175
    %v5693 = vunpack.c.l.b16 %v5176
    %v5694 = vunpack.c.l.b16 %v5177
    %v5695 = vunpack.c.l.b16 %v5178
    %v5696 = vunpack.c.l.b16 %v5179
    %v5697 = vunpack.c.l.b16 %v5180
    %v5698 = vunpack.c.l.b16 %v5181
    %v5699 = vunpack.c.l.b16 %v5182
    %v5700 = vunpack.c.l.b16 %v5183
    %v5701 = vunpack.c.l.b16 %v5184
    %v5702 = vunpack.c.l.b16 %v5185
    %v5703 = vunpack.c.l.b16 %v5186
    %v5704 = vunpack.c.l.b16 %v5187
    %v5705 = vunpack.c.l.b16 %v5188
    %v5706 = vunpack.c.l.b16 %v5189
    %v5707 = vunpack.c.l.b16 %v5190
    %v5708 = vunpack.c.l.b16 %v5191
    %v5709 = vunpack.c.l.b16 %v5192
    %v5710 = vunpack.c.l.b16 %v5193
    %v5711 = vunpack.c.l.b16 %v5194
    %v5712 = vunpack.c.l.b16 %v5195
    %v5713 = vunpack.c.l.b16 %v5196
    %v5714 = vunpack.c.l.b16 %v5197
    %v5715 = vunpack.c.l.b16 %v5198
    %v5716 = vunpack.c.l.b16 %v5199
    %v5717 = vunpack.c.l.b16 %v5200
    %v5718 = vunpack.c.l.b16 %v5201
    %v5719 = vunpack.c.l.b16 %v5202
    %v5720 = vunpack.c.l.b16 %v5203
    %v5721 = vunpack.c.l.b16 %v5204
    %v5722 = vunpack.c.l.b16 %v5205
    %v5723 = vunpack.c.l.b16 %v5206
    %v5724 = vunpack.c.l.b16 %v5207
    %v5725 = vunpack.c.l.b16 %v5208
    %v5726 = vunpack.c.l.b16 %v5209
    %v5727 = vunpack.c.l.b16 %v5210
    %v5728 = vunpack.c.l.b16 %v5211
    %v5729 = vunpack.c.l.b16 %v5212
    %v5730 = vunpack.c.l.b16 %v5213
    %v5731 = vunpack.c.l.b16 %v5214
    %v5732 = vunpack.c.l.b16 %v5215
    %v5733 = vunpack.c.l.b16 %v5216
    %v5734 = vunpack.c.l.b16 %v5217
    %v5735 = vunpack.c.l.b16 %v5218
    %v5736 = vunpack.c.l.b16 %v5219
    %v5737 = vunpack.c.l.b16 %v5220
    %v5738 = vunpack.c.l.b16 %v5221
    %v5739 = vunpack.c.l.b16 %v5222
    %v5740 = vunpack.c.l.b16 %v5223
    %v5741 = vunpack.c.l.b16 %v5224
    %v5742 = vunpack.c.l.b16 %v5225
    %v5743 = vunpack.c.l.b16 %v5226
    %v5744 = vunpack.c.l.b16 %v5227
    %v5745 = vunpack.c.l.b16 %v5228
    %v5746 = vunpack.c.l.b16 %v5229
    %v5747 = vunpack.c.l.b16 %v5230
    %v5748 = vunpack.c.l.b16 %v5231
    %v5749 = vunpack.c.l.b16 %v5232
    %v5750 = vunpack.c.l.b16 %v5233
    %v5751 = vunpack.c.l.b16 %v5234
    %v5752 = vunpack.c.l.b16 %v5235
    %v5753 = vunpack.c.l.b16 %v5236
    %v5754 = vunpack.c.l.b16 %v5237
    %v5755 = vunpack.c.l.b16 %v5238
    %v5756 = vunpack.c.l.b16 %v5239
    %v5757 = vunpack.c.l.b16 %v5240
    %v5758 = vunpack.c.l.b16 %v5241
    %v5759 = vunpack.c.l.b16 %v5242
    %v5760 = vunpack.c.l.b16 %v5243
    %v5761 = vunpack.c.l.b16 %v5244
    %v5762 = vunpack.c.l.b16 %v5245
    %v5763 = vunpack.c.l.b16 %v5246
    %v5764 = vunpack.c.l.b16 %v5247
    %v5765 = vunpack.c.l.b16 %v5248
    %v5766 = vunpack.c.l.b16 %v5249
    %v5767 = vunpack.c.l.b16 %v5250
    %v5768 = vunpack.c.l.b16 %v5251
    %v5769 = vunpack.c.l.b16 %v5252
    %v5770 = vunpack.c.l.b16 %v5253
    %v5771 = vunpack.c.l.b16 %v5254
    %v5772 = vunpack.c.l.b16 %v5255
    %v5773 = vunpack.c.l.b16 %v5256
    %v5774 = vunpack.c.l.b16 %v5257
    %v5775 = vunpack.c.l.b16 %v5258
    %v5776 = vunpack.c.l.b16 %v5259
    %v5777 = vunpack.c.l.b16 %v5260
    %v5778 = vunpack.c.l.b16 %v5261
    %v5779 = vunpack.c.l.b16 %v5262
    %v5780 = vunpack.c.l.b16 %v5263
    %v5781 = vunpack.c.l.b16 %v5264
    %v5782 = vunpack.c.l.b16 %v5265
    %v5783 = vunpack.c.l.b16 %v5266
    %v5784 = vunpack.c.l.b16 %v5267
    %v5785 = vunpack.c.l.b16 %v5268
    %v5786 = vunpack.c.l.b16 %v5269
    %v5787 = vunpack.c.l.b16 %v5270
    %v5788 = vunpack.c.l.b16 %v5271
    %v5789 = vunpack.c.l.b16 %v5272
    %v5790 = vunpack.c.l.b16 %v5273
    %v5791 = vunpack.c.l.b16 %v5274
    %v5792 = vunpack.c.l.b16 %v5275
    %v5793 = vunpack.c.l.b16 %v5276
    %v5794 = vunpack.c.l.b16 %v5277
    %v5795 = vunpack.c.l.b16 %v5278
    %v5796 = vunpack.c.l.b16 %v5279
    %v5797 = vunpack.c.l.b16 %v5280
    %v5798 = vunpack.c.l.b16 %v5281
    %v5799 = vunpack.c.l.b16 %v5282
    %v5800 = vunpack.c.l.b16 %v5283
    %v5801 = vunpack.c.l.b16 %v5284
    %v5802 = vunpack.c.l.b16 %v5285
    %v5803 = vunpack.c.l.b16 %v5286
    %v5804 = vunpack.c.l.b16 %v5287
    %v5805 = vunpack.c.l.b16 %v5288
    %v5806 = vunpack.c.l.b16 %v5289
    %v5807 = vunpack.c.l.b16 %v5290
    %v5808 = vunpack.c.l.b16 %v5291
    %v5809 = vunpack.c.l.b16 %v5292
    %v5810 = vunpack.c.l.b16 %v5293
    %v5811 = vunpack.c.l.b16 %v5294
    %v5812 = vunpack.c.l.b16 %v5295
    %v5813 = vunpack.c.l.b16 %v5296
    %v5814 = vunpack.c.l.b16 %v5297
    %v5815 = vunpack.c.l.b16 %v5298
    %v5816 = vunpack.c.l.b16 %v5299
    %v5817 = vunpack.c.l.b16 %v5300
    %v5818 = vunpack.c.l.b16 %v5301
    %v5819 = vunpack.c.l.b16 %v5302
    %v5820 = vunpack.c.l.b16 %v5303
    %v5821 = vunpack.c.l.b16 %v5304
    %v5822 = vunpack.c.l.b16 %v5305
    %v5823 = vunpack.c.l.b16 %v5306
    %v5824 = vunpack.c.l.b16 %v5307
    %v5825 = vunpack.c.l.b16 %v5308
    %v5826 = vunpack.c.l.b16 %v5309
    %v5827 = vunpack.c.l.b16 %v5310
    %v5828 = vunpack.c.l.b16 %v5311
    %v5829 = vunpack.c.l.b16 %v5312
    %v5830 = vunpack.c.l.b16 %v5313
    %v5831 = vunpack.c.l.b16 %v5314
    %v5832 = vunpack.c.l.b16 %v5315
    %v5833 = vunpack.c.l.b16 %v5316
    %v5834 = vunpack.c.l.b16 %v5317
    %v5835 = vunpack.c.l.b16 %v5318
    %v5836 = vunpack.c.l.b16 %v5319
    %v5837 = vunpack.c.l.b16 %v5320
    %v5838 = vunpack.c.l.b16 %v5321
    %v5839 = vunpack.c.l.b16 %v5322
    %v5840 = vunpack.c.l.b16 %v5323
    %v5841 = vunpack.c.l.b16 %v5324
    %v5842 = vunpack.c.l.b16 %v5325
    %v5843 = vunpack.c.l.b16 %v5326
    %v5844 = vunpack.c.l.b16 %v5327
    %v5845 = vunpack.c.l.b16 %v5328
    %v5846 = vunpack.c.l.b16 %v5329
    %v5847 = vunpack.c.l.b16 %v5330
    %v5848 = vunpack.c.l.b16 %v5331
    %v5849 = vunpack.c.l.b16 %v5332
    %v5850 = vunpack.c.l.b16 %v5333
    %v5851 = vunpack.c.l.b16 %v5334
    %v5852 = vunpack.c.l.b16 %v5335
    %v5853 = vunpack.c.l.b16 %v5336
    %v5854 = vunpack.c.l.b16 %v5337
    %v5855 = vunpack.c.l.b16 %v5338
    %v5856 = vunpack.c.l.b16 %v5339
    %v5857 = vunpack.c.l.b16 %v5340
    %v5858 = vunpack.c.l.b16 %v5341
    %v5859 = vunpack.c.l.b16 %v5342
    %v5860 = vunpack.c.l.b16 %v5343
    %v5861 = vunpack.c.l.b16 %v5344
    %v5862 = vunpack.c.l.b16 %v5345
    %v5863 = vunpack.c.l.b16 %v5346
    %v5864 = vunpack.c.l.b16 %v5347
    %v5865 = vunpack.c.l.b16 %v5348
    %v5866 = vunpack.c.l.b16 %v5349
    %v5867 = vunpack.c.l.b16 %v5350
    %v5868 = vunpack.c.l.b16 %v5351
    %v5869 = vunpack.c.l.b16 %v5352
    %v5870 = vunpack.c.l.b16 %v5353
    %v5871 = vunpack.c.l.b16 %v5354
    %v5872 = vunpack.c.l.b16 %v5355
    %v5873 = vunpack.c.l.b16 %v5356
    %v5874 = vunpack.c.l.b16 %v5357
    %v5875 = vunpack.c.l.b16 %v5358
    %v5876 = vunpack.c.l.b16 %v5359
    %v5877 = vunpack.c.l.b16 %v5360
    %v5878 = vunpack.c.l.b16 %v5361
    %v5879 = vunpack.c.l.b16 %v5362
    %v5880 = vunpack.c.l.b16 %v5363
    %v5881 = vunpack.c.l.b16 %v5364
    %v5882 = vunpack.c.l.b16 %v5365
    %v5883 = vunpack.c.l.b16 %v5366
    %v5884 = vunpack.c.l.b16 %v5367
    %v5885 = vunpack.c.l.b16 %v5368
    %v5886 = vunpack.c.l.b16 %v5369
    %v5887 = vunpack.c.l.b16 %v5370
    %v5888 = vunpack.c.l.b16 %v5371
    %v5889 = vunpack.c.l.b16 %v5372
    %v5890 = vunpack.c.l.b16 %v5373
    %v5891 = vunpack.c.l.b16 %v5374
    %v5892 = vunpack.c.l.b16 %v5375
    %v5893 = vunpack.c.l.b16 %v5376
    %v5894 = vunpack.c.l.b16 %v5377
    %v5895 = vunpack.c.l.b16 %v5378
    %v5896 = vunpack.c.l.b16 %v5379
    %v5897 = vunpack.c.l.b16 %v5380
    %v5898 = vunpack.c.l.b16 %v5381
    %v5899 = vunpack.c.l.b16 %v5382
    %v5900 = vunpack.c.l.b16 %v5383
    %v5901 = vunpack.c.l.b16 %v5384
    %v5902 = vunpack.c.l.b16 %v5385
    %v5903 = vunpack.c.l.b16 %v5386
    %v5904 = vunpack.c.l.b16 %v5387
    %v5905 = vunpack.c.l.b16 %v5388
    %v5906 = vunpack.c.l.b16 %v5389
    %v5907 = vunpack.c.l.b16 %v5390
    %v5908 = vunpack.c.l.b16 %v5391
    %v5909 = vunpack.c.l.b16 %v5392
    %v5910 = vunpack.c.l.b16 %v5393
    %v5911 = vunpack.c.l.b16 %v5394
    %v5912 = vunpack.c.l.b16 %v5395
    %v5913 = vunpack.c.l.b16 %v5396
    %v5914 = vunpack.c.l.b16 %v5397
    %v5915 = vunpack.c.l.b16 %v5398
    %v5916 = vunpack.c.l.b16 %v5399
    %v5917 = vunpack.c.l.b16 %v5400
    %v5918 = vunpack.c.l.b16 %v5401
    %v5919 = vunpack.c.l.b16 %v5402
    %v5920 = vunpack.c.l.b16 %v5403
    %v5921 = vunpack.c.l.b16 %v5404
    %v5922 = vpack.c.b16 %v5667, %v5666
    %v5923 = vpack.c.b16 %v5669, %v5668
    %v5924 = vpack.c.b16 %v5671, %v5670
    %v5925 = vpack.c.b16 %v5673, %v5672
    %v5926 = vpack.c.b16 %v5675, %v5674
    %v5927 = vpack.c.b16 %v5677, %v5676
    %v5928 = vpack.c.b16 %v5679, %v5678
    %v5929 = vpack.c.b16 %v5681, %v5680
    %v5930 = vpack.c.b16 %v5683, %v5682
    %v5931 = vpack.c.b16 %v5685, %v5684
    %v5932 = vpack.c.b16 %v5687, %v5686
    %v5933 = vpack.c.b16 %v5689, %v5688
    %v5934 = vpack.c.b16 %v5691, %v5690
    %v5935 = vpack.c.b16 %v5693, %v5692
    %v5936 = vpack.c.b16 %v5695, %v5694
    %v5937 = vpack.c.b16 %v5697, %v5696
    %v5938 = vpack.c.b16 %v5699, %v5698
    %v5939 = vpack.c.b16 %v5701, %v5700
    %v5940 = vpack.c.b16 %v5703, %v5702
    %v5941 = vpack.c.b16 %v5705, %v5704
    %v5942 = vpack.c.b16 %v5707, %v5706
    %v5943 = vpack.c.b16 %v5709, %v5708
    %v5944 = vpack.c.b16 %v5711, %v5710
    %v5945 = vpack.c.b16 %v5713, %v5712
    %v5946 = vpack.c.b16 %v5715, %v5714
    %v5947 = vpack.c.b16 %v5717, %v5716
    %v5948 = vpack.c.b16 %v5719, %v5718
    %v5949 = vpack.c.b16 %v5721, %v5720
    %v5950 = vpack.c.b16 %v5723, %v5722
    %v5951 = vpack.c.b16 %v5725, %v5724
    %v5952 = vpack.c.b16 %v5727, %v5726
    %v5953 = vpack.c.b16 %v5729, %v5728
    %v5954 = vpack.c.b16 %v5731, %v5730
    %v5955 = vpack.c.b16 %v5733, %v5732
    %v5956 = vpack.c.b16 %v5735, %v5734
    %v5957 = vpack.c.b16 %v5737, %v5736
    %v5958 = vpack.c.b16 %v5739, %v5738
    %v5959 = vpack.c.b16 %v5741, %v5740
    %v5960 = vpack.c.b16 %v5743, %v5742
    %v5961 = vpack.c.b16 %v5745, %v5744
    %v5962 = vpack.c.b16 %v5747, %v5746
    %v5963 = vpack.c.b16 %v5749, %v5748
    %v5964 = vpack.c.b16 %v5751, %v5750
    %v5965 = vpack.c.b16 %v5753, %v5752
    %v5966 = vpack.c.b16 %v5755, %v5754
    %v5967 = vpack.c.b16 %v5757, %v5756
    %v5968 = vpack.c.b16 %v5759, %v5758
    %v5969 = vpack.c.b16 %v5761, %v5760
    %v5970 = vpack.c.b16 %v5763, %v5762
    %v5971 = vpack.c.b16 %v5765, %v5764
    %v5972 = vpack.c.b16 %v5767, %v5766
    %v5973 = vpack.c.b16 %v5769, %v5768
    %v5974 = vpack.c.b16 %v5771, %v5770
    %v5975 = vpack.c.b16 %v5773, %v5772
    %v5976 = vpack.c.b16 %v5775, %v5774
    %v5977 = vpack.c.b16 %v5777, %v5776
    %v5978 = vpack.c.b16 %v5779, %v5778
    %v5979 = vpack.c.b16 %v5781, %v5780
    %v5980 = vpack.c.b16 %v5783, %v5782
    %v5981 = vpack.c.b16 %v5785, %v5784
    %v5982 = vpack.c.b16 %v5787, %v5786
    %v5983 = vpack.c.b16 %v5789, %v5788
    %v5984 = vpack.c.b16 %v5791, %v5790
    %v5985 = vpack.c.b16 %v5793, %v5792
    %v5986 = vpack.c.b16 %v5795, %v5794
    %v5987 = vpack.c.b16 %v5797, %v5796
    %v5988 = vpack.c.b16 %v5799, %v5798
    %v5989 = vpack.c.b16 %v5801, %v5800
    %v5990 = vpack.c.b16 %v5803, %v5802
    %v5991 = vpack.c.b16 %v5805, %v5804
    %v5992 = vpack.c.b16 %v5807, %v5806
    %v5993 = vpack.c.b16 %v5809, %v5808
    %v5994 = vpack.c.b16 %v5811, %v5810
    %v5995 = vpack.c.b16 %v5813, %v5812
    %v5996 = vpack.c.b16 %v5815, %v5814
    %v5997 = vpack.c.b16 %v5817, %v5816
    %v5998 = vpack.c.b16 %v5819, %v5818
    %v5999 = vpack.c.b16 %v5821, %v5820
    %v6000 = vpack.c.b16 %v5823, %v5822
    %v6001 = vpack.c.b16 %v5825, %v5824
    %v6002 = vpack.c.b16 %v5827, %v5826
    %v6003 = vpack.c.b16 %v5829, %v5828
    %v6004 = vpack.c.b16 %v5831, %v5830
    %v6005 = vpack.c.b16 %v5833, %v5832
    %v6006 = vpack.c.b16 %v5835, %v5834
    %v6007 = vpack.c.b16 %v5837, %v5836
    %v6008 = vpack.c.b16 %v5839, %v5838
    %v6009 = vpack.c.b16 %v5841, %v5840
    %v6010 = vpack.c.b16 %v5843, %v5842
    %v6011 = vpack.c.b16 %v5845, %v5844
    %v6012 = vpack.c.b16 %v5847, %v5846
    %v6013 = vpack.c.b16 %v5849, %v5848
    %v6014 = vpack.c.b16 %v5851, %v5850
    %v6015 = vpack.c.b16 %v5853, %v5852
    %v6016 = vpack.c.b16 %v5855, %v5854
    %v6017 = vpack.c.b16 %v5857, %v5856
    %v6018 = vpack.c.b16 %v5859, %v5858
    %v6019 = vpack.c.b16 %v5861, %v5860
    %v6020 = vpack.c.b16 %v5863, %v5862
    %v6021 = vpack.c.b16 %v5865, %v5864
    %v6022 = vpack.c.b16 %v5867, %v5866
    %v6023 = vpack.c.b16 %v5869, %v5868
    %v6024 = vpack.c.b16 %v5871, %v5870
    %v6025 = vpack.c.b16 %v5873, %v5872
    %v6026 = vpack.c.b16 %v5875, %v5874
    %v6027 = vpack.c.b16 %v5877, %v5876
    %v6028 = vpack.c.b16 %v5879, %v5878
    %v6029 = vpack.c.b16 %v5881, %v5880
    %v6030 = vpack.c.b16 %v5883, %v5882
    %v6031 = vpack.c.b16 %v5885, %v5884
    %v6032 = vpack.c.b16 %v5887, %v5886
    %v6033 = vpack.c.b16 %v5889, %v5888
    %v6034 = vpack.c.b16 %v5891, %v5890
    %v6035 = vpack.c.b16 %v5893, %v5892
    %v6036 = vpack.c.b16 %v5895, %v5894
    %v6037 = vpack.c.b16 %v5897, %v5896
    %v6038 = vpack.c.b16 %v5899, %v5898
    %v6039 = vpack.c.b16 %v5901, %v5900
    %v6040 = vpack.c.b16 %v5903, %v5902
    %v6041 = vpack.c.b16 %v5905, %v5904
    %v6042 = vpack.c.b16 %v5907, %v5906
    %v6043 = vpack.c.b16 %v5909, %v5908
    %v6044 = vpack.c.b16 %v5911, %v5910
    %v6045 = vpack.c.b16 %v5913, %v5912
    %v6046 = vpack.c.b16 %v5915, %v5914
    %v6047 = vpack.c.b16 %v5917, %v5916
    %v6048 = vpack.c.b16 %v5919, %v5918
    %v6049 = vpack.c.b16 %v5921, %v5920
    %6178 = vmatprep.subr.bf16.mxu0 0
    %6179 = vmatpush1.bf16.msra.mxu0 %v5922
    %6180 = vmatprep.subr.bf16.mxu0 0
    %6181 = vmatpush1.bf16.msra.mxu0 %v5923
    %6182 = vmatprep.subr.bf16.mxu0 0
    %6183 = vmatpush1.bf16.msra.mxu0 %v5924
    %6184 = vmatprep.subr.bf16.mxu0 0
    %6185 = vmatpush1.bf16.msra.mxu0 %v5925
    %6186 = vmatprep.subr.bf16.mxu0 0
    %6187 = vmatpush1.bf16.msra.mxu0 %v5926
    %6188 = vmatprep.subr.bf16.mxu0 0
    %6189 = vmatpush1.bf16.msra.mxu0 %v5927
    %6190 = vmatprep.subr.bf16.mxu0 0
    %6191 = vmatpush1.bf16.msra.mxu0 %v5928
    %6192 = vmatprep.subr.bf16.mxu0 0
    %6193 = vmatpush1.bf16.msra.mxu0 %v5929
    %6194 = vmatprep.subr.bf16.mxu0 0
    %6195 = vmatpush1.bf16.msra.mxu0 %v5930
    %6196 = vmatprep.subr.bf16.mxu0 0
    %6197 = vmatpush1.bf16.msra.mxu0 %v5931
    %6198 = vmatprep.subr.bf16.mxu0 0
    %6199 = vmatpush1.bf16.msra.mxu0 %v5932
    %6200 = vmatprep.subr.bf16.mxu0 0
    %6201 = vmatpush1.bf16.msra.mxu0 %v5933
    %6202 = vmatprep.subr.bf16.mxu0 0
    %6203 = vmatpush1.bf16.msra.mxu0 %v5934
    %6204 = vmatprep.subr.bf16.mxu0 0
    %6205 = vmatpush1.bf16.msra.mxu0 %v5935
    %6206 = vmatprep.subr.bf16.mxu0 0
    %6207 = vmatpush1.bf16.msra.mxu0 %v5936
    %6208 = vmatprep.subr.bf16.mxu0 0
    %6209 = vmatpush1.bf16.msra.mxu0 %v5937
    %6210 = vmatprep.mubr.bf16.mxu0 %v5117
    %6211 = vmatmul.mubr.bf16.gmra.mrb[0].mxu0 %v5116
    %v6212 = vpop.f32.mrb[0].mxu0
    %v6213 = vpop.f32.mrb[0].mxu0
    %v6214 = vpop.f32.mrb[0].mxu0
    %v6215 = vadd.f32 %v5409, %v6214
    %v6216 = vpop.f32.mrb[0].mxu0
    %6217 = vmatprep.mubr.bf16.mxu0 %v5133
    %6218 = vmatmul.mubr.bf16.gmra.mrb[0].mxu0 %v5132
    %v6219 = vpop.f32.mrb[0].mxu0
    %v6220 = vpop.f32.mrb[0].mxu0
    %v6221 = vpop.f32.mrb[0].mxu0
    %v6222 = vadd.f32 %v5409, %v6221
    %v6223 = vpop.f32.mrb[0].mxu0
    %6224 = vdwg.mxu0
    %6225 = vmatprep.subr.bf16.mxu0 0
    %6226 = vmatpush1.bf16.msra.mxu0 %v5938
    %6227 = vmatprep.subr.bf16.mxu0 0
    %6228 = vmatpush1.bf16.msra.mxu0 %v5939
    %6229 = vmatprep.subr.bf16.mxu0 0
    %6230 = vmatpush1.bf16.msra.mxu0 %v5940
    %6231 = vmatprep.subr.bf16.mxu0 0
    %6232 = vmatpush1.bf16.msra.mxu0 %v5941
    %6233 = vmatprep.subr.bf16.mxu0 0
    %6234 = vmatpush1.bf16.msra.mxu0 %v5942
    %6235 = vmatprep.subr.bf16.mxu0 0
    %6236 = vmatpush1.bf16.msra.mxu0 %v5943
    %6237 = vmatprep.subr.bf16.mxu0 0
    %6238 = vmatpush1.bf16.msra.mxu0 %v5944
    %6239 = vmatprep.subr.bf16.mxu0 0
    %6240 = vmatpush1.bf16.msra.mxu0 %v5945
    %6241 = vmatprep.subr.bf16.mxu0 0
    %6242 = vmatpush1.bf16.msra.mxu0 %v5946
    %6243 = vmatprep.subr.bf16.mxu0 0
    %6244 = vmatpush1.bf16.msra.mxu0 %v5947
    %6245 = vmatprep.subr.bf16.mxu0 0
    %6246 = vmatpush1.bf16.msra.mxu0 %v5948
    %6247 = vmatprep.subr.bf16.mxu0 0
    %6248 = vmatpush1.bf16.msra.mxu0 %v5949
    %6249 = vmatprep.subr.bf16.mxu0 0
    %6250 = vmatpush1.bf16.msra.mxu0 %v5950
    %6251 = vmatprep.subr.bf16.mxu0 0
    %6252 = vmatpush1.bf16.msra.mxu0 %v5951
    %6253 = vmatprep.subr.bf16.mxu0 0
    %6254 = vmatpush1.bf16.msra.mxu0 %v5952
    %6255 = vmatprep.subr.bf16.mxu0 0
    %6256 = vmatpush1.bf16.msra.mxu0 %v5953
    %6257 = vmatprep.mubr.bf16.mxu0 %v5119
    %6258 = vmatmul.mubr.bf16.gmra.mrb[0].mxu0 %v5118
    %v6259 = vpop.f32.mrb[0].mxu0
    %v6260 = vpop.f32.mrb[0].mxu0
    %v6261 = vpop.f32.mrb[0].mxu0
    %v6262 = vadd.f32 %v6215, %v6261
    %v6263 = vpop.f32.mrb[0].mxu0
    %6264 = vmatprep.mubr.bf16.mxu0 %v5135
    %6265 = vmatmul.mubr.bf16.gmra.mrb[0].mxu0 %v5134
    %v6266 = vpop.f32.mrb[0].mxu0
    %v6267 = vpop.f32.mrb[0].mxu0
    %v6268 = vpop.f32.mrb[0].mxu0
    %v6269 = vadd.f32 %v6222, %v6268
    %v6270 = vpop.f32.mrb[0].mxu0
    %6271 = vdwg.mxu0
    %6272 = vmatprep.subr.bf16.mxu0 0
    %6273 = vmatpush1.bf16.msra.mxu0 %v5954
    %6274 = vmatprep.subr.bf16.mxu0 0
    %6275 = vmatpush1.bf16.msra.mxu0 %v5955
    %6276 = vmatprep.subr.bf16.mxu0 0
    %6277 = vmatpush1.bf16.msra.mxu0 %v5956
    %6278 = vmatprep.subr.bf16.mxu0 0
    %6279 = vmatpush1.bf16.msra.mxu0 %v5957
    %6280 = vmatprep.subr.bf16.mxu0 0
    %6281 = vmatpush1.bf16.msra.mxu0 %v5958
    %6282 = vmatprep.subr.bf16.mxu0 0
    %6283 = vmatpush1.bf16.msra.mxu0 %v5959
    %6284 = vmatprep.subr.bf16.mxu0 0
    %6285 = vmatpush1.bf16.msra.mxu0 %v5960
    %6286 = vmatprep.subr.bf16.mxu0 0
    %6287 = vmatpush1.bf16.msra.mxu0 %v5961
    %6288 = vmatprep.subr.bf16.mxu0 0
    %6289 = vmatpush1.bf16.msra.mxu0 %v5962
    %6290 = vmatprep.subr.bf16.mxu0 0
    %6291 = vmatpush1.bf16.msra.mxu0 %v5963
    %6292 = vmatprep.subr.bf16.mxu0 0
    %6293 = vmatpush1.bf16.msra.mxu0 %v5964
    %6294 = vmatprep.subr.bf16.mxu0 0
    %6295 = vmatpush1.bf16.msra.mxu0 %v5965
    %6296 = vmatprep.subr.bf16.mxu0 0
    %6297 = vmatpush1.bf16.msra.mxu0 %v5966
    %6298 = vmatprep.subr.bf16.mxu0 0
    %6299 = vmatpush1.bf16.msra.mxu0 %v5967
    %6300 = vmatprep.subr.bf16.mxu0 0
    %6301 = vmatpush1.bf16.msra.mxu0 %v5968
    %6302 = vmatprep.subr.bf16.mxu0 0
    %6303 = vmatpush1.bf16.msra.mxu0 %v5969
    %6304 = vmatprep.mubr.bf16.mxu0 %v5121
    %6305 = vmatmul.mubr.bf16.gmra.mrb[0].mxu0 %v5120
    %v6306 = vpop.f32.mrb[0].mxu0
    %v6307 = vpop.f32.mrb[0].mxu0
    %v6308 = vpop.f32.mrb[0].mxu0
    %v6309 = vadd.f32 %v6262, %v6308
    %v6310 = vpop.f32.mrb[0].mxu0
    %6311 = vmatprep.mubr.bf16.mxu0 %v5137
    %6312 = vmatmul.mubr.bf16.gmra.mrb[0].mxu0 %v5136
    %v6313 = vpop.f32.mrb[0].mxu0
    %v6314 = vpop.f32.mrb[0].mxu0
    %v6315 = vpop.f32.mrb[0].mxu0
    %v6316 = vadd.f32 %v6269, %v6315
    %v6317 = vpop.f32.mrb[0].mxu0
    %6318 = vdwg.mxu0
    %6319 = vmatprep.subr.bf16.mxu0 0
    %6320 = vmatpush1.bf16.msra.mxu0 %v5970
    %6321 = vmatprep.subr.bf16.mxu0 0
    %6322 = vmatpush1.bf16.msra.mxu0 %v5971
    %6323 = vmatprep.subr.bf16.mxu0 0
    %6324 = vmatpush1.bf16.msra.mxu0 %v5972
    %6325 = vmatprep.subr.bf16.mxu0 0
    %6326 = vmatpush1.bf16.msra.mxu0 %v5973
    %6327 = vmatprep.subr.bf16.mxu0 0
    %6328 = vmatpush1.bf16.msra.mxu0 %v5974
    %6329 = vmatprep.subr.bf16.mxu0 0
    %6330 = vmatpush1.bf16.msra.mxu0 %v5975
    %6331 = vmatprep.subr.bf16.mxu0 0
    %6332 = vmatpush1.bf16.msra.mxu0 %v5976
    %6333 = vmatprep.subr.bf16.mxu0 0
    %6334 = vmatpush1.bf16.msra.mxu0 %v5977
    %6335 = vmatprep.subr.bf16.mxu0 0
    %6336 = vmatpush1.bf16.msra.mxu0 %v5978
    %6337 = vmatprep.subr.bf16.mxu0 0
    %6338 = vmatpush1.bf16.msra.mxu0 %v5979
    %6339 = vmatprep.subr.bf16.mxu0 0
    %6340 = vmatpush1.bf16.msra.mxu0 %v5980
    %6341 = vmatprep.subr.bf16.mxu0 0
    %6342 = vmatpush1.bf16.msra.mxu0 %v5981
    %6343 = vmatprep.subr.bf16.mxu0 0
    %6344 = vmatpush1.bf16.msra.mxu0 %v5982
    %6345 = vmatprep.subr.bf16.mxu0 0
    %6346 = vmatpush1.bf16.msra.mxu0 %v5983
    %6347 = vmatprep.subr.bf16.mxu0 0
    %6348 = vmatpush1.bf16.msra.mxu0 %v5984
    %6349 = vmatprep.subr.bf16.mxu0 0
    %6350 = vmatpush1.bf16.msra.mxu0 %v5985
    %6351 = vmatprep.mubr.bf16.mxu0 %v5123
    %6352 = vmatmul.mubr.bf16.gmra.mrb[0].mxu0 %v5122
    %v6353 = vpop.f32.mrb[0].mxu0
    %v6354 = vpop.f32.mrb[0].mxu0
    %v6355 = vpop.f32.mrb[0].mxu0
    %v6356 = vadd.f32 %v6309, %v6355
    %v6357 = vpop.f32.mrb[0].mxu0
    %6358 = vmatprep.mubr.bf16.mxu0 %v5139
    %6359 = vmatmul.mubr.bf16.gmra.mrb[0].mxu0 %v5138
    %v6360 = vpop.f32.mrb[0].mxu0
    %v6361 = vpop.f32.mrb[0].mxu0
    %v6362 = vpop.f32.mrb[0].mxu0
    %v6363 = vadd.f32 %v6316, %v6362
    %v6364 = vpop.f32.mrb[0].mxu0
    %6365 = vdwg.mxu0
    %6366 = vmatprep.subr.bf16.mxu0 0
    %6367 = vmatpush1.bf16.msra.mxu0 %v5986
    %6368 = vmatprep.subr.bf16.mxu0 0
    %6369 = vmatpush1.bf16.msra.mxu0 %v5987
    %6370 = vmatprep.subr.bf16.mxu0 0
    %6371 = vmatpush1.bf16.msra.mxu0 %v5988
    %6372 = vmatprep.subr.bf16.mxu0 0
    %6373 = vmatpush1.bf16.msra.mxu0 %v5989
    %6374 = vmatprep.subr.bf16.mxu0 0
    %6375 = vmatpush1.bf16.msra.mxu0 %v5990
    %6376 = vmatprep.subr.bf16.mxu0 0
    %6377 = vmatpush1.bf16.msra.mxu0 %v5991
    %6378 = vmatprep.subr.bf16.mxu0 0
    %6379 = vmatpush1.bf16.msra.mxu0 %v5992
    %6380 = vmatprep.subr.bf16.mxu0 0
    %6381 = vmatpush1.bf16.msra.mxu0 %v5993
    %6382 = vmatprep.subr.bf16.mxu0 0
    %6383 = vmatpush1.bf16.msra.mxu0 %v5994
    %6384 = vmatprep.subr.bf16.mxu0 0
    %6385 = vmatpush1.bf16.msra.mxu0 %v5995
    %6386 = vmatprep.subr.bf16.mxu0 0
    %6387 = vmatpush1.bf16.msra.mxu0 %v5996
    %6388 = vmatprep.subr.bf16.mxu0 0
    %6389 = vmatpush1.bf16.msra.mxu0 %v5997
    %6390 = vmatprep.subr.bf16.mxu0 0
    %6391 = vmatpush1.bf16.msra.mxu0 %v5998
    %6392 = vmatprep.subr.bf16.mxu0 0
    %6393 = vmatpush1.bf16.msra.mxu0 %v5999
    %6394 = vmatprep.subr.bf16.mxu0 0
    %6395 = vmatpush1.bf16.msra.mxu0 %v6000
    %6396 = vmatprep.subr.bf16.mxu0 0
    %6397 = vmatpush1.bf16.msra.mxu0 %v6001
    %6398 = vmatprep.mubr.bf16.mxu0 %v5125
    %6399 = vmatmul.mubr.bf16.gmra.mrb[0].mxu0 %v5124
    %v6400 = vpop.f32.mrb[0].mxu0
    %v6401 = vpop.f32.mrb[0].mxu0
    %v6402 = vpop.f32.mrb[0].mxu0
    %v6403 = vadd.f32 %v6356, %v6402
    %v6404 = vpop.f32.mrb[0].mxu0
    %6405 = vmatprep.mubr.bf16.mxu0 %v5141
    %6406 = vmatmul.mubr.bf16.gmra.mrb[0].mxu0 %v5140
    %v6407 = vpop.f32.mrb[0].mxu0
    %v6408 = vpop.f32.mrb[0].mxu0
    %v6409 = vpop.f32.mrb[0].mxu0
    %v6410 = vadd.f32 %v6363, %v6409
    %v6411 = vpop.f32.mrb[0].mxu0
    %6412 = vdwg.mxu0
    %6413 = vmatprep.subr.bf16.mxu0 0
    %6414 = vmatpush1.bf16.msra.mxu0 %v6002
    %6415 = vmatprep.subr.bf16.mxu0 0
    %6416 = vmatpush1.bf16.msra.mxu0 %v6003
    %6417 = vmatprep.subr.bf16.mxu0 0
    %6418 = vmatpush1.bf16.msra.mxu0 %v6004
    %6419 = vmatprep.subr.bf16.mxu0 0
    %6420 = vmatpush1.bf16.msra.mxu0 %v6005
    %6421 = vmatprep.subr.bf16.mxu0 0
    %6422 = vmatpush1.bf16.msra.mxu0 %v6006
    %6423 = vmatprep.subr.bf16.mxu0 0
    %6424 = vmatpush1.bf16.msra.mxu0 %v6007
    %6425 = vmatprep.subr.bf16.mxu0 0
    %6426 = vmatpush1.bf16.msra.mxu0 %v6008
    %6427 = vmatprep.subr.bf16.mxu0 0
    %6428 = vmatpush1.bf16.msra.mxu0 %v6009
    %6429 = vmatprep.subr.bf16.mxu0 0
    %6430 = vmatpush1.bf16.msra.mxu0 %v6010
    %6431 = vmatprep.subr.bf16.mxu0 0
    %6432 = vmatpush1.bf16.msra.mxu0 %v6011
    %6433 = vmatprep.subr.bf16.mxu0 0
    %6434 = vmatpush1.bf16.msra.mxu0 %v6012
    %6435 = vmatprep.subr.bf16.mxu0 0
    %6436 = vmatpush1.bf16.msra.mxu0 %v6013
    %6437 = vmatprep.subr.bf16.mxu0 0
    %6438 = vmatpush1.bf16.msra.mxu0 %v6014
    %6439 = vmatprep.subr.bf16.mxu0 0
    %6440 = vmatpush1.bf16.msra.mxu0 %v6015
    %6441 = vmatprep.subr.bf16.mxu0 0
    %6442 = vmatpush1.bf16.msra.mxu0 %v6016
    %6443 = vmatprep.subr.bf16.mxu0 0
    %6444 = vmatpush1.bf16.msra.mxu0 %v6017
    %6445 = vmatprep.mubr.bf16.mxu0 %v5127
    %6446 = vmatmul.mubr.bf16.gmra.mrb[0].mxu0 %v5126
    %v6447 = vpop.f32.mrb[0].mxu0
    %v6448 = vpop.f32.mrb[0].mxu0
    %v6449 = vpop.f32.mrb[0].mxu0
    %v6450 = vadd.f32 %v6403, %v6449
    %v6451 = vpop.f32.mrb[0].mxu0
    %6452 = vmatprep.mubr.bf16.mxu0 %v5143
    %6453 = vmatmul.mubr.bf16.gmra.mrb[0].mxu0 %v5142
    %v6454 = vpop.f32.mrb[0].mxu0
    %v6455 = vpop.f32.mrb[0].mxu0
    %v6456 = vpop.f32.mrb[0].mxu0
    %v6457 = vadd.f32 %v6410, %v6456
    %v6458 = vpop.f32.mrb[0].mxu0
    %6459 = vdwg.mxu0
    %6460 = vmatprep.subr.bf16.mxu0 0
    %6461 = vmatpush1.bf16.msra.mxu0 %v6018
    %6462 = vmatprep.subr.bf16.mxu0 0
    %6463 = vmatpush1.bf16.msra.mxu0 %v6019
    %6464 = vmatprep.subr.bf16.mxu0 0
    %6465 = vmatpush1.bf16.msra.mxu0 %v6020
    %6466 = vmatprep.subr.bf16.mxu0 0
    %6467 = vmatpush1.bf16.msra.mxu0 %v6021
    %6468 = vmatprep.subr.bf16.mxu0 0
    %6469 = vmatpush1.bf16.msra.mxu0 %v6022
    %6470 = vmatprep.subr.bf16.mxu0 0
    %6471 = vmatpush1.bf16.msra.mxu0 %v6023
    %6472 = vmatprep.subr.bf16.mxu0 0
    %6473 = vmatpush1.bf16.msra.mxu0 %v6024
    %6474 = vmatprep.subr.bf16.mxu0 0
    %6475 = vmatpush1.bf16.msra.mxu0 %v6025
    %6476 = vmatprep.subr.bf16.mxu0 0
    %6477 = vmatpush1.bf16.msra.mxu0 %v6026
    %6478 = vmatprep.subr.bf16.mxu0 0
    %6479 = vmatpush1.bf16.msra.mxu0 %v6027
    %6480 = vmatprep.subr.bf16.mxu0 0
    %6481 = vmatpush1.bf16.msra.mxu0 %v6028
    %6482 = vmatprep.subr.bf16.mxu0 0
    %6483 = vmatpush1.bf16.msra.mxu0 %v6029
    %6484 = vmatprep.subr.bf16.mxu0 0
    %6485 = vmatpush1.bf16.msra.mxu0 %v6030
    %6486 = vmatprep.subr.bf16.mxu0 0
    %6487 = vmatpush1.bf16.msra.mxu0 %v6031
    %6488 = vmatprep.subr.bf16.mxu0 0
    %6489 = vmatpush1.bf16.msra.mxu0 %v6032
    %6490 = vmatprep.subr.bf16.mxu0 0
    %6491 = vmatpush1.bf16.msra.mxu0 %v6033
    %6492 = vmatprep.mubr.bf16.mxu0 %v5129
    %6493 = vmatmul.mubr.bf16.gmra.mrb[0].mxu0 %v5128
    %v6494 = vpop.f32.mrb[0].mxu0
    %v6495 = vpop.f32.mrb[0].mxu0
    %v6496 = vpop.f32.mrb[0].mxu0
    %v6497 = vadd.f32 %v6450, %v6496
    %v6498 = vpop.f32.mrb[0].mxu0
    %6499 = vmatprep.mubr.bf16.mxu0 %v5145
    %6500 = vmatmul.mubr.bf16.gmra.mrb[0].mxu0 %v5144
    %v6501 = vpop.f32.mrb[0].mxu0
    %v6502 = vpop.f32.mrb[0].mxu0
    %v6503 = vpop.f32.mrb[0].mxu0
    %v6504 = vadd.f32 %v6457, %v6503
    %v6505 = vpop.f32.mrb[0].mxu0
    %6506 = vdwg.mxu0
    %6507 = vmatprep.subr.bf16.mxu0 0
    %6508 = vmatpush1.bf16.msra.mxu0 %v6034
    %6509 = vmatprep.subr.bf16.mxu0 0
    %6510 = vmatpush1.bf16.msra.mxu0 %v6035
    %6511 = vmatprep.subr.bf16.mxu0 0
    %6512 = vmatpush1.bf16.msra.mxu0 %v6036
    %6513 = vmatprep.subr.bf16.mxu0 0
    %6514 = vmatpush1.bf16.msra.mxu0 %v6037
    %6515 = vmatprep.subr.bf16.mxu0 0
    %6516 = vmatpush1.bf16.msra.mxu0 %v6038
    %6517 = vmatprep.subr.bf16.mxu0 0
    %6518 = vmatpush1.bf16.msra.mxu0 %v6039
    %6519 = vmatprep.subr.bf16.mxu0 0
    %6520 = vmatpush1.bf16.msra.mxu0 %v6040
    %6521 = vmatprep.subr.bf16.mxu0 0
    %6522 = vmatpush1.bf16.msra.mxu0 %v6041
    %6523 = vmatprep.subr.bf16.mxu0 0
    %6524 = vmatpush1.bf16.msra.mxu0 %v6042
    %6525 = vmatprep.subr.bf16.mxu0 0
    %6526 = vmatpush1.bf16.msra.mxu0 %v6043
    %6527 = vmatprep.subr.bf16.mxu0 0
    %6528 = vmatpush1.bf16.msra.mxu0 %v6044
    %6529 = vmatprep.subr.bf16.mxu0 0
    %6530 = vmatpush1.bf16.msra.mxu0 %v6045
    %6531 = vmatprep.subr.bf16.mxu0 0
    %6532 = vmatpush1.bf16.msra.mxu0 %v6046
    %6533 = vmatprep.subr.bf16.mxu0 0
    %6534 = vmatpush1.bf16.msra.mxu0 %v6047
    %6535 = vmatprep.subr.bf16.mxu0 0
    %6536 = vmatpush1.bf16.msra.mxu0 %v6048
    %6537 = vmatprep.subr.bf16.mxu0 0
    %6538 = vmatpush1.bf16.msra.mxu0 %v6049
    %6539 = vmatprep.mubr.bf16.mxu0 %v5131
    %6540 = vmatmul.mubr.bf16.gmra.mrb[0].mxu0 %v5130
    %v6541 = vpop.f32.mrb[0].mxu0
    %v6542 = vpop.f32.mrb[0].mxu0
    %v6543 = vpop.f32.mrb[0].mxu0
    %v6544 = vadd.f32 %v6497, %v6543
    %v6545 = vpop.f32.mrb[0].mxu0
    %6546 = vmatprep.mubr.bf16.mxu0 %v5147
    %6547 = vmatmul.mubr.bf16.gmra.mrb[0].mxu0 %v5146
    %v6548 = vpop.f32.mrb[0].mxu0
    %v6549 = vpop.f32.mrb[0].mxu0
    %v6550 = vpop.f32.mrb[0].mxu0
    %v6551 = vadd.f32 %v6504, %v6550
    %v6552 = vpop.f32.mrb[0].mxu0
    %6553 = vdwg.mxu0
    %v6554 = vadd.f32 %v4338, %v6544
    %v6555 = vadd.f32 %v4340, %v6551
    %v6556 = vld [vmem:[%s17 + $0x1] sm:$0x1]
    %v6557 = vld [vmem:[%s18 + $0x1] sm:$0x1]
    %v6558 = vsel %vm442, %v6554, 0.0
    %6559 = vadd.xlane.f32.xlu0 %v6558
    %v6560 = vpop.xlane.xlu0 %6559
    %v6561 = vsel %vm442, %v6555, 0.0
    %6562 = vadd.xlane.f32.xlu0 %v6561
    %v6563 = vpop.xlane.xlu0 %6562
    %v6564 = vmul.f32 %v6560, %v1213
    %v6565 = vmul.f32 %v6563, %v1213
    %v6566 = vsub.f32 %v6554, %v6564
    %v6567 = vsub.f32 %v6555, %v6565
    %v6568 = vmul.f32 %v6566, %v6566
    %v6569 = vmul.f32 %v6567, %v6567
    %v6570 = vsel %vm442, %v6568, 0.0
    %6571 = vadd.xlane.f32.xlu0 %v6570
    %v6572 = vpop.xlane.xlu0 %6571
    %v6573 = vsel %vm442, %v6569, 0.0
    %6574 = vadd.xlane.f32.xlu0 %v6573
    %v6575 = vpop.xlane.xlu0 %6574
    %v6576 = vmul.f32 %v6572, %v1213
    %v6577 = vmul.f32 %v6575, %v1213
    %v6578 = vadd.f32 %v6576, 1e-05
    %v6579 = vadd.f32 %v6577, 1e-05
    %v6580 = vrsqrt.pop %v6578
    %v6581 = vrsqrt.pop %v6579
    %v6582 = vmul.f32 %v6566, %v6580
    %v6583 = vmul.f32 %v6567, %v6581
    %v6584 = vlaneseq
    %v6585 = vshrl.u32 %v6584, 7
    %v6586 = vsub.s32 0, %v6585
    %v6587 = vrot.slane %v6556, %v6586
    %v6588 = vmul.f32 %v6582, %v6587
    %v6589 = vmul.f32 %v6583, %v6587
    %v6590 = vlaneseq
    %v6591 = vshrl.u32 %v6590, 7
    %v6592 = vsub.s32 0, %v6591
    %v6593 = vrot.slane %v6557, %v6592
    %v6594 = vadd.f32 %v6588, %v6593
    %v6595 = vadd.f32 %v6589, %v6593
    %v6597 = vrot.slane %v6594, 7
    %v6600 = vrot.slane %v6595, 6
    %vm6602 = vcmask 1040384
    %v6603 = vsel %vm6602, %v6597, %v6600
    %v6604 = vld [vmem:[%s19] sm:$0xff]
    %v6605 = vld [vmem:[%s19 + $0x8] sm:$0xff]
    %v6606 = vld [vmem:[%s19 + $0x10] sm:$0xff]
    %v6607 = vld [vmem:[%s19 + $0x18] sm:$0xff]
    %v6608 = vld [vmem:[%s20] sm:$0x1]
    %v6610 = vlaneseq
    %v6611 = vshrl.u32 %v6610, 7
    %v6612 = vsub.s32 0, %v6611
    %v6613 = vrot.slane %v6608, %v6612
    %v6616 = vsel %vm442, %v6603, 0
    %6618 = vmatprep.subr.mxu0 0.0
    %6619 = vmatpush1.msra.mxu0 %v6604
    %6620 = vmatprep.subr.mxu0 0.0
    %6621 = vmatpush1.msra.mxu0 %v6605
    %6622 = vmatprep.subr.mxu0 0.0
    %6623 = vmatpush1.msra.mxu0 %v6606
    %6624 = vmatprep.subr.mxu0 0.0
    %6625 = vmatpush1.msra.mxu0 %v6607
    %6626 = vmatprep.subr.mxu0 0.0
    %6627 = vmatpush1.msra.mxu0 0.0
    %6628 = vmatprep.subr.mxu0 0.0
    %6629 = vmatpush1.msra.mxu0 0.0
    %6630 = vmatprep.subr.mxu0 0.0
    %6631 = vmatpush1.msra.mxu0 0.0
    %6632 = vmatprep.subr.mxu0 0.0
    %6633 = vmatpush1.msra.mxu0 0.0
    %6634 = vmatprep.subr.mxu0 0.0
    %6635 = vmatpush1.msra.mxu0 0.0
    %6636 = vmatprep.subr.mxu0 0.0
    %6637 = vmatpush1.msra.mxu0 0.0
    %6638 = vmatprep.subr.mxu0 0.0
    %6639 = vmatpush1.msra.mxu0 0.0
    %6640 = vmatprep.subr.mxu0 0.0
    %6641 = vmatpush1.msra.mxu0 0.0
    %6642 = vmatprep.subr.mxu0 0.0
    %6643 = vmatpush1.msra.mxu0 0.0
    %6644 = vmatprep.subr.mxu0 0.0
    %6645 = vmatpush1.msra.mxu0 0.0
    %6646 = vmatprep.subr.mxu0 0.0
    %6647 = vmatpush1.msra.mxu0 0.0
    %6648 = vmatprep.subr.mxu0 0.0
    %6649 = vmatpush1.msra.mxu0 0.0
    %6650 = vmatprep.subr.mxu0 0.0
    %6651 = vmatpush1.msra.mxu0 0.0
    %6652 = vmatprep.subr.mxu0 0.0
    %6653 = vmatpush1.msra.mxu0 0.0
    %6654 = vmatprep.subr.mxu0 0.0
    %6655 = vmatpush1.msra.mxu0 0.0
    %6656 = vmatprep.subr.mxu0 0.0
    %6657 = vmatpush1.msra.mxu0 0.0
    %6658 = vmatprep.subr.mxu0 0.0
    %6659 = vmatpush1.msra.mxu0 0.0
    %6660 = vmatprep.subr.mxu0 0.0
    %6661 = vmatpush1.msra.mxu0 0.0
    %6662 = vmatprep.subr.mxu0 0.0
    %6663 = vmatpush1.msra.mxu0 0.0
    %6664 = vmatprep.subr.mxu0 0.0
    %6665 = vmatpush1.msra.mxu0 0.0
    %6666 = vmatprep.subr.mxu0 0.0
    %6667 = vmatpush1.msra.mxu0 0.0
    %6668 = vmatprep.subr.mxu0 0.0
    %6669 = vmatpush1.msra.mxu0 0.0
    %6670 = vmatprep.subr.mxu0 0.0
    %6671 = vmatpush1.msra.mxu0 0.0
    %6672 = vmatprep.subr.mxu0 0.0
    %6673 = vmatpush1.msra.mxu0 0.0
    %6674 = vmatprep.subr.mxu0 0.0
    %6675 = vmatpush1.msra.mxu0 0.0
    %6676 = vmatprep.subr.mxu0 0.0
    %6677 = vmatpush1.msra.mxu0 0.0
    %6678 = vmatprep.subr.mxu0 0.0
    %6679 = vmatpush1.msra.mxu0 0.0
    %6680 = vmatprep.subr.mxu0 0.0
    %6681 = vmatpush1.msra.mxu0 0.0
    %6682 = vmatprep.mubr.f32.mxu0 0.0
    %6683 = vmatmul.mubr.f32.gmra.mrb[0].mxu0 %v6616
    %v6684 = vpop.f32.mrb[0].mxu0
    %v6685 = vadd.f32 %v6613, %v6684
    %v6686 = vpop.f32.mrb[0].mxu0
    %6687 = vdwg.mxu0
    %vm6688 = vcmask 33792
    %6689 = vst.msk [vmem:[#allocation2] sm:$0x3] %vm6688, %v6685
    // Predicated region
    $region86: #{forward.1} parent=1 // pred_check
      _
    $region87: #{forward.1} parent=1 // pred_check_branch
      %6691 = sbr.rel (0) target = $region89
    $region88: #{forward.1} parent=1 // pred_region
      %s6693 = ssub.s32 32, 32
      %6694 = vsyncadd [#allocation3], %s6693
      %s6696 = sshll.u32 [#allocation2], 4
      %s6697 = int_to_ptr.vmem [resolvable:$true] %s6696
      %6699 = dma.vmem_to_hbm [thread:$0]  %s6697, 32, %s21, [#allocation3]
    $region89: #{forward.1} parent=1 // pred_fallthru
      _
    // Predicated region
    $region90: #{forward.1} parent=1 // pred_check
      _
    $region91: #{forward.1} parent=1 // pred_check_branch
      %6701 = sbr.rel (0) target = $region93
    $region92: #{forward.1} parent=1 // pred_region
      %6702 = dma.done [#allocation3], 32
    $region93: #{forward.1} parent=1 // pred_fallthru
      _
    %6703 = vsyncpa [#allocation3], 1

</llo_original>
